<compile_context>
chip_gen: v7x
topology: tpu7x:2x2x1
jax: 0.10.0
libtpu: 0.0.40
codegen_flags: <defaults>
</compile_context>

<pallas_src>
import functools

import jax
import jax.numpy as jnp
from jax.experimental import pallas as pl
from jax.experimental.pallas import tpu as pltpu


def _conv_norm_act_kernel(x_ref, w_ref, b_ref, m_ref, o_ref, *,
                          tap_starts, c_eff, inv_count,
                          add_bias, do_norm, slope):
    """One batch element: conv (per-tap MXU matmuls) + bias + IN + LeakyReLU.

    x_ref : (1, P, c_eff)       bf16  flattened padded input rows
    w_ref : (T*c_eff, Cout)     bf16  per-tap weight slabs, tap-major
    b_ref : (1, Cout)           f32
    m_ref : (L, 1)              f32   1.0 on rows that are real output positions
    o_ref : (1, L, Cout)
    """
    _, l_rows, cout = o_ref.shape

    acc = jnp.zeros((l_rows, cout), jnp.float32)
    for t, start in enumerate(tap_starts):
        xt = x_ref[:, pl.ds(start, l_rows), :].reshape(l_rows, c_eff)
        wt = w_ref[pl.ds(t * c_eff, c_eff), :]
        acc = acc + jnp.dot(xt, wt, preferred_element_type=jnp.float32)

    if add_bias:
        acc = acc + b_ref[...]

    if do_norm:
        # InstanceNorm2d(affine=False): per-(instance, channel) spatial stats
        # over the VALID rows only, one pass (sum + sum of squares), biased
        # variance, eps = 1e-5.  Bias add is skipped for these layers because
        # the mean subtraction cancels it exactly.
        m = m_ref[...]                                        # (L, 1)
        s = jnp.sum(acc * m, axis=0, keepdims=True)           # (1, Cout)
        ss = jnp.sum(acc * acc * m, axis=0, keepdims=True)
        mean = s * inv_count
        var = jnp.maximum(ss * inv_count - mean * mean, 0.0)
        acc = (acc - mean) * jax.lax.rsqrt(var + 1e-5)

    if slope is not None:
        acc = jnp.where(acc >= 0, acc, slope * acc)           # LeakyReLU

    o_ref[...] = acc.reshape(1, l_rows, cout).astype(o_ref.dtype)


def _vmem_limit_bytes(need):
    """Generation-aware scoped-VMEM request (headroom below physical capacity)."""
    try:
        cap = int(pltpu.get_tpu_info().vmem_capacity_bytes)
    except Exception:                      # conservative fallback
        cap = 64 << 20
    cap = min(cap - (16 << 20), 100 << 20)  # ~48 MiB on v7x, 100 MiB on v5e/v6e
    return int(min(max(need, 32 << 20), cap))


def conv_layer(x, w, b, *, stride, do_norm, slope, out_dtype):
    """x: (N, H, W, Cin) float; w: (4, 4, Cin, Cout) f32; b: (Cout,) f32."""
    n, h, wdt, cin = x.shape
    cout = w.shape[-1]

    # reflect pad 1 on H and W (padding_mode='reflect', padding=1)
    xp = jnp.pad(x, ((0, 0), (1, 1), (1, 1), (0, 0)), mode="reflect")

    if stride == 2:
        # Stride-2 4x4 conv == stride-1 2x2 conv over a space-to-depth grid
        # with 4*Cin channels (pure layout transform, same element count).
        hp, wp = h + 2, wdt + 2
        assert hp % 2 == 0 and wp % 2 == 0
        xg = xp.reshape(n, hp // 2, 2, wp // 2, 2, cin)
        xg = xg.transpose(0, 1, 3, 2, 4, 5).reshape(n, hp // 2, wp // 2, 4 * cin)
        wg = w.reshape(2, 2, 2, 2, cin, cout).transpose(0, 2, 1, 3, 4, 5)
        wg = wg.reshape(2, 2, 4 * cin, cout)
        keff, c_eff = 2, 4 * cin
    else:
        xg, wg = xp, w
        keff, c_eff = 4, cin

    gh, gw = xg.shape[1], xg.shape[2]
    ho, wo = gh - keff + 1, gw - keff + 1
    l_rows = ho * gw                       # conv rows incl. junk (wrap) columns
    p_rows = gh * gw + (keff - 1)          # flat input rows (+pad so all taps fit)

    # Flatten spatial dims; every tap window is then a contiguous row slice.
    xflat = xg.reshape(n, gh * gw, c_eff)
    xflat = jnp.pad(xflat, ((0, 0), (0, keff - 1), (0, 0))).astype(jnp.bfloat16)
    w2 = wg.reshape(keff * keff * c_eff, cout).astype(jnp.bfloat16)
    b2 = b.reshape(1, cout).astype(jnp.float32)

    # Flat row r is a real output position iff (r % gw) < wo.
    mask = ((jnp.arange(l_rows, dtype=jnp.int32) % gw) < wo)
    mask = mask.astype(jnp.float32).reshape(l_rows, 1)

    tap_starts = tuple(a * gw + bb for a in range(keff) for bb in range(keff))
    add_bias = not do_norm   # InstanceNorm's mean subtraction cancels the bias.

    kernel = functools.partial(
        _conv_norm_act_kernel, tap_starts=tap_starts, c_eff=c_eff,
        inv_count=1.0 / float(ho * wo), add_bias=add_bias, do_norm=do_norm,
        slope=slope)

    out_isz = jnp.dtype(out_dtype).itemsize
    n_taps = keff * keff
    flops = 2 * n * l_rows * c_eff * cout * n_taps
    transcendentals = n * cout if do_norm else 0
    bytes_accessed = (n * p_rows * c_eff * 2 + n_taps * c_eff * cout * 2
                      + cout * 4 + l_rows * 4 + n * l_rows * cout * out_isz)

    in_b = p_rows * c_eff * 2
    out_b = l_rows * cout * out_isz
    need = (2 * (in_b + out_b) + n_taps * c_eff * cout * 2
            + l_rows * 4 + cout * 4 + l_rows * cout * 4 + (4 << 20))

    out = pl.pallas_call(
        kernel,
        out_shape=jax.ShapeDtypeStruct((n, l_rows, cout), out_dtype),
        grid=(n,),
        in_specs=[
            pl.BlockSpec((1, p_rows, c_eff), lambda i: (i, 0, 0)),
            pl.BlockSpec((n_taps * c_eff, cout), lambda i: (0, 0)),
            pl.BlockSpec((1, cout), lambda i: (0, 0)),
            pl.BlockSpec((l_rows, 1), lambda i: (0, 0)),
        ],
        out_specs=pl.BlockSpec((1, l_rows, cout), lambda i: (i, 0, 0)),
        compiler_params=pltpu.CompilerParams(
            dimension_semantics=("parallel",),
            vmem_limit_bytes=_vmem_limit_bytes(need)),
        cost_estimate=pl.CostEstimate(flops=flops,
                                      transcendentals=transcendentals,
                                      bytes_accessed=bytes_accessed),
    )(xflat, w2, b2, mask)

    # Strip the junk columns and restore (N, HO, WO, Cout).
    return out.reshape(n, ho, gw, cout)[:, :, :wo, :]


def build_layer_cfgs(in_channels, features):
    """Mirror CycleDiscriminator.__init__."""
    cfgs = []
    # conv1 + nn.LeakyReLU() (default negative_slope = 0.01), no norm
    cfgs.append(dict(cin=in_channels, cout=features[0], stride=2,
                     norm=False, slope=0.01))
    cin = features[0]
    for f in features[1:]:
        s = 1 if f == features[-1] else 2
        # DiscBlock: conv + InstanceNorm2d + LeakyReLU(0.2)
        cfgs.append(dict(cin=cin, cout=f, stride=s, norm=True, slope=0.2))
        cin = f
    # final 1-channel conv, no norm, no activation
    cfgs.append(dict(cin=cin, cout=1, stride=1, norm=False, slope=None))
    return cfgs


def init_params(key, cfgs):
    # NOTE: real PyTorch Conv2d weights (Cout, Cin, KH, KW) must be permuted
    # to (KH, KW, Cin, Cout) before use here.
    params = []
    for cfg in cfgs:
        key, wk, bk = jax.random.split(key, 3)
        fan_in = cfg["cin"] * 4 * 4
        w = jax.random.normal(wk, (4, 4, cfg["cin"], cfg["cout"]),
                              jnp.float32) / jnp.sqrt(jnp.float32(fan_in))
        b = 0.01 * jax.random.normal(bk, (cfg["cout"],), jnp.float32)
        params.append((w, b))
    return params


def cycle_discriminator(x_nchw, params, cfgs):
    # NCHW (PyTorch convention) -> NHWC; carry activations in bf16.
    x = jnp.transpose(x_nchw, (0, 2, 3, 1)).astype(jnp.bfloat16)
    n_layers = len(cfgs)
    for li, ((w, b), cfg) in enumerate(zip(params, cfgs)):
        out_dtype = jnp.float32 if li == n_layers - 1 else jnp.bfloat16
        x = conv_layer(x, w, b, stride=cfg["stride"], do_norm=cfg["norm"],
                       slope=cfg["slope"], out_dtype=out_dtype)
    # back to NCHW
    return jnp.transpose(x, (0, 3, 1, 2))


if __name__ == "__main__":
    key = jax.random.PRNGKey(0)
    k_x, k_p = jax.random.split(key)

    # Small shapes consistent with the module (features scaled down from
    # [64, 128, 256, 512] to keep this synthetic run small).
    in_channels = 3
    features = [8, 16, 32, 64]
    batch, spatial = 2, 32

    x = jax.random.normal(k_x, (batch, in_channels, spatial, spatial),
                          jnp.float32)

    cfgs = build_layer_cfgs(in_channels, features)
    params = init_params(k_p, cfgs)

    fwd = jax.jit(functools.partial(cycle_discriminator, cfgs=cfgs))
    out = jax.block_until_ready(fwd(x, params))

    # Expected PatchGAN output: (2, 1, 2, 2) for a 32x32 input.
    assert out.shape == (batch, 1, 2, 2), out.shape
    assert bool(jnp.all(jnp.isfinite(out)))
    print("KERNEL_OK")
</pallas_src>

<mosaic_0001>
module attributes {stable_mosaic.version = 11 : i64} {
  func.func @_conv_norm_act_kernel(%arg0: i32, %arg1: memref<1x290x12xbf16, #tpu.memory_space<vmem>>, %arg2: memref<48x8xbf16, #tpu.memory_space<vmem>>, %arg3: memref<1x8xf32, #tpu.memory_space<vmem>>, %arg4: memref<272x1xf32, #tpu.memory_space<vmem>>, %arg5: memref<1x272x8xbf16, #tpu.memory_space<vmem>>) attributes {dimension_semantics = [#tpu.dimension_semantics<parallel>], iteration_bounds = array<i64: 2>, scalar_prefetch = 0 : i64, scratch_operands = 0 : i64, tpu.core_type = #tpu.core_type<tc>, window_params = [{transform_indices = @transform_0, window_bounds = array<i64: 1, 290, 12>}, {pipeline_mode = #tpu.pipeline_mode<synchronous>, transform_indices = @transform_1, window_bounds = array<i64: 48, 8>}, {pipeline_mode = #tpu.pipeline_mode<synchronous>, transform_indices = @transform_2, window_bounds = array<i64: 1, 8>}, {pipeline_mode = #tpu.pipeline_mode<synchronous>, transform_indices = @transform_3, window_bounds = array<i64: 272, 1>}, {transform_indices = @transform_4, window_bounds = array<i64: 1, 272, 8>}]} {
    %cst = arith.constant 0.000000e+00 : f32
    %0 = vector.broadcast %cst : f32 to vector<272x8xf32>
    %c0 = arith.constant 0 : index
    %c0_0 = arith.constant 0 : index
    %c0_1 = arith.constant 0 : index
    %1 = vector.load %arg1[%c0, %c0_0, %c0_1] : memref<1x290x12xbf16, #tpu.memory_space<vmem>>, vector<1x272x12xbf16>
    %2 = vector.shape_cast %1 : vector<1x272x12xbf16> to vector<272x12xbf16>
    %c0_2 = arith.constant 0 : index
    %c0_3 = arith.constant 0 : index
    %3 = vector.load %arg2[%c0_2, %c0_3] : memref<48x8xbf16, #tpu.memory_space<vmem>>, vector<12x8xbf16>
    %cst_4 = arith.constant dense<0.000000e+00> : vector<272x8xf32>
    %4 = tpu.matmul %2, %3, %cst_4 {dimension_numbers = #tpu.dot_dimension_numbers<[1], [0], [0], [1], [0, 0, 1, 1], [], []>} : vector<272x12xbf16>, vector<12x8xbf16>, vector<272x8xf32> -> vector<272x8xf32>
    %5 = arith.addf %0, %4 : vector<272x8xf32>
    %c0_5 = arith.constant 0 : index
    %c1 = arith.constant 1 : index
    %c0_6 = arith.constant 0 : index
    %6 = vector.load %arg1[%c0_5, %c1, %c0_6] : memref<1x290x12xbf16, #tpu.memory_space<vmem>>, vector<1x272x12xbf16>
    %7 = vector.shape_cast %6 : vector<1x272x12xbf16> to vector<272x12xbf16>
    %c12 = arith.constant 12 : index
    %c0_7 = arith.constant 0 : index
    %8 = vector.load %arg2[%c12, %c0_7] : memref<48x8xbf16, #tpu.memory_space<vmem>>, vector<12x8xbf16>
    %cst_8 = arith.constant dense<0.000000e+00> : vector<272x8xf32>
    %9 = tpu.matmul %7, %8, %cst_8 {dimension_numbers = #tpu.dot_dimension_numbers<[1], [0], [0], [1], [0, 0, 1, 1], [], []>} : vector<272x12xbf16>, vector<12x8xbf16>, vector<272x8xf32> -> vector<272x8xf32>
    %10 = arith.addf %5, %9 : vector<272x8xf32>
    %c0_9 = arith.constant 0 : index
    %c17 = arith.constant 17 : index
    %c0_10 = arith.constant 0 : index
    %11 = vector.load %arg1[%c0_9, %c17, %c0_10] : memref<1x290x12xbf16, #tpu.memory_space<vmem>>, vector<1x272x12xbf16>
    %12 = vector.shape_cast %11 : vector<1x272x12xbf16> to vector<272x12xbf16>
    %c24 = arith.constant 24 : index
    %c0_11 = arith.constant 0 : index
    %13 = vector.load %arg2[%c24, %c0_11] : memref<48x8xbf16, #tpu.memory_space<vmem>>, vector<12x8xbf16>
    %cst_12 = arith.constant dense<0.000000e+00> : vector<272x8xf32>
    %14 = tpu.matmul %12, %13, %cst_12 {dimension_numbers = #tpu.dot_dimension_numbers<[1], [0], [0], [1], [0, 0, 1, 1], [], []>} : vector<272x12xbf16>, vector<12x8xbf16>, vector<272x8xf32> -> vector<272x8xf32>
    %15 = arith.addf %10, %14 : vector<272x8xf32>
    %c0_13 = arith.constant 0 : index
    %c18 = arith.constant 18 : index
    %c0_14 = arith.constant 0 : index
    %16 = vector.load %arg1[%c0_13, %c18, %c0_14] : memref<1x290x12xbf16, #tpu.memory_space<vmem>>, vector<1x272x12xbf16>
    %17 = vector.shape_cast %16 : vector<1x272x12xbf16> to vector<272x12xbf16>
    %c36 = arith.constant 36 : index
    %c0_15 = arith.constant 0 : index
    %18 = vector.load %arg2[%c36, %c0_15] : memref<48x8xbf16, #tpu.memory_space<vmem>>, vector<12x8xbf16>
    %cst_16 = arith.constant dense<0.000000e+00> : vector<272x8xf32>
    %19 = tpu.matmul %17, %18, %cst_16 {dimension_numbers = #tpu.dot_dimension_numbers<[1], [0], [0], [1], [0, 0, 1, 1], [], []>} : vector<272x12xbf16>, vector<12x8xbf16>, vector<272x8xf32> -> vector<272x8xf32>
    %20 = arith.addf %15, %19 : vector<272x8xf32>
    %c0_17 = arith.constant 0 : index
    %c0_18 = arith.constant 0 : index
    %21 = vector.load %arg3[%c0_17, %c0_18] : memref<1x8xf32, #tpu.memory_space<vmem>>, vector<1x8xf32>
    %22 = vector.broadcast %21 : vector<1x8xf32> to vector<272x8xf32>
    %23 = arith.addf %20, %22 : vector<272x8xf32>
    %cst_19 = arith.constant 0.000000e+00 : f32
    %24 = vector.broadcast %cst_19 : f32 to vector<272x8xf32>
    %25 = arith.cmpf oge, %23, %24 : vector<272x8xf32>
    %cst_20 = arith.constant 0.00999999977 : f32
    %26 = vector.broadcast %cst_20 : f32 to vector<272x8xf32>
    %27 = arith.mulf %26, %23 : vector<272x8xf32>
    %28 = arith.select %25, %23, %27 : vector<272x8xi1>, vector<272x8xf32>
    %29 = vector.shape_cast %28 : vector<272x8xf32> to vector<1x272x8xf32>
    %30 = arith.truncf %29 : vector<1x272x8xf32> to vector<1x272x8xbf16>
    %c0_21 = arith.constant 0 : index
    %c0_22 = arith.constant 0 : index
    %c0_23 = arith.constant 0 : index
    %31 = vector.load %arg5[%c0_21, %c0_22, %c0_23] : memref<1x272x8xbf16, #tpu.memory_space<vmem>>, vector<1x272x8xbf16>
    tpu.vector_store %arg5[%c0_21, %c0_22, %c0_23], %30 {strides = array<i32>} : memref<1x272x8xbf16, #tpu.memory_space<vmem>>, vector<1x272x8xbf16>,
    return
  }
  func.func @transform_0(%arg0: i32) -> (i32, i32, i32) {
    %c0_i32 = arith.constant 0 : i32
    %c0_i32_0 = arith.constant 0 : i32
    %c0_i32_1 = arith.constant 0 : i32
    return %arg0, %c0_i32, %c0_i32_0 : i32, i32, i32
  }
  func.func @transform_1(%arg0: i32) -> (i32, i32) {
    %c0_i32 = arith.constant 0 : i32
    %c0_i32_0 = arith.constant 0 : i32
    %c0_i32_1 = arith.constant 0 : i32
    return %c0_i32, %c0_i32_0 : i32, i32
  }
  func.func @transform_2(%arg0: i32) -> (i32, i32) {
    %c0_i32 = arith.constant 0 : i32
    %c0_i32_0 = arith.constant 0 : i32
    %c0_i32_1 = arith.constant 0 : i32
    return %c0_i32, %c0_i32_0 : i32, i32
  }
  func.func @transform_3(%arg0: i32) -> (i32, i32) {
    %c0_i32 = arith.constant 0 : i32
    %c0_i32_0 = arith.constant 0 : i32
    %c0_i32_1 = arith.constant 0 : i32
    return %c0_i32, %c0_i32_0 : i32, i32
  }
  func.func @transform_4(%arg0: i32) -> (i32, i32, i32) {
    %c0_i32 = arith.constant 0 : i32
    %c0_i32_0 = arith.constant 0 : i32
    %c0_i32_1 = arith.constant 0 : i32
    return %arg0, %c0_i32, %c0_i32_0 : i32, i32, i32
  }
}

module attributes {stable_mosaic.version = 11 : i64} {
  func.func @_conv_norm_act_kernel(%arg0: i32, %arg1: memref<1x82x32xbf16, #tpu.memory_space<vmem>>, %arg2: memref<128x16xbf16, #tpu.memory_space<vmem>>, %arg3: memref<1x16xf32, #tpu.memory_space<vmem>>, %arg4: memref<72x1xf32, #tpu.memory_space<vmem>>, %arg5: memref<1x72x16xbf16, #tpu.memory_space<vmem>>) attributes {dimension_semantics = [#tpu.dimension_semantics<parallel>], iteration_bounds = array<i64: 2>, scalar_prefetch = 0 : i64, scratch_operands = 0 : i64, tpu.core_type = #tpu.core_type<tc>, window_params = [{transform_indices = @transform_0, window_bounds = array<i64: 1, 82, 32>}, {pipeline_mode = #tpu.pipeline_mode<synchronous>, transform_indices = @transform_1, window_bounds = array<i64: 128, 16>}, {pipeline_mode = #tpu.pipeline_mode<synchronous>, transform_indices = @transform_2, window_bounds = array<i64: 1, 16>}, {pipeline_mode = #tpu.pipeline_mode<synchronous>, transform_indices = @transform_3, window_bounds = array<i64: 72, 1>}, {transform_indices = @transform_4, window_bounds = array<i64: 1, 72, 16>}]} {
    %cst = arith.constant 0.000000e+00 : f32
    %0 = vector.broadcast %cst : f32 to vector<72x16xf32>
    %c0 = arith.constant 0 : index
    %c0_0 = arith.constant 0 : index
    %c0_1 = arith.constant 0 : index
    %1 = vector.load %arg1[%c0, %c0_0, %c0_1] : memref<1x82x32xbf16, #tpu.memory_space<vmem>>, vector<1x72x32xbf16>
    %2 = vector.shape_cast %1 : vector<1x72x32xbf16> to vector<72x32xbf16>
    %c0_2 = arith.constant 0 : index
    %c0_3 = arith.constant 0 : index
    %3 = vector.load %arg2[%c0_2, %c0_3] : memref<128x16xbf16, #tpu.memory_space<vmem>>, vector<32x16xbf16>
    %cst_4 = arith.constant dense<0.000000e+00> : vector<72x16xf32>
    %4 = tpu.matmul %2, %3, %cst_4 {dimension_numbers = #tpu.dot_dimension_numbers<[1], [0], [0], [1], [0, 0, 1, 1], [], []>} : vector<72x32xbf16>, vector<32x16xbf16>, vector<72x16xf32> -> vector<72x16xf32>
    %5 = arith.addf %0, %4 : vector<72x16xf32>
    %c0_5 = arith.constant 0 : index
    %c1 = arith.constant 1 : index
    %c0_6 = arith.constant 0 : index
    %6 = vector.load %arg1[%c0_5, %c1, %c0_6] : memref<1x82x32xbf16, #tpu.memory_space<vmem>>, vector<1x72x32xbf16>
    %7 = vector.shape_cast %6 : vector<1x72x32xbf16> to vector<72x32xbf16>
    %c32 = arith.constant 32 : index
    %c0_7 = arith.constant 0 : index
    %8 = vector.load %arg2[%c32, %c0_7] : memref<128x16xbf16, #tpu.memory_space<vmem>>, vector<32x16xbf16>
    %cst_8 = arith.constant dense<0.000000e+00> : vector<72x16xf32>
    %9 = tpu.matmul %7, %8, %cst_8 {dimension_numbers = #tpu.dot_dimension_numbers<[1], [0], [0], [1], [0, 0, 1, 1], [], []>} : vector<72x32xbf16>, vector<32x16xbf16>, vector<72x16xf32> -> vector<72x16xf32>
    %10 = arith.addf %5, %9 : vector<72x16xf32>
    %c0_9 = arith.constant 0 : index
    %c9 = arith.constant 9 : index
    %c0_10 = arith.constant 0 : index
    %11 = vector.load %arg1[%c0_9, %c9, %c0_10] : memref<1x82x32xbf16, #tpu.memory_space<vmem>>, vector<1x72x32xbf16>
    %12 = vector.shape_cast %11 : vector<1x72x32xbf16> to vector<72x32xbf16>
    %c64 = arith.constant 64 : index
    %c0_11 = arith.constant 0 : index
    %13 = vector.load %arg2[%c64, %c0_11] : memref<128x16xbf16, #tpu.memory_space<vmem>>, vector<32x16xbf16>
    %cst_12 = arith.constant dense<0.000000e+00> : vector<72x16xf32>
    %14 = tpu.matmul %12, %13, %cst_12 {dimension_numbers = #tpu.dot_dimension_numbers<[1], [0], [0], [1], [0, 0, 1, 1], [], []>} : vector<72x32xbf16>, vector<32x16xbf16>, vector<72x16xf32> -> vector<72x16xf32>
    %15 = arith.addf %10, %14 : vector<72x16xf32>
    %c0_13 = arith.constant 0 : index
    %c10 = arith.constant 10 : index
    %c0_14 = arith.constant 0 : index
    %16 = vector.load %arg1[%c0_13, %c10, %c0_14] : memref<1x82x32xbf16, #tpu.memory_space<vmem>>, vector<1x72x32xbf16>
    %17 = vector.shape_cast %16 : vector<1x72x32xbf16> to vector<72x32xbf16>
    %c96 = arith.constant 96 : index
    %c0_15 = arith.constant 0 : index
    %18 = vector.load %arg2[%c96, %c0_15] : memref<128x16xbf16, #tpu.memory_space<vmem>>, vector<32x16xbf16>
    %cst_16 = arith.constant dense<0.000000e+00> : vector<72x16xf32>
    %19 = tpu.matmul %17, %18, %cst_16 {dimension_numbers = #tpu.dot_dimension_numbers<[1], [0], [0], [1], [0, 0, 1, 1], [], []>} : vector<72x32xbf16>, vector<32x16xbf16>, vector<72x16xf32> -> vector<72x16xf32>
    %20 = arith.addf %15, %19 : vector<72x16xf32>
    %c0_17 = arith.constant 0 : index
    %c0_18 = arith.constant 0 : index
    %21 = vector.load %arg4[%c0_17, %c0_18] : memref<72x1xf32, #tpu.memory_space<vmem>>, vector<72x1xf32>
    %22 = vector.broadcast %21 : vector<72x1xf32> to vector<72x16xf32>
    %23 = arith.mulf %20, %22 : vector<72x16xf32>
    %cst_19 = arith.constant dense<0.000000e+00> : vector<16xf32>
    %24 = vector.multi_reduction <add>, %23, %cst_19 [0] : vector<72x16xf32> to vector<16xf32>
    %25 = vector.shape_cast %24 : vector<16xf32> to vector<1x16xf32>
    %26 = arith.mulf %20, %20 : vector<72x16xf32>
    %27 = vector.broadcast %21 : vector<72x1xf32> to vector<72x16xf32>
    %28 = arith.mulf %26, %27 : vector<72x16xf32>
    %cst_20 = arith.constant dense<0.000000e+00> : vector<16xf32>
    %29 = vector.multi_reduction <add>, %28, %cst_20 [0] : vector<72x16xf32> to vector<16xf32>
    %30 = vector.shape_cast %29 : vector<16xf32> to vector<1x16xf32>
    %cst_21 = arith.constant 1.562500e-02 : f32
    %31 = vector.broadcast %cst_21 : f32 to vector<1x16xf32>
    %32 = arith.mulf %25, %31 : vector<1x16xf32>
    %cst_22 = arith.constant 1.562500e-02 : f32
    %33 = vector.broadcast %cst_22 : f32 to vector<1x16xf32>
    %34 = arith.mulf %30, %33 : vector<1x16xf32>
    %35 = arith.mulf %32, %32 : vector<1x16xf32>
    %36 = arith.subf %34, %35 : vector<1x16xf32>
    %cst_23 = arith.constant 0.000000e+00 : f32
    %37 = vector.broadcast %cst_23 : f32 to vector<1x16xf32>
    %38 = arith.maximumf %36, %37 : vector<1x16xf32>
    %39 = vector.broadcast %32 : vector<1x16xf32> to vector<72x16xf32>
    %40 = arith.subf %20, %39 : vector<72x16xf32>
    %cst_24 = arith.constant 9.99999974E-6 : f32
    %41 = vector.broadcast %cst_24 : f32 to vector<1x16xf32>
    %42 = arith.addf %38, %41 : vector<1x16xf32>
    %43 = math.rsqrt %42 : vector<1x16xf32>
    %44 = vector.broadcast %43 : vector<1x16xf32> to vector<72x16xf32>
    %45 = arith.mulf %40, %44 : vector<72x16xf32>
    %cst_25 = arith.constant 0.000000e+00 : f32
    %46 = vector.broadcast %cst_25 : f32 to vector<72x16xf32>
    %47 = arith.cmpf oge, %45, %46 : vector<72x16xf32>
    %cst_26 = arith.constant 2.000000e-01 : f32
    %48 = vector.broadcast %cst_26 : f32 to vector<72x16xf32>
    %49 = arith.mulf %48, %45 : vector<72x16xf32>
    %50 = arith.select %47, %45, %49 : vector<72x16xi1>, vector<72x16xf32>
    %51 = vector.shape_cast %50 : vector<72x16xf32> to vector<1x72x16xf32>
    %52 = arith.truncf %51 : vector<1x72x16xf32> to vector<1x72x16xbf16>
    %c0_27 = arith.constant 0 : index
    %c0_28 = arith.constant 0 : index
    %c0_29 = arith.constant 0 : index
    %53 = vector.load %arg5[%c0_27, %c0_28, %c0_29] : memref<1x72x16xbf16, #tpu.memory_space<vmem>>, vector<1x72x16xbf16>
    tpu.vector_store %arg5[%c0_27, %c0_28, %c0_29], %52 {strides = array<i32>} : memref<1x72x16xbf16, #tpu.memory_space<vmem>>, vector<1x72x16xbf16>,
    return
  }
  func.func @transform_0(%arg0: i32) -> (i32, i32, i32) {
    %c0_i32 = arith.constant 0 : i32
    %c0_i32_0 = arith.constant 0 : i32
    %c0_i32_1 = arith.constant 0 : i32
    return %arg0, %c0_i32, %c0_i32_0 : i32, i32, i32
  }
  func.func @transform_1(%arg0: i32) -> (i32, i32) {
    %c0_i32 = arith.constant 0 : i32
    %c0_i32_0 = arith.constant 0 : i32
    %c0_i32_1 = arith.constant 0 : i32
    return %c0_i32, %c0_i32_0 : i32, i32
  }
  func.func @transform_2(%arg0: i32) -> (i32, i32) {
    %c0_i32 = arith.constant 0 : i32
    %c0_i32_0 = arith.constant 0 : i32
    %c0_i32_1 = arith.constant 0 : i32
    return %c0_i32, %c0_i32_0 : i32, i32
  }
  func.func @transform_3(%arg0: i32) -> (i32, i32) {
    %c0_i32 = arith.constant 0 : i32
    %c0_i32_0 = arith.constant 0 : i32
    %c0_i32_1 = arith.constant 0 : i32
    return %c0_i32, %c0_i32_0 : i32, i32
  }
  func.func @transform_4(%arg0: i32) -> (i32, i32, i32) {
    %c0_i32 = arith.constant 0 : i32
    %c0_i32_0 = arith.constant 0 : i32
    %c0_i32_1 = arith.constant 0 : i32
    return %arg0, %c0_i32, %c0_i32_0 : i32, i32, i32
  }
}

module attributes {stable_mosaic.version = 11 : i64} {
  func.func @_conv_norm_act_kernel(%arg0: i32, %arg1: memref<1x26x64xbf16, #tpu.memory_space<vmem>>, %arg2: memref<256x32xbf16, #tpu.memory_space<vmem>>, %arg3: memref<1x32xf32, #tpu.memory_space<vmem>>, %arg4: memref<20x1xf32, #tpu.memory_space<vmem>>, %arg5: memref<1x20x32xbf16, #tpu.memory_space<vmem>>) attributes {dimension_semantics = [#tpu.dimension_semantics<parallel>], iteration_bounds = array<i64: 2>, scalar_prefetch = 0 : i64, scratch_operands = 0 : i64, tpu.core_type = #tpu.core_type<tc>, window_params = [{transform_indices = @transform_0, window_bounds = array<i64: 1, 26, 64>}, {pipeline_mode = #tpu.pipeline_mode<synchronous>, transform_indices = @transform_1, window_bounds = array<i64: 256, 32>}, {pipeline_mode = #tpu.pipeline_mode<synchronous>, transform_indices = @transform_2, window_bounds = array<i64: 1, 32>}, {pipeline_mode = #tpu.pipeline_mode<synchronous>, transform_indices = @transform_3, window_bounds = array<i64: 20, 1>}, {transform_indices = @transform_4, window_bounds = array<i64: 1, 20, 32>}]} {
    %cst = arith.constant 0.000000e+00 : f32
    %0 = vector.broadcast %cst : f32 to vector<20x32xf32>
    %c0 = arith.constant 0 : index
    %c0_0 = arith.constant 0 : index
    %c0_1 = arith.constant 0 : index
    %1 = vector.load %arg1[%c0, %c0_0, %c0_1] : memref<1x26x64xbf16, #tpu.memory_space<vmem>>, vector<1x20x64xbf16>
    %2 = vector.shape_cast %1 : vector<1x20x64xbf16> to vector<20x64xbf16>
    %c0_2 = arith.constant 0 : index
    %c0_3 = arith.constant 0 : index
    %3 = vector.load %arg2[%c0_2, %c0_3] : memref<256x32xbf16, #tpu.memory_space<vmem>>, vector<64x32xbf16>
    %cst_4 = arith.constant dense<0.000000e+00> : vector<20x32xf32>
    %4 = tpu.matmul %2, %3, %cst_4 {dimension_numbers = #tpu.dot_dimension_numbers<[1], [0], [0], [1], [0, 0, 1, 1], [], []>} : vector<20x64xbf16>, vector<64x32xbf16>, vector<20x32xf32> -> vector<20x32xf32>
    %5 = arith.addf %0, %4 : vector<20x32xf32>
    %c0_5 = arith.constant 0 : index
    %c1 = arith.constant 1 : index
    %c0_6 = arith.constant 0 : index
    %6 = vector.load %arg1[%c0_5, %c1, %c0_6] : memref<1x26x64xbf16, #tpu.memory_space<vmem>>, vector<1x20x64xbf16>
    %7 = vector.shape_cast %6 : vector<1x20x64xbf16> to vector<20x64xbf16>
    %c64 = arith.constant 64 : index
    %c0_7 = arith.constant 0 : index
    %8 = vector.load %arg2[%c64, %c0_7] : memref<256x32xbf16, #tpu.memory_space<vmem>>, vector<64x32xbf16>
    %cst_8 = arith.constant dense<0.000000e+00> : vector<20x32xf32>
    %9 = tpu.matmul %7, %8, %cst_8 {dimension_numbers = #tpu.dot_dimension_numbers<[1], [0], [0], [1], [0, 0, 1, 1], [], []>} : vector<20x64xbf16>, vector<64x32xbf16>, vector<20x32xf32> -> vector<20x32xf32>
    %10 = arith.addf %5, %9 : vector<20x32xf32>
    %c0_9 = arith.constant 0 : index
    %c5 = arith.constant 5 : index
    %c0_10 = arith.constant 0 : index
    %11 = vector.load %arg1[%c0_9, %c5, %c0_10] : memref<1x26x64xbf16, #tpu.memory_space<vmem>>, vector<1x20x64xbf16>
    %12 = vector.shape_cast %11 : vector<1x20x64xbf16> to vector<20x64xbf16>
    %c128 = arith.constant 128 : index
    %c0_11 = arith.constant 0 : index
    %13 = vector.load %arg2[%c128, %c0_11] : memref<256x32xbf16, #tpu.memory_space<vmem>>, vector<64x32xbf16>
    %cst_12 = arith.constant dense<0.000000e+00> : vector<20x32xf32>
    %14 = tpu.matmul %12, %13, %cst_12 {dimension_numbers = #tpu.dot_dimension_numbers<[1], [0], [0], [1], [0, 0, 1, 1], [], []>} : vector<20x64xbf16>, vector<64x32xbf16>, vector<20x32xf32> -> vector<20x32xf32>
    %15 = arith.addf %10, %14 : vector<20x32xf32>
    %c0_13 = arith.constant 0 : index
    %c6 = arith.constant 6 : index
    %c0_14 = arith.constant 0 : index
    %16 = vector.load %arg1[%c0_13, %c6, %c0_14] : memref<1x26x64xbf16, #tpu.memory_space<vmem>>, vector<1x20x64xbf16>
    %17 = vector.shape_cast %16 : vector<1x20x64xbf16> to vector<20x64xbf16>
    %c192 = arith.constant 192 : index
    %c0_15 = arith.constant 0 : index
    %18 = vector.load %arg2[%c192, %c0_15] : memref<256x32xbf16, #tpu.memory_space<vmem>>, vector<64x32xbf16>
    %cst_16 = arith.constant dense<0.000000e+00> : vector<20x32xf32>
    %19 = tpu.matmul %17, %18, %cst_16 {dimension_numbers = #tpu.dot_dimension_numbers<[1], [0], [0], [1], [0, 0, 1, 1], [], []>} : vector<20x64xbf16>, vector<64x32xbf16>, vector<20x32xf32> -> vector<20x32xf32>
    %20 = arith.addf %15, %19 : vector<20x32xf32>
    %c0_17 = arith.constant 0 : index
    %c0_18 = arith.constant 0 : index
    %21 = vector.load %arg4[%c0_17, %c0_18] : memref<20x1xf32, #tpu.memory_space<vmem>>, vector<20x1xf32>
    %22 = vector.broadcast %21 : vector<20x1xf32> to vector<20x32xf32>
    %23 = arith.mulf %20, %22 : vector<20x32xf32>
    %cst_19 = arith.constant dense<0.000000e+00> : vector<32xf32>
    %24 = vector.multi_reduction <add>, %23, %cst_19 [0] : vector<20x32xf32> to vector<32xf32>
    %25 = vector.shape_cast %24 : vector<32xf32> to vector<1x32xf32>
    %26 = arith.mulf %20, %20 : vector<20x32xf32>
    %27 = vector.broadcast %21 : vector<20x1xf32> to vector<20x32xf32>
    %28 = arith.mulf %26, %27 : vector<20x32xf32>
    %cst_20 = arith.constant dense<0.000000e+00> : vector<32xf32>
    %29 = vector.multi_reduction <add>, %28, %cst_20 [0] : vector<20x32xf32> to vector<32xf32>
    %30 = vector.shape_cast %29 : vector<32xf32> to vector<1x32xf32>
    %cst_21 = arith.constant 6.250000e-02 : f32
    %31 = vector.broadcast %cst_21 : f32 to vector<1x32xf32>
    %32 = arith.mulf %25, %31 : vector<1x32xf32>
    %cst_22 = arith.constant 6.250000e-02 : f32
    %33 = vector.broadcast %cst_22 : f32 to vector<1x32xf32>
    %34 = arith.mulf %30, %33 : vector<1x32xf32>
    %35 = arith.mulf %32, %32 : vector<1x32xf32>
    %36 = arith.subf %34, %35 : vector<1x32xf32>
    %cst_23 = arith.constant 0.000000e+00 : f32
    %37 = vector.broadcast %cst_23 : f32 to vector<1x32xf32>
    %38 = arith.maximumf %36, %37 : vector<1x32xf32>
    %39 = vector.broadcast %32 : vector<1x32xf32> to vector<20x32xf32>
    %40 = arith.subf %20, %39 : vector<20x32xf32>
    %cst_24 = arith.constant 9.99999974E-6 : f32
    %41 = vector.broadcast %cst_24 : f32 to vector<1x32xf32>
    %42 = arith.addf %38, %41 : vector<1x32xf32>
    %43 = math.rsqrt %42 : vector<1x32xf32>
    %44 = vector.broadcast %43 : vector<1x32xf32> to vector<20x32xf32>
    %45 = arith.mulf %40, %44 : vector<20x32xf32>
    %cst_25 = arith.constant 0.000000e+00 : f32
    %46 = vector.broadcast %cst_25 : f32 to vector<20x32xf32>
    %47 = arith.cmpf oge, %45, %46 : vector<20x32xf32>
    %cst_26 = arith.constant 2.000000e-01 : f32
    %48 = vector.broadcast %cst_26 : f32 to vector<20x32xf32>
    %49 = arith.mulf %48, %45 : vector<20x32xf32>
    %50 = arith.select %47, %45, %49 : vector<20x32xi1>, vector<20x32xf32>
    %51 = vector.shape_cast %50 : vector<20x32xf32> to vector<1x20x32xf32>
    %52 = arith.truncf %51 : vector<1x20x32xf32> to vector<1x20x32xbf16>
    %c0_27 = arith.constant 0 : index
    %c0_28 = arith.constant 0 : index
    %c0_29 = arith.constant 0 : index
    %53 = vector.load %arg5[%c0_27, %c0_28, %c0_29] : memref<1x20x32xbf16, #tpu.memory_space<vmem>>, vector<1x20x32xbf16>
    tpu.vector_store %arg5[%c0_27, %c0_28, %c0_29], %52 {strides = array<i32>} : memref<1x20x32xbf16, #tpu.memory_space<vmem>>, vector<1x20x32xbf16>,
    return
  }
  func.func @transform_0(%arg0: i32) -> (i32, i32, i32) {
    %c0_i32 = arith.constant 0 : i32
    %c0_i32_0 = arith.constant 0 : i32
    %c0_i32_1 = arith.constant 0 : i32
    return %arg0, %c0_i32, %c0_i32_0 : i32, i32, i32
  }
  func.func @transform_1(%arg0: i32) -> (i32, i32) {
    %c0_i32 = arith.constant 0 : i32
    %c0_i32_0 = arith.constant 0 : i32
    %c0_i32_1 = arith.constant 0 : i32
    return %c0_i32, %c0_i32_0 : i32, i32
  }
  func.func @transform_2(%arg0: i32) -> (i32, i32) {
    %c0_i32 = arith.constant 0 : i32
    %c0_i32_0 = arith.constant 0 : i32
    %c0_i32_1 = arith.constant 0 : i32
    return %c0_i32, %c0_i32_0 : i32, i32
  }
  func.func @transform_3(%arg0: i32) -> (i32, i32) {
    %c0_i32 = arith.constant 0 : i32
    %c0_i32_0 = arith.constant 0 : i32
    %c0_i32_1 = arith.constant 0 : i32
    return %c0_i32, %c0_i32_0 : i32, i32
  }
  func.func @transform_4(%arg0: i32) -> (i32, i32, i32) {
    %c0_i32 = arith.constant 0 : i32
    %c0_i32_0 = arith.constant 0 : i32
    %c0_i32_1 = arith.constant 0 : i32
    return %arg0, %c0_i32, %c0_i32_0 : i32, i32, i32
  }
}

module attributes {stable_mosaic.version = 11 : i64} {
  func.func @_conv_norm_act_kernel(%arg0: i32, %arg1: memref<1x39x32xbf16, #tpu.memory_space<vmem>>, %arg2: memref<512x64xbf16, #tpu.memory_space<vmem>>, %arg3: memref<1x64xf32, #tpu.memory_space<vmem>>, %arg4: memref<18x1xf32, #tpu.memory_space<vmem>>, %arg5: memref<1x18x64xbf16, #tpu.memory_space<vmem>>) attributes {dimension_semantics = [#tpu.dimension_semantics<parallel>], iteration_bounds = array<i64: 2>, scalar_prefetch = 0 : i64, scratch_operands = 0 : i64, tpu.core_type = #tpu.core_type<tc>, window_params = [{transform_indices = @transform_0, window_bounds = array<i64: 1, 39, 32>}, {pipeline_mode = #tpu.pipeline_mode<synchronous>, transform_indices = @transform_1, window_bounds = array<i64: 512, 64>}, {pipeline_mode = #tpu.pipeline_mode<synchronous>, transform_indices = @transform_2, window_bounds = array<i64: 1, 64>}, {pipeline_mode = #tpu.pipeline_mode<synchronous>, transform_indices = @transform_3, window_bounds = array<i64: 18, 1>}, {transform_indices = @transform_4, window_bounds = array<i64: 1, 18, 64>}]} {
    %cst = arith.constant 0.000000e+00 : f32
    %0 = vector.broadcast %cst : f32 to vector<18x64xf32>
    %c0 = arith.constant 0 : index
    %c0_0 = arith.constant 0 : index
    %c0_1 = arith.constant 0 : index
    %1 = vector.load %arg1[%c0, %c0_0, %c0_1] : memref<1x39x32xbf16, #tpu.memory_space<vmem>>, vector<1x18x32xbf16>
    %2 = vector.shape_cast %1 : vector<1x18x32xbf16> to vector<18x32xbf16>
    %c0_2 = arith.constant 0 : index
    %c0_3 = arith.constant 0 : index
    %3 = vector.load %arg2[%c0_2, %c0_3] : memref<512x64xbf16, #tpu.memory_space<vmem>>, vector<32x64xbf16>
    %cst_4 = arith.constant dense<0.000000e+00> : vector<18x64xf32>
    %4 = tpu.matmul %2, %3, %cst_4 {dimension_numbers = #tpu.dot_dimension_numbers<[1], [0], [0], [1], [0, 0, 1, 1], [], []>} : vector<18x32xbf16>, vector<32x64xbf16>, vector<18x64xf32> -> vector<18x64xf32>
    %5 = arith.addf %0, %4 : vector<18x64xf32>
    %c0_5 = arith.constant 0 : index
    %c1 = arith.constant 1 : index
    %c0_6 = arith.constant 0 : index
    %6 = vector.load %arg1[%c0_5, %c1, %c0_6] : memref<1x39x32xbf16, #tpu.memory_space<vmem>>, vector<1x18x32xbf16>
    %7 = vector.shape_cast %6 : vector<1x18x32xbf16> to vector<18x32xbf16>
    %c32 = arith.constant 32 : index
    %c0_7 = arith.constant 0 : index
    %8 = vector.load %arg2[%c32, %c0_7] : memref<512x64xbf16, #tpu.memory_space<vmem>>, vector<32x64xbf16>
    %cst_8 = arith.constant dense<0.000000e+00> : vector<18x64xf32>
    %9 = tpu.matmul %7, %8, %cst_8 {dimension_numbers = #tpu.dot_dimension_numbers<[1], [0], [0], [1], [0, 0, 1, 1], [], []>} : vector<18x32xbf16>, vector<32x64xbf16>, vector<18x64xf32> -> vector<18x64xf32>
    %10 = arith.addf %5, %9 : vector<18x64xf32>
    %c0_9 = arith.constant 0 : index
    %c2 = arith.constant 2 : index
    %c0_10 = arith.constant 0 : index
    %11 = vector.load %arg1[%c0_9, %c2, %c0_10] : memref<1x39x32xbf16, #tpu.memory_space<vmem>>, vector<1x18x32xbf16>
    %12 = vector.shape_cast %11 : vector<1x18x32xbf16> to vector<18x32xbf16>
    %c64 = arith.constant 64 : index
    %c0_11 = arith.constant 0 : index
    %13 = vector.load %arg2[%c64, %c0_11] : memref<512x64xbf16, #tpu.memory_space<vmem>>, vector<32x64xbf16>
    %cst_12 = arith.constant dense<0.000000e+00> : vector<18x64xf32>
    %14 = tpu.matmul %12, %13, %cst_12 {dimension_numbers = #tpu.dot_dimension_numbers<[1], [0], [0], [1], [0, 0, 1, 1], [], []>} : vector<18x32xbf16>, vector<32x64xbf16>, vector<18x64xf32> -> vector<18x64xf32>
    %15 = arith.addf %10, %14 : vector<18x64xf32>
    %c0_13 = arith.constant 0 : index
    %c3 = arith.constant 3 : index
    %c0_14 = arith.constant 0 : index
    %16 = vector.load %arg1[%c0_13, %c3, %c0_14] : memref<1x39x32xbf16, #tpu.memory_space<vmem>>, vector<1x18x32xbf16>
    %17 = vector.shape_cast %16 : vector<1x18x32xbf16> to vector<18x32xbf16>
    %c96 = arith.constant 96 : index
    %c0_15 = arith.constant 0 : index
    %18 = vector.load %arg2[%c96, %c0_15] : memref<512x64xbf16, #tpu.memory_space<vmem>>, vector<32x64xbf16>
    %cst_16 = arith.constant dense<0.000000e+00> : vector<18x64xf32>
    %19 = tpu.matmul %17, %18, %cst_16 {dimension_numbers = #tpu.dot_dimension_numbers<[1], [0], [0], [1], [0, 0, 1, 1], [], []>} : vector<18x32xbf16>, vector<32x64xbf16>, vector<18x64xf32> -> vector<18x64xf32>
    %20 = arith.addf %15, %19 : vector<18x64xf32>
    %c0_17 = arith.constant 0 : index
    %c6 = arith.constant 6 : index
    %c0_18 = arith.constant 0 : index
    %21 = vector.load %arg1[%c0_17, %c6, %c0_18] : memref<1x39x32xbf16, #tpu.memory_space<vmem>>, vector<1x18x32xbf16>
    %22 = vector.shape_cast %21 : vector<1x18x32xbf16> to vector<18x32xbf16>
    %c128 = arith.constant 128 : index
    %c0_19 = arith.constant 0 : index
    %23 = vector.load %arg2[%c128, %c0_19] : memref<512x64xbf16, #tpu.memory_space<vmem>>, vector<32x64xbf16>
    %cst_20 = arith.constant dense<0.000000e+00> : vector<18x64xf32>
    %24 = tpu.matmul %22, %23, %cst_20 {dimension_numbers = #tpu.dot_dimension_numbers<[1], [0], [0], [1], [0, 0, 1, 1], [], []>} : vector<18x32xbf16>, vector<32x64xbf16>, vector<18x64xf32> -> vector<18x64xf32>
    %25 = arith.addf %20, %24 : vector<18x64xf32>
    %c0_21 = arith.constant 0 : index
    %c7 = arith.constant 7 : index
    %c0_22 = arith.constant 0 : index
    %26 = vector.load %arg1[%c0_21, %c7, %c0_22] : memref<1x39x32xbf16, #tpu.memory_space<vmem>>, vector<1x18x32xbf16>
    %27 = vector.shape_cast %26 : vector<1x18x32xbf16> to vector<18x32xbf16>
    %c160 = arith.constant 160 : index
    %c0_23 = arith.constant 0 : index
    %28 = vector.load %arg2[%c160, %c0_23] : memref<512x64xbf16, #tpu.memory_space<vmem>>, vector<32x64xbf16>
    %cst_24 = arith.constant dense<0.000000e+00> : vector<18x64xf32>
    %29 = tpu.matmul %27, %28, %cst_24 {dimension_numbers = #tpu.dot_dimension_numbers<[1], [0], [0], [1], [0, 0, 1, 1], [], []>} : vector<18x32xbf16>, vector<32x64xbf16>, vector<18x64xf32> -> vector<18x64xf32>
    %30 = arith.addf %25, %29 : vector<18x64xf32>
    %c0_25 = arith.constant 0 : index
    %c8 = arith.constant 8 : index
    %c0_26 = arith.constant 0 : index
    %31 = vector.load %arg1[%c0_25, %c8, %c0_26] : memref<1x39x32xbf16, #tpu.memory_space<vmem>>, vector<1x18x32xbf16>
    %32 = vector.shape_cast %31 : vector<1x18x32xbf16> to vector<18x32xbf16>
    %c192 = arith.constant 192 : index
    %c0_27 = arith.constant 0 : index
    %33 = vector.load %arg2[%c192, %c0_27] : memref<512x64xbf16, #tpu.memory_space<vmem>>, vector<32x64xbf16>
    %cst_28 = arith.constant dense<0.000000e+00> : vector<18x64xf32>
    %34 = tpu.matmul %32, %33, %cst_28 {dimension_numbers = #tpu.dot_dimension_numbers<[1], [0], [0], [1], [0, 0, 1, 1], [], []>} : vector<18x32xbf16>, vector<32x64xbf16>, vector<18x64xf32> -> vector<18x64xf32>
    %35 = arith.addf %30, %34 : vector<18x64xf32>
    %c0_29 = arith.constant 0 : index
    %c9 = arith.constant 9 : index
    %c0_30 = arith.constant 0 : index
    %36 = vector.load %arg1[%c0_29, %c9, %c0_30] : memref<1x39x32xbf16, #tpu.memory_space<vmem>>, vector<1x18x32xbf16>
    %37 = vector.shape_cast %36 : vector<1x18x32xbf16> to vector<18x32xbf16>
    %c224 = arith.constant 224 : index
    %c0_31 = arith.constant 0 : index
    %38 = vector.load %arg2[%c224, %c0_31] : memref<512x64xbf16, #tpu.memory_space<vmem>>, vector<32x64xbf16>
    %cst_32 = arith.constant dense<0.000000e+00> : vector<18x64xf32>
    %39 = tpu.matmul %37, %38, %cst_32 {dimension_numbers = #tpu.dot_dimension_numbers<[1], [0], [0], [1], [0, 0, 1, 1], [], []>} : vector<18x32xbf16>, vector<32x64xbf16>, vector<18x64xf32> -> vector<18x64xf32>
    %40 = arith.addf %35, %39 : vector<18x64xf32>
    %c0_33 = arith.constant 0 : index
    %c12 = arith.constant 12 : index
    %c0_34 = arith.constant 0 : index
    %41 = vector.load %arg1[%c0_33, %c12, %c0_34] : memref<1x39x32xbf16, #tpu.memory_space<vmem>>, vector<1x18x32xbf16>
    %42 = vector.shape_cast %41 : vector<1x18x32xbf16> to vector<18x32xbf16>
    %c256 = arith.constant 256 : index
    %c0_35 = arith.constant 0 : index
    %43 = vector.load %arg2[%c256, %c0_35] : memref<512x64xbf16, #tpu.memory_space<vmem>>, vector<32x64xbf16>
    %cst_36 = arith.constant dense<0.000000e+00> : vector<18x64xf32>
    %44 = tpu.matmul %42, %43, %cst_36 {dimension_numbers = #tpu.dot_dimension_numbers<[1], [0], [0], [1], [0, 0, 1, 1], [], []>} : vector<18x32xbf16>, vector<32x64xbf16>, vector<18x64xf32> -> vector<18x64xf32>
    %45 = arith.addf %40, %44 : vector<18x64xf32>
    %c0_37 = arith.constant 0 : index
    %c13 = arith.constant 13 : index
    %c0_38 = arith.constant 0 : index
    %46 = vector.load %arg1[%c0_37, %c13, %c0_38] : memref<1x39x32xbf16, #tpu.memory_space<vmem>>, vector<1x18x32xbf16>
    %47 = vector.shape_cast %46 : vector<1x18x32xbf16> to vector<18x32xbf16>
    %c288 = arith.constant 288 : index
    %c0_39 = arith.constant 0 : index
    %48 = vector.load %arg2[%c288, %c0_39] : memref<512x64xbf16, #tpu.memory_space<vmem>>, vector<32x64xbf16>
    %cst_40 = arith.constant dense<0.000000e+00> : vector<18x64xf32>
    %49 = tpu.matmul %47, %48, %cst_40 {dimension_numbers = #tpu.dot_dimension_numbers<[1], [0], [0], [1], [0, 0, 1, 1], [], []>} : vector<18x32xbf16>, vector<32x64xbf16>, vector<18x64xf32> -> vector<18x64xf32>
    %50 = arith.addf %45, %49 : vector<18x64xf32>
    %c0_41 = arith.constant 0 : index
    %c14 = arith.constant 14 : index
    %c0_42 = arith.constant 0 : index
    %51 = vector.load %arg1[%c0_41, %c14, %c0_42] : memref<1x39x32xbf16, #tpu.memory_space<vmem>>, vector<1x18x32xbf16>
    %52 = vector.shape_cast %51 : vector<1x18x32xbf16> to vector<18x32xbf16>
    %c320 = arith.constant 320 : index
    %c0_43 = arith.constant 0 : index
    %53 = vector.load %arg2[%c320, %c0_43] : memref<512x64xbf16, #tpu.memory_space<vmem>>, vector<32x64xbf16>
    %cst_44 = arith.constant dense<0.000000e+00> : vector<18x64xf32>
    %54 = tpu.matmul %52, %53, %cst_44 {dimension_numbers = #tpu.dot_dimension_numbers<[1], [0], [0], [1], [0, 0, 1, 1], [], []>} : vector<18x32xbf16>, vector<32x64xbf16>, vector<18x64xf32> -> vector<18x64xf32>
    %55 = arith.addf %50, %54 : vector<18x64xf32>
    %c0_45 = arith.constant 0 : index
    %c15 = arith.constant 15 : index
    %c0_46 = arith.constant 0 : index
    %56 = vector.load %arg1[%c0_45, %c15, %c0_46] : memref<1x39x32xbf16, #tpu.memory_space<vmem>>, vector<1x18x32xbf16>
    %57 = vector.shape_cast %56 : vector<1x18x32xbf16> to vector<18x32xbf16>
    %c352 = arith.constant 352 : index
    %c0_47 = arith.constant 0 : index
    %58 = vector.load %arg2[%c352, %c0_47] : memref<512x64xbf16, #tpu.memory_space<vmem>>, vector<32x64xbf16>
    %cst_48 = arith.constant dense<0.000000e+00> : vector<18x64xf32>
    %59 = tpu.matmul %57, %58, %cst_48 {dimension_numbers = #tpu.dot_dimension_numbers<[1], [0], [0], [1], [0, 0, 1, 1], [], []>} : vector<18x32xbf16>, vector<32x64xbf16>, vector<18x64xf32> -> vector<18x64xf32>
    %60 = arith.addf %55, %59 : vector<18x64xf32>
    %c0_49 = arith.constant 0 : index
    %c18 = arith.constant 18 : index
    %c0_50 = arith.constant 0 : index
    %61 = vector.load %arg1[%c0_49, %c18, %c0_50] : memref<1x39x32xbf16, #tpu.memory_space<vmem>>, vector<1x18x32xbf16>
    %62 = vector.shape_cast %61 : vector<1x18x32xbf16> to vector<18x32xbf16>
    %c384 = arith.constant 384 : index
    %c0_51 = arith.constant 0 : index
    %63 = vector.load %arg2[%c384, %c0_51] : memref<512x64xbf16, #tpu.memory_space<vmem>>, vector<32x64xbf16>
    %cst_52 = arith.constant dense<0.000000e+00> : vector<18x64xf32>
    %64 = tpu.matmul %62, %63, %cst_52 {dimension_numbers = #tpu.dot_dimension_numbers<[1], [0], [0], [1], [0, 0, 1, 1], [], []>} : vector<18x32xbf16>, vector<32x64xbf16>, vector<18x64xf32> -> vector<18x64xf32>
    %65 = arith.addf %60, %64 : vector<18x64xf32>
    %c0_53 = arith.constant 0 : index
    %c19 = arith.constant 19 : index
    %c0_54 = arith.constant 0 : index
    %66 = vector.load %arg1[%c0_53, %c19, %c0_54] : memref<1x39x32xbf16, #tpu.memory_space<vmem>>, vector<1x18x32xbf16>
    %67 = vector.shape_cast %66 : vector<1x18x32xbf16> to vector<18x32xbf16>
    %c416 = arith.constant 416 : index
    %c0_55 = arith.constant 0 : index
    %68 = vector.load %arg2[%c416, %c0_55] : memref<512x64xbf16, #tpu.memory_space<vmem>>, vector<32x64xbf16>
    %cst_56 = arith.constant dense<0.000000e+00> : vector<18x64xf32>
    %69 = tpu.matmul %67, %68, %cst_56 {dimension_numbers = #tpu.dot_dimension_numbers<[1], [0], [0], [1], [0, 0, 1, 1], [], []>} : vector<18x32xbf16>, vector<32x64xbf16>, vector<18x64xf32> -> vector<18x64xf32>
    %70 = arith.addf %65, %69 : vector<18x64xf32>
    %c0_57 = arith.constant 0 : index
    %c20 = arith.constant 20 : index
    %c0_58 = arith.constant 0 : index
    %71 = vector.load %arg1[%c0_57, %c20, %c0_58] : memref<1x39x32xbf16, #tpu.memory_space<vmem>>, vector<1x18x32xbf16>
    %72 = vector.shape_cast %71 : vector<1x18x32xbf16> to vector<18x32xbf16>
    %c448 = arith.constant 448 : index
    %c0_59 = arith.constant 0 : index
    %73 = vector.load %arg2[%c448, %c0_59] : memref<512x64xbf16, #tpu.memory_space<vmem>>, vector<32x64xbf16>
    %cst_60 = arith.constant dense<0.000000e+00> : vector<18x64xf32>
    %74 = tpu.matmul %72, %73, %cst_60 {dimension_numbers = #tpu.dot_dimension_numbers<[1], [0], [0], [1], [0, 0, 1, 1], [], []>} : vector<18x32xbf16>, vector<32x64xbf16>, vector<18x64xf32> -> vector<18x64xf32>
    %75 = arith.addf %70, %74 : vector<18x64xf32>
    %c0_61 = arith.constant 0 : index
    %c21 = arith.constant 21 : index
    %c0_62 = arith.constant 0 : index
    %76 = vector.load %arg1[%c0_61, %c21, %c0_62] : memref<1x39x32xbf16, #tpu.memory_space<vmem>>, vector<1x18x32xbf16>
    %77 = vector.shape_cast %76 : vector<1x18x32xbf16> to vector<18x32xbf16>
    %c480 = arith.constant 480 : index
    %c0_63 = arith.constant 0 : index
    %78 = vector.load %arg2[%c480, %c0_63] : memref<512x64xbf16, #tpu.memory_space<vmem>>, vector<32x64xbf16>
    %cst_64 = arith.constant dense<0.000000e+00> : vector<18x64xf32>
    %79 = tpu.matmul %77, %78, %cst_64 {dimension_numbers = #tpu.dot_dimension_numbers<[1], [0], [0], [1], [0, 0, 1, 1], [], []>} : vector<18x32xbf16>, vector<32x64xbf16>, vector<18x64xf32> -> vector<18x64xf32>
    %80 = arith.addf %75, %79 : vector<18x64xf32>
    %c0_65 = arith.constant 0 : index
    %c0_66 = arith.constant 0 : index
    %81 = vector.load %arg4[%c0_65, %c0_66] : memref<18x1xf32, #tpu.memory_space<vmem>>, vector<18x1xf32>
    %82 = vector.broadcast %81 : vector<18x1xf32> to vector<18x64xf32>
    %83 = arith.mulf %80, %82 : vector<18x64xf32>
    %cst_67 = arith.constant dense<0.000000e+00> : vector<64xf32>
    %84 = vector.multi_reduction <add>, %83, %cst_67 [0] : vector<18x64xf32> to vector<64xf32>
    %85 = vector.shape_cast %84 : vector<64xf32> to vector<1x64xf32>
    %86 = arith.mulf %80, %80 : vector<18x64xf32>
    %87 = vector.broadcast %81 : vector<18x1xf32> to vector<18x64xf32>
    %88 = arith.mulf %86, %87 : vector<18x64xf32>
    %cst_68 = arith.constant dense<0.000000e+00> : vector<64xf32>
    %89 = vector.multi_reduction <add>, %88, %cst_68 [0] : vector<18x64xf32> to vector<64xf32>
    %90 = vector.shape_cast %89 : vector<64xf32> to vector<1x64xf32>
    %cst_69 = arith.constant 0.111111112 : f32
    %91 = vector.broadcast %cst_69 : f32 to vector<1x64xf32>
    %92 = arith.mulf %85, %91 : vector<1x64xf32>
    %cst_70 = arith.constant 0.111111112 : f32
    %93 = vector.broadcast %cst_70 : f32 to vector<1x64xf32>
    %94 = arith.mulf %90, %93 : vector<1x64xf32>
    %95 = arith.mulf %92, %92 : vector<1x64xf32>
    %96 = arith.subf %94, %95 : vector<1x64xf32>
    %cst_71 = arith.constant 0.000000e+00 : f32
    %97 = vector.broadcast %cst_71 : f32 to vector<1x64xf32>
    %98 = arith.maximumf %96, %97 : vector<1x64xf32>
    %99 = vector.broadcast %92 : vector<1x64xf32> to vector<18x64xf32>
    %100 = arith.subf %80, %99 : vector<18x64xf32>
    %cst_72 = arith.constant 9.99999974E-6 : f32
    %101 = vector.broadcast %cst_72 : f32 to vector<1x64xf32>
    %102 = arith.addf %98, %101 : vector<1x64xf32>
    %103 = math.rsqrt %102 : vector<1x64xf32>
    %104 = vector.broadcast %103 : vector<1x64xf32> to vector<18x64xf32>
    %105 = arith.mulf %100, %104 : vector<18x64xf32>
    %cst_73 = arith.constant 0.000000e+00 : f32
    %106 = vector.broadcast %cst_73 : f32 to vector<18x64xf32>
    %107 = arith.cmpf oge, %105, %106 : vector<18x64xf32>
    %cst_74 = arith.constant 2.000000e-01 : f32
    %108 = vector.broadcast %cst_74 : f32 to vector<18x64xf32>
    %109 = arith.mulf %108, %105 : vector<18x64xf32>
    %110 = arith.select %107, %105, %109 : vector<18x64xi1>, vector<18x64xf32>
    %111 = vector.shape_cast %110 : vector<18x64xf32> to vector<1x18x64xf32>
    %112 = arith.truncf %111 : vector<1x18x64xf32> to vector<1x18x64xbf16>
    %c0_75 = arith.constant 0 : index
    %c0_76 = arith.constant 0 : index
    %c0_77 = arith.constant 0 : index
    %113 = vector.load %arg5[%c0_75, %c0_76, %c0_77] : memref<1x18x64xbf16, #tpu.memory_space<vmem>>, vector<1x18x64xbf16>
    tpu.vector_store %arg5[%c0_75, %c0_76, %c0_77], %112 {strides = array<i32>} : memref<1x18x64xbf16, #tpu.memory_space<vmem>>, vector<1x18x64xbf16>,
    return
  }
  func.func @transform_0(%arg0: i32) -> (i32, i32, i32) {
    %c0_i32 = arith.constant 0 : i32
    %c0_i32_0 = arith.constant 0 : i32
    %c0_i32_1 = arith.constant 0 : i32
    return %arg0, %c0_i32, %c0_i32_0 : i32, i32, i32
  }
  func.func @transform_1(%arg0: i32) -> (i32, i32) {
    %c0_i32 = arith.constant 0 : i32
    %c0_i32_0 = arith.constant 0 : i32
    %c0_i32_1 = arith.constant 0 : i32
    return %c0_i32, %c0_i32_0 : i32, i32
  }
  func.func @transform_2(%arg0: i32) -> (i32, i32) {
    %c0_i32 = arith.constant 0 : i32
    %c0_i32_0 = arith.constant 0 : i32
    %c0_i32_1 = arith.constant 0 : i32
    return %c0_i32, %c0_i32_0 : i32, i32
  }
  func.func @transform_3(%arg0: i32) -> (i32, i32) {
    %c0_i32 = arith.constant 0 : i32
    %c0_i32_0 = arith.constant 0 : i32
    %c0_i32_1 = arith.constant 0 : i32
    return %c0_i32, %c0_i32_0 : i32, i32
  }
  func.func @transform_4(%arg0: i32) -> (i32, i32, i32) {
    %c0_i32 = arith.constant 0 : i32
    %c0_i32_0 = arith.constant 0 : i32
    %c0_i32_1 = arith.constant 0 : i32
    return %arg0, %c0_i32, %c0_i32_0 : i32, i32, i32
  }
}

module attributes {stable_mosaic.version = 11 : i64} {
  func.func @_conv_norm_act_kernel(%arg0: i32, %arg1: memref<1x28x64xbf16, #tpu.memory_space<vmem>>, %arg2: memref<1024x1xbf16, #tpu.memory_space<vmem>>, %arg3: memref<1x1xf32, #tpu.memory_space<vmem>>, %arg4: memref<10x1xf32, #tpu.memory_space<vmem>>, %arg5: memref<1x10x1xf32, #tpu.memory_space<vmem>>) attributes {dimension_semantics = [#tpu.dimension_semantics<parallel>], iteration_bounds = array<i64: 2>, scalar_prefetch = 0 : i64, scratch_operands = 0 : i64, tpu.core_type = #tpu.core_type<tc>, window_params = [{transform_indices = @transform_0, window_bounds = array<i64: 1, 28, 64>}, {pipeline_mode = #tpu.pipeline_mode<synchronous>, transform_indices = @transform_1, window_bounds = array<i64: 1024, 1>}, {pipeline_mode = #tpu.pipeline_mode<synchronous>, transform_indices = @transform_2, window_bounds = array<i64: 1, 1>}, {pipeline_mode = #tpu.pipeline_mode<synchronous>, transform_indices = @transform_3, window_bounds = array<i64: 10, 1>}, {transform_indices = @transform_4, window_bounds = array<i64: 1, 10, 1>}]} {
    %cst = arith.constant 0.000000e+00 : f32
    %0 = vector.broadcast %cst : f32 to vector<10x1xf32>
    %c0 = arith.constant 0 : index
    %c0_0 = arith.constant 0 : index
    %c0_1 = arith.constant 0 : index
    %1 = vector.load %arg1[%c0, %c0_0, %c0_1] : memref<1x28x64xbf16, #tpu.memory_space<vmem>>, vector<1x10x64xbf16>
    %2 = vector.shape_cast %1 : vector<1x10x64xbf16> to vector<10x64xbf16>
    %c0_2 = arith.constant 0 : index
    %c0_3 = arith.constant 0 : index
    %3 = vector.load %arg2[%c0_2, %c0_3] : memref<1024x1xbf16, #tpu.memory_space<vmem>>, vector<64x1xbf16>
    %cst_4 = arith.constant dense<0.000000e+00> : vector<10x1xf32>
    %4 = tpu.matmul %2, %3, %cst_4 {dimension_numbers = #tpu.dot_dimension_numbers<[1], [0], [0], [1], [0, 0, 1, 1], [], []>} : vector<10x64xbf16>, vector<64x1xbf16>, vector<10x1xf32> -> vector<10x1xf32>
    %5 = arith.addf %0, %4 : vector<10x1xf32>
    %c0_5 = arith.constant 0 : index
    %c1 = arith.constant 1 : index
    %c0_6 = arith.constant 0 : index
    %6 = vector.load %arg1[%c0_5, %c1, %c0_6] : memref<1x28x64xbf16, #tpu.memory_space<vmem>>, vector<1x10x64xbf16>
    %7 = vector.shape_cast %6 : vector<1x10x64xbf16> to vector<10x64xbf16>
    %c64 = arith.constant 64 : index
    %c0_7 = arith.constant 0 : index
    %8 = vector.load %arg2[%c64, %c0_7] : memref<1024x1xbf16, #tpu.memory_space<vmem>>, vector<64x1xbf16>
    %cst_8 = arith.constant dense<0.000000e+00> : vector<10x1xf32>
    %9 = tpu.matmul %7, %8, %cst_8 {dimension_numbers = #tpu.dot_dimension_numbers<[1], [0], [0], [1], [0, 0, 1, 1], [], []>} : vector<10x64xbf16>, vector<64x1xbf16>, vector<10x1xf32> -> vector<10x1xf32>
    %10 = arith.addf %5, %9 : vector<10x1xf32>
    %c0_9 = arith.constant 0 : index
    %c2 = arith.constant 2 : index
    %c0_10 = arith.constant 0 : index
    %11 = vector.load %arg1[%c0_9, %c2, %c0_10] : memref<1x28x64xbf16, #tpu.memory_space<vmem>>, vector<1x10x64xbf16>
    %12 = vector.shape_cast %11 : vector<1x10x64xbf16> to vector<10x64xbf16>
    %c128 = arith.constant 128 : index
    %c0_11 = arith.constant 0 : index
    %13 = vector.load %arg2[%c128, %c0_11] : memref<1024x1xbf16, #tpu.memory_space<vmem>>, vector<64x1xbf16>
    %cst_12 = arith.constant dense<0.000000e+00> : vector<10x1xf32>
    %14 = tpu.matmul %12, %13, %cst_12 {dimension_numbers = #tpu.dot_dimension_numbers<[1], [0], [0], [1], [0, 0, 1, 1], [], []>} : vector<10x64xbf16>, vector<64x1xbf16>, vector<10x1xf32> -> vector<10x1xf32>
    %15 = arith.addf %10, %14 : vector<10x1xf32>
    %c0_13 = arith.constant 0 : index
    %c3 = arith.constant 3 : index
    %c0_14 = arith.constant 0 : index
    %16 = vector.load %arg1[%c0_13, %c3, %c0_14] : memref<1x28x64xbf16, #tpu.memory_space<vmem>>, vector<1x10x64xbf16>
    %17 = vector.shape_cast %16 : vector<1x10x64xbf16> to vector<10x64xbf16>
    %c192 = arith.constant 192 : index
    %c0_15 = arith.constant 0 : index
    %18 = vector.load %arg2[%c192, %c0_15] : memref<1024x1xbf16, #tpu.memory_space<vmem>>, vector<64x1xbf16>
    %cst_16 = arith.constant dense<0.000000e+00> : vector<10x1xf32>
    %19 = tpu.matmul %17, %18, %cst_16 {dimension_numbers = #tpu.dot_dimension_numbers<[1], [0], [0], [1], [0, 0, 1, 1], [], []>} : vector<10x64xbf16>, vector<64x1xbf16>, vector<10x1xf32> -> vector<10x1xf32>
    %20 = arith.addf %15, %19 : vector<10x1xf32>
    %c0_17 = arith.constant 0 : index
    %c5 = arith.constant 5 : index
    %c0_18 = arith.constant 0 : index
    %21 = vector.load %arg1[%c0_17, %c5, %c0_18] : memref<1x28x64xbf16, #tpu.memory_space<vmem>>, vector<1x10x64xbf16>
    %22 = vector.shape_cast %21 : vector<1x10x64xbf16> to vector<10x64xbf16>
    %c256 = arith.constant 256 : index
    %c0_19 = arith.constant 0 : index
    %23 = vector.load %arg2[%c256, %c0_19] : memref<1024x1xbf16, #tpu.memory_space<vmem>>, vector<64x1xbf16>
    %cst_20 = arith.constant dense<0.000000e+00> : vector<10x1xf32>
    %24 = tpu.matmul %22, %23, %cst_20 {dimension_numbers = #tpu.dot_dimension_numbers<[1], [0], [0], [1], [0, 0, 1, 1], [], []>} : vector<10x64xbf16>, vector<64x1xbf16>, vector<10x1xf32> -> vector<10x1xf32>
    %25 = arith.addf %20, %24 : vector<10x1xf32>
    %c0_21 = arith.constant 0 : index
    %c6 = arith.constant 6 : index
    %c0_22 = arith.constant 0 : index
    %26 = vector.load %arg1[%c0_21, %c6, %c0_22] : memref<1x28x64xbf16, #tpu.memory_space<vmem>>, vector<1x10x64xbf16>
    %27 = vector.shape_cast %26 : vector<1x10x64xbf16> to vector<10x64xbf16>
    %c320 = arith.constant 320 : index
    %c0_23 = arith.constant 0 : index
    %28 = vector.load %arg2[%c320, %c0_23] : memref<1024x1xbf16, #tpu.memory_space<vmem>>, vector<64x1xbf16>
    %cst_24 = arith.constant dense<0.000000e+00> : vector<10x1xf32>
    %29 = tpu.matmul %27, %28, %cst_24 {dimension_numbers = #tpu.dot_dimension_numbers<[1], [0], [0], [1], [0, 0, 1, 1], [], []>} : vector<10x64xbf16>, vector<64x1xbf16>, vector<10x1xf32> -> vector<10x1xf32>
    %30 = arith.addf %25, %29 : vector<10x1xf32>
    %c0_25 = arith.constant 0 : index
    %c7 = arith.constant 7 : index
    %c0_26 = arith.constant 0 : index
    %31 = vector.load %arg1[%c0_25, %c7, %c0_26] : memref<1x28x64xbf16, #tpu.memory_space<vmem>>, vector<1x10x64xbf16>
    %32 = vector.shape_cast %31 : vector<1x10x64xbf16> to vector<10x64xbf16>
    %c384 = arith.constant 384 : index
    %c0_27 = arith.constant 0 : index
    %33 = vector.load %arg2[%c384, %c0_27] : memref<1024x1xbf16, #tpu.memory_space<vmem>>, vector<64x1xbf16>
    %cst_28 = arith.constant dense<0.000000e+00> : vector<10x1xf32>
    %34 = tpu.matmul %32, %33, %cst_28 {dimension_numbers = #tpu.dot_dimension_numbers<[1], [0], [0], [1], [0, 0, 1, 1], [], []>} : vector<10x64xbf16>, vector<64x1xbf16>, vector<10x1xf32> -> vector<10x1xf32>
    %35 = arith.addf %30, %34 : vector<10x1xf32>
    %c0_29 = arith.constant 0 : index
    %c8 = arith.constant 8 : index
    %c0_30 = arith.constant 0 : index
    %36 = vector.load %arg1[%c0_29, %c8, %c0_30] : memref<1x28x64xbf16, #tpu.memory_space<vmem>>, vector<1x10x64xbf16>
    %37 = vector.shape_cast %36 : vector<1x10x64xbf16> to vector<10x64xbf16>
    %c448 = arith.constant 448 : index
    %c0_31 = arith.constant 0 : index
    %38 = vector.load %arg2[%c448, %c0_31] : memref<1024x1xbf16, #tpu.memory_space<vmem>>, vector<64x1xbf16>
    %cst_32 = arith.constant dense<0.000000e+00> : vector<10x1xf32>
    %39 = tpu.matmul %37, %38, %cst_32 {dimension_numbers = #tpu.dot_dimension_numbers<[1], [0], [0], [1], [0, 0, 1, 1], [], []>} : vector<10x64xbf16>, vector<64x1xbf16>, vector<10x1xf32> -> vector<10x1xf32>
    %40 = arith.addf %35, %39 : vector<10x1xf32>
    %c0_33 = arith.constant 0 : index
    %c10 = arith.constant 10 : index
    %c0_34 = arith.constant 0 : index
    %41 = vector.load %arg1[%c0_33, %c10, %c0_34] : memref<1x28x64xbf16, #tpu.memory_space<vmem>>, vector<1x10x64xbf16>
    %42 = vector.shape_cast %41 : vector<1x10x64xbf16> to vector<10x64xbf16>
    %c512 = arith.constant 512 : index
    %c0_35 = arith.constant 0 : index
    %43 = vector.load %arg2[%c512, %c0_35] : memref<1024x1xbf16, #tpu.memory_space<vmem>>, vector<64x1xbf16>
    %cst_36 = arith.constant dense<0.000000e+00> : vector<10x1xf32>
    %44 = tpu.matmul %42, %43, %cst_36 {dimension_numbers = #tpu.dot_dimension_numbers<[1], [0], [0], [1], [0, 0, 1, 1], [], []>} : vector<10x64xbf16>, vector<64x1xbf16>, vector<10x1xf32> -> vector<10x1xf32>
    %45 = arith.addf %40, %44 : vector<10x1xf32>
    %c0_37 = arith.constant 0 : index
    %c11 = arith.constant 11 : index
    %c0_38 = arith.constant 0 : index
    %46 = vector.load %arg1[%c0_37, %c11, %c0_38] : memref<1x28x64xbf16, #tpu.memory_space<vmem>>, vector<1x10x64xbf16>
    %47 = vector.shape_cast %46 : vector<1x10x64xbf16> to vector<10x64xbf16>
    %c576 = arith.constant 576 : index
    %c0_39 = arith.constant 0 : index
    %48 = vector.load %arg2[%c576, %c0_39] : memref<1024x1xbf16, #tpu.memory_space<vmem>>, vector<64x1xbf16>
    %cst_40 = arith.constant dense<0.000000e+00> : vector<10x1xf32>
    %49 = tpu.matmul %47, %48, %cst_40 {dimension_numbers = #tpu.dot_dimension_numbers<[1], [0], [0], [1], [0, 0, 1, 1], [], []>} : vector<10x64xbf16>, vector<64x1xbf16>, vector<10x1xf32> -> vector<10x1xf32>
    %50 = arith.addf %45, %49 : vector<10x1xf32>
    %c0_41 = arith.constant 0 : index
    %c12 = arith.constant 12 : index
    %c0_42 = arith.constant 0 : index
    %51 = vector.load %arg1[%c0_41, %c12, %c0_42] : memref<1x28x64xbf16, #tpu.memory_space<vmem>>, vector<1x10x64xbf16>
    %52 = vector.shape_cast %51 : vector<1x10x64xbf16> to vector<10x64xbf16>
    %c640 = arith.constant 640 : index
    %c0_43 = arith.constant 0 : index
    %53 = vector.load %arg2[%c640, %c0_43] : memref<1024x1xbf16, #tpu.memory_space<vmem>>, vector<64x1xbf16>
    %cst_44 = arith.constant dense<0.000000e+00> : vector<10x1xf32>
    %54 = tpu.matmul %52, %53, %cst_44 {dimension_numbers = #tpu.dot_dimension_numbers<[1], [0], [0], [1], [0, 0, 1, 1], [], []>} : vector<10x64xbf16>, vector<64x1xbf16>, vector<10x1xf32> -> vector<10x1xf32>
    %55 = arith.addf %50, %54 : vector<10x1xf32>
    %c0_45 = arith.constant 0 : index
    %c13 = arith.constant 13 : index
    %c0_46 = arith.constant 0 : index
    %56 = vector.load %arg1[%c0_45, %c13, %c0_46] : memref<1x28x64xbf16, #tpu.memory_space<vmem>>, vector<1x10x64xbf16>
    %57 = vector.shape_cast %56 : vector<1x10x64xbf16> to vector<10x64xbf16>
    %c704 = arith.constant 704 : index
    %c0_47 = arith.constant 0 : index
    %58 = vector.load %arg2[%c704, %c0_47] : memref<1024x1xbf16, #tpu.memory_space<vmem>>, vector<64x1xbf16>
    %cst_48 = arith.constant dense<0.000000e+00> : vector<10x1xf32>
    %59 = tpu.matmul %57, %58, %cst_48 {dimension_numbers = #tpu.dot_dimension_numbers<[1], [0], [0], [1], [0, 0, 1, 1], [], []>} : vector<10x64xbf16>, vector<64x1xbf16>, vector<10x1xf32> -> vector<10x1xf32>
    %60 = arith.addf %55, %59 : vector<10x1xf32>
    %c0_49 = arith.constant 0 : index
    %c15 = arith.constant 15 : index
    %c0_50 = arith.constant 0 : index
    %61 = vector.load %arg1[%c0_49, %c15, %c0_50] : memref<1x28x64xbf16, #tpu.memory_space<vmem>>, vector<1x10x64xbf16>
    %62 = vector.shape_cast %61 : vector<1x10x64xbf16> to vector<10x64xbf16>
    %c768 = arith.constant 768 : index
    %c0_51 = arith.constant 0 : index
    %63 = vector.load %arg2[%c768, %c0_51] : memref<1024x1xbf16, #tpu.memory_space<vmem>>, vector<64x1xbf16>
    %cst_52 = arith.constant dense<0.000000e+00> : vector<10x1xf32>
    %64 = tpu.matmul %62, %63, %cst_52 {dimension_numbers = #tpu.dot_dimension_numbers<[1], [0], [0], [1], [0, 0, 1, 1], [], []>} : vector<10x64xbf16>, vector<64x1xbf16>, vector<10x1xf32> -> vector<10x1xf32>
    %65 = arith.addf %60, %64 : vector<10x1xf32>
    %c0_53 = arith.constant 0 : index
    %c16 = arith.constant 16 : index
    %c0_54 = arith.constant 0 : index
    %66 = vector.load %arg1[%c0_53, %c16, %c0_54] : memref<1x28x64xbf16, #tpu.memory_space<vmem>>, vector<1x10x64xbf16>
    %67 = vector.shape_cast %66 : vector<1x10x64xbf16> to vector<10x64xbf16>
    %c832 = arith.constant 832 : index
    %c0_55 = arith.constant 0 : index
    %68 = vector.load %arg2[%c832, %c0_55] : memref<1024x1xbf16, #tpu.memory_space<vmem>>, vector<64x1xbf16>
    %cst_56 = arith.constant dense<0.000000e+00> : vector<10x1xf32>
    %69 = tpu.matmul %67, %68, %cst_56 {dimension_numbers = #tpu.dot_dimension_numbers<[1], [0], [0], [1], [0, 0, 1, 1], [], []>} : vector<10x64xbf16>, vector<64x1xbf16>, vector<10x1xf32> -> vector<10x1xf32>
    %70 = arith.addf %65, %69 : vector<10x1xf32>
    %c0_57 = arith.constant 0 : index
    %c17 = arith.constant 17 : index
    %c0_58 = arith.constant 0 : index
    %71 = vector.load %arg1[%c0_57, %c17, %c0_58] : memref<1x28x64xbf16, #tpu.memory_space<vmem>>, vector<1x10x64xbf16>
    %72 = vector.shape_cast %71 : vector<1x10x64xbf16> to vector<10x64xbf16>
    %c896 = arith.constant 896 : index
    %c0_59 = arith.constant 0 : index
    %73 = vector.load %arg2[%c896, %c0_59] : memref<1024x1xbf16, #tpu.memory_space<vmem>>, vector<64x1xbf16>
    %cst_60 = arith.constant dense<0.000000e+00> : vector<10x1xf32>
    %74 = tpu.matmul %72, %73, %cst_60 {dimension_numbers = #tpu.dot_dimension_numbers<[1], [0], [0], [1], [0, 0, 1, 1], [], []>} : vector<10x64xbf16>, vector<64x1xbf16>, vector<10x1xf32> -> vector<10x1xf32>
    %75 = arith.addf %70, %74 : vector<10x1xf32>
    %c0_61 = arith.constant 0 : index
    %c18 = arith.constant 18 : index
    %c0_62 = arith.constant 0 : index
    %76 = vector.load %arg1[%c0_61, %c18, %c0_62] : memref<1x28x64xbf16, #tpu.memory_space<vmem>>, vector<1x10x64xbf16>
    %77 = vector.shape_cast %76 : vector<1x10x64xbf16> to vector<10x64xbf16>
    %c960 = arith.constant 960 : index
    %c0_63 = arith.constant 0 : index
    %78 = vector.load %arg2[%c960, %c0_63] : memref<1024x1xbf16, #tpu.memory_space<vmem>>, vector<64x1xbf16>
    %cst_64 = arith.constant dense<0.000000e+00> : vector<10x1xf32>
    %79 = tpu.matmul %77, %78, %cst_64 {dimension_numbers = #tpu.dot_dimension_numbers<[1], [0], [0], [1], [0, 0, 1, 1], [], []>} : vector<10x64xbf16>, vector<64x1xbf16>, vector<10x1xf32> -> vector<10x1xf32>
    %80 = arith.addf %75, %79 : vector<10x1xf32>
    %c0_65 = arith.constant 0 : index
    %c0_66 = arith.constant 0 : index
    %81 = vector.load %arg3[%c0_65, %c0_66] : memref<1x1xf32, #tpu.memory_space<vmem>>, vector<1x1xf32>
    %82 = vector.broadcast %81 : vector<1x1xf32> to vector<10x1xf32>
    %83 = arith.addf %80, %82 : vector<10x1xf32>
    %84 = vector.shape_cast %83 : vector<10x1xf32> to vector<1x10x1xf32>
    %c0_67 = arith.constant 0 : index
    %c0_68 = arith.constant 0 : index
    %c0_69 = arith.constant 0 : index
    %85 = vector.load %arg5[%c0_67, %c0_68, %c0_69] : memref<1x10x1xf32, #tpu.memory_space<vmem>>, vector<1x10x1xf32>
    tpu.vector_store %arg5[%c0_67, %c0_68, %c0_69], %84 {strides = array<i32>} : memref<1x10x1xf32, #tpu.memory_space<vmem>>, vector<1x10x1xf32>,
    return
  }
  func.func @transform_0(%arg0: i32) -> (i32, i32, i32) {
    %c0_i32 = arith.constant 0 : i32
    %c0_i32_0 = arith.constant 0 : i32
    %c0_i32_1 = arith.constant 0 : i32
    return %arg0, %c0_i32, %c0_i32_0 : i32, i32, i32
  }
  func.func @transform_1(%arg0: i32) -> (i32, i32) {
    %c0_i32 = arith.constant 0 : i32
    %c0_i32_0 = arith.constant 0 : i32
    %c0_i32_1 = arith.constant 0 : i32
    return %c0_i32, %c0_i32_0 : i32, i32
  }
  func.func @transform_2(%arg0: i32) -> (i32, i32) {
    %c0_i32 = arith.constant 0 : i32
    %c0_i32_0 = arith.constant 0 : i32
    %c0_i32_1 = arith.constant 0 : i32
    return %c0_i32, %c0_i32_0 : i32, i32
  }
  func.func @transform_3(%arg0: i32) -> (i32, i32) {
    %c0_i32 = arith.constant 0 : i32
    %c0_i32_0 = arith.constant 0 : i32
    %c0_i32_1 = arith.constant 0 : i32
    return %c0_i32, %c0_i32_0 : i32, i32
  }
  func.func @transform_4(%arg0: i32) -> (i32, i32, i32) {
    %c0_i32 = arith.constant 0 : i32
    %c0_i32_0 = arith.constant 0 : i32
    %c0_i32_1 = arith.constant 0 : i32
    return %arg0, %c0_i32, %c0_i32_0 : i32, i32, i32
  }
}

</mosaic_0001>

<llo_original>
// kernel: cycle_discriminator.5
$region0: #{cycle_discriminator.5}
  #allocation0 [shape = 'u32[]', space=smem, size = 0x4, offset = 0x4, fixed_abs, tag = 'smem constant byte address 0x4 - core index']
  #allocation1 [shape = 'u32[144,128]{1,0:T(1,128)}', space=vmem, size = 0x12000, scoped, tag = 'internal scratch']
  %s0 = inlined_call_operand.vmem [shape: bf16[2,290,12], index: 0, kind: input, shape index: {}]
  %s1 = inlined_call_operand.vmem [shape: bf16[48,8], index: 1, kind: input, shape index: {}]
  %s2 = inlined_call_operand.vmem [shape: f32[1,8], index: 2, kind: input, shape index: {}]
  %s3 = inlined_call_operand.vmem [shape: f32[272,1], index: 3, kind: input, shape index: {}]
  %s4 = inlined_call_operand.vmem [shape: bf16[2,272,8], index: 4, kind: output, shape index: {}]
  %s5 = sld [smem:[#allocation0]]
  $region49: #{cycle_discriminator.5} parent=0
    _
  %s7 = ssub.s32 1, %s5
  %s8 = scalar_select 0, %s7, %s5
  loop: start=0, step=1, limit=4
  $region2: #{cycle_discriminator.5} parent=0 // loop_pre_header
    _
  $region3: #{cycle_discriminator.5} parent=0 // loop_header
    %s10 = sphi 0, %s14
    %p11 = scmp.ge.s32.totalorder %s10, 4
    %s20 = sphi 0, %s22
    %s23 = sphi 0, %s20
    %s24 = sphi 0, %s23
    %s40 = sphi 0, %s24
    %s44 = sphi 0, %s44
    %s46 = sphi 0, %s44
    %s47 = sphi 0, %s46
    %s61 = sphi 0, %s47
    %s65 = sphi 0, %s65
    %s67 = sphi 0, %s65
    %s68 = sphi 0, %s67
    %s82 = sphi 0, %s68
    %s86 = sphi 0, %s86
    %s88 = sphi 0, %s86
    %s89 = sphi 0, %s88
    %s103 = sphi 0, %s89
    %s109 = sphi 0, %s111
    %s112 = sphi 0, %s109
    %s113 = sphi 0, %s112
    %s129 = sphi 0, %s113
  $region4: #{cycle_discriminator.5} parent=0 // loop_header_branch
    %13 = sbr.rel (%p11) target = $region8
  $region5: #{cycle_discriminator.5} parent=0 // loop_body
    %s15 = ssub.s32 %s10, 1
    %s16 = ssub.s32 %s10, 2
    %s17 = sadd.s32 %s10, 1
    %s18 = ssub.s32 %s10, %s17
    %p19 = scmp.eq.s32.totalorder %s18, 0
    %s21 = sadd.s32 %s20, 1
    %s22 = scalar_select %p19, %s20, %s21
    %p25 = pneg %p19
    %p26 = scmp.eq.s32.totalorder %s10, 1
    %p27 = por %p25, %p26
    %p28 = scmp.ne.s32.totalorder %s20, %s23
    %p29 = scmp.eq.s32.totalorder %s10, 0
    %p30 = por %p28, %p29
    %p31 = scmp.ne.s32.totalorder %s20, %s23
    %p32 = scmp.eq.s32.totalorder %s15, 1
    %p33 = por %p31, %p32
    %p34 = scmp.ne.s32.totalorder %s23, %s24
    %p35 = scmp.eq.s32.totalorder %s15, 0
    %p36 = por %p34, %p35
    %p37 = scmp.ne.s32.totalorder %s23, %s24
    %p38 = scmp.eq.s32.totalorder %s16, 1
    %p39 = por %p37, %p38
    %p41 = scmp.ne.s32.totalorder %s24, %s40
    %p42 = scmp.eq.s32.totalorder %s16, 0
    %p43 = por %p41, %p42
    %s45 = sadd.s32 %s44, 1
    %p48 = scmp.eq.s32.totalorder %s10, 1
    %p49 = scmp.ne.s32.totalorder %s44, %s46
    %p50 = scmp.eq.s32.totalorder %s10, 0
    %p51 = por %p49, %p50
    %p52 = scmp.ne.s32.totalorder %s44, %s46
    %p53 = scmp.eq.s32.totalorder %s15, 1
    %p54 = por %p52, %p53
    %p55 = scmp.ne.s32.totalorder %s46, %s47
    %p56 = scmp.eq.s32.totalorder %s15, 0
    %p57 = por %p55, %p56
    %p58 = scmp.ne.s32.totalorder %s46, %s47
    %p59 = scmp.eq.s32.totalorder %s16, 1
    %p60 = por %p58, %p59
    %p62 = scmp.ne.s32.totalorder %s47, %s61
    %p63 = scmp.eq.s32.totalorder %s16, 0
    %p64 = por %p62, %p63
    %s66 = sadd.s32 %s65, 1
    %p69 = scmp.eq.s32.totalorder %s10, 1
    %p70 = scmp.ne.s32.totalorder %s65, %s67
    %p71 = scmp.eq.s32.totalorder %s10, 0
    %p72 = por %p70, %p71
    %p73 = scmp.ne.s32.totalorder %s65, %s67
    %p74 = scmp.eq.s32.totalorder %s15, 1
    %p75 = por %p73, %p74
    %p76 = scmp.ne.s32.totalorder %s67, %s68
    %p77 = scmp.eq.s32.totalorder %s15, 0
    %p78 = por %p76, %p77
    %p79 = scmp.ne.s32.totalorder %s67, %s68
    %p80 = scmp.eq.s32.totalorder %s16, 1
    %p81 = por %p79, %p80
    %p83 = scmp.ne.s32.totalorder %s68, %s82
    %p84 = scmp.eq.s32.totalorder %s16, 0
    %p85 = por %p83, %p84
    %s87 = sadd.s32 %s86, 1
    %p90 = scmp.eq.s32.totalorder %s10, 1
    %p91 = scmp.ne.s32.totalorder %s86, %s88
    %p92 = scmp.eq.s32.totalorder %s10, 0
    %p93 = por %p91, %p92
    %p94 = scmp.ne.s32.totalorder %s86, %s88
    %p95 = scmp.eq.s32.totalorder %s15, 1
    %p96 = por %p94, %p95
    %p97 = scmp.ne.s32.totalorder %s88, %s89
    %p98 = scmp.eq.s32.totalorder %s15, 0
    %p99 = por %p97, %p98
    %p100 = scmp.ne.s32.totalorder %s88, %s89
    %p101 = scmp.eq.s32.totalorder %s16, 1
    %p102 = por %p100, %p101
    %p104 = scmp.ne.s32.totalorder %s89, %s103
    %p105 = scmp.eq.s32.totalorder %s16, 0
    %p106 = por %p104, %p105
    %s107 = ssub.s32 %s10, %s17
    %p108 = scmp.eq.s32.totalorder %s107, 0
    %s110 = sadd.s32 %s109, 1
    %s111 = scalar_select %p108, %s109, %s110
    %p114 = pneg %p108
    %p115 = scmp.eq.s32.totalorder %s10, 1
    %p116 = por %p114, %p115
    %p117 = scmp.ne.s32.totalorder %s109, %s112
    %p118 = scmp.eq.s32.totalorder %s10, 0
    %p119 = por %p117, %p118
    %p120 = scmp.ne.s32.totalorder %s109, %s112
    %p121 = scmp.eq.s32.totalorder %s15, 1
    %p122 = por %p120, %p121
    %p123 = scmp.ne.s32.totalorder %s112, %s113
    %p124 = scmp.eq.s32.totalorder %s15, 0
    %p125 = por %p123, %p124
    %p126 = scmp.ne.s32.totalorder %s112, %s113
    %p127 = scmp.eq.s32.totalorder %s16, 1
    %p128 = por %p126, %p127
    %p130 = scmp.ne.s32.totalorder %s113, %s129
    %p131 = scmp.eq.s32.totalorder %s16, 0
    %p132 = por %p130, %p131
    %p133 = scmp.le.s32.totalorder 1, %s10
    %p134 = scmp.lt.s32.totalorder %s10, 3
    %p135 = pnand %p133, %p134
    %p136 = pneg %p135
    // Predicated region
    $region9: #{cycle_discriminator.5} parent=5 // pred_check
      _
    $region10: #{cycle_discriminator.5} parent=5 // pred_check_branch
      %138 = sbr.rel (%p135) target = $region12
    $region11: #{cycle_discriminator.5} parent=5 // pred_region
      %s139 = ssub.s32 %s10, 1
      // Predicated region
      $region13: #{cycle_discriminator.5} parent=11 // pred_check
        %p140 = pneg %p57
      $region14: #{cycle_discriminator.5} parent=11 // pred_check_branch
        %142 = sbr.rel (%p140) target = $region16
      $region15: #{cycle_discriminator.5} parent=11 // pred_region
        _
      $region16: #{cycle_discriminator.5} parent=11 // pred_fallthru
        _
      // Predicated region
      $region17: #{cycle_discriminator.5} parent=11 // pred_check
        %p143 = pneg %p78
      $region18: #{cycle_discriminator.5} parent=11 // pred_check_branch
        %145 = sbr.rel (%p143) target = $region20
      $region19: #{cycle_discriminator.5} parent=11 // pred_region
        _
      $region20: #{cycle_discriminator.5} parent=11 // pred_fallthru
        _
      // Predicated region
      $region21: #{cycle_discriminator.5} parent=11 // pred_check
        %p146 = pneg %p99
      $region22: #{cycle_discriminator.5} parent=11 // pred_check_branch
        %148 = sbr.rel (%p146) target = $region24
      $region23: #{cycle_discriminator.5} parent=11 // pred_region
        _
      $region24: #{cycle_discriminator.5} parent=11 // pred_fallthru
        _
    $region12: #{cycle_discriminator.5} parent=5 // pred_fallthru
      _
    %p149 = scmp.lt.s32.totalorder %s10, 2
    // Predicated region
    $region25: #{cycle_discriminator.5} parent=5 // pred_check
      %p150 = pneg %p149
    $region26: #{cycle_discriminator.5} parent=5 // pred_check_branch
      %152 = sbr.rel (%p150) target = $region28
    $region27: #{cycle_discriminator.5} parent=5 // pred_region
      // Predicated region
      $region29: #{cycle_discriminator.5} parent=27 // pred_check
        %p153 = pneg %p30
      $region30: #{cycle_discriminator.5} parent=27 // pred_check_branch
        %155 = sbr.rel (%p153) target = $region32
      $region31: #{cycle_discriminator.5} parent=27 // pred_region
        %p156 = scmp.lt.s32.totalorder %s10, 1
        %s157 = scalar_select %p156, %s10, 1
        %s158 = smul.addr %s157, 37
        %s159 = smul.addr %s158, 4
        %s160 = scalar_lea.vmem %s0, %s159
      $region32: #{cycle_discriminator.5} parent=27 // pred_fallthru
        _
    $region28: #{cycle_discriminator.5} parent=5 // pred_fallthru
      _
    %p161 = scmp.le.s32.totalorder 1, %s10
    %p162 = scmp.lt.s32.totalorder %s10, 3
    %p163 = pnand %p161, %p162
    %p164 = pneg %p163
    // Predicated region
    $region33: #{cycle_discriminator.5} parent=5 // pred_check
      _
    $region34: #{cycle_discriminator.5} parent=5 // pred_check_branch
      %166 = sbr.rel (%p163) target = $region36
    $region35: #{cycle_discriminator.5} parent=5 // pred_region
      %s167 = ssub.s32 %s10, 1
      %p168 = scmp.lt.s32.totalorder %s15, 1
      %s169 = scalar_select %p168, %s15, 1
      %s170 = smul.addr %s169, 37
      %s171 = smul.addr %s170, 4
      %s172 = scalar_lea.vmem %s0, %s171
      %p173 = pneg %p36
      %p174 = pneg %p33
      %p175 = pneg %p57
      %p176 = pneg %p54
      %p177 = pneg %p78
      %p178 = pneg %p75
      %p179 = pneg %p99
      %p180 = pneg %p96
      %p181 = pneg %p125
      %p182 = pneg %p122
      %p183 = scmp.lt.s32.totalorder %s15, 1
      %s184 = scalar_select %p183, %s15, 1
      %s185 = smul.addr %s184, 34
      %s186 = smul.addr %s185, 4
      %s187 = scalar_lea.vmem %s4, %s186
      %p188 = scmp.lt.s32.totalorder %s15, 1
      %s189 = scalar_select %p188, %s15, 1
      %s190 = smul.addr %s189, 37
      %s191 = smul.addr %s190, 4
      %s192 = scalar_lea.vmem %s0, %s191
      %p193 = scmp.lt.s32.totalorder %s15, 1
      %s194 = scalar_select %p193, %s15, 1
      %s195 = smul.addr %s194, 34
      %s196 = smul.addr %s195, 4
      %s197 = scalar_lea.vmem %s4, %s196
      %v199 = vld [vmem:[%s192] sm:$0xf]
      %v200 = vld [vmem:[%s192 + $0x4] sm:$0xf]
      %v201 = vld [vmem:[%s192 + $0x8] sm:$0xf]
      %v202 = vld [vmem:[%s192 + $0xc] sm:$0xf]
      %v203 = vld [vmem:[%s192 + $0x10] sm:$0xf]
      %v204 = vld [vmem:[%s192 + $0x14] sm:$0xf]
      %v205 = vld [vmem:[%s192 + $0x18] sm:$0xf]
      %v206 = vld [vmem:[%s192 + $0x1c] sm:$0xf]
      %v207 = vld [vmem:[%s192 + $0x20] sm:$0xf]
      %v208 = vld [vmem:[%s192 + $0x24] sm:$0xf]
      %v209 = vld [vmem:[%s192 + $0x28] sm:$0xf]
      %v210 = vld [vmem:[%s192 + $0x2c] sm:$0xf]
      %v211 = vld [vmem:[%s192 + $0x30] sm:$0xf]
      %v212 = vld [vmem:[%s192 + $0x34] sm:$0xf]
      %v213 = vld [vmem:[%s192 + $0x38] sm:$0xf]
      %v214 = vld [vmem:[%s192 + $0x3c] sm:$0xf]
      %v215 = vld [vmem:[%s192 + $0x40] sm:$0xf]
      %v216 = vld [vmem:[%s192 + $0x44] sm:$0xf]
      %v217 = vld [vmem:[%s192 + $0x48] sm:$0xf]
      %v218 = vld [vmem:[%s192 + $0x4c] sm:$0xf]
      %v219 = vld [vmem:[%s192 + $0x50] sm:$0xf]
      %v220 = vld [vmem:[%s192 + $0x54] sm:$0xf]
      %v221 = vld [vmem:[%s192 + $0x58] sm:$0xf]
      %v222 = vld [vmem:[%s192 + $0x5c] sm:$0xf]
      %v223 = vld [vmem:[%s192 + $0x60] sm:$0xf]
      %v224 = vld [vmem:[%s192 + $0x64] sm:$0xf]
      %v225 = vld [vmem:[%s192 + $0x68] sm:$0xf]
      %v226 = vld [vmem:[%s192 + $0x6c] sm:$0xf]
      %v227 = vld [vmem:[%s192 + $0x70] sm:$0xf]
      %v228 = vld [vmem:[%s192 + $0x74] sm:$0xf]
      %v229 = vld [vmem:[%s192 + $0x78] sm:$0xf]
      %v230 = vld [vmem:[%s192 + $0x7c] sm:$0xf]
      %v231 = vld [vmem:[%s192 + $0x80] sm:$0xf]
      %v232 = vld [vmem:[%s192 + $0x84] sm:$0xf]
      %v233 = vld [vmem:[%s1] sm:$0xf]
      %v234 = vld [vmem:[%s1 + $0x4] sm:$0x3]
      %v235 = vld [vmem:[%s192 + $0x88] sm:$0x1]
      %v236 = vld [vmem:[%s1 + $0x4] sm:$0xc]
      %v237 = vld [vmem:[%s1 + $0x8] sm:$0xf]
      %v273 = vunpack.c.l.b16 %v199
      %v274 = vunpack.c.l.b16 %v200
      %v275 = vunpack.c.l.b16 %v201
      %v276 = vunpack.c.l.b16 %v202
      %v277 = vunpack.c.l.b16 %v203
      %v278 = vunpack.c.l.b16 %v204
      %v279 = vunpack.c.l.b16 %v205
      %v280 = vunpack.c.l.b16 %v206
      %v281 = vunpack.c.l.b16 %v207
      %v282 = vunpack.c.l.b16 %v208
      %v283 = vunpack.c.l.b16 %v209
      %v284 = vunpack.c.l.b16 %v210
      %v285 = vunpack.c.l.b16 %v211
      %v286 = vunpack.c.l.b16 %v212
      %v287 = vunpack.c.l.b16 %v213
      %v288 = vunpack.c.l.b16 %v214
      %v289 = vunpack.c.l.b16 %v215
      %v290 = vunpack.c.l.b16 %v216
      %v291 = vunpack.c.l.b16 %v217
      %v292 = vunpack.c.l.b16 %v218
      %v293 = vunpack.c.l.b16 %v219
      %v294 = vunpack.c.l.b16 %v220
      %v295 = vunpack.c.l.b16 %v221
      %v296 = vunpack.c.l.b16 %v222
      %v297 = vunpack.c.l.b16 %v223
      %v298 = vunpack.c.l.b16 %v224
      %v299 = vunpack.c.l.b16 %v225
      %v300 = vunpack.c.l.b16 %v226
      %v301 = vunpack.c.l.b16 %v227
      %v302 = vunpack.c.l.b16 %v228
      %v303 = vunpack.c.l.b16 %v229
      %v304 = vunpack.c.l.b16 %v230
      %v305 = vunpack.c.l.b16 %v231
      %v306 = vunpack.c.l.b16 %v232
      %v307 = vunpack.c.l.b16 %v235
      %v308 = vpack.c.b16 %v274, %v273
      %v309 = vpack.c.b16 %v276, %v275
      %v310 = vpack.c.b16 %v278, %v277
      %v311 = vpack.c.b16 %v280, %v279
      %v312 = vpack.c.b16 %v282, %v281
      %v313 = vpack.c.b16 %v284, %v283
      %v314 = vpack.c.b16 %v286, %v285
      %v315 = vpack.c.b16 %v288, %v287
      %v316 = vpack.c.b16 %v290, %v289
      %v317 = vpack.c.b16 %v292, %v291
      %v318 = vpack.c.b16 %v294, %v293
      %v319 = vpack.c.b16 %v296, %v295
      %v320 = vpack.c.b16 %v298, %v297
      %v321 = vpack.c.b16 %v300, %v299
      %v322 = vpack.c.b16 %v302, %v301
      %v323 = vpack.c.b16 %v304, %v303
      %v324 = vpack.c.b16 %v306, %v305
      %v325 = vpack.c.b16 %v307, %v307
      %vm326 = vsmask.f32 7424
      %v328 = vshrl.u32 %v308, 16
      %v330 = vshll.u32 %v308, 16
      %v332 = vrot.slane %v330, 1
      %v333 = vor.u32 %v328, %v332
      %v335 = vshll.u32 %v309, 16
      %v337 = vrot.slane %v335, 1
      %v338 = vsel %vm326, %v333, %v337
      %v339 = vshrl.u32 %v309, 16
      %v341 = vor.u32 %v339, %v337
      %v343 = vshll.u32 %v310, 16
      %v345 = vrot.slane %v343, 1
      %v346 = vsel %vm326, %v341, %v345
      %v347 = vshrl.u32 %v310, 16
      %v349 = vor.u32 %v347, %v345
      %v351 = vshll.u32 %v311, 16
      %v353 = vrot.slane %v351, 1
      %v354 = vsel %vm326, %v349, %v353
      %v355 = vshrl.u32 %v311, 16
      %v357 = vor.u32 %v355, %v353
      %v359 = vshll.u32 %v312, 16
      %v361 = vrot.slane %v359, 1
      %v362 = vsel %vm326, %v357, %v361
      %v363 = vshrl.u32 %v312, 16
      %v365 = vor.u32 %v363, %v361
      %v367 = vshll.u32 %v313, 16
      %v369 = vrot.slane %v367, 1
      %v370 = vsel %vm326, %v365, %v369
      %v371 = vshrl.u32 %v313, 16
      %v373 = vor.u32 %v371, %v369
      %v375 = vshll.u32 %v314, 16
      %v377 = vrot.slane %v375, 1
      %v378 = vsel %vm326, %v373, %v377
      %v379 = vshrl.u32 %v314, 16
      %v381 = vor.u32 %v379, %v377
      %v383 = vshll.u32 %v315, 16
      %v385 = vrot.slane %v383, 1
      %v386 = vsel %vm326, %v381, %v385
      %v387 = vshrl.u32 %v315, 16
      %v389 = vor.u32 %v387, %v385
      %v391 = vshll.u32 %v316, 16
      %v393 = vrot.slane %v391, 1
      %v394 = vsel %vm326, %v389, %v393
      %v395 = vshrl.u32 %v316, 16
      %v397 = vor.u32 %v395, %v393
      %v399 = vshll.u32 %v317, 16
      %v401 = vrot.slane %v399, 1
      %v402 = vsel %vm326, %v397, %v401
      %v403 = vshrl.u32 %v317, 16
      %v405 = vor.u32 %v403, %v401
      %v407 = vshll.u32 %v318, 16
      %v409 = vrot.slane %v407, 1
      %v410 = vsel %vm326, %v405, %v409
      %v411 = vshrl.u32 %v318, 16
      %v413 = vor.u32 %v411, %v409
      %v415 = vshll.u32 %v319, 16
      %v417 = vrot.slane %v415, 1
      %v418 = vsel %vm326, %v413, %v417
      %v419 = vshrl.u32 %v319, 16
      %v421 = vor.u32 %v419, %v417
      %v423 = vshll.u32 %v320, 16
      %v425 = vrot.slane %v423, 1
      %v426 = vsel %vm326, %v421, %v425
      %v427 = vshrl.u32 %v320, 16
      %v429 = vor.u32 %v427, %v425
      %v431 = vshll.u32 %v321, 16
      %v433 = vrot.slane %v431, 1
      %v434 = vsel %vm326, %v429, %v433
      %v435 = vshrl.u32 %v321, 16
      %v437 = vor.u32 %v435, %v433
      %v439 = vshll.u32 %v322, 16
      %v441 = vrot.slane %v439, 1
      %v442 = vsel %vm326, %v437, %v441
      %v443 = vshrl.u32 %v322, 16
      %v445 = vor.u32 %v443, %v441
      %v447 = vshll.u32 %v323, 16
      %v449 = vrot.slane %v447, 1
      %v450 = vsel %vm326, %v445, %v449
      %v451 = vshrl.u32 %v323, 16
      %v453 = vor.u32 %v451, %v449
      %v455 = vshll.u32 %v324, 16
      %v457 = vrot.slane %v455, 1
      %v458 = vsel %vm326, %v453, %v457
      %v459 = vshrl.u32 %v324, 16
      %v461 = vor.u32 %v459, %v457
      %v463 = vshll.u32 %v325, 16
      %v465 = vrot.slane %v463, 1
      %v466 = vsel %vm326, %v461, %v465
      %v469 = vunpack.c.l.b16 %v236
      %v470 = vunpack.c.l.b16 %v237
      %v471 = vpack.c.b16 %v470, %v469
      %v472 = vrot.slane %v471, 2
      %vm473 = vcmask 97280
      %v475 = vsel %vm473, %v338, 0
      %v478 = vsel %vm473, %v346, 0
      %v481 = vsel %vm473, %v354, 0
      %v484 = vsel %vm473, %v362, 0
      %v487 = vsel %vm473, %v370, 0
      %v490 = vsel %vm473, %v378, 0
      %v493 = vsel %vm473, %v386, 0
      %v496 = vsel %vm473, %v394, 0
      %v499 = vsel %vm473, %v402, 0
      %v502 = vsel %vm473, %v410, 0
      %v505 = vsel %vm473, %v418, 0
      %v508 = vsel %vm473, %v426, 0
      %v511 = vsel %vm473, %v434, 0
      %v514 = vsel %vm473, %v442, 0
      %v517 = vsel %vm473, %v450, 0
      %v520 = vsel %vm473, %v458, 0
      %v523 = vsel %vm473, %v466, 0
      %vm525 = vcmask 1045504
      %v527 = vsel %vm525, %v472, 0
      %529 = vmatprep.subr.bf16.mxu0 0
      %530 = vmatpush1.bf16.msra.mxu0 %v527
      %531 = vmatprep.subr.bf16.mxu0 0
      %532 = vmatpush1.bf16.msra.mxu0 0
      %533 = vmatprep.subr.bf16.mxu0 0
      %534 = vmatpush1.bf16.msra.mxu0 0
      %535 = vmatprep.subr.bf16.mxu0 0
      %536 = vmatpush1.bf16.msra.mxu0 0
      %537 = vmatprep.subr.bf16.mxu0 0
      %538 = vmatpush1.bf16.msra.mxu0 0
      %539 = vmatprep.subr.bf16.mxu0 0
      %540 = vmatpush1.bf16.msra.mxu0 0
      %541 = vmatprep.subr.bf16.mxu0 0
      %542 = vmatpush1.bf16.msra.mxu0 0
      %543 = vmatprep.subr.bf16.mxu0 0
      %544 = vmatpush1.bf16.msra.mxu0 0
      %545 = vmatprep.subr.bf16.mxu0 0
      %546 = vmatpush1.bf16.msra.mxu0 0
      %547 = vmatprep.subr.bf16.mxu0 0
      %548 = vmatpush1.bf16.msra.mxu0 0
      %549 = vmatprep.subr.bf16.mxu0 0
      %550 = vmatpush1.bf16.msra.mxu0 0
      %551 = vmatprep.subr.bf16.mxu0 0
      %552 = vmatpush1.bf16.msra.mxu0 0
      %553 = vmatprep.subr.bf16.mxu0 0
      %554 = vmatpush1.bf16.msra.mxu0 0
      %555 = vmatprep.subr.bf16.mxu0 0
      %556 = vmatpush1.bf16.msra.mxu0 0
      %557 = vmatprep.subr.bf16.mxu0 0
      %558 = vmatpush1.bf16.msra.mxu0 0
      %559 = vmatprep.subr.bf16.mxu0 0
      %560 = vmatpush1.bf16.msra.mxu0 0
      %561 = vmatprep.mubr.bf16.mxu0 0
      %562 = vmatmul.mubr.bf16.gmra.mrb[0].mxu0 %v475
      %v563 = vpop.f32.mrb[0].mxu0
      %v564 = vadd.f32 0.0, %v563
      %v565 = vpop.f32.mrb[0].mxu0
      %v566 = vpop.f32.mrb[0].mxu0
      %v567 = vadd.f32 0.0, %v566
      %v568 = vpop.f32.mrb[0].mxu0
      %569 = vmatprep.mubr.bf16.mxu0 0
      %570 = vmatmul.mubr.bf16.gmra.mrb[0].mxu0 %v478
      %v571 = vpop.f32.mrb[0].mxu0
      %v572 = vadd.f32 0.0, %v571
      %v573 = vpop.f32.mrb[0].mxu0
      %v574 = vpop.f32.mrb[0].mxu0
      %v575 = vadd.f32 0.0, %v574
      %v576 = vpop.f32.mrb[0].mxu0
      %577 = vmatprep.mubr.bf16.mxu0 0
      %578 = vmatmul.mubr.bf16.gmra.mrb[0].mxu0 %v481
      %v579 = vpop.f32.mrb[0].mxu0
      %v580 = vadd.f32 0.0, %v579
      %v581 = vpop.f32.mrb[0].mxu0
      %v582 = vpop.f32.mrb[0].mxu0
      %v583 = vadd.f32 0.0, %v582
      %v584 = vpop.f32.mrb[0].mxu0
      %585 = vmatprep.mubr.bf16.mxu0 0
      %586 = vmatmul.mubr.bf16.gmra.mrb[0].mxu0 %v484
      %v587 = vpop.f32.mrb[0].mxu0
      %v588 = vadd.f32 0.0, %v587
      %v589 = vpop.f32.mrb[0].mxu0
      %v590 = vpop.f32.mrb[0].mxu0
      %v591 = vadd.f32 0.0, %v590
      %v592 = vpop.f32.mrb[0].mxu0
      %593 = vmatprep.mubr.bf16.mxu0 0
      %594 = vmatmul.mubr.bf16.gmra.mrb[0].mxu0 %v487
      %v595 = vpop.f32.mrb[0].mxu0
      %v596 = vadd.f32 0.0, %v595
      %v597 = vpop.f32.mrb[0].mxu0
      %v598 = vpop.f32.mrb[0].mxu0
      %v599 = vadd.f32 0.0, %v598
      %v600 = vpop.f32.mrb[0].mxu0
      %601 = vmatprep.mubr.bf16.mxu0 0
      %602 = vmatmul.mubr.bf16.gmra.mrb[0].mxu0 %v490
      %v603 = vpop.f32.mrb[0].mxu0
      %v604 = vadd.f32 0.0, %v603
      %v605 = vpop.f32.mrb[0].mxu0
      %v606 = vpop.f32.mrb[0].mxu0
      %v607 = vadd.f32 0.0, %v606
      %v608 = vpop.f32.mrb[0].mxu0
      %609 = vmatprep.mubr.bf16.mxu0 0
      %610 = vmatmul.mubr.bf16.gmra.mrb[0].mxu0 %v493
      %v611 = vpop.f32.mrb[0].mxu0
      %v612 = vadd.f32 0.0, %v611
      %v613 = vpop.f32.mrb[0].mxu0
      %v614 = vpop.f32.mrb[0].mxu0
      %v615 = vadd.f32 0.0, %v614
      %v616 = vpop.f32.mrb[0].mxu0
      %617 = vmatprep.mubr.bf16.mxu0 0
      %618 = vmatmul.mubr.bf16.gmra.mrb[0].mxu0 %v496
      %v619 = vpop.f32.mrb[0].mxu0
      %v620 = vadd.f32 0.0, %v619
      %v621 = vpop.f32.mrb[0].mxu0
      %v622 = vpop.f32.mrb[0].mxu0
      %v623 = vadd.f32 0.0, %v622
      %v624 = vpop.f32.mrb[0].mxu0
      %625 = vmatprep.mubr.bf16.mxu0 0
      %626 = vmatmul.mubr.bf16.gmra.mrb[0].mxu0 %v499
      %v627 = vpop.f32.mrb[0].mxu0
      %v628 = vadd.f32 0.0, %v627
      %v629 = vpop.f32.mrb[0].mxu0
      %v630 = vpop.f32.mrb[0].mxu0
      %v631 = vadd.f32 0.0, %v630
      %v632 = vpop.f32.mrb[0].mxu0
      %633 = vmatprep.mubr.bf16.mxu0 0
      %634 = vmatmul.mubr.bf16.gmra.mrb[0].mxu0 %v502
      %v635 = vpop.f32.mrb[0].mxu0
      %v636 = vadd.f32 0.0, %v635
      %v637 = vpop.f32.mrb[0].mxu0
      %v638 = vpop.f32.mrb[0].mxu0
      %v639 = vadd.f32 0.0, %v638
      %v640 = vpop.f32.mrb[0].mxu0
      %641 = vmatprep.mubr.bf16.mxu0 0
      %642 = vmatmul.mubr.bf16.gmra.mrb[0].mxu0 %v505
      %v643 = vpop.f32.mrb[0].mxu0
      %v644 = vadd.f32 0.0, %v643
      %v645 = vpop.f32.mrb[0].mxu0
      %v646 = vpop.f32.mrb[0].mxu0
      %v647 = vadd.f32 0.0, %v646
      %v648 = vpop.f32.mrb[0].mxu0
      %649 = vmatprep.mubr.bf16.mxu0 0
      %650 = vmatmul.mubr.bf16.gmra.mrb[0].mxu0 %v508
      %v651 = vpop.f32.mrb[0].mxu0
      %v652 = vadd.f32 0.0, %v651
      %v653 = vpop.f32.mrb[0].mxu0
      %v654 = vpop.f32.mrb[0].mxu0
      %v655 = vadd.f32 0.0, %v654
      %v656 = vpop.f32.mrb[0].mxu0
      %657 = vmatprep.mubr.bf16.mxu0 0
      %658 = vmatmul.mubr.bf16.gmra.mrb[0].mxu0 %v511
      %v659 = vpop.f32.mrb[0].mxu0
      %v660 = vadd.f32 0.0, %v659
      %v661 = vpop.f32.mrb[0].mxu0
      %v662 = vpop.f32.mrb[0].mxu0
      %v663 = vadd.f32 0.0, %v662
      %v664 = vpop.f32.mrb[0].mxu0
      %665 = vmatprep.mubr.bf16.mxu0 0
      %666 = vmatmul.mubr.bf16.gmra.mrb[0].mxu0 %v514
      %v667 = vpop.f32.mrb[0].mxu0
      %v668 = vadd.f32 0.0, %v667
      %v669 = vpop.f32.mrb[0].mxu0
      %v670 = vpop.f32.mrb[0].mxu0
      %v671 = vadd.f32 0.0, %v670
      %v672 = vpop.f32.mrb[0].mxu0
      %673 = vmatprep.mubr.bf16.mxu0 0
      %674 = vmatmul.mubr.bf16.gmra.mrb[0].mxu0 %v517
      %v675 = vpop.f32.mrb[0].mxu0
      %v676 = vadd.f32 0.0, %v675
      %v677 = vpop.f32.mrb[0].mxu0
      %v678 = vpop.f32.mrb[0].mxu0
      %v679 = vadd.f32 0.0, %v678
      %v680 = vpop.f32.mrb[0].mxu0
      %681 = vmatprep.mubr.bf16.mxu0 0
      %682 = vmatmul.mubr.bf16.gmra.mrb[0].mxu0 %v520
      %v683 = vpop.f32.mrb[0].mxu0
      %v684 = vadd.f32 0.0, %v683
      %v685 = vpop.f32.mrb[0].mxu0
      %v686 = vpop.f32.mrb[0].mxu0
      %v687 = vadd.f32 0.0, %v686
      %v688 = vpop.f32.mrb[0].mxu0
      %689 = vmatprep.mubr.bf16.mxu0 0
      %690 = vmatmul.mubr.bf16.gmra.mrb[0].mxu0 %v523
      %v691 = vpop.f32.mrb[0].mxu0
      %v692 = vadd.f32 0.0, %v691
      %v693 = vpop.f32.mrb[0].mxu0
      %v694 = vpop.f32.mrb[0].mxu0
      %v695 = vadd.f32 0.0, %v694
      %v696 = vpop.f32.mrb[0].mxu0
      %697 = vdwg.mxu0
      %v700 = vunpack.c.l.b16 %v233
      %v701 = vunpack.c.l.b16 %v234
      %v702 = vpack.c.b16 %v701, %v700
      %v703 = vsel %vm473, %v308, 0
      %v705 = vsel %vm473, %v309, 0
      %v707 = vsel %vm473, %v310, 0
      %v709 = vsel %vm473, %v311, 0
      %v711 = vsel %vm473, %v312, 0
      %v713 = vsel %vm473, %v313, 0
      %v715 = vsel %vm473, %v314, 0
      %v717 = vsel %vm473, %v315, 0
      %v719 = vsel %vm473, %v316, 0
      %v721 = vsel %vm473, %v317, 0
      %v723 = vsel %vm473, %v318, 0
      %v725 = vsel %vm473, %v319, 0
      %v727 = vsel %vm473, %v320, 0
      %v729 = vsel %vm473, %v321, 0
      %v731 = vsel %vm473, %v322, 0
      %v733 = vsel %vm473, %v323, 0
      %v735 = vsel %vm473, %v324, 0
      %v738 = vsel %vm525, %v702, 0
      %740 = vmatprep.subr.bf16.mxu0 0
      %741 = vmatpush1.bf16.msra.mxu0 %v738
      %742 = vmatprep.subr.bf16.mxu0 0
      %743 = vmatpush1.bf16.msra.mxu0 0
      %744 = vmatprep.subr.bf16.mxu0 0
      %745 = vmatpush1.bf16.msra.mxu0 0
      %746 = vmatprep.subr.bf16.mxu0 0
      %747 = vmatpush1.bf16.msra.mxu0 0
      %748 = vmatprep.subr.bf16.mxu0 0
      %749 = vmatpush1.bf16.msra.mxu0 0
      %750 = vmatprep.subr.bf16.mxu0 0
      %751 = vmatpush1.bf16.msra.mxu0 0
      %752 = vmatprep.subr.bf16.mxu0 0
      %753 = vmatpush1.bf16.msra.mxu0 0
      %754 = vmatprep.subr.bf16.mxu0 0
      %755 = vmatpush1.bf16.msra.mxu0 0
      %756 = vmatprep.subr.bf16.mxu0 0
      %757 = vmatpush1.bf16.msra.mxu0 0
      %758 = vmatprep.subr.bf16.mxu0 0
      %759 = vmatpush1.bf16.msra.mxu0 0
      %760 = vmatprep.subr.bf16.mxu0 0
      %761 = vmatpush1.bf16.msra.mxu0 0
      %762 = vmatprep.subr.bf16.mxu0 0
      %763 = vmatpush1.bf16.msra.mxu0 0
      %764 = vmatprep.subr.bf16.mxu0 0
      %765 = vmatpush1.bf16.msra.mxu0 0
      %766 = vmatprep.subr.bf16.mxu0 0
      %767 = vmatpush1.bf16.msra.mxu0 0
      %768 = vmatprep.subr.bf16.mxu0 0
      %769 = vmatpush1.bf16.msra.mxu0 0
      %770 = vmatprep.subr.bf16.mxu0 0
      %771 = vmatpush1.bf16.msra.mxu0 0
      %772 = vmatprep.mubr.bf16.mxu0 0
      %773 = vmatmul.mubr.bf16.gmra.mrb[0].mxu0 %v703
      %v774 = vpop.f32.mrb[0].mxu0
      %v775 = vadd.f32 %v564, %v774
      %v776 = vpop.f32.mrb[0].mxu0
      %v777 = vpop.f32.mrb[0].mxu0
      %v778 = vadd.f32 %v567, %v777
      %v779 = vpop.f32.mrb[0].mxu0
      %780 = vmatprep.mubr.bf16.mxu0 0
      %781 = vmatmul.mubr.bf16.gmra.mrb[0].mxu0 %v705
      %v782 = vpop.f32.mrb[0].mxu0
      %v783 = vadd.f32 %v572, %v782
      %v784 = vpop.f32.mrb[0].mxu0
      %v785 = vpop.f32.mrb[0].mxu0
      %v786 = vadd.f32 %v575, %v785
      %v787 = vpop.f32.mrb[0].mxu0
      %788 = vmatprep.mubr.bf16.mxu0 0
      %789 = vmatmul.mubr.bf16.gmra.mrb[0].mxu0 %v707
      %v790 = vpop.f32.mrb[0].mxu0
      %v791 = vadd.f32 %v580, %v790
      %v792 = vpop.f32.mrb[0].mxu0
      %v793 = vpop.f32.mrb[0].mxu0
      %v794 = vadd.f32 %v583, %v793
      %v795 = vpop.f32.mrb[0].mxu0
      %796 = vmatprep.mubr.bf16.mxu0 0
      %797 = vmatmul.mubr.bf16.gmra.mrb[0].mxu0 %v709
      %v798 = vpop.f32.mrb[0].mxu0
      %v799 = vadd.f32 %v588, %v798
      %v800 = vpop.f32.mrb[0].mxu0
      %v801 = vpop.f32.mrb[0].mxu0
      %v802 = vadd.f32 %v591, %v801
      %v803 = vpop.f32.mrb[0].mxu0
      %804 = vmatprep.mubr.bf16.mxu0 0
      %805 = vmatmul.mubr.bf16.gmra.mrb[0].mxu0 %v711
      %v806 = vpop.f32.mrb[0].mxu0
      %v807 = vadd.f32 %v596, %v806
      %v808 = vpop.f32.mrb[0].mxu0
      %v809 = vpop.f32.mrb[0].mxu0
      %v810 = vadd.f32 %v599, %v809
      %v811 = vpop.f32.mrb[0].mxu0
      %812 = vmatprep.mubr.bf16.mxu0 0
      %813 = vmatmul.mubr.bf16.gmra.mrb[0].mxu0 %v713
      %v814 = vpop.f32.mrb[0].mxu0
      %v815 = vadd.f32 %v604, %v814
      %v816 = vpop.f32.mrb[0].mxu0
      %v817 = vpop.f32.mrb[0].mxu0
      %v818 = vadd.f32 %v607, %v817
      %v819 = vpop.f32.mrb[0].mxu0
      %820 = vmatprep.mubr.bf16.mxu0 0
      %821 = vmatmul.mubr.bf16.gmra.mrb[0].mxu0 %v715
      %v822 = vpop.f32.mrb[0].mxu0
      %v823 = vadd.f32 %v612, %v822
      %v824 = vpop.f32.mrb[0].mxu0
      %v825 = vpop.f32.mrb[0].mxu0
      %v826 = vadd.f32 %v615, %v825
      %v827 = vpop.f32.mrb[0].mxu0
      %828 = vmatprep.mubr.bf16.mxu0 0
      %829 = vmatmul.mubr.bf16.gmra.mrb[0].mxu0 %v717
      %v830 = vpop.f32.mrb[0].mxu0
      %v831 = vadd.f32 %v620, %v830
      %v832 = vpop.f32.mrb[0].mxu0
      %v833 = vpop.f32.mrb[0].mxu0
      %v834 = vadd.f32 %v623, %v833
      %v835 = vpop.f32.mrb[0].mxu0
      %836 = vmatprep.mubr.bf16.mxu0 0
      %837 = vmatmul.mubr.bf16.gmra.mrb[0].mxu0 %v719
      %v838 = vpop.f32.mrb[0].mxu0
      %v839 = vadd.f32 %v628, %v838
      %v840 = vpop.f32.mrb[0].mxu0
      %v841 = vpop.f32.mrb[0].mxu0
      %v842 = vadd.f32 %v631, %v841
      %v843 = vpop.f32.mrb[0].mxu0
      %844 = vmatprep.mubr.bf16.mxu0 0
      %845 = vmatmul.mubr.bf16.gmra.mrb[0].mxu0 %v721
      %v846 = vpop.f32.mrb[0].mxu0
      %v847 = vadd.f32 %v636, %v846
      %v848 = vpop.f32.mrb[0].mxu0
      %v849 = vpop.f32.mrb[0].mxu0
      %v850 = vadd.f32 %v639, %v849
      %v851 = vpop.f32.mrb[0].mxu0
      %852 = vmatprep.mubr.bf16.mxu0 0
      %853 = vmatmul.mubr.bf16.gmra.mrb[0].mxu0 %v723
      %v854 = vpop.f32.mrb[0].mxu0
      %v855 = vadd.f32 %v644, %v854
      %v856 = vpop.f32.mrb[0].mxu0
      %v857 = vpop.f32.mrb[0].mxu0
      %v858 = vadd.f32 %v647, %v857
      %v859 = vpop.f32.mrb[0].mxu0
      %860 = vmatprep.mubr.bf16.mxu0 0
      %861 = vmatmul.mubr.bf16.gmra.mrb[0].mxu0 %v725
      %v862 = vpop.f32.mrb[0].mxu0
      %v863 = vadd.f32 %v652, %v862
      %v864 = vpop.f32.mrb[0].mxu0
      %v865 = vpop.f32.mrb[0].mxu0
      %v866 = vadd.f32 %v655, %v865
      %v867 = vpop.f32.mrb[0].mxu0
      %868 = vmatprep.mubr.bf16.mxu0 0
      %869 = vmatmul.mubr.bf16.gmra.mrb[0].mxu0 %v727
      %v870 = vpop.f32.mrb[0].mxu0
      %v871 = vadd.f32 %v660, %v870
      %v872 = vpop.f32.mrb[0].mxu0
      %v873 = vpop.f32.mrb[0].mxu0
      %v874 = vadd.f32 %v663, %v873
      %v875 = vpop.f32.mrb[0].mxu0
      %876 = vmatprep.mubr.bf16.mxu0 0
      %877 = vmatmul.mubr.bf16.gmra.mrb[0].mxu0 %v729
      %v878 = vpop.f32.mrb[0].mxu0
      %v879 = vadd.f32 %v668, %v878
      %v880 = vpop.f32.mrb[0].mxu0
      %v881 = vpop.f32.mrb[0].mxu0
      %v882 = vadd.f32 %v671, %v881
      %v883 = vpop.f32.mrb[0].mxu0
      %884 = vmatprep.mubr.bf16.mxu0 0
      %885 = vmatmul.mubr.bf16.gmra.mrb[0].mxu0 %v731
      %v886 = vpop.f32.mrb[0].mxu0
      %v887 = vadd.f32 %v676, %v886
      %v888 = vpop.f32.mrb[0].mxu0
      %v889 = vpop.f32.mrb[0].mxu0
      %v890 = vadd.f32 %v679, %v889
      %v891 = vpop.f32.mrb[0].mxu0
      %892 = vmatprep.mubr.bf16.mxu0 0
      %893 = vmatmul.mubr.bf16.gmra.mrb[0].mxu0 %v733
      %v894 = vpop.f32.mrb[0].mxu0
      %v895 = vadd.f32 %v684, %v894
      %v896 = vpop.f32.mrb[0].mxu0
      %v897 = vpop.f32.mrb[0].mxu0
      %v898 = vadd.f32 %v687, %v897
      %v899 = vpop.f32.mrb[0].mxu0
      %900 = vmatprep.mubr.bf16.mxu0 0
      %901 = vmatmul.mubr.bf16.gmra.mrb[0].mxu0 %v735
      %v902 = vpop.f32.mrb[0].mxu0
      %v903 = vadd.f32 %v692, %v902
      %v904 = vpop.f32.mrb[0].mxu0
      %v905 = vpop.f32.mrb[0].mxu0
      %v906 = vadd.f32 %v695, %v905
      %v907 = vpop.f32.mrb[0].mxu0
      %908 = vdwg.mxu0
      %v909 = vld [vmem:[%s192 + $0x8] sm:$0xf]
      %v910 = vld [vmem:[%s192 + $0xc] sm:$0xf]
      %v911 = vld [vmem:[%s192 + $0x10] sm:$0xf]
      %v912 = vld [vmem:[%s192 + $0x14] sm:$0xf]
      %v913 = vld [vmem:[%s192 + $0x18] sm:$0xf]
      %v914 = vld [vmem:[%s192 + $0x1c] sm:$0xf]
      %v915 = vld [vmem:[%s192 + $0x20] sm:$0xf]
      %v916 = vld [vmem:[%s192 + $0x24] sm:$0xf]
      %v917 = vld [vmem:[%s192 + $0x28] sm:$0xf]
      %v918 = vld [vmem:[%s192 + $0x2c] sm:$0xf]
      %v919 = vld [vmem:[%s192 + $0x30] sm:$0xf]
      %v920 = vld [vmem:[%s192 + $0x34] sm:$0xf]
      %v921 = vld [vmem:[%s192 + $0x38] sm:$0xf]
      %v922 = vld [vmem:[%s192 + $0x3c] sm:$0xf]
      %v923 = vld [vmem:[%s192 + $0x40] sm:$0xf]
      %v924 = vld [vmem:[%s192 + $0x44] sm:$0xf]
      %v925 = vld [vmem:[%s192 + $0x48] sm:$0xf]
      %v926 = vld [vmem:[%s192 + $0x4c] sm:$0xf]
      %v927 = vld [vmem:[%s192 + $0x50] sm:$0xf]
      %v928 = vld [vmem:[%s192 + $0x54] sm:$0xf]
      %v929 = vld [vmem:[%s192 + $0x58] sm:$0xf]
      %v930 = vld [vmem:[%s192 + $0x5c] sm:$0xf]
      %v931 = vld [vmem:[%s192 + $0x60] sm:$0xf]
      %v932 = vld [vmem:[%s192 + $0x64] sm:$0xf]
      %v933 = vld [vmem:[%s192 + $0x68] sm:$0xf]
      %v934 = vld [vmem:[%s192 + $0x6c] sm:$0xf]
      %v935 = vld [vmem:[%s192 + $0x70] sm:$0xf]
      %v936 = vld [vmem:[%s192 + $0x74] sm:$0xf]
      %v937 = vld [vmem:[%s192 + $0x78] sm:$0xf]
      %v938 = vld [vmem:[%s192 + $0x7c] sm:$0xf]
      %v939 = vld [vmem:[%s192 + $0x80] sm:$0xf]
      %v940 = vld [vmem:[%s192 + $0x84] sm:$0xf]
      %v941 = vld [vmem:[%s192 + $0x88] sm:$0xf]
      %v942 = vld [vmem:[%s192 + $0x8c] sm:$0xf]
      %v943 = vld [vmem:[%s192 + $0x90] sm:$0x1]
      %v944 = vld [vmem:[%s1 + $0xc] sm:$0xf]
      %v945 = vld [vmem:[%s1 + $0x10] sm:$0x3]
      %v981 = vunpack.c.l.b16 %v909
      %v982 = vunpack.c.l.b16 %v910
      %v983 = vunpack.c.l.b16 %v911
      %v984 = vunpack.c.l.b16 %v912
      %v985 = vunpack.c.l.b16 %v913
      %v986 = vunpack.c.l.b16 %v914
      %v987 = vunpack.c.l.b16 %v915
      %v988 = vunpack.c.l.b16 %v916
      %v989 = vunpack.c.l.b16 %v917
      %v990 = vunpack.c.l.b16 %v918
      %v991 = vunpack.c.l.b16 %v919
      %v992 = vunpack.c.l.b16 %v920
      %v993 = vunpack.c.l.b16 %v921
      %v994 = vunpack.c.l.b16 %v922
      %v995 = vunpack.c.l.b16 %v923
      %v996 = vunpack.c.l.b16 %v924
      %v997 = vunpack.c.l.b16 %v925
      %v998 = vunpack.c.l.b16 %v926
      %v999 = vunpack.c.l.b16 %v927
      %v1000 = vunpack.c.l.b16 %v928
      %v1001 = vunpack.c.l.b16 %v929
      %v1002 = vunpack.c.l.b16 %v930
      %v1003 = vunpack.c.l.b16 %v931
      %v1004 = vunpack.c.l.b16 %v932
      %v1005 = vunpack.c.l.b16 %v933
      %v1006 = vunpack.c.l.b16 %v934
      %v1007 = vunpack.c.l.b16 %v935
      %v1008 = vunpack.c.l.b16 %v936
      %v1009 = vunpack.c.l.b16 %v937
      %v1010 = vunpack.c.l.b16 %v938
      %v1011 = vunpack.c.l.b16 %v939
      %v1012 = vunpack.c.l.b16 %v940
      %v1013 = vunpack.c.l.b16 %v941
      %v1014 = vunpack.c.l.b16 %v942
      %v1015 = vunpack.c.l.b16 %v943
      %v1016 = vpack.c.b16 %v982, %v981
      %v1017 = vpack.c.b16 %v984, %v983
      %v1018 = vpack.c.b16 %v986, %v985
      %v1019 = vpack.c.b16 %v988, %v987
      %v1020 = vpack.c.b16 %v990, %v989
      %v1021 = vpack.c.b16 %v992, %v991
      %v1022 = vpack.c.b16 %v994, %v993
      %v1023 = vpack.c.b16 %v996, %v995
      %v1024 = vpack.c.b16 %v998, %v997
      %v1025 = vpack.c.b16 %v1000, %v999
      %v1026 = vpack.c.b16 %v1002, %v1001
      %v1027 = vpack.c.b16 %v1004, %v1003
      %v1028 = vpack.c.b16 %v1006, %v1005
      %v1029 = vpack.c.b16 %v1008, %v1007
      %v1030 = vpack.c.b16 %v1010, %v1009
      %v1031 = vpack.c.b16 %v1012, %v1011
      %v1032 = vpack.c.b16 %v1014, %v1013
      %v1033 = vpack.c.b16 %v1015, %v1015
      %v1035 = vshrl.u32 %v1016, 16
      %v1037 = vshll.u32 %v1016, 16
      %v1039 = vrot.slane %v1037, 1
      %v1040 = vor.u32 %v1035, %v1039
      %v1042 = vshll.u32 %v1017, 16
      %v1044 = vrot.slane %v1042, 1
      %v1045 = vsel %vm326, %v1040, %v1044
      %v1046 = vshrl.u32 %v1017, 16
      %v1048 = vor.u32 %v1046, %v1044
      %v1050 = vshll.u32 %v1018, 16
      %v1052 = vrot.slane %v1050, 1
      %v1053 = vsel %vm326, %v1048, %v1052
      %v1054 = vshrl.u32 %v1018, 16
      %v1056 = vor.u32 %v1054, %v1052
      %v1058 = vshll.u32 %v1019, 16
      %v1060 = vrot.slane %v1058, 1
      %v1061 = vsel %vm326, %v1056, %v1060
      %v1062 = vshrl.u32 %v1019, 16
      %v1064 = vor.u32 %v1062, %v1060
      %v1066 = vshll.u32 %v1020, 16
      %v1068 = vrot.slane %v1066, 1
      %v1069 = vsel %vm326, %v1064, %v1068
      %v1070 = vshrl.u32 %v1020, 16
      %v1072 = vor.u32 %v1070, %v1068
      %v1074 = vshll.u32 %v1021, 16
      %v1076 = vrot.slane %v1074, 1
      %v1077 = vsel %vm326, %v1072, %v1076
      %v1078 = vshrl.u32 %v1021, 16
      %v1080 = vor.u32 %v1078, %v1076
      %v1082 = vshll.u32 %v1022, 16
      %v1084 = vrot.slane %v1082, 1
      %v1085 = vsel %vm326, %v1080, %v1084
      %v1086 = vshrl.u32 %v1022, 16
      %v1088 = vor.u32 %v1086, %v1084
      %v1090 = vshll.u32 %v1023, 16
      %v1092 = vrot.slane %v1090, 1
      %v1093 = vsel %vm326, %v1088, %v1092
      %v1094 = vshrl.u32 %v1023, 16
      %v1096 = vor.u32 %v1094, %v1092
      %v1098 = vshll.u32 %v1024, 16
      %v1100 = vrot.slane %v1098, 1
      %v1101 = vsel %vm326, %v1096, %v1100
      %v1102 = vshrl.u32 %v1024, 16
      %v1104 = vor.u32 %v1102, %v1100
      %v1106 = vshll.u32 %v1025, 16
      %v1108 = vrot.slane %v1106, 1
      %v1109 = vsel %vm326, %v1104, %v1108
      %v1110 = vshrl.u32 %v1025, 16
      %v1112 = vor.u32 %v1110, %v1108
      %v1114 = vshll.u32 %v1026, 16
      %v1116 = vrot.slane %v1114, 1
      %v1117 = vsel %vm326, %v1112, %v1116
      %v1118 = vshrl.u32 %v1026, 16
      %v1120 = vor.u32 %v1118, %v1116
      %v1122 = vshll.u32 %v1027, 16
      %v1124 = vrot.slane %v1122, 1
      %v1125 = vsel %vm326, %v1120, %v1124
      %v1126 = vshrl.u32 %v1027, 16
      %v1128 = vor.u32 %v1126, %v1124
      %v1130 = vshll.u32 %v1028, 16
      %v1132 = vrot.slane %v1130, 1
      %v1133 = vsel %vm326, %v1128, %v1132
      %v1134 = vshrl.u32 %v1028, 16
      %v1136 = vor.u32 %v1134, %v1132
      %v1138 = vshll.u32 %v1029, 16
      %v1140 = vrot.slane %v1138, 1
      %v1141 = vsel %vm326, %v1136, %v1140
      %v1142 = vshrl.u32 %v1029, 16
      %v1144 = vor.u32 %v1142, %v1140
      %v1146 = vshll.u32 %v1030, 16
      %v1148 = vrot.slane %v1146, 1
      %v1149 = vsel %vm326, %v1144, %v1148
      %v1150 = vshrl.u32 %v1030, 16
      %v1152 = vor.u32 %v1150, %v1148
      %v1154 = vshll.u32 %v1031, 16
      %v1156 = vrot.slane %v1154, 1
      %v1157 = vsel %vm326, %v1152, %v1156
      %v1158 = vshrl.u32 %v1031, 16
      %v1160 = vor.u32 %v1158, %v1156
      %v1162 = vshll.u32 %v1032, 16
      %v1164 = vrot.slane %v1162, 1
      %v1165 = vsel %vm326, %v1160, %v1164
      %v1166 = vshrl.u32 %v1032, 16
      %v1168 = vor.u32 %v1166, %v1164
      %v1170 = vshll.u32 %v1033, 16
      %v1172 = vrot.slane %v1170, 1
      %v1173 = vsel %vm326, %v1168, %v1172
      %v1176 = vunpack.c.l.b16 %v944
      %v1177 = vunpack.c.l.b16 %v945
      %v1178 = vpack.c.b16 %v1177, %v1176
      %v1180 = vsel %vm473, %v1045, 0
      %v1183 = vsel %vm473, %v1053, 0
      %v1186 = vsel %vm473, %v1061, 0
      %v1189 = vsel %vm473, %v1069, 0
      %v1192 = vsel %vm473, %v1077, 0
      %v1195 = vsel %vm473, %v1085, 0
      %v1198 = vsel %vm473, %v1093, 0
      %v1201 = vsel %vm473, %v1101, 0
      %v1204 = vsel %vm473, %v1109, 0
      %v1207 = vsel %vm473, %v1117, 0
      %v1210 = vsel %vm473, %v1125, 0
      %v1213 = vsel %vm473, %v1133, 0
      %v1216 = vsel %vm473, %v1141, 0
      %v1219 = vsel %vm473, %v1149, 0
      %v1222 = vsel %vm473, %v1157, 0
      %v1225 = vsel %vm473, %v1165, 0
      %v1228 = vsel %vm473, %v1173, 0
      %v1231 = vsel %vm525, %v1178, 0
      %1233 = vmatprep.subr.bf16.mxu0 0
      %1234 = vmatpush1.bf16.msra.mxu0 %v1231
      %1235 = vmatprep.subr.bf16.mxu0 0
      %1236 = vmatpush1.bf16.msra.mxu0 0
      %1237 = vmatprep.subr.bf16.mxu0 0
      %1238 = vmatpush1.bf16.msra.mxu0 0
      %1239 = vmatprep.subr.bf16.mxu0 0
      %1240 = vmatpush1.bf16.msra.mxu0 0
      %1241 = vmatprep.subr.bf16.mxu0 0
      %1242 = vmatpush1.bf16.msra.mxu0 0
      %1243 = vmatprep.subr.bf16.mxu0 0
      %1244 = vmatpush1.bf16.msra.mxu0 0
      %1245 = vmatprep.subr.bf16.mxu0 0
      %1246 = vmatpush1.bf16.msra.mxu0 0
      %1247 = vmatprep.subr.bf16.mxu0 0
      %1248 = vmatpush1.bf16.msra.mxu0 0
      %1249 = vmatprep.subr.bf16.mxu0 0
      %1250 = vmatpush1.bf16.msra.mxu0 0
      %1251 = vmatprep.subr.bf16.mxu0 0
      %1252 = vmatpush1.bf16.msra.mxu0 0
      %1253 = vmatprep.subr.bf16.mxu0 0
      %1254 = vmatpush1.bf16.msra.mxu0 0
      %1255 = vmatprep.subr.bf16.mxu0 0
      %1256 = vmatpush1.bf16.msra.mxu0 0
      %1257 = vmatprep.subr.bf16.mxu0 0
      %1258 = vmatpush1.bf16.msra.mxu0 0
      %1259 = vmatprep.subr.bf16.mxu0 0
      %1260 = vmatpush1.bf16.msra.mxu0 0
      %1261 = vmatprep.subr.bf16.mxu0 0
      %1262 = vmatpush1.bf16.msra.mxu0 0
      %1263 = vmatprep.subr.bf16.mxu0 0
      %1264 = vmatpush1.bf16.msra.mxu0 0
      %1265 = vmatprep.mubr.bf16.mxu0 0
      %1266 = vmatmul.mubr.bf16.gmra.mrb[0].mxu0 %v1180
      %v1267 = vpop.f32.mrb[0].mxu0
      %v1268 = vadd.f32 0.0, %v1267
      %v1269 = vpop.f32.mrb[0].mxu0
      %v1270 = vpop.f32.mrb[0].mxu0
      %v1271 = vadd.f32 0.0, %v1270
      %v1272 = vpop.f32.mrb[0].mxu0
      %1273 = vmatprep.mubr.bf16.mxu0 0
      %1274 = vmatmul.mubr.bf16.gmra.mrb[0].mxu0 %v1183
      %v1275 = vpop.f32.mrb[0].mxu0
      %v1276 = vadd.f32 0.0, %v1275
      %v1277 = vpop.f32.mrb[0].mxu0
      %v1278 = vpop.f32.mrb[0].mxu0
      %v1279 = vadd.f32 0.0, %v1278
      %v1280 = vpop.f32.mrb[0].mxu0
      %1281 = vmatprep.mubr.bf16.mxu0 0
      %1282 = vmatmul.mubr.bf16.gmra.mrb[0].mxu0 %v1186
      %v1283 = vpop.f32.mrb[0].mxu0
      %v1284 = vadd.f32 0.0, %v1283
      %v1285 = vpop.f32.mrb[0].mxu0
      %v1286 = vpop.f32.mrb[0].mxu0
      %v1287 = vadd.f32 0.0, %v1286
      %v1288 = vpop.f32.mrb[0].mxu0
      %1289 = vmatprep.mubr.bf16.mxu0 0
      %1290 = vmatmul.mubr.bf16.gmra.mrb[0].mxu0 %v1189
      %v1291 = vpop.f32.mrb[0].mxu0
      %v1292 = vadd.f32 0.0, %v1291
      %v1293 = vpop.f32.mrb[0].mxu0
      %v1294 = vpop.f32.mrb[0].mxu0
      %v1295 = vadd.f32 0.0, %v1294
      %v1296 = vpop.f32.mrb[0].mxu0
      %1297 = vmatprep.mubr.bf16.mxu0 0
      %1298 = vmatmul.mubr.bf16.gmra.mrb[0].mxu0 %v1192
      %v1299 = vpop.f32.mrb[0].mxu0
      %v1300 = vadd.f32 0.0, %v1299
      %v1301 = vpop.f32.mrb[0].mxu0
      %v1302 = vpop.f32.mrb[0].mxu0
      %v1303 = vadd.f32 0.0, %v1302
      %v1304 = vpop.f32.mrb[0].mxu0
      %1305 = vmatprep.mubr.bf16.mxu0 0
      %1306 = vmatmul.mubr.bf16.gmra.mrb[0].mxu0 %v1195
      %v1307 = vpop.f32.mrb[0].mxu0
      %v1308 = vadd.f32 0.0, %v1307
      %v1309 = vpop.f32.mrb[0].mxu0
      %v1310 = vpop.f32.mrb[0].mxu0
      %v1311 = vadd.f32 0.0, %v1310
      %v1312 = vpop.f32.mrb[0].mxu0
      %1313 = vmatprep.mubr.bf16.mxu0 0
      %1314 = vmatmul.mubr.bf16.gmra.mrb[0].mxu0 %v1198
      %v1315 = vpop.f32.mrb[0].mxu0
      %v1316 = vadd.f32 0.0, %v1315
      %v1317 = vpop.f32.mrb[0].mxu0
      %v1318 = vpop.f32.mrb[0].mxu0
      %v1319 = vadd.f32 0.0, %v1318
      %v1320 = vpop.f32.mrb[0].mxu0
      %1321 = vmatprep.mubr.bf16.mxu0 0
      %1322 = vmatmul.mubr.bf16.gmra.mrb[0].mxu0 %v1201
      %v1323 = vpop.f32.mrb[0].mxu0
      %v1324 = vadd.f32 0.0, %v1323
      %v1325 = vpop.f32.mrb[0].mxu0
      %v1326 = vpop.f32.mrb[0].mxu0
      %v1327 = vadd.f32 0.0, %v1326
      %v1328 = vpop.f32.mrb[0].mxu0
      %1329 = vmatprep.mubr.bf16.mxu0 0
      %1330 = vmatmul.mubr.bf16.gmra.mrb[0].mxu0 %v1204
      %v1331 = vpop.f32.mrb[0].mxu0
      %v1332 = vadd.f32 0.0, %v1331
      %v1333 = vpop.f32.mrb[0].mxu0
      %v1334 = vpop.f32.mrb[0].mxu0
      %v1335 = vadd.f32 0.0, %v1334
      %v1336 = vpop.f32.mrb[0].mxu0
      %1337 = vmatprep.mubr.bf16.mxu0 0
      %1338 = vmatmul.mubr.bf16.gmra.mrb[0].mxu0 %v1207
      %v1339 = vpop.f32.mrb[0].mxu0
      %v1340 = vadd.f32 0.0, %v1339
      %v1341 = vpop.f32.mrb[0].mxu0
      %v1342 = vpop.f32.mrb[0].mxu0
      %v1343 = vadd.f32 0.0, %v1342
      %v1344 = vpop.f32.mrb[0].mxu0
      %1345 = vmatprep.mubr.bf16.mxu0 0
      %1346 = vmatmul.mubr.bf16.gmra.mrb[0].mxu0 %v1210
      %v1347 = vpop.f32.mrb[0].mxu0
      %v1348 = vadd.f32 0.0, %v1347
      %v1349 = vpop.f32.mrb[0].mxu0
      %v1350 = vpop.f32.mrb[0].mxu0
      %v1351 = vadd.f32 0.0, %v1350
      %v1352 = vpop.f32.mrb[0].mxu0
      %1353 = vmatprep.mubr.bf16.mxu0 0
      %1354 = vmatmul.mubr.bf16.gmra.mrb[0].mxu0 %v1213
      %v1355 = vpop.f32.mrb[0].mxu0
      %v1356 = vadd.f32 0.0, %v1355
      %v1357 = vpop.f32.mrb[0].mxu0
      %v1358 = vpop.f32.mrb[0].mxu0
      %v1359 = vadd.f32 0.0, %v1358
      %v1360 = vpop.f32.mrb[0].mxu0
      %1361 = vmatprep.mubr.bf16.mxu0 0
      %1362 = vmatmul.mubr.bf16.gmra.mrb[0].mxu0 %v1216
      %v1363 = vpop.f32.mrb[0].mxu0
      %v1364 = vadd.f32 0.0, %v1363
      %v1365 = vpop.f32.mrb[0].mxu0
      %v1366 = vpop.f32.mrb[0].mxu0
      %v1367 = vadd.f32 0.0, %v1366
      %v1368 = vpop.f32.mrb[0].mxu0
      %1369 = vmatprep.mubr.bf16.mxu0 0
      %1370 = vmatmul.mubr.bf16.gmra.mrb[0].mxu0 %v1219
      %v1371 = vpop.f32.mrb[0].mxu0
      %v1372 = vadd.f32 0.0, %v1371
      %v1373 = vpop.f32.mrb[0].mxu0
      %v1374 = vpop.f32.mrb[0].mxu0
      %v1375 = vadd.f32 0.0, %v1374
      %v1376 = vpop.f32.mrb[0].mxu0
      %1377 = vmatprep.mubr.bf16.mxu0 0
      %1378 = vmatmul.mubr.bf16.gmra.mrb[0].mxu0 %v1222
      %v1379 = vpop.f32.mrb[0].mxu0
      %v1380 = vadd.f32 0.0, %v1379
      %v1381 = vpop.f32.mrb[0].mxu0
      %v1382 = vpop.f32.mrb[0].mxu0
      %v1383 = vadd.f32 0.0, %v1382
      %v1384 = vpop.f32.mrb[0].mxu0
      %1385 = vmatprep.mubr.bf16.mxu0 0
      %1386 = vmatmul.mubr.bf16.gmra.mrb[0].mxu0 %v1225
      %v1387 = vpop.f32.mrb[0].mxu0
      %v1388 = vadd.f32 0.0, %v1387
      %v1389 = vpop.f32.mrb[0].mxu0
      %v1390 = vpop.f32.mrb[0].mxu0
      %v1391 = vadd.f32 0.0, %v1390
      %v1392 = vpop.f32.mrb[0].mxu0
      %1393 = vmatprep.mubr.bf16.mxu0 0
      %1394 = vmatmul.mubr.bf16.gmra.mrb[0].mxu0 %v1228
      %v1395 = vpop.f32.mrb[0].mxu0
      %v1396 = vadd.f32 0.0, %v1395
      %v1397 = vpop.f32.mrb[0].mxu0
      %v1398 = vpop.f32.mrb[0].mxu0
      %v1399 = vadd.f32 0.0, %v1398
      %v1400 = vpop.f32.mrb[0].mxu0
      %1401 = vdwg.mxu0
      %v1402 = vadd.f32 %v775, %v1268
      %v1403 = vadd.f32 %v778, %v1271
      %v1404 = vadd.f32 %v783, %v1276
      %v1405 = vadd.f32 %v786, %v1279
      %v1406 = vadd.f32 %v791, %v1284
      %v1407 = vadd.f32 %v794, %v1287
      %v1408 = vadd.f32 %v799, %v1292
      %v1409 = vadd.f32 %v802, %v1295
      %v1410 = vadd.f32 %v807, %v1300
      %v1411 = vadd.f32 %v810, %v1303
      %v1412 = vadd.f32 %v815, %v1308
      %v1413 = vadd.f32 %v818, %v1311
      %v1414 = vadd.f32 %v823, %v1316
      %v1415 = vadd.f32 %v826, %v1319
      %v1416 = vadd.f32 %v831, %v1324
      %v1417 = vadd.f32 %v834, %v1327
      %v1418 = vadd.f32 %v839, %v1332
      %v1419 = vadd.f32 %v842, %v1335
      %v1420 = vadd.f32 %v847, %v1340
      %v1421 = vadd.f32 %v850, %v1343
      %v1422 = vadd.f32 %v855, %v1348
      %v1423 = vadd.f32 %v858, %v1351
      %v1424 = vadd.f32 %v863, %v1356
      %v1425 = vadd.f32 %v866, %v1359
      %v1426 = vadd.f32 %v871, %v1364
      %v1427 = vadd.f32 %v874, %v1367
      %v1428 = vadd.f32 %v879, %v1372
      %v1429 = vadd.f32 %v882, %v1375
      %v1430 = vadd.f32 %v887, %v1380
      %v1431 = vadd.f32 %v890, %v1383
      %v1432 = vadd.f32 %v895, %v1388
      %v1433 = vadd.f32 %v898, %v1391
      %v1434 = vadd.f32 %v903, %v1396
      %v1435 = vadd.f32 %v906, %v1399
      %v1436 = vld [vmem:[%s192 + $0x8] sm:$0xe]
      %v1437 = vld [vmem:[%s1 + $0x10] sm:$0xc]
      %v1438 = vld [vmem:[%s1 + $0x14] sm:$0xf]
      %v1440 = vunpack.c.l.b16 %v1436
      %v1441 = vpack.c.b16 %v982, %v1440
      %vm1442 = vcmask 1046528
      %v1443 = vrot.slane %v1441, 1
      %v1444 = vrot.slane %v1017, 1
      %v1445 = vsel %vm1442, %v1443, %v1444
      %v1446 = vrot.slane %v1018, 1
      %v1447 = vsel %vm1442, %v1444, %v1446
      %v1448 = vrot.slane %v1019, 1
      %v1449 = vsel %vm1442, %v1446, %v1448
      %v1450 = vrot.slane %v1020, 1
      %v1451 = vsel %vm1442, %v1448, %v1450
      %v1452 = vrot.slane %v1021, 1
      %v1453 = vsel %vm1442, %v1450, %v1452
      %v1454 = vrot.slane %v1022, 1
      %v1455 = vsel %vm1442, %v1452, %v1454
      %v1456 = vrot.slane %v1023, 1
      %v1457 = vsel %vm1442, %v1454, %v1456
      %v1458 = vrot.slane %v1024, 1
      %v1459 = vsel %vm1442, %v1456, %v1458
      %v1460 = vrot.slane %v1025, 1
      %v1461 = vsel %vm1442, %v1458, %v1460
      %v1462 = vrot.slane %v1026, 1
      %v1463 = vsel %vm1442, %v1460, %v1462
      %v1464 = vrot.slane %v1027, 1
      %v1465 = vsel %vm1442, %v1462, %v1464
      %v1466 = vrot.slane %v1028, 1
      %v1467 = vsel %vm1442, %v1464, %v1466
      %v1468 = vrot.slane %v1029, 1
      %v1469 = vsel %vm1442, %v1466, %v1468
      %v1470 = vrot.slane %v1030, 1
      %v1471 = vsel %vm1442, %v1468, %v1470
      %v1472 = vrot.slane %v1031, 1
      %v1473 = vsel %vm1442, %v1470, %v1472
      %v1474 = vrot.slane %v1032, 1
      %v1475 = vsel %vm1442, %v1472, %v1474
      %v1476 = vrot.slane %v1033, 1
      %v1477 = vsel %vm1442, %v1474, %v1476
      %v1480 = vunpack.c.l.b16 %v1437
      %v1481 = vunpack.c.l.b16 %v1438
      %v1482 = vpack.c.b16 %v1481, %v1480
      %v1483 = vrot.slane %v1482, 2
      %v1485 = vsel %vm473, %v1445, 0
      %v1488 = vsel %vm473, %v1447, 0
      %v1491 = vsel %vm473, %v1449, 0
      %v1494 = vsel %vm473, %v1451, 0
      %v1497 = vsel %vm473, %v1453, 0
      %v1500 = vsel %vm473, %v1455, 0
      %v1503 = vsel %vm473, %v1457, 0
      %v1506 = vsel %vm473, %v1459, 0
      %v1509 = vsel %vm473, %v1461, 0
      %v1512 = vsel %vm473, %v1463, 0
      %v1515 = vsel %vm473, %v1465, 0
      %v1518 = vsel %vm473, %v1467, 0
      %v1521 = vsel %vm473, %v1469, 0
      %v1524 = vsel %vm473, %v1471, 0
      %v1527 = vsel %vm473, %v1473, 0
      %v1530 = vsel %vm473, %v1475, 0
      %v1533 = vsel %vm473, %v1477, 0
      %v1536 = vsel %vm525, %v1483, 0
      %1538 = vmatprep.subr.bf16.mxu0 0
      %1539 = vmatpush1.bf16.msra.mxu0 %v1536
      %1540 = vmatprep.subr.bf16.mxu0 0
      %1541 = vmatpush1.bf16.msra.mxu0 0
      %1542 = vmatprep.subr.bf16.mxu0 0
      %1543 = vmatpush1.bf16.msra.mxu0 0
      %1544 = vmatprep.subr.bf16.mxu0 0
      %1545 = vmatpush1.bf16.msra.mxu0 0
      %1546 = vmatprep.subr.bf16.mxu0 0
      %1547 = vmatpush1.bf16.msra.mxu0 0
      %1548 = vmatprep.subr.bf16.mxu0 0
      %1549 = vmatpush1.bf16.msra.mxu0 0
      %1550 = vmatprep.subr.bf16.mxu0 0
      %1551 = vmatpush1.bf16.msra.mxu0 0
      %1552 = vmatprep.subr.bf16.mxu0 0
      %1553 = vmatpush1.bf16.msra.mxu0 0
      %1554 = vmatprep.subr.bf16.mxu0 0
      %1555 = vmatpush1.bf16.msra.mxu0 0
      %1556 = vmatprep.subr.bf16.mxu0 0
      %1557 = vmatpush1.bf16.msra.mxu0 0
      %1558 = vmatprep.subr.bf16.mxu0 0
      %1559 = vmatpush1.bf16.msra.mxu0 0
      %1560 = vmatprep.subr.bf16.mxu0 0
      %1561 = vmatpush1.bf16.msra.mxu0 0
      %1562 = vmatprep.subr.bf16.mxu0 0
      %1563 = vmatpush1.bf16.msra.mxu0 0
      %1564 = vmatprep.subr.bf16.mxu0 0
      %1565 = vmatpush1.bf16.msra.mxu0 0
      %1566 = vmatprep.subr.bf16.mxu0 0
      %1567 = vmatpush1.bf16.msra.mxu0 0
      %1568 = vmatprep.subr.bf16.mxu0 0
      %1569 = vmatpush1.bf16.msra.mxu0 0
      %1570 = vmatprep.mubr.bf16.mxu0 0
      %1571 = vmatmul.mubr.bf16.gmra.mrb[0].mxu0 %v1485
      %v1572 = vpop.f32.mrb[0].mxu0
      %v1573 = vadd.f32 0.0, %v1572
      %v1574 = vpop.f32.mrb[0].mxu0
      %v1575 = vpop.f32.mrb[0].mxu0
      %v1576 = vadd.f32 0.0, %v1575
      %v1577 = vpop.f32.mrb[0].mxu0
      %1578 = vmatprep.mubr.bf16.mxu0 0
      %1579 = vmatmul.mubr.bf16.gmra.mrb[0].mxu0 %v1488
      %v1580 = vpop.f32.mrb[0].mxu0
      %v1581 = vadd.f32 0.0, %v1580
      %v1582 = vpop.f32.mrb[0].mxu0
      %v1583 = vpop.f32.mrb[0].mxu0
      %v1584 = vadd.f32 0.0, %v1583
      %v1585 = vpop.f32.mrb[0].mxu0
      %1586 = vmatprep.mubr.bf16.mxu0 0
      %1587 = vmatmul.mubr.bf16.gmra.mrb[0].mxu0 %v1491
      %v1588 = vpop.f32.mrb[0].mxu0
      %v1589 = vadd.f32 0.0, %v1588
      %v1590 = vpop.f32.mrb[0].mxu0
      %v1591 = vpop.f32.mrb[0].mxu0
      %v1592 = vadd.f32 0.0, %v1591
      %v1593 = vpop.f32.mrb[0].mxu0
      %1594 = vmatprep.mubr.bf16.mxu0 0
      %1595 = vmatmul.mubr.bf16.gmra.mrb[0].mxu0 %v1494
      %v1596 = vpop.f32.mrb[0].mxu0
      %v1597 = vadd.f32 0.0, %v1596
      %v1598 = vpop.f32.mrb[0].mxu0
      %v1599 = vpop.f32.mrb[0].mxu0
      %v1600 = vadd.f32 0.0, %v1599
      %v1601 = vpop.f32.mrb[0].mxu0
      %1602 = vmatprep.mubr.bf16.mxu0 0
      %1603 = vmatmul.mubr.bf16.gmra.mrb[0].mxu0 %v1497
      %v1604 = vpop.f32.mrb[0].mxu0
      %v1605 = vadd.f32 0.0, %v1604
      %v1606 = vpop.f32.mrb[0].mxu0
      %v1607 = vpop.f32.mrb[0].mxu0
      %v1608 = vadd.f32 0.0, %v1607
      %v1609 = vpop.f32.mrb[0].mxu0
      %1610 = vmatprep.mubr.bf16.mxu0 0
      %1611 = vmatmul.mubr.bf16.gmra.mrb[0].mxu0 %v1500
      %v1612 = vpop.f32.mrb[0].mxu0
      %v1613 = vadd.f32 0.0, %v1612
      %v1614 = vpop.f32.mrb[0].mxu0
      %v1615 = vpop.f32.mrb[0].mxu0
      %v1616 = vadd.f32 0.0, %v1615
      %v1617 = vpop.f32.mrb[0].mxu0
      %1618 = vmatprep.mubr.bf16.mxu0 0
      %1619 = vmatmul.mubr.bf16.gmra.mrb[0].mxu0 %v1503
      %v1620 = vpop.f32.mrb[0].mxu0
      %v1621 = vadd.f32 0.0, %v1620
      %v1622 = vpop.f32.mrb[0].mxu0
      %v1623 = vpop.f32.mrb[0].mxu0
      %v1624 = vadd.f32 0.0, %v1623
      %v1625 = vpop.f32.mrb[0].mxu0
      %1626 = vmatprep.mubr.bf16.mxu0 0
      %1627 = vmatmul.mubr.bf16.gmra.mrb[0].mxu0 %v1506
      %v1628 = vpop.f32.mrb[0].mxu0
      %v1629 = vadd.f32 0.0, %v1628
      %v1630 = vpop.f32.mrb[0].mxu0
      %v1631 = vpop.f32.mrb[0].mxu0
      %v1632 = vadd.f32 0.0, %v1631
      %v1633 = vpop.f32.mrb[0].mxu0
      %1634 = vmatprep.mubr.bf16.mxu0 0
      %1635 = vmatmul.mubr.bf16.gmra.mrb[0].mxu0 %v1509
      %v1636 = vpop.f32.mrb[0].mxu0
      %v1637 = vadd.f32 0.0, %v1636
      %v1638 = vpop.f32.mrb[0].mxu0
      %v1639 = vpop.f32.mrb[0].mxu0
      %v1640 = vadd.f32 0.0, %v1639
      %v1641 = vpop.f32.mrb[0].mxu0
      %1642 = vmatprep.mubr.bf16.mxu0 0
      %1643 = vmatmul.mubr.bf16.gmra.mrb[0].mxu0 %v1512
      %v1644 = vpop.f32.mrb[0].mxu0
      %v1645 = vadd.f32 0.0, %v1644
      %v1646 = vpop.f32.mrb[0].mxu0
      %v1647 = vpop.f32.mrb[0].mxu0
      %v1648 = vadd.f32 0.0, %v1647
      %v1649 = vpop.f32.mrb[0].mxu0
      %1650 = vmatprep.mubr.bf16.mxu0 0
      %1651 = vmatmul.mubr.bf16.gmra.mrb[0].mxu0 %v1515
      %v1652 = vpop.f32.mrb[0].mxu0
      %v1653 = vadd.f32 0.0, %v1652
      %v1654 = vpop.f32.mrb[0].mxu0
      %v1655 = vpop.f32.mrb[0].mxu0
      %v1656 = vadd.f32 0.0, %v1655
      %v1657 = vpop.f32.mrb[0].mxu0
      %1658 = vmatprep.mubr.bf16.mxu0 0
      %1659 = vmatmul.mubr.bf16.gmra.mrb[0].mxu0 %v1518
      %v1660 = vpop.f32.mrb[0].mxu0
      %v1661 = vadd.f32 0.0, %v1660
      %v1662 = vpop.f32.mrb[0].mxu0
      %v1663 = vpop.f32.mrb[0].mxu0
      %v1664 = vadd.f32 0.0, %v1663
      %v1665 = vpop.f32.mrb[0].mxu0
      %1666 = vmatprep.mubr.bf16.mxu0 0
      %1667 = vmatmul.mubr.bf16.gmra.mrb[0].mxu0 %v1521
      %v1668 = vpop.f32.mrb[0].mxu0
      %v1669 = vadd.f32 0.0, %v1668
      %v1670 = vpop.f32.mrb[0].mxu0
      %v1671 = vpop.f32.mrb[0].mxu0
      %v1672 = vadd.f32 0.0, %v1671
      %v1673 = vpop.f32.mrb[0].mxu0
      %1674 = vmatprep.mubr.bf16.mxu0 0
      %1675 = vmatmul.mubr.bf16.gmra.mrb[0].mxu0 %v1524
      %v1676 = vpop.f32.mrb[0].mxu0
      %v1677 = vadd.f32 0.0, %v1676
      %v1678 = vpop.f32.mrb[0].mxu0
      %v1679 = vpop.f32.mrb[0].mxu0
      %v1680 = vadd.f32 0.0, %v1679
      %v1681 = vpop.f32.mrb[0].mxu0
      %1682 = vmatprep.mubr.bf16.mxu0 0
      %1683 = vmatmul.mubr.bf16.gmra.mrb[0].mxu0 %v1527
      %v1684 = vpop.f32.mrb[0].mxu0
      %v1685 = vadd.f32 0.0, %v1684
      %v1686 = vpop.f32.mrb[0].mxu0
      %v1687 = vpop.f32.mrb[0].mxu0
      %v1688 = vadd.f32 0.0, %v1687
      %v1689 = vpop.f32.mrb[0].mxu0
      %1690 = vmatprep.mubr.bf16.mxu0 0
      %1691 = vmatmul.mubr.bf16.gmra.mrb[0].mxu0 %v1530
      %v1692 = vpop.f32.mrb[0].mxu0
      %v1693 = vadd.f32 0.0, %v1692
      %v1694 = vpop.f32.mrb[0].mxu0
      %v1695 = vpop.f32.mrb[0].mxu0
      %v1696 = vadd.f32 0.0, %v1695
      %v1697 = vpop.f32.mrb[0].mxu0
      %1698 = vmatprep.mubr.bf16.mxu0 0
      %1699 = vmatmul.mubr.bf16.gmra.mrb[0].mxu0 %v1533
      %v1700 = vpop.f32.mrb[0].mxu0
      %v1701 = vadd.f32 0.0, %v1700
      %v1702 = vpop.f32.mrb[0].mxu0
      %v1703 = vpop.f32.mrb[0].mxu0
      %v1704 = vadd.f32 0.0, %v1703
      %v1705 = vpop.f32.mrb[0].mxu0
      %1706 = vdwg.mxu0
      %v1707 = vadd.f32 %v1402, %v1573
      %v1708 = vadd.f32 %v1403, %v1576
      %v1709 = vadd.f32 %v1404, %v1581
      %v1710 = vadd.f32 %v1405, %v1584
      %v1711 = vadd.f32 %v1406, %v1589
      %v1712 = vadd.f32 %v1407, %v1592
      %v1713 = vadd.f32 %v1408, %v1597
      %v1714 = vadd.f32 %v1409, %v1600
      %v1715 = vadd.f32 %v1410, %v1605
      %v1716 = vadd.f32 %v1411, %v1608
      %v1717 = vadd.f32 %v1412, %v1613
      %v1718 = vadd.f32 %v1413, %v1616
      %v1719 = vadd.f32 %v1414, %v1621
      %v1720 = vadd.f32 %v1415, %v1624
      %v1721 = vadd.f32 %v1416, %v1629
      %v1722 = vadd.f32 %v1417, %v1632
      %v1723 = vadd.f32 %v1418, %v1637
      %v1724 = vadd.f32 %v1419, %v1640
      %v1725 = vadd.f32 %v1420, %v1645
      %v1726 = vadd.f32 %v1421, %v1648
      %v1727 = vadd.f32 %v1422, %v1653
      %v1728 = vadd.f32 %v1423, %v1656
      %v1729 = vadd.f32 %v1424, %v1661
      %v1730 = vadd.f32 %v1425, %v1664
      %v1731 = vadd.f32 %v1426, %v1669
      %v1732 = vadd.f32 %v1427, %v1672
      %v1733 = vadd.f32 %v1428, %v1677
      %v1734 = vadd.f32 %v1429, %v1680
      %v1735 = vadd.f32 %v1430, %v1685
      %v1736 = vadd.f32 %v1431, %v1688
      %v1737 = vadd.f32 %v1432, %v1693
      %v1738 = vadd.f32 %v1433, %v1696
      %v1739 = vadd.f32 %v1434, %v1701
      %v1740 = vadd.f32 %v1435, %v1704
      %v1741 = vld [vmem:[%s2] sm:$0x1]
      %v1743 = vlaneseq
      %v1744 = vshrl.u32 %v1743, 7
      %v1745 = vsub.s32 0, %v1744
      %v1746 = vrot.slane %v1741, %v1745
      %v1748 = vadd.f32 %v1707, %v1746
      %v1749 = vadd.f32 %v1708, %v1746
      %v1750 = vadd.f32 %v1709, %v1746
      %v1751 = vadd.f32 %v1710, %v1746
      %v1752 = vadd.f32 %v1711, %v1746
      %v1753 = vadd.f32 %v1712, %v1746
      %v1754 = vadd.f32 %v1713, %v1746
      %v1755 = vadd.f32 %v1714, %v1746
      %v1756 = vadd.f32 %v1715, %v1746
      %v1757 = vadd.f32 %v1716, %v1746
      %v1758 = vadd.f32 %v1717, %v1746
      %v1759 = vadd.f32 %v1718, %v1746
      %v1760 = vadd.f32 %v1719, %v1746
      %v1761 = vadd.f32 %v1720, %v1746
      %v1762 = vadd.f32 %v1721, %v1746
      %v1763 = vadd.f32 %v1722, %v1746
      %v1764 = vadd.f32 %v1723, %v1746
      %v1765 = vadd.f32 %v1724, %v1746
      %v1766 = vadd.f32 %v1725, %v1746
      %v1767 = vadd.f32 %v1726, %v1746
      %v1768 = vadd.f32 %v1727, %v1746
      %v1769 = vadd.f32 %v1728, %v1746
      %v1770 = vadd.f32 %v1729, %v1746
      %v1771 = vadd.f32 %v1730, %v1746
      %v1772 = vadd.f32 %v1731, %v1746
      %v1773 = vadd.f32 %v1732, %v1746
      %v1774 = vadd.f32 %v1733, %v1746
      %v1775 = vadd.f32 %v1734, %v1746
      %v1776 = vadd.f32 %v1735, %v1746
      %v1777 = vadd.f32 %v1736, %v1746
      %v1778 = vadd.f32 %v1737, %v1746
      %v1779 = vadd.f32 %v1738, %v1746
      %v1780 = vadd.f32 %v1739, %v1746
      %v1781 = vadd.f32 %v1740, %v1746
      %vm1782 = vcmp.ge.f32.partialorder %v1748, 0.0
      %vm1783 = vcmp.ge.f32.partialorder %v1749, 0.0
      %vm1784 = vcmp.ge.f32.partialorder %v1750, 0.0
      %vm1785 = vcmp.ge.f32.partialorder %v1751, 0.0
      %vm1786 = vcmp.ge.f32.partialorder %v1752, 0.0
      %vm1787 = vcmp.ge.f32.partialorder %v1753, 0.0
      %vm1788 = vcmp.ge.f32.partialorder %v1754, 0.0
      %vm1789 = vcmp.ge.f32.partialorder %v1755, 0.0
      %vm1790 = vcmp.ge.f32.partialorder %v1756, 0.0
      %vm1791 = vcmp.ge.f32.partialorder %v1757, 0.0
      %vm1792 = vcmp.ge.f32.partialorder %v1758, 0.0
      %vm1793 = vcmp.ge.f32.partialorder %v1759, 0.0
      %vm1794 = vcmp.ge.f32.partialorder %v1760, 0.0
      %vm1795 = vcmp.ge.f32.partialorder %v1761, 0.0
      %vm1796 = vcmp.ge.f32.partialorder %v1762, 0.0
      %vm1797 = vcmp.ge.f32.partialorder %v1763, 0.0
      %vm1798 = vcmp.ge.f32.partialorder %v1764, 0.0
      %vm1799 = vcmp.ge.f32.partialorder %v1765, 0.0
      %vm1800 = vcmp.ge.f32.partialorder %v1766, 0.0
      %vm1801 = vcmp.ge.f32.partialorder %v1767, 0.0
      %vm1802 = vcmp.ge.f32.partialorder %v1768, 0.0
      %vm1803 = vcmp.ge.f32.partialorder %v1769, 0.0
      %vm1804 = vcmp.ge.f32.partialorder %v1770, 0.0
      %vm1805 = vcmp.ge.f32.partialorder %v1771, 0.0
      %vm1806 = vcmp.ge.f32.partialorder %v1772, 0.0
      %vm1807 = vcmp.ge.f32.partialorder %v1773, 0.0
      %vm1808 = vcmp.ge.f32.partialorder %v1774, 0.0
      %vm1809 = vcmp.ge.f32.partialorder %v1775, 0.0
      %vm1810 = vcmp.ge.f32.partialorder %v1776, 0.0
      %vm1811 = vcmp.ge.f32.partialorder %v1777, 0.0
      %vm1812 = vcmp.ge.f32.partialorder %v1778, 0.0
      %vm1813 = vcmp.ge.f32.partialorder %v1779, 0.0
      %vm1814 = vcmp.ge.f32.partialorder %v1780, 0.0
      %vm1815 = vcmp.ge.f32.partialorder %v1781, 0.0
      %v1816 = vmul.f32 %v1748, 0.01
      %v1817 = vmul.f32 %v1749, 0.01
      %v1818 = vmul.f32 %v1750, 0.01
      %v1819 = vmul.f32 %v1751, 0.01
      %v1820 = vmul.f32 %v1752, 0.01
      %v1821 = vmul.f32 %v1753, 0.01
      %v1822 = vmul.f32 %v1754, 0.01
      %v1823 = vmul.f32 %v1755, 0.01
      %v1824 = vmul.f32 %v1756, 0.01
      %v1825 = vmul.f32 %v1757, 0.01
      %v1826 = vmul.f32 %v1758, 0.01
      %v1827 = vmul.f32 %v1759, 0.01
      %v1828 = vmul.f32 %v1760, 0.01
      %v1829 = vmul.f32 %v1761, 0.01
      %v1830 = vmul.f32 %v1762, 0.01
      %v1831 = vmul.f32 %v1763, 0.01
      %v1832 = vmul.f32 %v1764, 0.01
      %v1833 = vmul.f32 %v1765, 0.01
      %v1834 = vmul.f32 %v1766, 0.01
      %v1835 = vmul.f32 %v1767, 0.01
      %v1836 = vmul.f32 %v1768, 0.01
      %v1837 = vmul.f32 %v1769, 0.01
      %v1838 = vmul.f32 %v1770, 0.01
      %v1839 = vmul.f32 %v1771, 0.01
      %v1840 = vmul.f32 %v1772, 0.01
      %v1841 = vmul.f32 %v1773, 0.01
      %v1842 = vmul.f32 %v1774, 0.01
      %v1843 = vmul.f32 %v1775, 0.01
      %v1844 = vmul.f32 %v1776, 0.01
      %v1845 = vmul.f32 %v1777, 0.01
      %v1846 = vmul.f32 %v1778, 0.01
      %v1847 = vmul.f32 %v1779, 0.01
      %v1848 = vmul.f32 %v1780, 0.01
      %v1849 = vmul.f32 %v1781, 0.01
      %v1850 = vsel %vm1782, %v1748, %v1816
      %v1851 = vsel %vm1783, %v1749, %v1817
      %v1852 = vsel %vm1784, %v1750, %v1818
      %v1853 = vsel %vm1785, %v1751, %v1819
      %v1854 = vsel %vm1786, %v1752, %v1820
      %v1855 = vsel %vm1787, %v1753, %v1821
      %v1856 = vsel %vm1788, %v1754, %v1822
      %v1857 = vsel %vm1789, %v1755, %v1823
      %v1858 = vsel %vm1790, %v1756, %v1824
      %v1859 = vsel %vm1791, %v1757, %v1825
      %v1860 = vsel %vm1792, %v1758, %v1826
      %v1861 = vsel %vm1793, %v1759, %v1827
      %v1862 = vsel %vm1794, %v1760, %v1828
      %v1863 = vsel %vm1795, %v1761, %v1829
      %v1864 = vsel %vm1796, %v1762, %v1830
      %v1865 = vsel %vm1797, %v1763, %v1831
      %v1866 = vsel %vm1798, %v1764, %v1832
      %v1867 = vsel %vm1799, %v1765, %v1833
      %v1868 = vsel %vm1800, %v1766, %v1834
      %v1869 = vsel %vm1801, %v1767, %v1835
      %v1870 = vsel %vm1802, %v1768, %v1836
      %v1871 = vsel %vm1803, %v1769, %v1837
      %v1872 = vsel %vm1804, %v1770, %v1838
      %v1873 = vsel %vm1805, %v1771, %v1839
      %v1874 = vsel %vm1806, %v1772, %v1840
      %v1875 = vsel %vm1807, %v1773, %v1841
      %v1876 = vsel %vm1808, %v1774, %v1842
      %v1877 = vsel %vm1809, %v1775, %v1843
      %v1878 = vsel %vm1810, %v1776, %v1844
      %v1879 = vsel %vm1811, %v1777, %v1845
      %v1880 = vsel %vm1812, %v1778, %v1846
      %v1881 = vsel %vm1813, %v1779, %v1847
      %v1882 = vsel %vm1814, %v1780, %v1848
      %v1883 = vsel %vm1815, %v1781, %v1849
      %v1884 = vpack.c.bf16 %v1851, %v1850
      %v1885 = vpack.c.bf16 %v1853, %v1852
      %v1886 = vpack.c.bf16 %v1855, %v1854
      %v1887 = vpack.c.bf16 %v1857, %v1856
      %v1888 = vpack.c.bf16 %v1859, %v1858
      %v1889 = vpack.c.bf16 %v1861, %v1860
      %v1890 = vpack.c.bf16 %v1863, %v1862
      %v1891 = vpack.c.bf16 %v1865, %v1864
      %v1892 = vpack.c.bf16 %v1867, %v1866
      %v1893 = vpack.c.bf16 %v1869, %v1868
      %v1894 = vpack.c.bf16 %v1871, %v1870
      %v1895 = vpack.c.bf16 %v1873, %v1872
      %v1896 = vpack.c.bf16 %v1875, %v1874
      %v1897 = vpack.c.bf16 %v1877, %v1876
      %v1898 = vpack.c.bf16 %v1879, %v1878
      %v1899 = vpack.c.bf16 %v1881, %v1880
      %v1900 = vpack.c.bf16 %v1883, %v1882
      %v1918 = vunpack.c.l.b16 %v1884
      %v1919 = vunpack.c.h.b16 %v1884
      %v1920 = vunpack.c.l.b16 %v1885
      %v1921 = vunpack.c.h.b16 %v1885
      %v1922 = vunpack.c.l.b16 %v1886
      %v1923 = vunpack.c.h.b16 %v1886
      %v1924 = vunpack.c.l.b16 %v1887
      %v1925 = vunpack.c.h.b16 %v1887
      %v1926 = vunpack.c.l.b16 %v1888
      %v1927 = vunpack.c.h.b16 %v1888
      %v1928 = vunpack.c.l.b16 %v1889
      %v1929 = vunpack.c.h.b16 %v1889
      %v1930 = vunpack.c.l.b16 %v1890
      %v1931 = vunpack.c.h.b16 %v1890
      %v1932 = vunpack.c.l.b16 %v1891
      %v1933 = vunpack.c.h.b16 %v1891
      %v1934 = vunpack.c.l.b16 %v1892
      %v1935 = vunpack.c.h.b16 %v1892
      %v1936 = vunpack.c.l.b16 %v1893
      %v1937 = vunpack.c.h.b16 %v1893
      %v1938 = vunpack.c.l.b16 %v1894
      %v1939 = vunpack.c.h.b16 %v1894
      %v1940 = vunpack.c.l.b16 %v1895
      %v1941 = vunpack.c.h.b16 %v1895
      %v1942 = vunpack.c.l.b16 %v1896
      %v1943 = vunpack.c.h.b16 %v1896
      %v1944 = vunpack.c.l.b16 %v1897
      %v1945 = vunpack.c.h.b16 %v1897
      %v1946 = vunpack.c.l.b16 %v1898
      %v1947 = vunpack.c.h.b16 %v1898
      %v1948 = vunpack.c.l.b16 %v1899
      %v1949 = vunpack.c.h.b16 %v1899
      %v1950 = vunpack.c.l.b16 %v1900
      %v1951 = vunpack.c.h.b16 %v1900
      %v1952 = vpack.c.b16 %v1918, %v1918
      %v1953 = vpack.c.b16 %v1919, %v1919
      %v1954 = vpack.c.b16 %v1920, %v1920
      %v1955 = vpack.c.b16 %v1921, %v1921
      %v1956 = vpack.c.b16 %v1922, %v1922
      %v1957 = vpack.c.b16 %v1923, %v1923
      %v1958 = vpack.c.b16 %v1924, %v1924
      %v1959 = vpack.c.b16 %v1925, %v1925
      %v1960 = vpack.c.b16 %v1926, %v1926
      %v1961 = vpack.c.b16 %v1927, %v1927
      %v1962 = vpack.c.b16 %v1928, %v1928
      %v1963 = vpack.c.b16 %v1929, %v1929
      %v1964 = vpack.c.b16 %v1930, %v1930
      %v1965 = vpack.c.b16 %v1931, %v1931
      %v1966 = vpack.c.b16 %v1932, %v1932
      %v1967 = vpack.c.b16 %v1933, %v1933
      %v1968 = vpack.c.b16 %v1934, %v1934
      %v1969 = vpack.c.b16 %v1935, %v1935
      %v1970 = vpack.c.b16 %v1936, %v1936
      %v1971 = vpack.c.b16 %v1937, %v1937
      %v1972 = vpack.c.b16 %v1938, %v1938
      %v1973 = vpack.c.b16 %v1939, %v1939
      %v1974 = vpack.c.b16 %v1940, %v1940
      %v1975 = vpack.c.b16 %v1941, %v1941
      %v1976 = vpack.c.b16 %v1942, %v1942
      %v1977 = vpack.c.b16 %v1943, %v1943
      %v1978 = vpack.c.b16 %v1944, %v1944
      %v1979 = vpack.c.b16 %v1945, %v1945
      %v1980 = vpack.c.b16 %v1946, %v1946
      %v1981 = vpack.c.b16 %v1947, %v1947
      %v1982 = vpack.c.b16 %v1948, %v1948
      %v1983 = vpack.c.b16 %v1949, %v1949
      %v1984 = vpack.c.b16 %v1950, %v1950
      %v1985 = vpack.c.b16 %v1951, %v1951
      %vm2020 = vcmask 60416
      %2021 = vst.msk [vmem:[%s197] sm:$0xf] %vm2020, %v1952
      %2022 = vst.msk [vmem:[%s197 + $0x4] sm:$0xf] %vm2020, %v1953
      %2023 = vst.msk [vmem:[%s197 + $0x8] sm:$0xf] %vm2020, %v1954
      %2024 = vst.msk [vmem:[%s197 + $0xc] sm:$0xf] %vm2020, %v1955
      %2025 = vst.msk [vmem:[%s197 + $0x10] sm:$0xf] %vm2020, %v1956
      %2026 = vst.msk [vmem:[%s197 + $0x14] sm:$0xf] %vm2020, %v1957
      %2027 = vst.msk [vmem:[%s197 + $0x18] sm:$0xf] %vm2020, %v1958
      %2028 = vst.msk [vmem:[%s197 + $0x1c] sm:$0xf] %vm2020, %v1959
      %2029 = vst.msk [vmem:[%s197 + $0x20] sm:$0xf] %vm2020, %v1960
      %2030 = vst.msk [vmem:[%s197 + $0x24] sm:$0xf] %vm2020, %v1961
      %2031 = vst.msk [vmem:[%s197 + $0x28] sm:$0xf] %vm2020, %v1962
      %2032 = vst.msk [vmem:[%s197 + $0x2c] sm:$0xf] %vm2020, %v1963
      %2033 = vst.msk [vmem:[%s197 + $0x30] sm:$0xf] %vm2020, %v1964
      %2034 = vst.msk [vmem:[%s197 + $0x34] sm:$0xf] %vm2020, %v1965
      %2035 = vst.msk [vmem:[%s197 + $0x38] sm:$0xf] %vm2020, %v1966
      %2036 = vst.msk [vmem:[%s197 + $0x3c] sm:$0xf] %vm2020, %v1967
      %2037 = vst.msk [vmem:[%s197 + $0x40] sm:$0xf] %vm2020, %v1968
      %2038 = vst.msk [vmem:[%s197 + $0x44] sm:$0xf] %vm2020, %v1969
      %2039 = vst.msk [vmem:[%s197 + $0x48] sm:$0xf] %vm2020, %v1970
      %2040 = vst.msk [vmem:[%s197 + $0x4c] sm:$0xf] %vm2020, %v1971
      %2041 = vst.msk [vmem:[%s197 + $0x50] sm:$0xf] %vm2020, %v1972
      %2042 = vst.msk [vmem:[%s197 + $0x54] sm:$0xf] %vm2020, %v1973
      %2043 = vst.msk [vmem:[%s197 + $0x58] sm:$0xf] %vm2020, %v1974
      %2044 = vst.msk [vmem:[%s197 + $0x5c] sm:$0xf] %vm2020, %v1975
      %2045 = vst.msk [vmem:[%s197 + $0x60] sm:$0xf] %vm2020, %v1976
      %2046 = vst.msk [vmem:[%s197 + $0x64] sm:$0xf] %vm2020, %v1977
      %2047 = vst.msk [vmem:[%s197 + $0x68] sm:$0xf] %vm2020, %v1978
      %2048 = vst.msk [vmem:[%s197 + $0x6c] sm:$0xf] %vm2020, %v1979
      %2049 = vst.msk [vmem:[%s197 + $0x70] sm:$0xf] %vm2020, %v1980
      %2050 = vst.msk [vmem:[%s197 + $0x74] sm:$0xf] %vm2020, %v1981
      %2051 = vst.msk [vmem:[%s197 + $0x78] sm:$0xf] %vm2020, %v1982
      %2052 = vst.msk [vmem:[%s197 + $0x7c] sm:$0xf] %vm2020, %v1983
      %2053 = vst.msk [vmem:[%s197 + $0x80] sm:$0xf] %vm2020, %v1984
      %2054 = vst.msk [vmem:[%s197 + $0x84] sm:$0xf] %vm2020, %v1985
      %p2055 = scmp.lt.s32.totalorder %s15, 1
      %s2056 = scalar_select %p2055, %s15, 1
      %s2057 = smul.addr %s2056, 34
      %s2058 = smul.addr %s2057, 4
      %s2059 = scalar_lea.vmem %s4, %s2058
      // Predicated region
      $region37: #{cycle_discriminator.5} parent=35 // pred_check
        %p2060 = pneg %p122
      $region38: #{cycle_discriminator.5} parent=35 // pred_check_branch
        %2062 = sbr.rel (%p2060) target = $region40
      $region39: #{cycle_discriminator.5} parent=35 // pred_region
        _
      $region40: #{cycle_discriminator.5} parent=35 // pred_fallthru
        _
    $region36: #{cycle_discriminator.5} parent=5 // pred_fallthru
      _
    %p2063 = scmp.le.s32.totalorder 2, %s10
    // Predicated region
    $region41: #{cycle_discriminator.5} parent=5 // pred_check
      %p2064 = pneg %p2063
    $region42: #{cycle_discriminator.5} parent=5 // pred_check_branch
      %2066 = sbr.rel (%p2064) target = $region44
    $region43: #{cycle_discriminator.5} parent=5 // pred_region
      %s2067 = ssub.s32 %s10, 2
      // Predicated region
      $region45: #{cycle_discriminator.5} parent=43 // pred_check
        %p2068 = pneg %p128
      $region46: #{cycle_discriminator.5} parent=43 // pred_check_branch
        %2070 = sbr.rel (%p2068) target = $region48
      $region47: #{cycle_discriminator.5} parent=43 // pred_region
        %p2071 = scmp.lt.s32.totalorder %s16, 1
        %s2072 = scalar_select %p2071, %s16, 1
        %s2073 = smul.addr %s2072, 34
        %s2074 = smul.addr %s2073, 4
        %s2075 = scalar_lea.vmem %s4, %s2074
      $region48: #{cycle_discriminator.5} parent=43 // pred_fallthru
        _
    $region44: #{cycle_discriminator.5} parent=5 // pred_fallthru
      _
  $region6: #{cycle_discriminator.5} parent=0 // loop_footer
    %s14 = sadd.s32 1, %s10
  $region7: #{cycle_discriminator.5} parent=0 // loop_footer_branch
    %9 = sbr.rel target = $region3
  $region8: #{cycle_discriminator.5} parent=0 // loop_exit
    _

// kernel: cycle_discriminator.6
$region0: #{cycle_discriminator.6}
  #allocation0 [shape = 'u32[]', space=smem, size = 0x4, offset = 0x4, fixed_abs, tag = 'smem constant byte address 0x4 - core index']
  #allocation1 [shape = 'u32[144,128]{1,0:T(1,128)}', space=vmem, size = 0x12000, scoped, tag = 'internal scratch']
  %s0 = inlined_call_operand.vmem [shape: bf16[2,82,32], index: 0, kind: input, shape index: {}]
  %s1 = inlined_call_operand.vmem [shape: bf16[128,16], index: 1, kind: input, shape index: {}]
  %s2 = inlined_call_operand.vmem [shape: f32[1,16], index: 2, kind: input, shape index: {}]
  %s3 = inlined_call_operand.vmem [shape: f32[72,1], index: 3, kind: input, shape index: {}]
  %s4 = inlined_call_operand.vmem [shape: bf16[2,72,16], index: 4, kind: output, shape index: {}]
  %s5 = sld [smem:[#allocation0]]
  $region49: #{cycle_discriminator.6} parent=0
    _
  %s7 = ssub.s32 1, %s5
  %s8 = scalar_select 0, %s7, %s5
  loop: start=0, step=1, limit=4
  $region2: #{cycle_discriminator.6} parent=0 // loop_pre_header
    _
  $region3: #{cycle_discriminator.6} parent=0 // loop_header
    %s10 = sphi 0, %s14
    %p11 = scmp.ge.s32.totalorder %s10, 4
    %s20 = sphi 0, %s22
    %s23 = sphi 0, %s20
    %s24 = sphi 0, %s23
    %s40 = sphi 0, %s24
    %s44 = sphi 0, %s44
    %s46 = sphi 0, %s44
    %s47 = sphi 0, %s46
    %s61 = sphi 0, %s47
    %s65 = sphi 0, %s65
    %s67 = sphi 0, %s65
    %s68 = sphi 0, %s67
    %s82 = sphi 0, %s68
    %s86 = sphi 0, %s86
    %s88 = sphi 0, %s86
    %s89 = sphi 0, %s88
    %s103 = sphi 0, %s89
    %s109 = sphi 0, %s111
    %s112 = sphi 0, %s109
    %s113 = sphi 0, %s112
    %s129 = sphi 0, %s113
  $region4: #{cycle_discriminator.6} parent=0 // loop_header_branch
    %13 = sbr.rel (%p11) target = $region8
  $region5: #{cycle_discriminator.6} parent=0 // loop_body
    %s15 = ssub.s32 %s10, 1
    %s16 = ssub.s32 %s10, 2
    %s17 = sadd.s32 %s10, 1
    %s18 = ssub.s32 %s10, %s17
    %p19 = scmp.eq.s32.totalorder %s18, 0
    %s21 = sadd.s32 %s20, 1
    %s22 = scalar_select %p19, %s20, %s21
    %p25 = pneg %p19
    %p26 = scmp.eq.s32.totalorder %s10, 1
    %p27 = por %p25, %p26
    %p28 = scmp.ne.s32.totalorder %s20, %s23
    %p29 = scmp.eq.s32.totalorder %s10, 0
    %p30 = por %p28, %p29
    %p31 = scmp.ne.s32.totalorder %s20, %s23
    %p32 = scmp.eq.s32.totalorder %s15, 1
    %p33 = por %p31, %p32
    %p34 = scmp.ne.s32.totalorder %s23, %s24
    %p35 = scmp.eq.s32.totalorder %s15, 0
    %p36 = por %p34, %p35
    %p37 = scmp.ne.s32.totalorder %s23, %s24
    %p38 = scmp.eq.s32.totalorder %s16, 1
    %p39 = por %p37, %p38
    %p41 = scmp.ne.s32.totalorder %s24, %s40
    %p42 = scmp.eq.s32.totalorder %s16, 0
    %p43 = por %p41, %p42
    %s45 = sadd.s32 %s44, 1
    %p48 = scmp.eq.s32.totalorder %s10, 1
    %p49 = scmp.ne.s32.totalorder %s44, %s46
    %p50 = scmp.eq.s32.totalorder %s10, 0
    %p51 = por %p49, %p50
    %p52 = scmp.ne.s32.totalorder %s44, %s46
    %p53 = scmp.eq.s32.totalorder %s15, 1
    %p54 = por %p52, %p53
    %p55 = scmp.ne.s32.totalorder %s46, %s47
    %p56 = scmp.eq.s32.totalorder %s15, 0
    %p57 = por %p55, %p56
    %p58 = scmp.ne.s32.totalorder %s46, %s47
    %p59 = scmp.eq.s32.totalorder %s16, 1
    %p60 = por %p58, %p59
    %p62 = scmp.ne.s32.totalorder %s47, %s61
    %p63 = scmp.eq.s32.totalorder %s16, 0
    %p64 = por %p62, %p63
    %s66 = sadd.s32 %s65, 1
    %p69 = scmp.eq.s32.totalorder %s10, 1
    %p70 = scmp.ne.s32.totalorder %s65, %s67
    %p71 = scmp.eq.s32.totalorder %s10, 0
    %p72 = por %p70, %p71
    %p73 = scmp.ne.s32.totalorder %s65, %s67
    %p74 = scmp.eq.s32.totalorder %s15, 1
    %p75 = por %p73, %p74
    %p76 = scmp.ne.s32.totalorder %s67, %s68
    %p77 = scmp.eq.s32.totalorder %s15, 0
    %p78 = por %p76, %p77
    %p79 = scmp.ne.s32.totalorder %s67, %s68
    %p80 = scmp.eq.s32.totalorder %s16, 1
    %p81 = por %p79, %p80
    %p83 = scmp.ne.s32.totalorder %s68, %s82
    %p84 = scmp.eq.s32.totalorder %s16, 0
    %p85 = por %p83, %p84
    %s87 = sadd.s32 %s86, 1
    %p90 = scmp.eq.s32.totalorder %s10, 1
    %p91 = scmp.ne.s32.totalorder %s86, %s88
    %p92 = scmp.eq.s32.totalorder %s10, 0
    %p93 = por %p91, %p92
    %p94 = scmp.ne.s32.totalorder %s86, %s88
    %p95 = scmp.eq.s32.totalorder %s15, 1
    %p96 = por %p94, %p95
    %p97 = scmp.ne.s32.totalorder %s88, %s89
    %p98 = scmp.eq.s32.totalorder %s15, 0
    %p99 = por %p97, %p98
    %p100 = scmp.ne.s32.totalorder %s88, %s89
    %p101 = scmp.eq.s32.totalorder %s16, 1
    %p102 = por %p100, %p101
    %p104 = scmp.ne.s32.totalorder %s89, %s103
    %p105 = scmp.eq.s32.totalorder %s16, 0
    %p106 = por %p104, %p105
    %s107 = ssub.s32 %s10, %s17
    %p108 = scmp.eq.s32.totalorder %s107, 0
    %s110 = sadd.s32 %s109, 1
    %s111 = scalar_select %p108, %s109, %s110
    %p114 = pneg %p108
    %p115 = scmp.eq.s32.totalorder %s10, 1
    %p116 = por %p114, %p115
    %p117 = scmp.ne.s32.totalorder %s109, %s112
    %p118 = scmp.eq.s32.totalorder %s10, 0
    %p119 = por %p117, %p118
    %p120 = scmp.ne.s32.totalorder %s109, %s112
    %p121 = scmp.eq.s32.totalorder %s15, 1
    %p122 = por %p120, %p121
    %p123 = scmp.ne.s32.totalorder %s112, %s113
    %p124 = scmp.eq.s32.totalorder %s15, 0
    %p125 = por %p123, %p124
    %p126 = scmp.ne.s32.totalorder %s112, %s113
    %p127 = scmp.eq.s32.totalorder %s16, 1
    %p128 = por %p126, %p127
    %p130 = scmp.ne.s32.totalorder %s113, %s129
    %p131 = scmp.eq.s32.totalorder %s16, 0
    %p132 = por %p130, %p131
    %p133 = scmp.le.s32.totalorder 1, %s10
    %p134 = scmp.lt.s32.totalorder %s10, 3
    %p135 = pnand %p133, %p134
    %p136 = pneg %p135
    // Predicated region
    $region9: #{cycle_discriminator.6} parent=5 // pred_check
      _
    $region10: #{cycle_discriminator.6} parent=5 // pred_check_branch
      %138 = sbr.rel (%p135) target = $region12
    $region11: #{cycle_discriminator.6} parent=5 // pred_region
      %s139 = ssub.s32 %s10, 1
      // Predicated region
      $region13: #{cycle_discriminator.6} parent=11 // pred_check
        %p140 = pneg %p57
      $region14: #{cycle_discriminator.6} parent=11 // pred_check_branch
        %142 = sbr.rel (%p140) target = $region16
      $region15: #{cycle_discriminator.6} parent=11 // pred_region
        _
      $region16: #{cycle_discriminator.6} parent=11 // pred_fallthru
        _
      // Predicated region
      $region17: #{cycle_discriminator.6} parent=11 // pred_check
        %p143 = pneg %p78
      $region18: #{cycle_discriminator.6} parent=11 // pred_check_branch
        %145 = sbr.rel (%p143) target = $region20
      $region19: #{cycle_discriminator.6} parent=11 // pred_region
        _
      $region20: #{cycle_discriminator.6} parent=11 // pred_fallthru
        _
      // Predicated region
      $region21: #{cycle_discriminator.6} parent=11 // pred_check
        %p146 = pneg %p99
      $region22: #{cycle_discriminator.6} parent=11 // pred_check_branch
        %148 = sbr.rel (%p146) target = $region24
      $region23: #{cycle_discriminator.6} parent=11 // pred_region
        _
      $region24: #{cycle_discriminator.6} parent=11 // pred_fallthru
        _
    $region12: #{cycle_discriminator.6} parent=5 // pred_fallthru
      _
    %p149 = scmp.lt.s32.totalorder %s10, 2
    // Predicated region
    $region25: #{cycle_discriminator.6} parent=5 // pred_check
      %p150 = pneg %p149
    $region26: #{cycle_discriminator.6} parent=5 // pred_check_branch
      %152 = sbr.rel (%p150) target = $region28
    $region27: #{cycle_discriminator.6} parent=5 // pred_region
      // Predicated region
      $region29: #{cycle_discriminator.6} parent=27 // pred_check
        %p153 = pneg %p30
      $region30: #{cycle_discriminator.6} parent=27 // pred_check_branch
        %155 = sbr.rel (%p153) target = $region32
      $region31: #{cycle_discriminator.6} parent=27 // pred_region
        %p156 = scmp.lt.s32.totalorder %s10, 1
        %s157 = scalar_select %p156, %s10, 1
        %s158 = smul.addr %s157, 11
        %s159 = smul.addr %s158, 4
        %s160 = scalar_lea.vmem %s0, %s159
      $region32: #{cycle_discriminator.6} parent=27 // pred_fallthru
        _
    $region28: #{cycle_discriminator.6} parent=5 // pred_fallthru
      _
    %p161 = scmp.le.s32.totalorder 1, %s10
    %p162 = scmp.lt.s32.totalorder %s10, 3
    %p163 = pnand %p161, %p162
    %p164 = pneg %p163
    // Predicated region
    $region33: #{cycle_discriminator.6} parent=5 // pred_check
      _
    $region34: #{cycle_discriminator.6} parent=5 // pred_check_branch
      %166 = sbr.rel (%p163) target = $region36
    $region35: #{cycle_discriminator.6} parent=5 // pred_region
      %s167 = ssub.s32 %s10, 1
      %p168 = scmp.lt.s32.totalorder %s15, 1
      %s169 = scalar_select %p168, %s15, 1
      %s170 = smul.addr %s169, 11
      %s171 = smul.addr %s170, 4
      %s172 = scalar_lea.vmem %s0, %s171
      %p173 = pneg %p36
      %p174 = pneg %p33
      %p175 = pneg %p57
      %p176 = pneg %p54
      %p177 = pneg %p78
      %p178 = pneg %p75
      %p179 = pneg %p99
      %p180 = pneg %p96
      %p181 = pneg %p125
      %p182 = pneg %p122
      %p183 = scmp.lt.s32.totalorder %s15, 1
      %s184 = scalar_select %p183, %s15, 1
      %s185 = smul.addr %s184, 9
      %s186 = smul.addr %s185, 4
      %s187 = scalar_lea.vmem %s4, %s186
      %p188 = scmp.lt.s32.totalorder %s15, 1
      %s189 = scalar_select %p188, %s15, 1
      %s190 = smul.addr %s189, 11
      %s191 = smul.addr %s190, 4
      %s192 = scalar_lea.vmem %s0, %s191
      %p193 = scmp.lt.s32.totalorder %s15, 1
      %s194 = scalar_select %p193, %s15, 1
      %s195 = smul.addr %s194, 9
      %s196 = smul.addr %s195, 4
      %s197 = scalar_lea.vmem %s4, %s196
      %v199 = vld [vmem:[%s192] sm:$0xf]
      %v200 = vld [vmem:[%s192 + $0x4] sm:$0xf]
      %v201 = vld [vmem:[%s192 + $0x8] sm:$0xf]
      %v202 = vld [vmem:[%s192 + $0xc] sm:$0xf]
      %v203 = vld [vmem:[%s192 + $0x10] sm:$0xf]
      %v204 = vld [vmem:[%s192 + $0x14] sm:$0xf]
      %v205 = vld [vmem:[%s192 + $0x18] sm:$0xf]
      %v206 = vld [vmem:[%s192 + $0x1c] sm:$0xf]
      %v207 = vld [vmem:[%s192 + $0x20] sm:$0xf]
      %v208 = vld [vmem:[%s1] sm:$0xf]
      %v209 = vld [vmem:[%s1 + $0x4] sm:$0xf]
      %v210 = vld [vmem:[%s1 + $0x8] sm:$0xf]
      %v211 = vld [vmem:[%s1 + $0xc] sm:$0xf]
      %v212 = vld [vmem:[%s192 + $0x24] sm:$0x1]
      %v213 = vld [vmem:[%s1 + $0x10] sm:$0xf]
      %v214 = vld [vmem:[%s1 + $0x14] sm:$0xf]
      %v215 = vld [vmem:[%s1 + $0x18] sm:$0xf]
      %v216 = vld [vmem:[%s1 + $0x1c] sm:$0xf]
      %v227 = vunpack.c.l.b16 %v199
      %v228 = vunpack.c.l.b16 %v200
      %v229 = vunpack.c.l.b16 %v201
      %v230 = vunpack.c.l.b16 %v202
      %v231 = vunpack.c.l.b16 %v203
      %v232 = vunpack.c.l.b16 %v204
      %v233 = vunpack.c.l.b16 %v205
      %v234 = vunpack.c.l.b16 %v206
      %v235 = vunpack.c.l.b16 %v207
      %v236 = vunpack.c.l.b16 %v212
      %v237 = vpack.c.b16 %v228, %v227
      %v238 = vpack.c.b16 %v230, %v229
      %v239 = vpack.c.b16 %v232, %v231
      %v240 = vpack.c.b16 %v234, %v233
      %v241 = vpack.c.b16 %v236, %v235
      %vm242 = vsmask.f32 7424
      %v244 = vshrl.u32 %v237, 16
      %v246 = vshll.u32 %v237, 16
      %v248 = vrot.slane %v246, 1
      %v249 = vor.u32 %v244, %v248
      %v251 = vshll.u32 %v238, 16
      %v253 = vrot.slane %v251, 1
      %v254 = vsel %vm242, %v249, %v253
      %v255 = vshrl.u32 %v238, 16
      %v257 = vor.u32 %v255, %v253
      %v259 = vshll.u32 %v239, 16
      %v261 = vrot.slane %v259, 1
      %v262 = vsel %vm242, %v257, %v261
      %v263 = vshrl.u32 %v239, 16
      %v265 = vor.u32 %v263, %v261
      %v267 = vshll.u32 %v240, 16
      %v269 = vrot.slane %v267, 1
      %v270 = vsel %vm242, %v265, %v269
      %v271 = vshrl.u32 %v240, 16
      %v273 = vor.u32 %v271, %v269
      %v275 = vshll.u32 %v241, 16
      %v277 = vrot.slane %v275, 1
      %v278 = vsel %vm242, %v273, %v277
      %v279 = vshrl.u32 %v241, 16
      %v281 = vor.u32 %v279, %v277
      %v286 = vunpack.c.l.b16 %v213
      %v287 = vunpack.c.l.b16 %v214
      %v288 = vunpack.c.l.b16 %v215
      %v289 = vunpack.c.l.b16 %v216
      %v290 = vpack.c.b16 %v287, %v286
      %v291 = vpack.c.b16 %v289, %v288
      %vm294 = vcmask 261120
      %v296 = vsel %vm294, %v254, 0
      %v299 = vsel %vm294, %v262, 0
      %v302 = vsel %vm294, %v270, 0
      %v305 = vsel %vm294, %v278, 0
      %v308 = vsel %vm294, %v281, 0
      %310 = vmatprep.subr.bf16.mxu0 0
      %311 = vmatpush1.bf16.msra.mxu0 %v290
      %312 = vmatprep.subr.bf16.mxu0 0
      %313 = vmatpush1.bf16.msra.mxu0 %v291
      %314 = vmatprep.subr.bf16.mxu0 0
      %315 = vmatpush1.bf16.msra.mxu0 0
      %316 = vmatprep.subr.bf16.mxu0 0
      %317 = vmatpush1.bf16.msra.mxu0 0
      %318 = vmatprep.subr.bf16.mxu0 0
      %319 = vmatpush1.bf16.msra.mxu0 0
      %320 = vmatprep.subr.bf16.mxu0 0
      %321 = vmatpush1.bf16.msra.mxu0 0
      %322 = vmatprep.subr.bf16.mxu0 0
      %323 = vmatpush1.bf16.msra.mxu0 0
      %324 = vmatprep.subr.bf16.mxu0 0
      %325 = vmatpush1.bf16.msra.mxu0 0
      %326 = vmatprep.subr.bf16.mxu0 0
      %327 = vmatpush1.bf16.msra.mxu0 0
      %328 = vmatprep.subr.bf16.mxu0 0
      %329 = vmatpush1.bf16.msra.mxu0 0
      %330 = vmatprep.subr.bf16.mxu0 0
      %331 = vmatpush1.bf16.msra.mxu0 0
      %332 = vmatprep.subr.bf16.mxu0 0
      %333 = vmatpush1.bf16.msra.mxu0 0
      %334 = vmatprep.subr.bf16.mxu0 0
      %335 = vmatpush1.bf16.msra.mxu0 0
      %336 = vmatprep.subr.bf16.mxu0 0
      %337 = vmatpush1.bf16.msra.mxu0 0
      %338 = vmatprep.subr.bf16.mxu0 0
      %339 = vmatpush1.bf16.msra.mxu0 0
      %340 = vmatprep.subr.bf16.mxu0 0
      %341 = vmatpush1.bf16.msra.mxu0 0
      %342 = vmatprep.mubr.bf16.mxu0 0
      %343 = vmatmul.mubr.bf16.gmra.mrb[0].mxu0 %v296
      %v344 = vpop.f32.mrb[0].mxu0
      %v345 = vadd.f32 0.0, %v344
      %v346 = vpop.f32.mrb[0].mxu0
      %v347 = vpop.f32.mrb[0].mxu0
      %v348 = vadd.f32 0.0, %v347
      %v349 = vpop.f32.mrb[0].mxu0
      %350 = vmatprep.mubr.bf16.mxu0 0
      %351 = vmatmul.mubr.bf16.gmra.mrb[0].mxu0 %v299
      %v352 = vpop.f32.mrb[0].mxu0
      %v353 = vadd.f32 0.0, %v352
      %v354 = vpop.f32.mrb[0].mxu0
      %v355 = vpop.f32.mrb[0].mxu0
      %v356 = vadd.f32 0.0, %v355
      %v357 = vpop.f32.mrb[0].mxu0
      %358 = vmatprep.mubr.bf16.mxu0 0
      %359 = vmatmul.mubr.bf16.gmra.mrb[0].mxu0 %v302
      %v360 = vpop.f32.mrb[0].mxu0
      %v361 = vadd.f32 0.0, %v360
      %v362 = vpop.f32.mrb[0].mxu0
      %v363 = vpop.f32.mrb[0].mxu0
      %v364 = vadd.f32 0.0, %v363
      %v365 = vpop.f32.mrb[0].mxu0
      %366 = vmatprep.mubr.bf16.mxu0 0
      %367 = vmatmul.mubr.bf16.gmra.mrb[0].mxu0 %v305
      %v368 = vpop.f32.mrb[0].mxu0
      %v369 = vadd.f32 0.0, %v368
      %v370 = vpop.f32.mrb[0].mxu0
      %v371 = vpop.f32.mrb[0].mxu0
      %v372 = vadd.f32 0.0, %v371
      %v373 = vpop.f32.mrb[0].mxu0
      %374 = vmatprep.mubr.bf16.mxu0 0
      %375 = vmatmul.mubr.bf16.gmra.mrb[0].mxu0 %v308
      %v376 = vpop.f32.mrb[0].mxu0
      %v377 = vadd.f32 0.0, %v376
      %v378 = vpop.f32.mrb[0].mxu0
      %v379 = vpop.f32.mrb[0].mxu0
      %v380 = vpop.f32.mrb[0].mxu0
      %381 = vdwg.mxu0
      %v382 = vpack.c.b16 %v235, %v235
      %v387 = vunpack.c.l.b16 %v208
      %v388 = vunpack.c.l.b16 %v209
      %v389 = vunpack.c.l.b16 %v210
      %v390 = vunpack.c.l.b16 %v211
      %v391 = vpack.c.b16 %v388, %v387
      %v392 = vpack.c.b16 %v390, %v389
      %v395 = vsel %vm294, %v237, 0
      %v397 = vsel %vm294, %v238, 0
      %v399 = vsel %vm294, %v239, 0
      %v401 = vsel %vm294, %v240, 0
      %v404 = vsel %vm294, %v382, 0
      %406 = vmatprep.subr.bf16.mxu0 0
      %407 = vmatpush1.bf16.msra.mxu0 %v391
      %408 = vmatprep.subr.bf16.mxu0 0
      %409 = vmatpush1.bf16.msra.mxu0 %v392
      %410 = vmatprep.subr.bf16.mxu0 0
      %411 = vmatpush1.bf16.msra.mxu0 0
      %412 = vmatprep.subr.bf16.mxu0 0
      %413 = vmatpush1.bf16.msra.mxu0 0
      %414 = vmatprep.subr.bf16.mxu0 0
      %415 = vmatpush1.bf16.msra.mxu0 0
      %416 = vmatprep.subr.bf16.mxu0 0
      %417 = vmatpush1.bf16.msra.mxu0 0
      %418 = vmatprep.subr.bf16.mxu0 0
      %419 = vmatpush1.bf16.msra.mxu0 0
      %420 = vmatprep.subr.bf16.mxu0 0
      %421 = vmatpush1.bf16.msra.mxu0 0
      %422 = vmatprep.subr.bf16.mxu0 0
      %423 = vmatpush1.bf16.msra.mxu0 0
      %424 = vmatprep.subr.bf16.mxu0 0
      %425 = vmatpush1.bf16.msra.mxu0 0
      %426 = vmatprep.subr.bf16.mxu0 0
      %427 = vmatpush1.bf16.msra.mxu0 0
      %428 = vmatprep.subr.bf16.mxu0 0
      %429 = vmatpush1.bf16.msra.mxu0 0
      %430 = vmatprep.subr.bf16.mxu0 0
      %431 = vmatpush1.bf16.msra.mxu0 0
      %432 = vmatprep.subr.bf16.mxu0 0
      %433 = vmatpush1.bf16.msra.mxu0 0
      %434 = vmatprep.subr.bf16.mxu0 0
      %435 = vmatpush1.bf16.msra.mxu0 0
      %436 = vmatprep.subr.bf16.mxu0 0
      %437 = vmatpush1.bf16.msra.mxu0 0
      %438 = vmatprep.mubr.bf16.mxu0 0
      %439 = vmatmul.mubr.bf16.gmra.mrb[0].mxu0 %v395
      %v440 = vpop.f32.mrb[0].mxu0
      %v441 = vadd.f32 %v345, %v440
      %v442 = vpop.f32.mrb[0].mxu0
      %v443 = vpop.f32.mrb[0].mxu0
      %v444 = vadd.f32 %v348, %v443
      %v445 = vpop.f32.mrb[0].mxu0
      %446 = vmatprep.mubr.bf16.mxu0 0
      %447 = vmatmul.mubr.bf16.gmra.mrb[0].mxu0 %v397
      %v448 = vpop.f32.mrb[0].mxu0
      %v449 = vadd.f32 %v353, %v448
      %v450 = vpop.f32.mrb[0].mxu0
      %v451 = vpop.f32.mrb[0].mxu0
      %v452 = vadd.f32 %v356, %v451
      %v453 = vpop.f32.mrb[0].mxu0
      %454 = vmatprep.mubr.bf16.mxu0 0
      %455 = vmatmul.mubr.bf16.gmra.mrb[0].mxu0 %v399
      %v456 = vpop.f32.mrb[0].mxu0
      %v457 = vadd.f32 %v361, %v456
      %v458 = vpop.f32.mrb[0].mxu0
      %v459 = vpop.f32.mrb[0].mxu0
      %v460 = vadd.f32 %v364, %v459
      %v461 = vpop.f32.mrb[0].mxu0
      %462 = vmatprep.mubr.bf16.mxu0 0
      %463 = vmatmul.mubr.bf16.gmra.mrb[0].mxu0 %v401
      %v464 = vpop.f32.mrb[0].mxu0
      %v465 = vadd.f32 %v369, %v464
      %v466 = vpop.f32.mrb[0].mxu0
      %v467 = vpop.f32.mrb[0].mxu0
      %v468 = vadd.f32 %v372, %v467
      %v469 = vpop.f32.mrb[0].mxu0
      %470 = vmatprep.mubr.bf16.mxu0 0
      %471 = vmatmul.mubr.bf16.gmra.mrb[0].mxu0 %v404
      %v472 = vpop.f32.mrb[0].mxu0
      %v473 = vadd.f32 %v377, %v472
      %v474 = vpop.f32.mrb[0].mxu0
      %v475 = vpop.f32.mrb[0].mxu0
      %v476 = vpop.f32.mrb[0].mxu0
      %477 = vdwg.mxu0
      %v478 = vld [vmem:[%s192 + $0x4] sm:$0xf]
      %v479 = vld [vmem:[%s192 + $0x8] sm:$0xf]
      %v480 = vld [vmem:[%s192 + $0xc] sm:$0xf]
      %v481 = vld [vmem:[%s192 + $0x10] sm:$0xf]
      %v482 = vld [vmem:[%s192 + $0x14] sm:$0xf]
      %v483 = vld [vmem:[%s192 + $0x18] sm:$0xf]
      %v484 = vld [vmem:[%s192 + $0x1c] sm:$0xf]
      %v485 = vld [vmem:[%s192 + $0x20] sm:$0xf]
      %v486 = vld [vmem:[%s192 + $0x24] sm:$0xf]
      %v487 = vld [vmem:[%s192 + $0x28] sm:$0x1]
      %v488 = vld [vmem:[%s1 + $0x20] sm:$0xf]
      %v489 = vld [vmem:[%s1 + $0x24] sm:$0xf]
      %v490 = vld [vmem:[%s1 + $0x28] sm:$0xf]
      %v491 = vld [vmem:[%s1 + $0x2c] sm:$0xf]
      %v502 = vunpack.c.l.b16 %v478
      %v503 = vunpack.c.l.b16 %v479
      %v504 = vunpack.c.l.b16 %v480
      %v505 = vunpack.c.l.b16 %v481
      %v506 = vunpack.c.l.b16 %v482
      %v507 = vunpack.c.l.b16 %v483
      %v508 = vunpack.c.l.b16 %v484
      %v509 = vunpack.c.l.b16 %v485
      %v510 = vunpack.c.l.b16 %v486
      %v511 = vunpack.c.l.b16 %v487
      %v512 = vpack.c.b16 %v503, %v502
      %v513 = vpack.c.b16 %v505, %v504
      %v514 = vpack.c.b16 %v507, %v506
      %v515 = vpack.c.b16 %v509, %v508
      %v516 = vpack.c.b16 %v511, %v510
      %v518 = vshrl.u32 %v512, 16
      %v520 = vshll.u32 %v512, 16
      %v522 = vrot.slane %v520, 1
      %v523 = vor.u32 %v518, %v522
      %v525 = vshll.u32 %v513, 16
      %v527 = vrot.slane %v525, 1
      %v528 = vsel %vm242, %v523, %v527
      %v529 = vshrl.u32 %v513, 16
      %v531 = vor.u32 %v529, %v527
      %v533 = vshll.u32 %v514, 16
      %v535 = vrot.slane %v533, 1
      %v536 = vsel %vm242, %v531, %v535
      %v537 = vshrl.u32 %v514, 16
      %v539 = vor.u32 %v537, %v535
      %v541 = vshll.u32 %v515, 16
      %v543 = vrot.slane %v541, 1
      %v544 = vsel %vm242, %v539, %v543
      %v545 = vshrl.u32 %v515, 16
      %v547 = vor.u32 %v545, %v543
      %v549 = vshll.u32 %v516, 16
      %v551 = vrot.slane %v549, 1
      %v552 = vsel %vm242, %v547, %v551
      %v553 = vshrl.u32 %v516, 16
      %v555 = vor.u32 %v553, %v551
      %v560 = vunpack.c.l.b16 %v488
      %v561 = vunpack.c.l.b16 %v489
      %v562 = vunpack.c.l.b16 %v490
      %v563 = vunpack.c.l.b16 %v491
      %v564 = vpack.c.b16 %v561, %v560
      %v565 = vpack.c.b16 %v563, %v562
      %v569 = vsel %vm294, %v528, 0
      %v572 = vsel %vm294, %v536, 0
      %v575 = vsel %vm294, %v544, 0
      %v578 = vsel %vm294, %v552, 0
      %v581 = vsel %vm294, %v555, 0
      %583 = vmatprep.subr.bf16.mxu0 0
      %584 = vmatpush1.bf16.msra.mxu0 %v564
      %585 = vmatprep.subr.bf16.mxu0 0
      %586 = vmatpush1.bf16.msra.mxu0 %v565
      %587 = vmatprep.subr.bf16.mxu0 0
      %588 = vmatpush1.bf16.msra.mxu0 0
      %589 = vmatprep.subr.bf16.mxu0 0
      %590 = vmatpush1.bf16.msra.mxu0 0
      %591 = vmatprep.subr.bf16.mxu0 0
      %592 = vmatpush1.bf16.msra.mxu0 0
      %593 = vmatprep.subr.bf16.mxu0 0
      %594 = vmatpush1.bf16.msra.mxu0 0
      %595 = vmatprep.subr.bf16.mxu0 0
      %596 = vmatpush1.bf16.msra.mxu0 0
      %597 = vmatprep.subr.bf16.mxu0 0
      %598 = vmatpush1.bf16.msra.mxu0 0
      %599 = vmatprep.subr.bf16.mxu0 0
      %600 = vmatpush1.bf16.msra.mxu0 0
      %601 = vmatprep.subr.bf16.mxu0 0
      %602 = vmatpush1.bf16.msra.mxu0 0
      %603 = vmatprep.subr.bf16.mxu0 0
      %604 = vmatpush1.bf16.msra.mxu0 0
      %605 = vmatprep.subr.bf16.mxu0 0
      %606 = vmatpush1.bf16.msra.mxu0 0
      %607 = vmatprep.subr.bf16.mxu0 0
      %608 = vmatpush1.bf16.msra.mxu0 0
      %609 = vmatprep.subr.bf16.mxu0 0
      %610 = vmatpush1.bf16.msra.mxu0 0
      %611 = vmatprep.subr.bf16.mxu0 0
      %612 = vmatpush1.bf16.msra.mxu0 0
      %613 = vmatprep.subr.bf16.mxu0 0
      %614 = vmatpush1.bf16.msra.mxu0 0
      %615 = vmatprep.mubr.bf16.mxu0 0
      %616 = vmatmul.mubr.bf16.gmra.mrb[0].mxu0 %v569
      %v617 = vpop.f32.mrb[0].mxu0
      %v618 = vadd.f32 0.0, %v617
      %v619 = vpop.f32.mrb[0].mxu0
      %v620 = vpop.f32.mrb[0].mxu0
      %v621 = vadd.f32 0.0, %v620
      %v622 = vpop.f32.mrb[0].mxu0
      %623 = vmatprep.mubr.bf16.mxu0 0
      %624 = vmatmul.mubr.bf16.gmra.mrb[0].mxu0 %v572
      %v625 = vpop.f32.mrb[0].mxu0
      %v626 = vadd.f32 0.0, %v625
      %v627 = vpop.f32.mrb[0].mxu0
      %v628 = vpop.f32.mrb[0].mxu0
      %v629 = vadd.f32 0.0, %v628
      %v630 = vpop.f32.mrb[0].mxu0
      %631 = vmatprep.mubr.bf16.mxu0 0
      %632 = vmatmul.mubr.bf16.gmra.mrb[0].mxu0 %v575
      %v633 = vpop.f32.mrb[0].mxu0
      %v634 = vadd.f32 0.0, %v633
      %v635 = vpop.f32.mrb[0].mxu0
      %v636 = vpop.f32.mrb[0].mxu0
      %v637 = vadd.f32 0.0, %v636
      %v638 = vpop.f32.mrb[0].mxu0
      %639 = vmatprep.mubr.bf16.mxu0 0
      %640 = vmatmul.mubr.bf16.gmra.mrb[0].mxu0 %v578
      %v641 = vpop.f32.mrb[0].mxu0
      %v642 = vadd.f32 0.0, %v641
      %v643 = vpop.f32.mrb[0].mxu0
      %v644 = vpop.f32.mrb[0].mxu0
      %v645 = vadd.f32 0.0, %v644
      %v646 = vpop.f32.mrb[0].mxu0
      %647 = vmatprep.mubr.bf16.mxu0 0
      %648 = vmatmul.mubr.bf16.gmra.mrb[0].mxu0 %v581
      %v649 = vpop.f32.mrb[0].mxu0
      %v650 = vadd.f32 0.0, %v649
      %v651 = vpop.f32.mrb[0].mxu0
      %v652 = vpop.f32.mrb[0].mxu0
      %v653 = vpop.f32.mrb[0].mxu0
      %654 = vdwg.mxu0
      %v655 = vadd.f32 %v441, %v618
      %v656 = vadd.f32 %v444, %v621
      %v657 = vadd.f32 %v449, %v626
      %v658 = vadd.f32 %v452, %v629
      %v659 = vadd.f32 %v457, %v634
      %v660 = vadd.f32 %v460, %v637
      %v661 = vadd.f32 %v465, %v642
      %v662 = vadd.f32 %v468, %v645
      %v663 = vadd.f32 %v473, %v650
      %v664 = vld [vmem:[%s192 + $0x4] sm:$0xe]
      %v665 = vld [vmem:[%s1 + $0x30] sm:$0xf]
      %v666 = vld [vmem:[%s1 + $0x34] sm:$0xf]
      %v667 = vld [vmem:[%s1 + $0x38] sm:$0xf]
      %v668 = vld [vmem:[%s1 + $0x3c] sm:$0xf]
      %v670 = vunpack.c.l.b16 %v664
      %v671 = vpack.c.b16 %v503, %v670
      %vm672 = vcmask 1046528
      %v673 = vrot.slane %v671, 1
      %v674 = vrot.slane %v513, 1
      %v675 = vsel %vm672, %v673, %v674
      %v676 = vrot.slane %v514, 1
      %v677 = vsel %vm672, %v674, %v676
      %v678 = vrot.slane %v515, 1
      %v679 = vsel %vm672, %v676, %v678
      %v680 = vrot.slane %v516, 1
      %v681 = vsel %vm672, %v678, %v680
      %v686 = vunpack.c.l.b16 %v665
      %v687 = vunpack.c.l.b16 %v666
      %v688 = vunpack.c.l.b16 %v667
      %v689 = vunpack.c.l.b16 %v668
      %v690 = vpack.c.b16 %v687, %v686
      %v691 = vpack.c.b16 %v689, %v688
      %v695 = vsel %vm294, %v675, 0
      %v698 = vsel %vm294, %v677, 0
      %v701 = vsel %vm294, %v679, 0
      %v704 = vsel %vm294, %v681, 0
      %v707 = vsel %vm294, %v680, 0
      %709 = vmatprep.subr.bf16.mxu0 0
      %710 = vmatpush1.bf16.msra.mxu0 %v690
      %711 = vmatprep.subr.bf16.mxu0 0
      %712 = vmatpush1.bf16.msra.mxu0 %v691
      %713 = vmatprep.subr.bf16.mxu0 0
      %714 = vmatpush1.bf16.msra.mxu0 0
      %715 = vmatprep.subr.bf16.mxu0 0
      %716 = vmatpush1.bf16.msra.mxu0 0
      %717 = vmatprep.subr.bf16.mxu0 0
      %718 = vmatpush1.bf16.msra.mxu0 0
      %719 = vmatprep.subr.bf16.mxu0 0
      %720 = vmatpush1.bf16.msra.mxu0 0
      %721 = vmatprep.subr.bf16.mxu0 0
      %722 = vmatpush1.bf16.msra.mxu0 0
      %723 = vmatprep.subr.bf16.mxu0 0
      %724 = vmatpush1.bf16.msra.mxu0 0
      %725 = vmatprep.subr.bf16.mxu0 0
      %726 = vmatpush1.bf16.msra.mxu0 0
      %727 = vmatprep.subr.bf16.mxu0 0
      %728 = vmatpush1.bf16.msra.mxu0 0
      %729 = vmatprep.subr.bf16.mxu0 0
      %730 = vmatpush1.bf16.msra.mxu0 0
      %731 = vmatprep.subr.bf16.mxu0 0
      %732 = vmatpush1.bf16.msra.mxu0 0
      %733 = vmatprep.subr.bf16.mxu0 0
      %734 = vmatpush1.bf16.msra.mxu0 0
      %735 = vmatprep.subr.bf16.mxu0 0
      %736 = vmatpush1.bf16.msra.mxu0 0
      %737 = vmatprep.subr.bf16.mxu0 0
      %738 = vmatpush1.bf16.msra.mxu0 0
      %739 = vmatprep.subr.bf16.mxu0 0
      %740 = vmatpush1.bf16.msra.mxu0 0
      %741 = vmatprep.mubr.bf16.mxu0 0
      %742 = vmatmul.mubr.bf16.gmra.mrb[0].mxu0 %v695
      %v743 = vpop.f32.mrb[0].mxu0
      %v744 = vadd.f32 0.0, %v743
      %v745 = vpop.f32.mrb[0].mxu0
      %v746 = vpop.f32.mrb[0].mxu0
      %v747 = vadd.f32 0.0, %v746
      %v748 = vpop.f32.mrb[0].mxu0
      %749 = vmatprep.mubr.bf16.mxu0 0
      %750 = vmatmul.mubr.bf16.gmra.mrb[0].mxu0 %v698
      %v751 = vpop.f32.mrb[0].mxu0
      %v752 = vadd.f32 0.0, %v751
      %v753 = vpop.f32.mrb[0].mxu0
      %v754 = vpop.f32.mrb[0].mxu0
      %v755 = vadd.f32 0.0, %v754
      %v756 = vpop.f32.mrb[0].mxu0
      %757 = vmatprep.mubr.bf16.mxu0 0
      %758 = vmatmul.mubr.bf16.gmra.mrb[0].mxu0 %v701
      %v759 = vpop.f32.mrb[0].mxu0
      %v760 = vadd.f32 0.0, %v759
      %v761 = vpop.f32.mrb[0].mxu0
      %v762 = vpop.f32.mrb[0].mxu0
      %v763 = vadd.f32 0.0, %v762
      %v764 = vpop.f32.mrb[0].mxu0
      %765 = vmatprep.mubr.bf16.mxu0 0
      %766 = vmatmul.mubr.bf16.gmra.mrb[0].mxu0 %v704
      %v767 = vpop.f32.mrb[0].mxu0
      %v768 = vadd.f32 0.0, %v767
      %v769 = vpop.f32.mrb[0].mxu0
      %v770 = vpop.f32.mrb[0].mxu0
      %v771 = vadd.f32 0.0, %v770
      %v772 = vpop.f32.mrb[0].mxu0
      %773 = vmatprep.mubr.bf16.mxu0 0
      %774 = vmatmul.mubr.bf16.gmra.mrb[0].mxu0 %v707
      %v775 = vpop.f32.mrb[0].mxu0
      %v776 = vadd.f32 0.0, %v775
      %v777 = vpop.f32.mrb[0].mxu0
      %v778 = vpop.f32.mrb[0].mxu0
      %v779 = vpop.f32.mrb[0].mxu0
      %780 = vdwg.mxu0
      %v781 = vadd.f32 %v655, %v744
      %v782 = vadd.f32 %v656, %v747
      %v783 = vadd.f32 %v657, %v752
      %v784 = vadd.f32 %v658, %v755
      %v785 = vadd.f32 %v659, %v760
      %v786 = vadd.f32 %v660, %v763
      %v787 = vadd.f32 %v661, %v768
      %v788 = vadd.f32 %v662, %v771
      %v789 = vadd.f32 %v663, %v776
      %v790 = vld [vmem:[%s3] sm:$0xff]
      %v791 = vld [vmem:[%s3 + $0x8] sm:$0xff]
      %v792 = vld [vmem:[%s3 + $0x10] sm:$0xff]
      %v793 = vld [vmem:[%s3 + $0x18] sm:$0xff]
      %v794 = vld [vmem:[%s3 + $0x20] sm:$0xff]
      %v795 = vld [vmem:[%s3 + $0x28] sm:$0xff]
      %v796 = vld [vmem:[%s3 + $0x30] sm:$0xff]
      %v797 = vld [vmem:[%s3 + $0x38] sm:$0xff]
      %v798 = vld [vmem:[%s3 + $0x40] sm:$0xff]
      %800 = vset.pattern.permute.xlu0 0
      %801 = vperm.xlu0 %800, %v790
      %v802 = vpop.permute.xlu0 %801
      %805 = vset.pattern.permute.xlu0 0
      %806 = vperm.xlu0 %805, %v791
      %v807 = vpop.permute.xlu0 %806
      %810 = vset.pattern.permute.xlu0 0
      %811 = vperm.xlu0 %810, %v792
      %v812 = vpop.permute.xlu0 %811
      %815 = vset.pattern.permute.xlu0 0
      %816 = vperm.xlu0 %815, %v793
      %v817 = vpop.permute.xlu0 %816
      %820 = vset.pattern.permute.xlu0 0
      %821 = vperm.xlu0 %820, %v794
      %v822 = vpop.permute.xlu0 %821
      %825 = vset.pattern.permute.xlu0 0
      %826 = vperm.xlu0 %825, %v795
      %v827 = vpop.permute.xlu0 %826
      %830 = vset.pattern.permute.xlu0 0
      %831 = vperm.xlu0 %830, %v796
      %v832 = vpop.permute.xlu0 %831
      %835 = vset.pattern.permute.xlu0 0
      %836 = vperm.xlu0 %835, %v797
      %v837 = vpop.permute.xlu0 %836
      %840 = vset.pattern.permute.xlu0 0
      %841 = vperm.xlu0 %840, %v798
      %v842 = vpop.permute.xlu0 %841
      %v844 = vmul.f32 %v781, %v802
      %v845 = vmul.f32 %v782, %v807
      %v846 = vmul.f32 %v783, %v812
      %v847 = vmul.f32 %v784, %v817
      %v848 = vmul.f32 %v785, %v822
      %v849 = vmul.f32 %v786, %v827
      %v850 = vmul.f32 %v787, %v832
      %v851 = vmul.f32 %v788, %v837
      %v852 = vmul.f32 %v789, %v842
      %vm853 = vcmask 130048
      %v854 = vsel %vm853, %v844, 0.0
      %v855 = vsel %vm853, %v845, 0.0
      %v856 = vadd.f32 %v854, %v855
      %v857 = vsel %vm853, %v846, 0.0
      %v858 = vadd.f32 %v856, %v857
      %v859 = vsel %vm853, %v847, 0.0
      %v860 = vadd.f32 %v858, %v859
      %v861 = vsel %vm853, %v848, 0.0
      %v862 = vadd.f32 %v860, %v861
      %v863 = vsel %vm853, %v849, 0.0
      %v864 = vadd.f32 %v862, %v863
      %v865 = vsel %vm853, %v850, 0.0
      %v866 = vadd.f32 %v864, %v865
      %v867 = vsel %vm853, %v851, 0.0
      %v868 = vadd.f32 %v866, %v867
      %v869 = vsel %vm853, %v852, 0.0
      %v870 = vadd.f32 %v868, %v869
      %v871 = vrot.slane %v870, 4
      %v872 = vadd.f32 %v870, %v871
      %v873 = vrot.slane %v872, 2
      %v874 = vadd.f32 %v872, %v873
      %v875 = vrot.slane %v874, 1
      %v876 = vadd.f32 %v874, %v875
      %v877 = vmul.f32 %v781, %v781
      %v878 = vmul.f32 %v782, %v782
      %v879 = vmul.f32 %v783, %v783
      %v880 = vmul.f32 %v784, %v784
      %v881 = vmul.f32 %v785, %v785
      %v882 = vmul.f32 %v786, %v786
      %v883 = vmul.f32 %v787, %v787
      %v884 = vmul.f32 %v788, %v788
      %v885 = vmul.f32 %v789, %v789
      %v886 = vmul.f32 %v877, %v802
      %v887 = vmul.f32 %v878, %v807
      %v888 = vmul.f32 %v879, %v812
      %v889 = vmul.f32 %v880, %v817
      %v890 = vmul.f32 %v881, %v822
      %v891 = vmul.f32 %v882, %v827
      %v892 = vmul.f32 %v883, %v832
      %v893 = vmul.f32 %v884, %v837
      %v894 = vmul.f32 %v885, %v842
      %v895 = vsel %vm853, %v886, 0.0
      %v896 = vsel %vm853, %v887, 0.0
      %v897 = vadd.f32 %v895, %v896
      %v898 = vsel %vm853, %v888, 0.0
      %v899 = vadd.f32 %v897, %v898
      %v900 = vsel %vm853, %v889, 0.0
      %v901 = vadd.f32 %v899, %v900
      %v902 = vsel %vm853, %v890, 0.0
      %v903 = vadd.f32 %v901, %v902
      %v904 = vsel %vm853, %v891, 0.0
      %v905 = vadd.f32 %v903, %v904
      %v906 = vsel %vm853, %v892, 0.0
      %v907 = vadd.f32 %v905, %v906
      %v908 = vsel %vm853, %v893, 0.0
      %v909 = vadd.f32 %v907, %v908
      %v910 = vsel %vm853, %v894, 0.0
      %v911 = vadd.f32 %v909, %v910
      %v912 = vrot.slane %v911, 4
      %v913 = vadd.f32 %v911, %v912
      %v914 = vrot.slane %v913, 2
      %v915 = vadd.f32 %v913, %v914
      %v916 = vrot.slane %v915, 1
      %v917 = vadd.f32 %v915, %v916
      %v918 = vmul.f32 %v876, 0.015625
      %v919 = vmul.f32 %v917, 0.015625
      %v920 = vmul.f32 %v918, %v918
      %v921 = vsub.f32 %v919, %v920
      %v922 = vmax.f32 %v921, 0.0
      %v923 = vsub.f32 %v781, %v918
      %v924 = vsub.f32 %v782, %v918
      %v925 = vsub.f32 %v783, %v918
      %v926 = vsub.f32 %v784, %v918
      %v927 = vsub.f32 %v785, %v918
      %v928 = vsub.f32 %v786, %v918
      %v929 = vsub.f32 %v787, %v918
      %v930 = vsub.f32 %v788, %v918
      %v931 = vsub.f32 %v789, %v918
      %v932 = vadd.f32 %v922, 1e-05
      %v933 = vrsqrt.pop %v932
      %v934 = vmul.f32 %v923, %v933
      %v935 = vmul.f32 %v924, %v933
      %v936 = vmul.f32 %v925, %v933
      %v937 = vmul.f32 %v926, %v933
      %v938 = vmul.f32 %v927, %v933
      %v939 = vmul.f32 %v928, %v933
      %v940 = vmul.f32 %v929, %v933
      %v941 = vmul.f32 %v930, %v933
      %v942 = vmul.f32 %v931, %v933
      %vm943 = vcmp.ge.f32.partialorder %v934, 0.0
      %vm944 = vcmp.ge.f32.partialorder %v935, 0.0
      %vm945 = vcmp.ge.f32.partialorder %v936, 0.0
      %vm946 = vcmp.ge.f32.partialorder %v937, 0.0
      %vm947 = vcmp.ge.f32.partialorder %v938, 0.0
      %vm948 = vcmp.ge.f32.partialorder %v939, 0.0
      %vm949 = vcmp.ge.f32.partialorder %v940, 0.0
      %vm950 = vcmp.ge.f32.partialorder %v941, 0.0
      %vm951 = vcmp.ge.f32.partialorder %v942, 0.0
      %v952 = vmul.f32 %v934, 0.2
      %v953 = vmul.f32 %v935, 0.2
      %v954 = vmul.f32 %v936, 0.2
      %v955 = vmul.f32 %v937, 0.2
      %v956 = vmul.f32 %v938, 0.2
      %v957 = vmul.f32 %v939, 0.2
      %v958 = vmul.f32 %v940, 0.2
      %v959 = vmul.f32 %v941, 0.2
      %v960 = vmul.f32 %v942, 0.2
      %v961 = vsel %vm943, %v934, %v952
      %v962 = vsel %vm944, %v935, %v953
      %v963 = vsel %vm945, %v936, %v954
      %v964 = vsel %vm946, %v937, %v955
      %v965 = vsel %vm947, %v938, %v956
      %v966 = vsel %vm948, %v939, %v957
      %v967 = vsel %vm949, %v940, %v958
      %v968 = vsel %vm950, %v941, %v959
      %v969 = vsel %vm951, %v942, %v960
      %v970 = vpack.c.bf16 %v962, %v961
      %v971 = vpack.c.bf16 %v964, %v963
      %v972 = vpack.c.bf16 %v966, %v965
      %v973 = vpack.c.bf16 %v968, %v967
      %v974 = vpack.c.bf16 %v969, %v969
      %v980 = vunpack.c.l.b16 %v970
      %v981 = vunpack.c.h.b16 %v970
      %v982 = vunpack.c.l.b16 %v971
      %v983 = vunpack.c.h.b16 %v971
      %v984 = vunpack.c.l.b16 %v972
      %v985 = vunpack.c.h.b16 %v972
      %v986 = vunpack.c.l.b16 %v973
      %v987 = vunpack.c.h.b16 %v973
      %v988 = vunpack.c.l.b16 %v974
      %v989 = vpack.c.b16 %v980, %v980
      %v990 = vpack.c.b16 %v981, %v981
      %v991 = vpack.c.b16 %v982, %v982
      %v992 = vpack.c.b16 %v983, %v983
      %v993 = vpack.c.b16 %v984, %v984
      %v994 = vpack.c.b16 %v985, %v985
      %v995 = vpack.c.b16 %v986, %v986
      %v996 = vpack.c.b16 %v987, %v987
      %v997 = vpack.c.b16 %v988, %v988
      %vm1007 = vcmask 125952
      %1008 = vst.msk [vmem:[%s197] sm:$0xf] %vm1007, %v989
      %1009 = vst.msk [vmem:[%s197 + $0x4] sm:$0xf] %vm1007, %v990
      %1010 = vst.msk [vmem:[%s197 + $0x8] sm:$0xf] %vm1007, %v991
      %1011 = vst.msk [vmem:[%s197 + $0xc] sm:$0xf] %vm1007, %v992
      %1012 = vst.msk [vmem:[%s197 + $0x10] sm:$0xf] %vm1007, %v993
      %1013 = vst.msk [vmem:[%s197 + $0x14] sm:$0xf] %vm1007, %v994
      %1014 = vst.msk [vmem:[%s197 + $0x18] sm:$0xf] %vm1007, %v995
      %1015 = vst.msk [vmem:[%s197 + $0x1c] sm:$0xf] %vm1007, %v996
      %1016 = vst.msk [vmem:[%s197 + $0x20] sm:$0xf] %vm1007, %v997
      %p1017 = scmp.lt.s32.totalorder %s15, 1
      %s1018 = scalar_select %p1017, %s15, 1
      %s1019 = smul.addr %s1018, 9
      %s1020 = smul.addr %s1019, 4
      %s1021 = scalar_lea.vmem %s4, %s1020
      // Predicated region
      $region37: #{cycle_discriminator.6} parent=35 // pred_check
        %p1022 = pneg %p122
      $region38: #{cycle_discriminator.6} parent=35 // pred_check_branch
        %1024 = sbr.rel (%p1022) target = $region40
      $region39: #{cycle_discriminator.6} parent=35 // pred_region
        _
      $region40: #{cycle_discriminator.6} parent=35 // pred_fallthru
        _
    $region36: #{cycle_discriminator.6} parent=5 // pred_fallthru
      _
    %p1025 = scmp.le.s32.totalorder 2, %s10
    // Predicated region
    $region41: #{cycle_discriminator.6} parent=5 // pred_check
      %p1026 = pneg %p1025
    $region42: #{cycle_discriminator.6} parent=5 // pred_check_branch
      %1028 = sbr.rel (%p1026) target = $region44
    $region43: #{cycle_discriminator.6} parent=5 // pred_region
      %s1029 = ssub.s32 %s10, 2
      // Predicated region
      $region45: #{cycle_discriminator.6} parent=43 // pred_check
        %p1030 = pneg %p128
      $region46: #{cycle_discriminator.6} parent=43 // pred_check_branch
        %1032 = sbr.rel (%p1030) target = $region48
      $region47: #{cycle_discriminator.6} parent=43 // pred_region
        %p1033 = scmp.lt.s32.totalorder %s16, 1
        %s1034 = scalar_select %p1033, %s16, 1
        %s1035 = smul.addr %s1034, 9
        %s1036 = smul.addr %s1035, 4
        %s1037 = scalar_lea.vmem %s4, %s1036
      $region48: #{cycle_discriminator.6} parent=43 // pred_fallthru
        _
    $region44: #{cycle_discriminator.6} parent=5 // pred_fallthru
      _
  $region6: #{cycle_discriminator.6} parent=0 // loop_footer
    %s14 = sadd.s32 1, %s10
  $region7: #{cycle_discriminator.6} parent=0 // loop_footer_branch
    %9 = sbr.rel target = $region3
  $region8: #{cycle_discriminator.6} parent=0 // loop_exit
    _

// kernel: cycle_discriminator.7
$region0: #{cycle_discriminator.7}
  #allocation0 [shape = 'u32[]', space=smem, size = 0x4, offset = 0x4, fixed_abs, tag = 'smem constant byte address 0x4 - core index']
  #allocation1 [shape = 'u32[144,128]{1,0:T(1,128)}', space=vmem, size = 0x12000, scoped, tag = 'internal scratch']
  %s0 = inlined_call_operand.vmem [shape: bf16[2,26,64], index: 0, kind: input, shape index: {}]
  %s1 = inlined_call_operand.vmem [shape: bf16[256,32], index: 1, kind: input, shape index: {}]
  %s2 = inlined_call_operand.vmem [shape: f32[1,32], index: 2, kind: input, shape index: {}]
  %s3 = inlined_call_operand.vmem [shape: f32[20,1], index: 3, kind: input, shape index: {}]
  %s4 = inlined_call_operand.vmem [shape: bf16[2,20,32], index: 4, kind: output, shape index: {}]
  %s5 = sld [smem:[#allocation0]]
  $region49: #{cycle_discriminator.7} parent=0
    _
  %s7 = ssub.s32 1, %s5
  %s8 = scalar_select 0, %s7, %s5
  loop: start=0, step=1, limit=4
  $region2: #{cycle_discriminator.7} parent=0 // loop_pre_header
    _
  $region3: #{cycle_discriminator.7} parent=0 // loop_header
    %s10 = sphi 0, %s14
    %p11 = scmp.ge.s32.totalorder %s10, 4
    %s20 = sphi 0, %s22
    %s23 = sphi 0, %s20
    %s24 = sphi 0, %s23
    %s40 = sphi 0, %s24
    %s44 = sphi 0, %s44
    %s46 = sphi 0, %s44
    %s47 = sphi 0, %s46
    %s61 = sphi 0, %s47
    %s65 = sphi 0, %s65
    %s67 = sphi 0, %s65
    %s68 = sphi 0, %s67
    %s82 = sphi 0, %s68
    %s86 = sphi 0, %s86
    %s88 = sphi 0, %s86
    %s89 = sphi 0, %s88
    %s103 = sphi 0, %s89
    %s109 = sphi 0, %s111
    %s112 = sphi 0, %s109
    %s113 = sphi 0, %s112
    %s129 = sphi 0, %s113
  $region4: #{cycle_discriminator.7} parent=0 // loop_header_branch
    %13 = sbr.rel (%p11) target = $region8
  $region5: #{cycle_discriminator.7} parent=0 // loop_body
    %s15 = ssub.s32 %s10, 1
    %s16 = ssub.s32 %s10, 2
    %s17 = sadd.s32 %s10, 1
    %s18 = ssub.s32 %s10, %s17
    %p19 = scmp.eq.s32.totalorder %s18, 0
    %s21 = sadd.s32 %s20, 1
    %s22 = scalar_select %p19, %s20, %s21
    %p25 = pneg %p19
    %p26 = scmp.eq.s32.totalorder %s10, 1
    %p27 = por %p25, %p26
    %p28 = scmp.ne.s32.totalorder %s20, %s23
    %p29 = scmp.eq.s32.totalorder %s10, 0
    %p30 = por %p28, %p29
    %p31 = scmp.ne.s32.totalorder %s20, %s23
    %p32 = scmp.eq.s32.totalorder %s15, 1
    %p33 = por %p31, %p32
    %p34 = scmp.ne.s32.totalorder %s23, %s24
    %p35 = scmp.eq.s32.totalorder %s15, 0
    %p36 = por %p34, %p35
    %p37 = scmp.ne.s32.totalorder %s23, %s24
    %p38 = scmp.eq.s32.totalorder %s16, 1
    %p39 = por %p37, %p38
    %p41 = scmp.ne.s32.totalorder %s24, %s40
    %p42 = scmp.eq.s32.totalorder %s16, 0
    %p43 = por %p41, %p42
    %s45 = sadd.s32 %s44, 1
    %p48 = scmp.eq.s32.totalorder %s10, 1
    %p49 = scmp.ne.s32.totalorder %s44, %s46
    %p50 = scmp.eq.s32.totalorder %s10, 0
    %p51 = por %p49, %p50
    %p52 = scmp.ne.s32.totalorder %s44, %s46
    %p53 = scmp.eq.s32.totalorder %s15, 1
    %p54 = por %p52, %p53
    %p55 = scmp.ne.s32.totalorder %s46, %s47
    %p56 = scmp.eq.s32.totalorder %s15, 0
    %p57 = por %p55, %p56
    %p58 = scmp.ne.s32.totalorder %s46, %s47
    %p59 = scmp.eq.s32.totalorder %s16, 1
    %p60 = por %p58, %p59
    %p62 = scmp.ne.s32.totalorder %s47, %s61
    %p63 = scmp.eq.s32.totalorder %s16, 0
    %p64 = por %p62, %p63
    %s66 = sadd.s32 %s65, 1
    %p69 = scmp.eq.s32.totalorder %s10, 1
    %p70 = scmp.ne.s32.totalorder %s65, %s67
    %p71 = scmp.eq.s32.totalorder %s10, 0
    %p72 = por %p70, %p71
    %p73 = scmp.ne.s32.totalorder %s65, %s67
    %p74 = scmp.eq.s32.totalorder %s15, 1
    %p75 = por %p73, %p74
    %p76 = scmp.ne.s32.totalorder %s67, %s68
    %p77 = scmp.eq.s32.totalorder %s15, 0
    %p78 = por %p76, %p77
    %p79 = scmp.ne.s32.totalorder %s67, %s68
    %p80 = scmp.eq.s32.totalorder %s16, 1
    %p81 = por %p79, %p80
    %p83 = scmp.ne.s32.totalorder %s68, %s82
    %p84 = scmp.eq.s32.totalorder %s16, 0
    %p85 = por %p83, %p84
    %s87 = sadd.s32 %s86, 1
    %p90 = scmp.eq.s32.totalorder %s10, 1
    %p91 = scmp.ne.s32.totalorder %s86, %s88
    %p92 = scmp.eq.s32.totalorder %s10, 0
    %p93 = por %p91, %p92
    %p94 = scmp.ne.s32.totalorder %s86, %s88
    %p95 = scmp.eq.s32.totalorder %s15, 1
    %p96 = por %p94, %p95
    %p97 = scmp.ne.s32.totalorder %s88, %s89
    %p98 = scmp.eq.s32.totalorder %s15, 0
    %p99 = por %p97, %p98
    %p100 = scmp.ne.s32.totalorder %s88, %s89
    %p101 = scmp.eq.s32.totalorder %s16, 1
    %p102 = por %p100, %p101
    %p104 = scmp.ne.s32.totalorder %s89, %s103
    %p105 = scmp.eq.s32.totalorder %s16, 0
    %p106 = por %p104, %p105
    %s107 = ssub.s32 %s10, %s17
    %p108 = scmp.eq.s32.totalorder %s107, 0
    %s110 = sadd.s32 %s109, 1
    %s111 = scalar_select %p108, %s109, %s110
    %p114 = pneg %p108
    %p115 = scmp.eq.s32.totalorder %s10, 1
    %p116 = por %p114, %p115
    %p117 = scmp.ne.s32.totalorder %s109, %s112
    %p118 = scmp.eq.s32.totalorder %s10, 0
    %p119 = por %p117, %p118
    %p120 = scmp.ne.s32.totalorder %s109, %s112
    %p121 = scmp.eq.s32.totalorder %s15, 1
    %p122 = por %p120, %p121
    %p123 = scmp.ne.s32.totalorder %s112, %s113
    %p124 = scmp.eq.s32.totalorder %s15, 0
    %p125 = por %p123, %p124
    %p126 = scmp.ne.s32.totalorder %s112, %s113
    %p127 = scmp.eq.s32.totalorder %s16, 1
    %p128 = por %p126, %p127
    %p130 = scmp.ne.s32.totalorder %s113, %s129
    %p131 = scmp.eq.s32.totalorder %s16, 0
    %p132 = por %p130, %p131
    %p133 = scmp.le.s32.totalorder 1, %s10
    %p134 = scmp.lt.s32.totalorder %s10, 3
    %p135 = pnand %p133, %p134
    %p136 = pneg %p135
    // Predicated region
    $region9: #{cycle_discriminator.7} parent=5 // pred_check
      _
    $region10: #{cycle_discriminator.7} parent=5 // pred_check_branch
      %138 = sbr.rel (%p135) target = $region12
    $region11: #{cycle_discriminator.7} parent=5 // pred_region
      %s139 = ssub.s32 %s10, 1
      // Predicated region
      $region13: #{cycle_discriminator.7} parent=11 // pred_check
        %p140 = pneg %p57
      $region14: #{cycle_discriminator.7} parent=11 // pred_check_branch
        %142 = sbr.rel (%p140) target = $region16
      $region15: #{cycle_discriminator.7} parent=11 // pred_region
        _
      $region16: #{cycle_discriminator.7} parent=11 // pred_fallthru
        _
      // Predicated region
      $region17: #{cycle_discriminator.7} parent=11 // pred_check
        %p143 = pneg %p78
      $region18: #{cycle_discriminator.7} parent=11 // pred_check_branch
        %145 = sbr.rel (%p143) target = $region20
      $region19: #{cycle_discriminator.7} parent=11 // pred_region
        _
      $region20: #{cycle_discriminator.7} parent=11 // pred_fallthru
        _
      // Predicated region
      $region21: #{cycle_discriminator.7} parent=11 // pred_check
        %p146 = pneg %p99
      $region22: #{cycle_discriminator.7} parent=11 // pred_check_branch
        %148 = sbr.rel (%p146) target = $region24
      $region23: #{cycle_discriminator.7} parent=11 // pred_region
        _
      $region24: #{cycle_discriminator.7} parent=11 // pred_fallthru
        _
    $region12: #{cycle_discriminator.7} parent=5 // pred_fallthru
      _
    %p149 = scmp.lt.s32.totalorder %s10, 2
    // Predicated region
    $region25: #{cycle_discriminator.7} parent=5 // pred_check
      %p150 = pneg %p149
    $region26: #{cycle_discriminator.7} parent=5 // pred_check_branch
      %152 = sbr.rel (%p150) target = $region28
    $region27: #{cycle_discriminator.7} parent=5 // pred_region
      // Predicated region
      $region29: #{cycle_discriminator.7} parent=27 // pred_check
        %p153 = pneg %p30
      $region30: #{cycle_discriminator.7} parent=27 // pred_check_branch
        %155 = sbr.rel (%p153) target = $region32
      $region31: #{cycle_discriminator.7} parent=27 // pred_region
        %p156 = scmp.lt.s32.totalorder %s10, 1
        %s157 = scalar_select %p156, %s10, 1
        %s158 = smul.addr %s157, 4
        %s159 = smul.addr %s158, 4
        %s160 = scalar_lea.vmem %s0, %s159
      $region32: #{cycle_discriminator.7} parent=27 // pred_fallthru
        _
    $region28: #{cycle_discriminator.7} parent=5 // pred_fallthru
      _
    %p161 = scmp.le.s32.totalorder 1, %s10
    %p162 = scmp.lt.s32.totalorder %s10, 3
    %p163 = pnand %p161, %p162
    %p164 = pneg %p163
    // Predicated region
    $region33: #{cycle_discriminator.7} parent=5 // pred_check
      _
    $region34: #{cycle_discriminator.7} parent=5 // pred_check_branch
      %166 = sbr.rel (%p163) target = $region36
    $region35: #{cycle_discriminator.7} parent=5 // pred_region
      %s167 = ssub.s32 %s10, 1
      %p168 = scmp.lt.s32.totalorder %s15, 1
      %s169 = scalar_select %p168, %s15, 1
      %s170 = smul.addr %s169, 4
      %s171 = smul.addr %s170, 4
      %s172 = scalar_lea.vmem %s0, %s171
      %p173 = pneg %p36
      %p174 = pneg %p33
      %p175 = pneg %p57
      %p176 = pneg %p54
      %p177 = pneg %p78
      %p178 = pneg %p75
      %p179 = pneg %p99
      %p180 = pneg %p96
      %p181 = pneg %p125
      %p182 = pneg %p122
      %p183 = scmp.lt.s32.totalorder %s15, 1
      %s184 = scalar_select %p183, %s15, 1
      %s185 = smul.addr %s184, 3
      %s186 = smul.addr %s185, 4
      %s187 = scalar_lea.vmem %s4, %s186
      %p188 = scmp.lt.s32.totalorder %s15, 1
      %s189 = scalar_select %p188, %s15, 1
      %s190 = smul.addr %s189, 4
      %s191 = smul.addr %s190, 4
      %s192 = scalar_lea.vmem %s0, %s191
      %p193 = scmp.lt.s32.totalorder %s15, 1
      %s194 = scalar_select %p193, %s15, 1
      %s195 = smul.addr %s194, 3
      %s196 = smul.addr %s195, 4
      %s197 = scalar_lea.vmem %s4, %s196
      %v199 = vld [vmem:[%s192] sm:$0xf]
      %v200 = vld [vmem:[%s192 + $0x4] sm:$0xf]
      %v201 = vld [vmem:[%s192 + $0x8] sm:$0x3]
      %v202 = vld [vmem:[%s1] sm:$0xf]
      %v203 = vld [vmem:[%s1 + $0x4] sm:$0xf]
      %v204 = vld [vmem:[%s1 + $0x8] sm:$0xf]
      %v205 = vld [vmem:[%s1 + $0xc] sm:$0xf]
      %v206 = vld [vmem:[%s1 + $0x10] sm:$0xf]
      %v207 = vld [vmem:[%s1 + $0x14] sm:$0xf]
      %v208 = vld [vmem:[%s1 + $0x18] sm:$0xf]
      %v209 = vld [vmem:[%s1 + $0x1c] sm:$0xf]
      %v210 = vld [vmem:[%s192 + $0x8] sm:$0x7]
      %v211 = vld [vmem:[%s1 + $0x20] sm:$0xf]
      %v212 = vld [vmem:[%s1 + $0x24] sm:$0xf]
      %v213 = vld [vmem:[%s1 + $0x28] sm:$0xf]
      %v214 = vld [vmem:[%s1 + $0x2c] sm:$0xf]
      %v215 = vld [vmem:[%s1 + $0x30] sm:$0xf]
      %v216 = vld [vmem:[%s1 + $0x34] sm:$0xf]
      %v217 = vld [vmem:[%s1 + $0x38] sm:$0xf]
      %v218 = vld [vmem:[%s1 + $0x3c] sm:$0xf]
      %v222 = vunpack.c.l.b16 %v199
      %v223 = vunpack.c.l.b16 %v200
      %v224 = vunpack.c.l.b16 %v210
      %v225 = vpack.c.b16 %v223, %v222
      %v226 = vpack.c.b16 %v224, %v224
      %vm227 = vsmask.f32 7424
      %v229 = vshrl.u32 %v225, 16
      %v231 = vshll.u32 %v225, 16
      %v233 = vrot.slane %v231, 1
      %v234 = vor.u32 %v229, %v233
      %v236 = vshll.u32 %v226, 16
      %v238 = vrot.slane %v236, 1
      %v239 = vsel %vm227, %v234, %v238
      %v240 = vshrl.u32 %v226, 16
      %v242 = vor.u32 %v240, %v238
      %v251 = vunpack.c.l.b16 %v211
      %v252 = vunpack.c.l.b16 %v212
      %v253 = vunpack.c.l.b16 %v213
      %v254 = vunpack.c.l.b16 %v214
      %v255 = vunpack.c.l.b16 %v215
      %v256 = vunpack.c.l.b16 %v216
      %v257 = vunpack.c.l.b16 %v217
      %v258 = vunpack.c.l.b16 %v218
      %v259 = vpack.c.b16 %v252, %v251
      %v260 = vpack.c.b16 %v254, %v253
      %v261 = vpack.c.b16 %v256, %v255
      %v262 = vpack.c.b16 %v258, %v257
      %vm267 = vcmask 523264
      %v269 = vsel %vm267, %v239, 0
      %v272 = vsel %vm267, %v242, 0
      %274 = vmatprep.subr.bf16.mxu0 0
      %275 = vmatpush1.bf16.msra.mxu0 %v259
      %276 = vmatprep.subr.bf16.mxu0 0
      %277 = vmatpush1.bf16.msra.mxu0 %v260
      %278 = vmatprep.subr.bf16.mxu0 0
      %279 = vmatpush1.bf16.msra.mxu0 %v261
      %280 = vmatprep.subr.bf16.mxu0 0
      %281 = vmatpush1.bf16.msra.mxu0 %v262
      %282 = vmatprep.subr.bf16.mxu0 0
      %283 = vmatpush1.bf16.msra.mxu0 0
      %284 = vmatprep.subr.bf16.mxu0 0
      %285 = vmatpush1.bf16.msra.mxu0 0
      %286 = vmatprep.subr.bf16.mxu0 0
      %287 = vmatpush1.bf16.msra.mxu0 0
      %288 = vmatprep.subr.bf16.mxu0 0
      %289 = vmatpush1.bf16.msra.mxu0 0
      %290 = vmatprep.subr.bf16.mxu0 0
      %291 = vmatpush1.bf16.msra.mxu0 0
      %292 = vmatprep.subr.bf16.mxu0 0
      %293 = vmatpush1.bf16.msra.mxu0 0
      %294 = vmatprep.subr.bf16.mxu0 0
      %295 = vmatpush1.bf16.msra.mxu0 0
      %296 = vmatprep.subr.bf16.mxu0 0
      %297 = vmatpush1.bf16.msra.mxu0 0
      %298 = vmatprep.subr.bf16.mxu0 0
      %299 = vmatpush1.bf16.msra.mxu0 0
      %300 = vmatprep.subr.bf16.mxu0 0
      %301 = vmatpush1.bf16.msra.mxu0 0
      %302 = vmatprep.subr.bf16.mxu0 0
      %303 = vmatpush1.bf16.msra.mxu0 0
      %304 = vmatprep.subr.bf16.mxu0 0
      %305 = vmatpush1.bf16.msra.mxu0 0
      %306 = vmatprep.mubr.bf16.mxu0 0
      %307 = vmatmul.mubr.bf16.gmra.mrb[0].mxu0 %v269
      %v308 = vpop.f32.mrb[0].mxu0
      %v309 = vadd.f32 0.0, %v308
      %v310 = vpop.f32.mrb[0].mxu0
      %v311 = vpop.f32.mrb[0].mxu0
      %v312 = vadd.f32 0.0, %v311
      %v313 = vpop.f32.mrb[0].mxu0
      %314 = vmatprep.mubr.bf16.mxu0 0
      %315 = vmatmul.mubr.bf16.gmra.mrb[0].mxu0 %v272
      %v316 = vpop.f32.mrb[0].mxu0
      %v317 = vadd.f32 0.0, %v316
      %v318 = vpop.f32.mrb[0].mxu0
      %v319 = vpop.f32.mrb[0].mxu0
      %v320 = vpop.f32.mrb[0].mxu0
      %321 = vdwg.mxu0
      %v323 = vunpack.c.l.b16 %v201
      %v324 = vpack.c.b16 %v323, %v323
      %v333 = vunpack.c.l.b16 %v202
      %v334 = vunpack.c.l.b16 %v203
      %v335 = vunpack.c.l.b16 %v204
      %v336 = vunpack.c.l.b16 %v205
      %v337 = vunpack.c.l.b16 %v206
      %v338 = vunpack.c.l.b16 %v207
      %v339 = vunpack.c.l.b16 %v208
      %v340 = vunpack.c.l.b16 %v209
      %v341 = vpack.c.b16 %v334, %v333
      %v342 = vpack.c.b16 %v336, %v335
      %v343 = vpack.c.b16 %v338, %v337
      %v344 = vpack.c.b16 %v340, %v339
      %v349 = vsel %vm267, %v225, 0
      %v352 = vsel %vm267, %v324, 0
      %354 = vmatprep.subr.bf16.mxu0 0
      %355 = vmatpush1.bf16.msra.mxu0 %v341
      %356 = vmatprep.subr.bf16.mxu0 0
      %357 = vmatpush1.bf16.msra.mxu0 %v342
      %358 = vmatprep.subr.bf16.mxu0 0
      %359 = vmatpush1.bf16.msra.mxu0 %v343
      %360 = vmatprep.subr.bf16.mxu0 0
      %361 = vmatpush1.bf16.msra.mxu0 %v344
      %362 = vmatprep.subr.bf16.mxu0 0
      %363 = vmatpush1.bf16.msra.mxu0 0
      %364 = vmatprep.subr.bf16.mxu0 0
      %365 = vmatpush1.bf16.msra.mxu0 0
      %366 = vmatprep.subr.bf16.mxu0 0
      %367 = vmatpush1.bf16.msra.mxu0 0
      %368 = vmatprep.subr.bf16.mxu0 0
      %369 = vmatpush1.bf16.msra.mxu0 0
      %370 = vmatprep.subr.bf16.mxu0 0
      %371 = vmatpush1.bf16.msra.mxu0 0
      %372 = vmatprep.subr.bf16.mxu0 0
      %373 = vmatpush1.bf16.msra.mxu0 0
      %374 = vmatprep.subr.bf16.mxu0 0
      %375 = vmatpush1.bf16.msra.mxu0 0
      %376 = vmatprep.subr.bf16.mxu0 0
      %377 = vmatpush1.bf16.msra.mxu0 0
      %378 = vmatprep.subr.bf16.mxu0 0
      %379 = vmatpush1.bf16.msra.mxu0 0
      %380 = vmatprep.subr.bf16.mxu0 0
      %381 = vmatpush1.bf16.msra.mxu0 0
      %382 = vmatprep.subr.bf16.mxu0 0
      %383 = vmatpush1.bf16.msra.mxu0 0
      %384 = vmatprep.subr.bf16.mxu0 0
      %385 = vmatpush1.bf16.msra.mxu0 0
      %386 = vmatprep.mubr.bf16.mxu0 0
      %387 = vmatmul.mubr.bf16.gmra.mrb[0].mxu0 %v349
      %v388 = vpop.f32.mrb[0].mxu0
      %v389 = vadd.f32 %v309, %v388
      %v390 = vpop.f32.mrb[0].mxu0
      %v391 = vpop.f32.mrb[0].mxu0
      %v392 = vadd.f32 %v312, %v391
      %v393 = vpop.f32.mrb[0].mxu0
      %394 = vmatprep.mubr.bf16.mxu0 0
      %395 = vmatmul.mubr.bf16.gmra.mrb[0].mxu0 %v352
      %v396 = vpop.f32.mrb[0].mxu0
      %v397 = vadd.f32 %v317, %v396
      %v398 = vpop.f32.mrb[0].mxu0
      %v399 = vpop.f32.mrb[0].mxu0
      %v400 = vpop.f32.mrb[0].mxu0
      %401 = vdwg.mxu0
      %v402 = vld [vmem:[%s192] sm:$0xc]
      %v403 = vld [vmem:[%s192 + $0x4] sm:$0xf]
      %v404 = vld [vmem:[%s192 + $0x8] sm:$0xf]
      %v405 = vld [vmem:[%s192 + $0xc] sm:$0x1]
      %v406 = vld [vmem:[%s1 + $0x40] sm:$0xf]
      %v407 = vld [vmem:[%s1 + $0x44] sm:$0xf]
      %v408 = vld [vmem:[%s1 + $0x48] sm:$0xf]
      %v409 = vld [vmem:[%s1 + $0x4c] sm:$0xf]
      %v410 = vld [vmem:[%s1 + $0x50] sm:$0xf]
      %v411 = vld [vmem:[%s1 + $0x54] sm:$0xf]
      %v412 = vld [vmem:[%s1 + $0x58] sm:$0xf]
      %v413 = vld [vmem:[%s1 + $0x5c] sm:$0xf]
      %v418 = vunpack.c.l.b16 %v402
      %v419 = vunpack.c.l.b16 %v403
      %v420 = vunpack.c.l.b16 %v404
      %v421 = vunpack.c.l.b16 %v405
      %v422 = vpack.c.b16 %v419, %v418
      %v423 = vpack.c.b16 %v421, %v420
      %vm424 = vsmask.f32 5376
      %v426 = vshrl.u32 %v422, 16
      %v428 = vrot.slane %v426, 2
      %v429 = vshll.u32 %v422, 16
      %v431 = vrot.slane %v429, 3
      %v432 = vor.u32 %v428, %v431
      %v434 = vshrl.u32 %v423, 16
      %v436 = vrot.slane %v434, 2
      %v437 = vshll.u32 %v423, 16
      %v439 = vrot.slane %v437, 3
      %v440 = vor.u32 %v436, %v439
      %v441 = vsel %vm424, %v432, %v440
      %v450 = vunpack.c.l.b16 %v406
      %v451 = vunpack.c.l.b16 %v407
      %v452 = vunpack.c.l.b16 %v408
      %v453 = vunpack.c.l.b16 %v409
      %v454 = vunpack.c.l.b16 %v410
      %v455 = vunpack.c.l.b16 %v411
      %v456 = vunpack.c.l.b16 %v412
      %v457 = vunpack.c.l.b16 %v413
      %v458 = vpack.c.b16 %v451, %v450
      %v459 = vpack.c.b16 %v453, %v452
      %v460 = vpack.c.b16 %v455, %v454
      %v461 = vpack.c.b16 %v457, %v456
      %v467 = vsel %vm267, %v441, 0
      %v470 = vsel %vm267, %v440, 0
      %472 = vmatprep.subr.bf16.mxu0 0
      %473 = vmatpush1.bf16.msra.mxu0 %v458
      %474 = vmatprep.subr.bf16.mxu0 0
      %475 = vmatpush1.bf16.msra.mxu0 %v459
      %476 = vmatprep.subr.bf16.mxu0 0
      %477 = vmatpush1.bf16.msra.mxu0 %v460
      %478 = vmatprep.subr.bf16.mxu0 0
      %479 = vmatpush1.bf16.msra.mxu0 %v461
      %480 = vmatprep.subr.bf16.mxu0 0
      %481 = vmatpush1.bf16.msra.mxu0 0
      %482 = vmatprep.subr.bf16.mxu0 0
      %483 = vmatpush1.bf16.msra.mxu0 0
      %484 = vmatprep.subr.bf16.mxu0 0
      %485 = vmatpush1.bf16.msra.mxu0 0
      %486 = vmatprep.subr.bf16.mxu0 0
      %487 = vmatpush1.bf16.msra.mxu0 0
      %488 = vmatprep.subr.bf16.mxu0 0
      %489 = vmatpush1.bf16.msra.mxu0 0
      %490 = vmatprep.subr.bf16.mxu0 0
      %491 = vmatpush1.bf16.msra.mxu0 0
      %492 = vmatprep.subr.bf16.mxu0 0
      %493 = vmatpush1.bf16.msra.mxu0 0
      %494 = vmatprep.subr.bf16.mxu0 0
      %495 = vmatpush1.bf16.msra.mxu0 0
      %496 = vmatprep.subr.bf16.mxu0 0
      %497 = vmatpush1.bf16.msra.mxu0 0
      %498 = vmatprep.subr.bf16.mxu0 0
      %499 = vmatpush1.bf16.msra.mxu0 0
      %500 = vmatprep.subr.bf16.mxu0 0
      %501 = vmatpush1.bf16.msra.mxu0 0
      %502 = vmatprep.subr.bf16.mxu0 0
      %503 = vmatpush1.bf16.msra.mxu0 0
      %504 = vmatprep.mubr.bf16.mxu0 0
      %505 = vmatmul.mubr.bf16.gmra.mrb[0].mxu0 %v467
      %v506 = vpop.f32.mrb[0].mxu0
      %v507 = vadd.f32 0.0, %v506
      %v508 = vpop.f32.mrb[0].mxu0
      %v509 = vpop.f32.mrb[0].mxu0
      %v510 = vadd.f32 0.0, %v509
      %v511 = vpop.f32.mrb[0].mxu0
      %512 = vmatprep.mubr.bf16.mxu0 0
      %513 = vmatmul.mubr.bf16.gmra.mrb[0].mxu0 %v470
      %v514 = vpop.f32.mrb[0].mxu0
      %v515 = vadd.f32 0.0, %v514
      %v516 = vpop.f32.mrb[0].mxu0
      %v517 = vpop.f32.mrb[0].mxu0
      %v518 = vpop.f32.mrb[0].mxu0
      %519 = vdwg.mxu0
      %v520 = vadd.f32 %v389, %v507
      %v521 = vadd.f32 %v392, %v510
      %v522 = vadd.f32 %v397, %v515
      %v523 = vld [vmem:[%s192] sm:$0x8]
      %v524 = vld [vmem:[%s1 + $0x60] sm:$0xf]
      %v525 = vld [vmem:[%s1 + $0x64] sm:$0xf]
      %v526 = vld [vmem:[%s1 + $0x68] sm:$0xf]
      %v527 = vld [vmem:[%s1 + $0x6c] sm:$0xf]
      %v528 = vld [vmem:[%s1 + $0x70] sm:$0xf]
      %v529 = vld [vmem:[%s1 + $0x74] sm:$0xf]
      %v530 = vld [vmem:[%s1 + $0x78] sm:$0xf]
      %v531 = vld [vmem:[%s1 + $0x7c] sm:$0xf]
      %v533 = vunpack.c.l.b16 %v523
      %v534 = vpack.c.b16 %v419, %v533
      %vm535 = vcmask 1044480
      %v536 = vrot.slane %v534, 3
      %v537 = vrot.slane %v423, 3
      %v538 = vsel %vm535, %v536, %v537
      %v547 = vunpack.c.l.b16 %v524
      %v548 = vunpack.c.l.b16 %v525
      %v549 = vunpack.c.l.b16 %v526
      %v550 = vunpack.c.l.b16 %v527
      %v551 = vunpack.c.l.b16 %v528
      %v552 = vunpack.c.l.b16 %v529
      %v553 = vunpack.c.l.b16 %v530
      %v554 = vunpack.c.l.b16 %v531
      %v555 = vpack.c.b16 %v548, %v547
      %v556 = vpack.c.b16 %v550, %v549
      %v557 = vpack.c.b16 %v552, %v551
      %v558 = vpack.c.b16 %v554, %v553
      %v564 = vsel %vm267, %v538, 0
      %v567 = vsel %vm267, %v537, 0
      %569 = vmatprep.subr.bf16.mxu0 0
      %570 = vmatpush1.bf16.msra.mxu0 %v555
      %571 = vmatprep.subr.bf16.mxu0 0
      %572 = vmatpush1.bf16.msra.mxu0 %v556
      %573 = vmatprep.subr.bf16.mxu0 0
      %574 = vmatpush1.bf16.msra.mxu0 %v557
      %575 = vmatprep.subr.bf16.mxu0 0
      %576 = vmatpush1.bf16.msra.mxu0 %v558
      %577 = vmatprep.subr.bf16.mxu0 0
      %578 = vmatpush1.bf16.msra.mxu0 0
      %579 = vmatprep.subr.bf16.mxu0 0
      %580 = vmatpush1.bf16.msra.mxu0 0
      %581 = vmatprep.subr.bf16.mxu0 0
      %582 = vmatpush1.bf16.msra.mxu0 0
      %583 = vmatprep.subr.bf16.mxu0 0
      %584 = vmatpush1.bf16.msra.mxu0 0
      %585 = vmatprep.subr.bf16.mxu0 0
      %586 = vmatpush1.bf16.msra.mxu0 0
      %587 = vmatprep.subr.bf16.mxu0 0
      %588 = vmatpush1.bf16.msra.mxu0 0
      %589 = vmatprep.subr.bf16.mxu0 0
      %590 = vmatpush1.bf16.msra.mxu0 0
      %591 = vmatprep.subr.bf16.mxu0 0
      %592 = vmatpush1.bf16.msra.mxu0 0
      %593 = vmatprep.subr.bf16.mxu0 0
      %594 = vmatpush1.bf16.msra.mxu0 0
      %595 = vmatprep.subr.bf16.mxu0 0
      %596 = vmatpush1.bf16.msra.mxu0 0
      %597 = vmatprep.subr.bf16.mxu0 0
      %598 = vmatpush1.bf16.msra.mxu0 0
      %599 = vmatprep.subr.bf16.mxu0 0
      %600 = vmatpush1.bf16.msra.mxu0 0
      %601 = vmatprep.mubr.bf16.mxu0 0
      %602 = vmatmul.mubr.bf16.gmra.mrb[0].mxu0 %v564
      %v603 = vpop.f32.mrb[0].mxu0
      %v604 = vadd.f32 0.0, %v603
      %v605 = vpop.f32.mrb[0].mxu0
      %v606 = vpop.f32.mrb[0].mxu0
      %v607 = vadd.f32 0.0, %v606
      %v608 = vpop.f32.mrb[0].mxu0
      %609 = vmatprep.mubr.bf16.mxu0 0
      %610 = vmatmul.mubr.bf16.gmra.mrb[0].mxu0 %v567
      %v611 = vpop.f32.mrb[0].mxu0
      %v612 = vadd.f32 0.0, %v611
      %v613 = vpop.f32.mrb[0].mxu0
      %v614 = vpop.f32.mrb[0].mxu0
      %v615 = vpop.f32.mrb[0].mxu0
      %616 = vdwg.mxu0
      %v617 = vadd.f32 %v520, %v604
      %v618 = vadd.f32 %v521, %v607
      %v619 = vadd.f32 %v522, %v612
      %v620 = vld [vmem:[%s3] sm:$0xff]
      %v621 = vld [vmem:[%s3 + $0x8] sm:$0xff]
      %v622 = vld [vmem:[%s3 + $0x10] sm:$0xf]
      %624 = vset.pattern.permute.xlu0 0
      %625 = vperm.xlu0 %624, %v620
      %v626 = vpop.permute.xlu0 %625
      %629 = vset.pattern.permute.xlu0 0
      %630 = vperm.xlu0 %629, %v621
      %v631 = vpop.permute.xlu0 %630
      %634 = vset.pattern.permute.xlu0 0
      %635 = vperm.xlu0 %634, %v622
      %v636 = vpop.permute.xlu0 %635
      %v638 = vmul.f32 %v617, %v626
      %v639 = vmul.f32 %v618, %v631
      %v640 = vmul.f32 %v619, %v636
      %vm641 = vcmask 261120
      %v642 = vsel %vm641, %v638, 0.0
      %v643 = vsel %vm641, %v639, 0.0
      %v644 = vadd.f32 %v642, %v643
      %vm645 = vcmask 257024
      %v646 = vsel %vm645, %v640, 0.0
      %v647 = vadd.f32 %v644, %v646
      %v648 = vrot.slane %v647, 4
      %v649 = vadd.f32 %v647, %v648
      %v650 = vrot.slane %v649, 2
      %v651 = vadd.f32 %v649, %v650
      %v652 = vrot.slane %v651, 1
      %v653 = vadd.f32 %v651, %v652
      %v654 = vmul.f32 %v617, %v617
      %v655 = vmul.f32 %v618, %v618
      %v656 = vmul.f32 %v619, %v619
      %v657 = vmul.f32 %v654, %v626
      %v658 = vmul.f32 %v655, %v631
      %v659 = vmul.f32 %v656, %v636
      %v660 = vsel %vm641, %v657, 0.0
      %v661 = vsel %vm641, %v658, 0.0
      %v662 = vadd.f32 %v660, %v661
      %v663 = vsel %vm645, %v659, 0.0
      %v664 = vadd.f32 %v662, %v663
      %v665 = vrot.slane %v664, 4
      %v666 = vadd.f32 %v664, %v665
      %v667 = vrot.slane %v666, 2
      %v668 = vadd.f32 %v666, %v667
      %v669 = vrot.slane %v668, 1
      %v670 = vadd.f32 %v668, %v669
      %v671 = vmul.f32 %v653, 0.0625
      %v672 = vmul.f32 %v670, 0.0625
      %v673 = vmul.f32 %v671, %v671
      %v674 = vsub.f32 %v672, %v673
      %v675 = vmax.f32 %v674, 0.0
      %v676 = vsub.f32 %v617, %v671
      %v677 = vsub.f32 %v618, %v671
      %v678 = vsub.f32 %v619, %v671
      %v679 = vadd.f32 %v675, 1e-05
      %v680 = vrsqrt.pop %v679
      %v681 = vmul.f32 %v676, %v680
      %v682 = vmul.f32 %v677, %v680
      %v683 = vmul.f32 %v678, %v680
      %vm684 = vcmp.ge.f32.partialorder %v681, 0.0
      %vm685 = vcmp.ge.f32.partialorder %v682, 0.0
      %vm686 = vcmp.ge.f32.partialorder %v683, 0.0
      %v687 = vmul.f32 %v681, 0.2
      %v688 = vmul.f32 %v682, 0.2
      %v689 = vmul.f32 %v683, 0.2
      %v690 = vsel %vm684, %v681, %v687
      %v691 = vsel %vm685, %v682, %v688
      %v692 = vsel %vm686, %v683, %v689
      %v693 = vpack.c.bf16 %v691, %v690
      %v694 = vpack.c.bf16 %v692, %v692
      %v697 = vunpack.c.l.b16 %v693
      %v698 = vunpack.c.h.b16 %v693
      %v699 = vunpack.c.l.b16 %v694
      %v700 = vpack.c.b16 %v697, %v697
      %v701 = vpack.c.b16 %v698, %v698
      %v702 = vpack.c.b16 %v699, %v699
      %706 = vst.msk [vmem:[%s197] sm:$0xf] %vm645, %v700
      %707 = vst.msk [vmem:[%s197 + $0x4] sm:$0xf] %vm645, %v701
      %vm708 = vcmask 254976
      %709 = vst.msk [vmem:[%s197 + $0x8] sm:$0x3] %vm708, %v702
      %p710 = scmp.lt.s32.totalorder %s15, 1
      %s711 = scalar_select %p710, %s15, 1
      %s712 = smul.addr %s711, 3
      %s713 = smul.addr %s712, 4
      %s714 = scalar_lea.vmem %s4, %s713
      // Predicated region
      $region37: #{cycle_discriminator.7} parent=35 // pred_check
        %p715 = pneg %p122
      $region38: #{cycle_discriminator.7} parent=35 // pred_check_branch
        %717 = sbr.rel (%p715) target = $region40
      $region39: #{cycle_discriminator.7} parent=35 // pred_region
        _
      $region40: #{cycle_discriminator.7} parent=35 // pred_fallthru
        _
    $region36: #{cycle_discriminator.7} parent=5 // pred_fallthru
      _
    %p718 = scmp.le.s32.totalorder 2, %s10
    // Predicated region
    $region41: #{cycle_discriminator.7} parent=5 // pred_check
      %p719 = pneg %p718
    $region42: #{cycle_discriminator.7} parent=5 // pred_check_branch
      %721 = sbr.rel (%p719) target = $region44
    $region43: #{cycle_discriminator.7} parent=5 // pred_region
      %s722 = ssub.s32 %s10, 2
      // Predicated region
      $region45: #{cycle_discriminator.7} parent=43 // pred_check
        %p723 = pneg %p128
      $region46: #{cycle_discriminator.7} parent=43 // pred_check_branch
        %725 = sbr.rel (%p723) target = $region48
      $region47: #{cycle_discriminator.7} parent=43 // pred_region
        %p726 = scmp.lt.s32.totalorder %s16, 1
        %s727 = scalar_select %p726, %s16, 1
        %s728 = smul.addr %s727, 3
        %s729 = smul.addr %s728, 4
        %s730 = scalar_lea.vmem %s4, %s729
      $region48: #{cycle_discriminator.7} parent=43 // pred_fallthru
        _
    $region44: #{cycle_discriminator.7} parent=5 // pred_fallthru
      _
  $region6: #{cycle_discriminator.7} parent=0 // loop_footer
    %s14 = sadd.s32 1, %s10
  $region7: #{cycle_discriminator.7} parent=0 // loop_footer_branch
    %9 = sbr.rel target = $region3
  $region8: #{cycle_discriminator.7} parent=0 // loop_exit
    _

// kernel: cycle_discriminator.8
$region0: #{cycle_discriminator.8}
  #allocation0 [shape = 'u32[]', space=smem, size = 0x4, offset = 0x4, fixed_abs, tag = 'smem constant byte address 0x4 - core index']
  #allocation1 [shape = 'u32[144,128]{1,0:T(1,128)}', space=vmem, size = 0x12000, scoped, tag = 'internal scratch']
  %s0 = inlined_call_operand.vmem [shape: bf16[2,39,32], index: 0, kind: input, shape index: {}]
  %s1 = inlined_call_operand.vmem [shape: bf16[512,64], index: 1, kind: input, shape index: {}]
  %s2 = inlined_call_operand.vmem [shape: f32[1,64], index: 2, kind: input, shape index: {}]
  %s3 = inlined_call_operand.vmem [shape: f32[18,1], index: 3, kind: input, shape index: {}]
  %s4 = inlined_call_operand.vmem [shape: bf16[2,18,64], index: 4, kind: output, shape index: {}]
  %s5 = sld [smem:[#allocation0]]
  $region49: #{cycle_discriminator.8} parent=0
    _
  %s7 = ssub.s32 1, %s5
  %s8 = scalar_select 0, %s7, %s5
  loop: start=0, step=1, limit=4
  $region2: #{cycle_discriminator.8} parent=0 // loop_pre_header
    _
  $region3: #{cycle_discriminator.8} parent=0 // loop_header
    %s10 = sphi 0, %s14
    %p11 = scmp.ge.s32.totalorder %s10, 4
    %s20 = sphi 0, %s22
    %s23 = sphi 0, %s20
    %s24 = sphi 0, %s23
    %s40 = sphi 0, %s24
    %s44 = sphi 0, %s44
    %s46 = sphi 0, %s44
    %s47 = sphi 0, %s46
    %s61 = sphi 0, %s47
    %s65 = sphi 0, %s65
    %s67 = sphi 0, %s65
    %s68 = sphi 0, %s67
    %s82 = sphi 0, %s68
    %s86 = sphi 0, %s86
    %s88 = sphi 0, %s86
    %s89 = sphi 0, %s88
    %s103 = sphi 0, %s89
    %s109 = sphi 0, %s111
    %s112 = sphi 0, %s109
    %s113 = sphi 0, %s112
    %s129 = sphi 0, %s113
  $region4: #{cycle_discriminator.8} parent=0 // loop_header_branch
    %13 = sbr.rel (%p11) target = $region8
  $region5: #{cycle_discriminator.8} parent=0 // loop_body
    %s15 = ssub.s32 %s10, 1
    %s16 = ssub.s32 %s10, 2
    %s17 = sadd.s32 %s10, 1
    %s18 = ssub.s32 %s10, %s17
    %p19 = scmp.eq.s32.totalorder %s18, 0
    %s21 = sadd.s32 %s20, 1
    %s22 = scalar_select %p19, %s20, %s21
    %p25 = pneg %p19
    %p26 = scmp.eq.s32.totalorder %s10, 1
    %p27 = por %p25, %p26
    %p28 = scmp.ne.s32.totalorder %s20, %s23
    %p29 = scmp.eq.s32.totalorder %s10, 0
    %p30 = por %p28, %p29
    %p31 = scmp.ne.s32.totalorder %s20, %s23
    %p32 = scmp.eq.s32.totalorder %s15, 1
    %p33 = por %p31, %p32
    %p34 = scmp.ne.s32.totalorder %s23, %s24
    %p35 = scmp.eq.s32.totalorder %s15, 0
    %p36 = por %p34, %p35
    %p37 = scmp.ne.s32.totalorder %s23, %s24
    %p38 = scmp.eq.s32.totalorder %s16, 1
    %p39 = por %p37, %p38
    %p41 = scmp.ne.s32.totalorder %s24, %s40
    %p42 = scmp.eq.s32.totalorder %s16, 0
    %p43 = por %p41, %p42
    %s45 = sadd.s32 %s44, 1
    %p48 = scmp.eq.s32.totalorder %s10, 1
    %p49 = scmp.ne.s32.totalorder %s44, %s46
    %p50 = scmp.eq.s32.totalorder %s10, 0
    %p51 = por %p49, %p50
    %p52 = scmp.ne.s32.totalorder %s44, %s46
    %p53 = scmp.eq.s32.totalorder %s15, 1
    %p54 = por %p52, %p53
    %p55 = scmp.ne.s32.totalorder %s46, %s47
    %p56 = scmp.eq.s32.totalorder %s15, 0
    %p57 = por %p55, %p56
    %p58 = scmp.ne.s32.totalorder %s46, %s47
    %p59 = scmp.eq.s32.totalorder %s16, 1
    %p60 = por %p58, %p59
    %p62 = scmp.ne.s32.totalorder %s47, %s61
    %p63 = scmp.eq.s32.totalorder %s16, 0
    %p64 = por %p62, %p63
    %s66 = sadd.s32 %s65, 1
    %p69 = scmp.eq.s32.totalorder %s10, 1
    %p70 = scmp.ne.s32.totalorder %s65, %s67
    %p71 = scmp.eq.s32.totalorder %s10, 0
    %p72 = por %p70, %p71
    %p73 = scmp.ne.s32.totalorder %s65, %s67
    %p74 = scmp.eq.s32.totalorder %s15, 1
    %p75 = por %p73, %p74
    %p76 = scmp.ne.s32.totalorder %s67, %s68
    %p77 = scmp.eq.s32.totalorder %s15, 0
    %p78 = por %p76, %p77
    %p79 = scmp.ne.s32.totalorder %s67, %s68
    %p80 = scmp.eq.s32.totalorder %s16, 1
    %p81 = por %p79, %p80
    %p83 = scmp.ne.s32.totalorder %s68, %s82
    %p84 = scmp.eq.s32.totalorder %s16, 0
    %p85 = por %p83, %p84
    %s87 = sadd.s32 %s86, 1
    %p90 = scmp.eq.s32.totalorder %s10, 1
    %p91 = scmp.ne.s32.totalorder %s86, %s88
    %p92 = scmp.eq.s32.totalorder %s10, 0
    %p93 = por %p91, %p92
    %p94 = scmp.ne.s32.totalorder %s86, %s88
    %p95 = scmp.eq.s32.totalorder %s15, 1
    %p96 = por %p94, %p95
    %p97 = scmp.ne.s32.totalorder %s88, %s89
    %p98 = scmp.eq.s32.totalorder %s15, 0
    %p99 = por %p97, %p98
    %p100 = scmp.ne.s32.totalorder %s88, %s89
    %p101 = scmp.eq.s32.totalorder %s16, 1
    %p102 = por %p100, %p101
    %p104 = scmp.ne.s32.totalorder %s89, %s103
    %p105 = scmp.eq.s32.totalorder %s16, 0
    %p106 = por %p104, %p105
    %s107 = ssub.s32 %s10, %s17
    %p108 = scmp.eq.s32.totalorder %s107, 0
    %s110 = sadd.s32 %s109, 1
    %s111 = scalar_select %p108, %s109, %s110
    %p114 = pneg %p108
    %p115 = scmp.eq.s32.totalorder %s10, 1
    %p116 = por %p114, %p115
    %p117 = scmp.ne.s32.totalorder %s109, %s112
    %p118 = scmp.eq.s32.totalorder %s10, 0
    %p119 = por %p117, %p118
    %p120 = scmp.ne.s32.totalorder %s109, %s112
    %p121 = scmp.eq.s32.totalorder %s15, 1
    %p122 = por %p120, %p121
    %p123 = scmp.ne.s32.totalorder %s112, %s113
    %p124 = scmp.eq.s32.totalorder %s15, 0
    %p125 = por %p123, %p124
    %p126 = scmp.ne.s32.totalorder %s112, %s113
    %p127 = scmp.eq.s32.totalorder %s16, 1
    %p128 = por %p126, %p127
    %p130 = scmp.ne.s32.totalorder %s113, %s129
    %p131 = scmp.eq.s32.totalorder %s16, 0
    %p132 = por %p130, %p131
    %p133 = scmp.le.s32.totalorder 1, %s10
    %p134 = scmp.lt.s32.totalorder %s10, 3
    %p135 = pnand %p133, %p134
    %p136 = pneg %p135
    // Predicated region
    $region9: #{cycle_discriminator.8} parent=5 // pred_check
      _
    $region10: #{cycle_discriminator.8} parent=5 // pred_check_branch
      %138 = sbr.rel (%p135) target = $region12
    $region11: #{cycle_discriminator.8} parent=5 // pred_region
      %s139 = ssub.s32 %s10, 1
      // Predicated region
      $region13: #{cycle_discriminator.8} parent=11 // pred_check
        %p140 = pneg %p57
      $region14: #{cycle_discriminator.8} parent=11 // pred_check_branch
        %142 = sbr.rel (%p140) target = $region16
      $region15: #{cycle_discriminator.8} parent=11 // pred_region
        _
      $region16: #{cycle_discriminator.8} parent=11 // pred_fallthru
        _
      // Predicated region
      $region17: #{cycle_discriminator.8} parent=11 // pred_check
        %p143 = pneg %p78
      $region18: #{cycle_discriminator.8} parent=11 // pred_check_branch
        %145 = sbr.rel (%p143) target = $region20
      $region19: #{cycle_discriminator.8} parent=11 // pred_region
        _
      $region20: #{cycle_discriminator.8} parent=11 // pred_fallthru
        _
      // Predicated region
      $region21: #{cycle_discriminator.8} parent=11 // pred_check
        %p146 = pneg %p99
      $region22: #{cycle_discriminator.8} parent=11 // pred_check_branch
        %148 = sbr.rel (%p146) target = $region24
      $region23: #{cycle_discriminator.8} parent=11 // pred_region
        _
      $region24: #{cycle_discriminator.8} parent=11 // pred_fallthru
        _
    $region12: #{cycle_discriminator.8} parent=5 // pred_fallthru
      _
    %p149 = scmp.lt.s32.totalorder %s10, 2
    // Predicated region
    $region25: #{cycle_discriminator.8} parent=5 // pred_check
      %p150 = pneg %p149
    $region26: #{cycle_discriminator.8} parent=5 // pred_check_branch
      %152 = sbr.rel (%p150) target = $region28
    $region27: #{cycle_discriminator.8} parent=5 // pred_region
      // Predicated region
      $region29: #{cycle_discriminator.8} parent=27 // pred_check
        %p153 = pneg %p30
      $region30: #{cycle_discriminator.8} parent=27 // pred_check_branch
        %155 = sbr.rel (%p153) target = $region32
      $region31: #{cycle_discriminator.8} parent=27 // pred_region
        %p156 = scmp.lt.s32.totalorder %s10, 1
        %s157 = scalar_select %p156, %s10, 1
        %s158 = smul.addr %s157, 5
        %s159 = smul.addr %s158, 4
        %s160 = scalar_lea.vmem %s0, %s159
      $region32: #{cycle_discriminator.8} parent=27 // pred_fallthru
        _
    $region28: #{cycle_discriminator.8} parent=5 // pred_fallthru
      _
    %p161 = scmp.le.s32.totalorder 1, %s10
    %p162 = scmp.lt.s32.totalorder %s10, 3
    %p163 = pnand %p161, %p162
    %p164 = pneg %p163
    // Predicated region
    $region33: #{cycle_discriminator.8} parent=5 // pred_check
      _
    $region34: #{cycle_discriminator.8} parent=5 // pred_check_branch
      %166 = sbr.rel (%p163) target = $region36
    $region35: #{cycle_discriminator.8} parent=5 // pred_region
      %s167 = ssub.s32 %s10, 1
      %p168 = scmp.lt.s32.totalorder %s15, 1
      %s169 = scalar_select %p168, %s15, 1
      %s170 = smul.addr %s169, 5
      %s171 = smul.addr %s170, 4
      %s172 = scalar_lea.vmem %s0, %s171
      %p173 = pneg %p36
      %p174 = pneg %p33
      %p175 = pneg %p57
      %p176 = pneg %p54
      %p177 = pneg %p78
      %p178 = pneg %p75
      %p179 = pneg %p99
      %p180 = pneg %p96
      %p181 = pneg %p125
      %p182 = pneg %p122
      %p183 = scmp.lt.s32.totalorder %s15, 1
      %s184 = scalar_select %p183, %s15, 1
      %s185 = smul.addr %s184, 3
      %s186 = smul.addr %s185, 4
      %s187 = scalar_lea.vmem %s4, %s186
      %p188 = scmp.lt.s32.totalorder %s15, 1
      %s189 = scalar_select %p188, %s15, 1
      %s190 = smul.addr %s189, 5
      %s191 = smul.addr %s190, 4
      %s192 = scalar_lea.vmem %s0, %s191
      %p193 = scmp.lt.s32.totalorder %s15, 1
      %s194 = scalar_select %p193, %s15, 1
      %s195 = smul.addr %s194, 3
      %s196 = smul.addr %s195, 4
      %s197 = scalar_lea.vmem %s4, %s196
      %v199 = vld [vmem:[%s192] sm:$0xf]
      %v200 = vld [vmem:[%s192 + $0x4] sm:$0xf]
      %v201 = vld [vmem:[%s192 + $0x8] sm:$0x1]
      %v202 = vld [vmem:[%s1] sm:$0xf]
      %v203 = vld [vmem:[%s1 + $0x4] sm:$0xf]
      %v204 = vld [vmem:[%s1 + $0x8] sm:$0xf]
      %v205 = vld [vmem:[%s1 + $0xc] sm:$0xf]
      %v206 = vld [vmem:[%s192 + $0x8] sm:$0x3]
      %v207 = vld [vmem:[%s1 + $0x10] sm:$0xf]
      %v208 = vld [vmem:[%s1 + $0x14] sm:$0xf]
      %v209 = vld [vmem:[%s1 + $0x18] sm:$0xf]
      %v210 = vld [vmem:[%s1 + $0x1c] sm:$0xf]
      %v214 = vunpack.c.l.b16 %v199
      %v215 = vunpack.c.l.b16 %v200
      %v216 = vunpack.c.l.b16 %v206
      %v217 = vpack.c.b16 %v215, %v214
      %v218 = vpack.c.b16 %v216, %v216
      %vm219 = vsmask.f32 7424
      %v221 = vshrl.u32 %v217, 16
      %v223 = vshll.u32 %v217, 16
      %v225 = vrot.slane %v223, 1
      %v226 = vor.u32 %v221, %v225
      %v228 = vshll.u32 %v218, 16
      %v230 = vrot.slane %v228, 1
      %v231 = vsel %vm219, %v226, %v230
      %v232 = vshrl.u32 %v218, 16
      %v234 = vor.u32 %v232, %v230
      %v239 = vunpack.c.l.b16 %v207
      %v240 = vunpack.c.l.b16 %v208
      %v241 = vunpack.c.l.b16 %v209
      %v242 = vunpack.c.l.b16 %v210
      %v243 = vpack.c.b16 %v240, %v239
      %v244 = vpack.c.b16 %v242, %v241
      %vm247 = vcmask 261120
      %v249 = vsel %vm247, %v231, 0
      %v252 = vsel %vm247, %v234, 0
      %254 = vmatprep.subr.bf16.mxu0 0
      %255 = vmatpush1.bf16.msra.mxu0 %v243
      %256 = vmatprep.subr.bf16.mxu0 0
      %257 = vmatpush1.bf16.msra.mxu0 %v244
      %258 = vmatprep.subr.bf16.mxu0 0
      %259 = vmatpush1.bf16.msra.mxu0 0
      %260 = vmatprep.subr.bf16.mxu0 0
      %261 = vmatpush1.bf16.msra.mxu0 0
      %262 = vmatprep.subr.bf16.mxu0 0
      %263 = vmatpush1.bf16.msra.mxu0 0
      %264 = vmatprep.subr.bf16.mxu0 0
      %265 = vmatpush1.bf16.msra.mxu0 0
      %266 = vmatprep.subr.bf16.mxu0 0
      %267 = vmatpush1.bf16.msra.mxu0 0
      %268 = vmatprep.subr.bf16.mxu0 0
      %269 = vmatpush1.bf16.msra.mxu0 0
      %270 = vmatprep.subr.bf16.mxu0 0
      %271 = vmatpush1.bf16.msra.mxu0 0
      %272 = vmatprep.subr.bf16.mxu0 0
      %273 = vmatpush1.bf16.msra.mxu0 0
      %274 = vmatprep.subr.bf16.mxu0 0
      %275 = vmatpush1.bf16.msra.mxu0 0
      %276 = vmatprep.subr.bf16.mxu0 0
      %277 = vmatpush1.bf16.msra.mxu0 0
      %278 = vmatprep.subr.bf16.mxu0 0
      %279 = vmatpush1.bf16.msra.mxu0 0
      %280 = vmatprep.subr.bf16.mxu0 0
      %281 = vmatpush1.bf16.msra.mxu0 0
      %282 = vmatprep.subr.bf16.mxu0 0
      %283 = vmatpush1.bf16.msra.mxu0 0
      %284 = vmatprep.subr.bf16.mxu0 0
      %285 = vmatpush1.bf16.msra.mxu0 0
      %286 = vmatprep.mubr.bf16.mxu0 0
      %287 = vmatmul.mubr.bf16.gmra.mrb[0].mxu0 %v249
      %v288 = vpop.f32.mrb[0].mxu0
      %v289 = vadd.f32 0.0, %v288
      %v290 = vpop.f32.mrb[0].mxu0
      %v291 = vpop.f32.mrb[0].mxu0
      %v292 = vadd.f32 0.0, %v291
      %v293 = vpop.f32.mrb[0].mxu0
      %294 = vmatprep.mubr.bf16.mxu0 0
      %295 = vmatmul.mubr.bf16.gmra.mrb[0].mxu0 %v252
      %v296 = vpop.f32.mrb[0].mxu0
      %v297 = vadd.f32 0.0, %v296
      %v298 = vpop.f32.mrb[0].mxu0
      %v299 = vpop.f32.mrb[0].mxu0
      %v300 = vpop.f32.mrb[0].mxu0
      %301 = vdwg.mxu0
      %v303 = vunpack.c.l.b16 %v201
      %v304 = vpack.c.b16 %v303, %v303
      %v309 = vunpack.c.l.b16 %v202
      %v310 = vunpack.c.l.b16 %v203
      %v311 = vunpack.c.l.b16 %v204
      %v312 = vunpack.c.l.b16 %v205
      %v313 = vpack.c.b16 %v310, %v309
      %v314 = vpack.c.b16 %v312, %v311
      %v317 = vsel %vm247, %v217, 0
      %v320 = vsel %vm247, %v304, 0
      %322 = vmatprep.subr.bf16.mxu0 0
      %323 = vmatpush1.bf16.msra.mxu0 %v313
      %324 = vmatprep.subr.bf16.mxu0 0
      %325 = vmatpush1.bf16.msra.mxu0 %v314
      %326 = vmatprep.subr.bf16.mxu0 0
      %327 = vmatpush1.bf16.msra.mxu0 0
      %328 = vmatprep.subr.bf16.mxu0 0
      %329 = vmatpush1.bf16.msra.mxu0 0
      %330 = vmatprep.subr.bf16.mxu0 0
      %331 = vmatpush1.bf16.msra.mxu0 0
      %332 = vmatprep.subr.bf16.mxu0 0
      %333 = vmatpush1.bf16.msra.mxu0 0
      %334 = vmatprep.subr.bf16.mxu0 0
      %335 = vmatpush1.bf16.msra.mxu0 0
      %336 = vmatprep.subr.bf16.mxu0 0
      %337 = vmatpush1.bf16.msra.mxu0 0
      %338 = vmatprep.subr.bf16.mxu0 0
      %339 = vmatpush1.bf16.msra.mxu0 0
      %340 = vmatprep.subr.bf16.mxu0 0
      %341 = vmatpush1.bf16.msra.mxu0 0
      %342 = vmatprep.subr.bf16.mxu0 0
      %343 = vmatpush1.bf16.msra.mxu0 0
      %344 = vmatprep.subr.bf16.mxu0 0
      %345 = vmatpush1.bf16.msra.mxu0 0
      %346 = vmatprep.subr.bf16.mxu0 0
      %347 = vmatpush1.bf16.msra.mxu0 0
      %348 = vmatprep.subr.bf16.mxu0 0
      %349 = vmatpush1.bf16.msra.mxu0 0
      %350 = vmatprep.subr.bf16.mxu0 0
      %351 = vmatpush1.bf16.msra.mxu0 0
      %352 = vmatprep.subr.bf16.mxu0 0
      %353 = vmatpush1.bf16.msra.mxu0 0
      %354 = vmatprep.mubr.bf16.mxu0 0
      %355 = vmatmul.mubr.bf16.gmra.mrb[0].mxu0 %v317
      %v356 = vpop.f32.mrb[0].mxu0
      %v357 = vadd.f32 %v289, %v356
      %v358 = vpop.f32.mrb[0].mxu0
      %v359 = vpop.f32.mrb[0].mxu0
      %v360 = vadd.f32 %v292, %v359
      %v361 = vpop.f32.mrb[0].mxu0
      %362 = vmatprep.mubr.bf16.mxu0 0
      %363 = vmatmul.mubr.bf16.gmra.mrb[0].mxu0 %v320
      %v364 = vpop.f32.mrb[0].mxu0
      %v365 = vadd.f32 %v297, %v364
      %v366 = vpop.f32.mrb[0].mxu0
      %v367 = vpop.f32.mrb[0].mxu0
      %v368 = vpop.f32.mrb[0].mxu0
      %369 = vdwg.mxu0
      %v370 = vld [vmem:[%s192] sm:$0xe]
      %v371 = vld [vmem:[%s1 + $0x20] sm:$0xf]
      %v372 = vld [vmem:[%s1 + $0x24] sm:$0xf]
      %v373 = vld [vmem:[%s1 + $0x28] sm:$0xf]
      %v374 = vld [vmem:[%s1 + $0x2c] sm:$0xf]
      %v376 = vunpack.c.l.b16 %v370
      %v377 = vpack.c.b16 %v215, %v376
      %vm378 = vcmask 1046528
      %v379 = vrot.slane %v377, 1
      %v380 = vrot.slane %v218, 1
      %v381 = vsel %vm378, %v379, %v380
      %v386 = vunpack.c.l.b16 %v371
      %v387 = vunpack.c.l.b16 %v372
      %v388 = vunpack.c.l.b16 %v373
      %v389 = vunpack.c.l.b16 %v374
      %v390 = vpack.c.b16 %v387, %v386
      %v391 = vpack.c.b16 %v389, %v388
      %v395 = vsel %vm247, %v381, 0
      %v398 = vsel %vm247, %v380, 0
      %400 = vmatprep.subr.bf16.mxu0 0
      %401 = vmatpush1.bf16.msra.mxu0 %v390
      %402 = vmatprep.subr.bf16.mxu0 0
      %403 = vmatpush1.bf16.msra.mxu0 %v391
      %404 = vmatprep.subr.bf16.mxu0 0
      %405 = vmatpush1.bf16.msra.mxu0 0
      %406 = vmatprep.subr.bf16.mxu0 0
      %407 = vmatpush1.bf16.msra.mxu0 0
      %408 = vmatprep.subr.bf16.mxu0 0
      %409 = vmatpush1.bf16.msra.mxu0 0
      %410 = vmatprep.subr.bf16.mxu0 0
      %411 = vmatpush1.bf16.msra.mxu0 0
      %412 = vmatprep.subr.bf16.mxu0 0
      %413 = vmatpush1.bf16.msra.mxu0 0
      %414 = vmatprep.subr.bf16.mxu0 0
      %415 = vmatpush1.bf16.msra.mxu0 0
      %416 = vmatprep.subr.bf16.mxu0 0
      %417 = vmatpush1.bf16.msra.mxu0 0
      %418 = vmatprep.subr.bf16.mxu0 0
      %419 = vmatpush1.bf16.msra.mxu0 0
      %420 = vmatprep.subr.bf16.mxu0 0
      %421 = vmatpush1.bf16.msra.mxu0 0
      %422 = vmatprep.subr.bf16.mxu0 0
      %423 = vmatpush1.bf16.msra.mxu0 0
      %424 = vmatprep.subr.bf16.mxu0 0
      %425 = vmatpush1.bf16.msra.mxu0 0
      %426 = vmatprep.subr.bf16.mxu0 0
      %427 = vmatpush1.bf16.msra.mxu0 0
      %428 = vmatprep.subr.bf16.mxu0 0
      %429 = vmatpush1.bf16.msra.mxu0 0
      %430 = vmatprep.subr.bf16.mxu0 0
      %431 = vmatpush1.bf16.msra.mxu0 0
      %432 = vmatprep.mubr.bf16.mxu0 0
      %433 = vmatmul.mubr.bf16.gmra.mrb[0].mxu0 %v395
      %v434 = vpop.f32.mrb[0].mxu0
      %v435 = vadd.f32 0.0, %v434
      %v436 = vpop.f32.mrb[0].mxu0
      %v437 = vpop.f32.mrb[0].mxu0
      %v438 = vadd.f32 0.0, %v437
      %v439 = vpop.f32.mrb[0].mxu0
      %440 = vmatprep.mubr.bf16.mxu0 0
      %441 = vmatmul.mubr.bf16.gmra.mrb[0].mxu0 %v398
      %v442 = vpop.f32.mrb[0].mxu0
      %v443 = vadd.f32 0.0, %v442
      %v444 = vpop.f32.mrb[0].mxu0
      %v445 = vpop.f32.mrb[0].mxu0
      %v446 = vpop.f32.mrb[0].mxu0
      %447 = vdwg.mxu0
      %v448 = vadd.f32 %v357, %v435
      %v449 = vadd.f32 %v360, %v438
      %v450 = vadd.f32 %v365, %v443
      %v451 = vld [vmem:[%s192 + $0x8] sm:$0x7]
      %v452 = vld [vmem:[%s1 + $0x30] sm:$0xf]
      %v453 = vld [vmem:[%s1 + $0x34] sm:$0xf]
      %v454 = vld [vmem:[%s1 + $0x38] sm:$0xf]
      %v455 = vld [vmem:[%s1 + $0x3c] sm:$0xf]
      %v457 = vunpack.c.l.b16 %v451
      %v458 = vpack.c.b16 %v457, %v457
      %vm459 = vsmask.f32 6400
      %v461 = vshrl.u32 %v377, 16
      %v463 = vrot.slane %v461, 1
      %v464 = vshll.u32 %v377, 16
      %v466 = vrot.slane %v464, 2
      %v467 = vor.u32 %v463, %v466
      %v469 = vshrl.u32 %v458, 16
      %v471 = vrot.slane %v469, 1
      %v472 = vshll.u32 %v458, 16
      %v474 = vrot.slane %v472, 2
      %v475 = vor.u32 %v471, %v474
      %v476 = vsel %vm459, %v467, %v475
      %v481 = vunpack.c.l.b16 %v452
      %v482 = vunpack.c.l.b16 %v453
      %v483 = vunpack.c.l.b16 %v454
      %v484 = vunpack.c.l.b16 %v455
      %v485 = vpack.c.b16 %v482, %v481
      %v486 = vpack.c.b16 %v484, %v483
      %v490 = vsel %vm247, %v476, 0
      %v493 = vsel %vm247, %v475, 0
      %495 = vmatprep.subr.bf16.mxu0 0
      %496 = vmatpush1.bf16.msra.mxu0 %v485
      %497 = vmatprep.subr.bf16.mxu0 0
      %498 = vmatpush1.bf16.msra.mxu0 %v486
      %499 = vmatprep.subr.bf16.mxu0 0
      %500 = vmatpush1.bf16.msra.mxu0 0
      %501 = vmatprep.subr.bf16.mxu0 0
      %502 = vmatpush1.bf16.msra.mxu0 0
      %503 = vmatprep.subr.bf16.mxu0 0
      %504 = vmatpush1.bf16.msra.mxu0 0
      %505 = vmatprep.subr.bf16.mxu0 0
      %506 = vmatpush1.bf16.msra.mxu0 0
      %507 = vmatprep.subr.bf16.mxu0 0
      %508 = vmatpush1.bf16.msra.mxu0 0
      %509 = vmatprep.subr.bf16.mxu0 0
      %510 = vmatpush1.bf16.msra.mxu0 0
      %511 = vmatprep.subr.bf16.mxu0 0
      %512 = vmatpush1.bf16.msra.mxu0 0
      %513 = vmatprep.subr.bf16.mxu0 0
      %514 = vmatpush1.bf16.msra.mxu0 0
      %515 = vmatprep.subr.bf16.mxu0 0
      %516 = vmatpush1.bf16.msra.mxu0 0
      %517 = vmatprep.subr.bf16.mxu0 0
      %518 = vmatpush1.bf16.msra.mxu0 0
      %519 = vmatprep.subr.bf16.mxu0 0
      %520 = vmatpush1.bf16.msra.mxu0 0
      %521 = vmatprep.subr.bf16.mxu0 0
      %522 = vmatpush1.bf16.msra.mxu0 0
      %523 = vmatprep.subr.bf16.mxu0 0
      %524 = vmatpush1.bf16.msra.mxu0 0
      %525 = vmatprep.subr.bf16.mxu0 0
      %526 = vmatpush1.bf16.msra.mxu0 0
      %527 = vmatprep.mubr.bf16.mxu0 0
      %528 = vmatmul.mubr.bf16.gmra.mrb[0].mxu0 %v490
      %v529 = vpop.f32.mrb[0].mxu0
      %v530 = vadd.f32 0.0, %v529
      %v531 = vpop.f32.mrb[0].mxu0
      %v532 = vpop.f32.mrb[0].mxu0
      %v533 = vadd.f32 0.0, %v532
      %v534 = vpop.f32.mrb[0].mxu0
      %535 = vmatprep.mubr.bf16.mxu0 0
      %536 = vmatmul.mubr.bf16.gmra.mrb[0].mxu0 %v493
      %v537 = vpop.f32.mrb[0].mxu0
      %v538 = vadd.f32 0.0, %v537
      %v539 = vpop.f32.mrb[0].mxu0
      %v540 = vpop.f32.mrb[0].mxu0
      %v541 = vpop.f32.mrb[0].mxu0
      %542 = vdwg.mxu0
      %v543 = vadd.f32 %v448, %v530
      %v544 = vadd.f32 %v449, %v533
      %v545 = vadd.f32 %v450, %v538
      %v546 = vld [vmem:[%s192] sm:$0x8]
      %v547 = vld [vmem:[%s192 + $0x8] sm:$0xf]
      %v548 = vld [vmem:[%s1 + $0x40] sm:$0xf]
      %v549 = vld [vmem:[%s1 + $0x44] sm:$0xf]
      %v550 = vld [vmem:[%s1 + $0x48] sm:$0xf]
      %v551 = vld [vmem:[%s1 + $0x4c] sm:$0xf]
      %v554 = vunpack.c.l.b16 %v546
      %v555 = vunpack.c.l.b16 %v547
      %v556 = vpack.c.b16 %v215, %v554
      %v557 = vpack.c.b16 %v555, %v555
      %vm558 = vcmask 1044480
      %v559 = vrot.slane %v556, 3
      %v560 = vrot.slane %v557, 3
      %v561 = vsel %vm558, %v559, %v560
      %v566 = vunpack.c.l.b16 %v548
      %v567 = vunpack.c.l.b16 %v549
      %v568 = vunpack.c.l.b16 %v550
      %v569 = vunpack.c.l.b16 %v551
      %v570 = vpack.c.b16 %v567, %v566
      %v571 = vpack.c.b16 %v569, %v568
      %v575 = vsel %vm247, %v561, 0
      %v578 = vsel %vm247, %v560, 0
      %580 = vmatprep.subr.bf16.mxu0 0
      %581 = vmatpush1.bf16.msra.mxu0 %v570
      %582 = vmatprep.subr.bf16.mxu0 0
      %583 = vmatpush1.bf16.msra.mxu0 %v571
      %584 = vmatprep.subr.bf16.mxu0 0
      %585 = vmatpush1.bf16.msra.mxu0 0
      %586 = vmatprep.subr.bf16.mxu0 0
      %587 = vmatpush1.bf16.msra.mxu0 0
      %588 = vmatprep.subr.bf16.mxu0 0
      %589 = vmatpush1.bf16.msra.mxu0 0
      %590 = vmatprep.subr.bf16.mxu0 0
      %591 = vmatpush1.bf16.msra.mxu0 0
      %592 = vmatprep.subr.bf16.mxu0 0
      %593 = vmatpush1.bf16.msra.mxu0 0
      %594 = vmatprep.subr.bf16.mxu0 0
      %595 = vmatpush1.bf16.msra.mxu0 0
      %596 = vmatprep.subr.bf16.mxu0 0
      %597 = vmatpush1.bf16.msra.mxu0 0
      %598 = vmatprep.subr.bf16.mxu0 0
      %599 = vmatpush1.bf16.msra.mxu0 0
      %600 = vmatprep.subr.bf16.mxu0 0
      %601 = vmatpush1.bf16.msra.mxu0 0
      %602 = vmatprep.subr.bf16.mxu0 0
      %603 = vmatpush1.bf16.msra.mxu0 0
      %604 = vmatprep.subr.bf16.mxu0 0
      %605 = vmatpush1.bf16.msra.mxu0 0
      %606 = vmatprep.subr.bf16.mxu0 0
      %607 = vmatpush1.bf16.msra.mxu0 0
      %608 = vmatprep.subr.bf16.mxu0 0
      %609 = vmatpush1.bf16.msra.mxu0 0
      %610 = vmatprep.subr.bf16.mxu0 0
      %611 = vmatpush1.bf16.msra.mxu0 0
      %612 = vmatprep.mubr.bf16.mxu0 0
      %613 = vmatmul.mubr.bf16.gmra.mrb[0].mxu0 %v575
      %v614 = vpop.f32.mrb[0].mxu0
      %v615 = vadd.f32 0.0, %v614
      %v616 = vpop.f32.mrb[0].mxu0
      %v617 = vpop.f32.mrb[0].mxu0
      %v618 = vadd.f32 0.0, %v617
      %v619 = vpop.f32.mrb[0].mxu0
      %620 = vmatprep.mubr.bf16.mxu0 0
      %621 = vmatmul.mubr.bf16.gmra.mrb[0].mxu0 %v578
      %v622 = vpop.f32.mrb[0].mxu0
      %v623 = vadd.f32 0.0, %v622
      %v624 = vpop.f32.mrb[0].mxu0
      %v625 = vpop.f32.mrb[0].mxu0
      %v626 = vpop.f32.mrb[0].mxu0
      %627 = vdwg.mxu0
      %v628 = vadd.f32 %v543, %v615
      %v629 = vadd.f32 %v544, %v618
      %v630 = vadd.f32 %v545, %v623
      %v631 = vld [vmem:[%s192] sm:$0x8]
      %v632 = vld [vmem:[%s192 + $0x4] sm:$0xf]
      %v633 = vld [vmem:[%s192 + $0x8] sm:$0xf]
      %v634 = vld [vmem:[%s192 + $0xc] sm:$0x1]
      %v635 = vld [vmem:[%s1 + $0x50] sm:$0xf]
      %v636 = vld [vmem:[%s1 + $0x54] sm:$0xf]
      %v637 = vld [vmem:[%s1 + $0x58] sm:$0xf]
      %v638 = vld [vmem:[%s1 + $0x5c] sm:$0xf]
      %v643 = vunpack.c.l.b16 %v631
      %v644 = vunpack.c.l.b16 %v632
      %v645 = vunpack.c.l.b16 %v633
      %v646 = vunpack.c.l.b16 %v634
      %v647 = vpack.c.b16 %v644, %v643
      %v648 = vpack.c.b16 %v646, %v645
      %vm649 = vsmask.f32 4352
      %v651 = vshrl.u32 %v647, 16
      %v653 = vrot.slane %v651, 3
      %v654 = vshll.u32 %v647, 16
      %v656 = vrot.slane %v654, 4
      %v657 = vor.u32 %v653, %v656
      %v659 = vshrl.u32 %v648, 16
      %v661 = vrot.slane %v659, 3
      %v662 = vshll.u32 %v648, 16
      %v664 = vrot.slane %v662, 4
      %v665 = vor.u32 %v661, %v664
      %v666 = vsel %vm649, %v657, %v665
      %v671 = vunpack.c.l.b16 %v635
      %v672 = vunpack.c.l.b16 %v636
      %v673 = vunpack.c.l.b16 %v637
      %v674 = vunpack.c.l.b16 %v638
      %v675 = vpack.c.b16 %v672, %v671
      %v676 = vpack.c.b16 %v674, %v673
      %v680 = vsel %vm247, %v666, 0
      %v683 = vsel %vm247, %v665, 0
      %685 = vmatprep.subr.bf16.mxu0 0
      %686 = vmatpush1.bf16.msra.mxu0 %v675
      %687 = vmatprep.subr.bf16.mxu0 0
      %688 = vmatpush1.bf16.msra.mxu0 %v676
      %689 = vmatprep.subr.bf16.mxu0 0
      %690 = vmatpush1.bf16.msra.mxu0 0
      %691 = vmatprep.subr.bf16.mxu0 0
      %692 = vmatpush1.bf16.msra.mxu0 0
      %693 = vmatprep.subr.bf16.mxu0 0
      %694 = vmatpush1.bf16.msra.mxu0 0
      %695 = vmatprep.subr.bf16.mxu0 0
      %696 = vmatpush1.bf16.msra.mxu0 0
      %697 = vmatprep.subr.bf16.mxu0 0
      %698 = vmatpush1.bf16.msra.mxu0 0
      %699 = vmatprep.subr.bf16.mxu0 0
      %700 = vmatpush1.bf16.msra.mxu0 0
      %701 = vmatprep.subr.bf16.mxu0 0
      %702 = vmatpush1.bf16.msra.mxu0 0
      %703 = vmatprep.subr.bf16.mxu0 0
      %704 = vmatpush1.bf16.msra.mxu0 0
      %705 = vmatprep.subr.bf16.mxu0 0
      %706 = vmatpush1.bf16.msra.mxu0 0
      %707 = vmatprep.subr.bf16.mxu0 0
      %708 = vmatpush1.bf16.msra.mxu0 0
      %709 = vmatprep.subr.bf16.mxu0 0
      %710 = vmatpush1.bf16.msra.mxu0 0
      %711 = vmatprep.subr.bf16.mxu0 0
      %712 = vmatpush1.bf16.msra.mxu0 0
      %713 = vmatprep.subr.bf16.mxu0 0
      %714 = vmatpush1.bf16.msra.mxu0 0
      %715 = vmatprep.subr.bf16.mxu0 0
      %716 = vmatpush1.bf16.msra.mxu0 0
      %717 = vmatprep.mubr.bf16.mxu0 0
      %718 = vmatmul.mubr.bf16.gmra.mrb[0].mxu0 %v680
      %v719 = vpop.f32.mrb[0].mxu0
      %v720 = vadd.f32 0.0, %v719
      %v721 = vpop.f32.mrb[0].mxu0
      %v722 = vpop.f32.mrb[0].mxu0
      %v723 = vadd.f32 0.0, %v722
      %v724 = vpop.f32.mrb[0].mxu0
      %725 = vmatprep.mubr.bf16.mxu0 0
      %726 = vmatmul.mubr.bf16.gmra.mrb[0].mxu0 %v683
      %v727 = vpop.f32.mrb[0].mxu0
      %v728 = vadd.f32 0.0, %v727
      %v729 = vpop.f32.mrb[0].mxu0
      %v730 = vpop.f32.mrb[0].mxu0
      %v731 = vpop.f32.mrb[0].mxu0
      %732 = vdwg.mxu0
      %v733 = vadd.f32 %v628, %v720
      %v734 = vadd.f32 %v629, %v723
      %v735 = vadd.f32 %v630, %v728
      %v736 = vld [vmem:[%s1 + $0x60] sm:$0xf]
      %v737 = vld [vmem:[%s1 + $0x64] sm:$0xf]
      %v738 = vld [vmem:[%s1 + $0x68] sm:$0xf]
      %v739 = vld [vmem:[%s1 + $0x6c] sm:$0xf]
      %v740 = vpack.c.b16 %v645, %v644
      %v741 = vpack.c.b16 %v646, %v646
      %v746 = vunpack.c.l.b16 %v736
      %v747 = vunpack.c.l.b16 %v737
      %v748 = vunpack.c.l.b16 %v738
      %v749 = vunpack.c.l.b16 %v739
      %v750 = vpack.c.b16 %v747, %v746
      %v751 = vpack.c.b16 %v749, %v748
      %v755 = vsel %vm247, %v740, 0
      %v758 = vsel %vm247, %v741, 0
      %760 = vmatprep.subr.bf16.mxu0 0
      %761 = vmatpush1.bf16.msra.mxu0 %v750
      %762 = vmatprep.subr.bf16.mxu0 0
      %763 = vmatpush1.bf16.msra.mxu0 %v751
      %764 = vmatprep.subr.bf16.mxu0 0
      %765 = vmatpush1.bf16.msra.mxu0 0
      %766 = vmatprep.subr.bf16.mxu0 0
      %767 = vmatpush1.bf16.msra.mxu0 0
      %768 = vmatprep.subr.bf16.mxu0 0
      %769 = vmatpush1.bf16.msra.mxu0 0
      %770 = vmatprep.subr.bf16.mxu0 0
      %771 = vmatpush1.bf16.msra.mxu0 0
      %772 = vmatprep.subr.bf16.mxu0 0
      %773 = vmatpush1.bf16.msra.mxu0 0
      %774 = vmatprep.subr.bf16.mxu0 0
      %775 = vmatpush1.bf16.msra.mxu0 0
      %776 = vmatprep.subr.bf16.mxu0 0
      %777 = vmatpush1.bf16.msra.mxu0 0
      %778 = vmatprep.subr.bf16.mxu0 0
      %779 = vmatpush1.bf16.msra.mxu0 0
      %780 = vmatprep.subr.bf16.mxu0 0
      %781 = vmatpush1.bf16.msra.mxu0 0
      %782 = vmatprep.subr.bf16.mxu0 0
      %783 = vmatpush1.bf16.msra.mxu0 0
      %784 = vmatprep.subr.bf16.mxu0 0
      %785 = vmatpush1.bf16.msra.mxu0 0
      %786 = vmatprep.subr.bf16.mxu0 0
      %787 = vmatpush1.bf16.msra.mxu0 0
      %788 = vmatprep.subr.bf16.mxu0 0
      %789 = vmatpush1.bf16.msra.mxu0 0
      %790 = vmatprep.subr.bf16.mxu0 0
      %791 = vmatpush1.bf16.msra.mxu0 0
      %792 = vmatprep.mubr.bf16.mxu0 0
      %793 = vmatmul.mubr.bf16.gmra.mrb[0].mxu0 %v755
      %v794 = vpop.f32.mrb[0].mxu0
      %v795 = vadd.f32 0.0, %v794
      %v796 = vpop.f32.mrb[0].mxu0
      %v797 = vpop.f32.mrb[0].mxu0
      %v798 = vadd.f32 0.0, %v797
      %v799 = vpop.f32.mrb[0].mxu0
      %800 = vmatprep.mubr.bf16.mxu0 0
      %801 = vmatmul.mubr.bf16.gmra.mrb[0].mxu0 %v758
      %v802 = vpop.f32.mrb[0].mxu0
      %v803 = vadd.f32 0.0, %v802
      %v804 = vpop.f32.mrb[0].mxu0
      %v805 = vpop.f32.mrb[0].mxu0
      %v806 = vpop.f32.mrb[0].mxu0
      %807 = vdwg.mxu0
      %v808 = vadd.f32 %v733, %v795
      %v809 = vadd.f32 %v734, %v798
      %v810 = vadd.f32 %v735, %v803
      %v811 = vld [vmem:[%s192 + $0xc] sm:$0x3]
      %v812 = vld [vmem:[%s1 + $0x70] sm:$0xf]
      %v813 = vld [vmem:[%s1 + $0x74] sm:$0xf]
      %v814 = vld [vmem:[%s1 + $0x78] sm:$0xf]
      %v815 = vld [vmem:[%s1 + $0x7c] sm:$0xf]
      %v817 = vunpack.c.l.b16 %v811
      %v818 = vpack.c.b16 %v817, %v817
      %v819 = vshrl.u32 %v740, 16
      %v821 = vshll.u32 %v740, 16
      %v823 = vrot.slane %v821, 1
      %v824 = vor.u32 %v819, %v823
      %v826 = vshll.u32 %v818, 16
      %v828 = vrot.slane %v826, 1
      %v829 = vsel %vm219, %v824, %v828
      %v830 = vshrl.u32 %v818, 16
      %v832 = vor.u32 %v830, %v828
      %v837 = vunpack.c.l.b16 %v812
      %v838 = vunpack.c.l.b16 %v813
      %v839 = vunpack.c.l.b16 %v814
      %v840 = vunpack.c.l.b16 %v815
      %v841 = vpack.c.b16 %v838, %v837
      %v842 = vpack.c.b16 %v840, %v839
      %v846 = vsel %vm247, %v829, 0
      %v849 = vsel %vm247, %v832, 0
      %851 = vmatprep.subr.bf16.mxu0 0
      %852 = vmatpush1.bf16.msra.mxu0 %v841
      %853 = vmatprep.subr.bf16.mxu0 0
      %854 = vmatpush1.bf16.msra.mxu0 %v842
      %855 = vmatprep.subr.bf16.mxu0 0
      %856 = vmatpush1.bf16.msra.mxu0 0
      %857 = vmatprep.subr.bf16.mxu0 0
      %858 = vmatpush1.bf16.msra.mxu0 0
      %859 = vmatprep.subr.bf16.mxu0 0
      %860 = vmatpush1.bf16.msra.mxu0 0
      %861 = vmatprep.subr.bf16.mxu0 0
      %862 = vmatpush1.bf16.msra.mxu0 0
      %863 = vmatprep.subr.bf16.mxu0 0
      %864 = vmatpush1.bf16.msra.mxu0 0
      %865 = vmatprep.subr.bf16.mxu0 0
      %866 = vmatpush1.bf16.msra.mxu0 0
      %867 = vmatprep.subr.bf16.mxu0 0
      %868 = vmatpush1.bf16.msra.mxu0 0
      %869 = vmatprep.subr.bf16.mxu0 0
      %870 = vmatpush1.bf16.msra.mxu0 0
      %871 = vmatprep.subr.bf16.mxu0 0
      %872 = vmatpush1.bf16.msra.mxu0 0
      %873 = vmatprep.subr.bf16.mxu0 0
      %874 = vmatpush1.bf16.msra.mxu0 0
      %875 = vmatprep.subr.bf16.mxu0 0
      %876 = vmatpush1.bf16.msra.mxu0 0
      %877 = vmatprep.subr.bf16.mxu0 0
      %878 = vmatpush1.bf16.msra.mxu0 0
      %879 = vmatprep.subr.bf16.mxu0 0
      %880 = vmatpush1.bf16.msra.mxu0 0
      %881 = vmatprep.subr.bf16.mxu0 0
      %882 = vmatpush1.bf16.msra.mxu0 0
      %883 = vmatprep.mubr.bf16.mxu0 0
      %884 = vmatmul.mubr.bf16.gmra.mrb[0].mxu0 %v846
      %v885 = vpop.f32.mrb[0].mxu0
      %v886 = vadd.f32 0.0, %v885
      %v887 = vpop.f32.mrb[0].mxu0
      %v888 = vpop.f32.mrb[0].mxu0
      %v889 = vadd.f32 0.0, %v888
      %v890 = vpop.f32.mrb[0].mxu0
      %891 = vmatprep.mubr.bf16.mxu0 0
      %892 = vmatmul.mubr.bf16.gmra.mrb[0].mxu0 %v849
      %v893 = vpop.f32.mrb[0].mxu0
      %v894 = vadd.f32 0.0, %v893
      %v895 = vpop.f32.mrb[0].mxu0
      %v896 = vpop.f32.mrb[0].mxu0
      %v897 = vpop.f32.mrb[0].mxu0
      %898 = vdwg.mxu0
      %v899 = vadd.f32 %v808, %v886
      %v900 = vadd.f32 %v809, %v889
      %v901 = vadd.f32 %v810, %v894
      %v902 = vld [vmem:[%s192 + $0x4] sm:$0xc]
      %v903 = vld [vmem:[%s192 + $0xc] sm:$0x7]
      %v904 = vld [vmem:[%s1 + $0x80] sm:$0xf]
      %v905 = vld [vmem:[%s1 + $0x84] sm:$0xf]
      %v906 = vld [vmem:[%s1 + $0x88] sm:$0xf]
      %v907 = vld [vmem:[%s1 + $0x8c] sm:$0xf]
      %v910 = vunpack.c.l.b16 %v902
      %v911 = vunpack.c.l.b16 %v903
      %v912 = vpack.c.b16 %v645, %v910
      %v913 = vpack.c.b16 %v911, %v911
      %vm914 = vcmask 1045504
      %v915 = vrot.slane %v912, 2
      %v916 = vrot.slane %v913, 2
      %v917 = vsel %vm914, %v915, %v916
      %v922 = vunpack.c.l.b16 %v904
      %v923 = vunpack.c.l.b16 %v905
      %v924 = vunpack.c.l.b16 %v906
      %v925 = vunpack.c.l.b16 %v907
      %v926 = vpack.c.b16 %v923, %v922
      %v927 = vpack.c.b16 %v925, %v924
      %v931 = vsel %vm247, %v917, 0
      %v934 = vsel %vm247, %v916, 0
      %936 = vmatprep.subr.bf16.mxu0 0
      %937 = vmatpush1.bf16.msra.mxu0 %v926
      %938 = vmatprep.subr.bf16.mxu0 0
      %939 = vmatpush1.bf16.msra.mxu0 %v927
      %940 = vmatprep.subr.bf16.mxu0 0
      %941 = vmatpush1.bf16.msra.mxu0 0
      %942 = vmatprep.subr.bf16.mxu0 0
      %943 = vmatpush1.bf16.msra.mxu0 0
      %944 = vmatprep.subr.bf16.mxu0 0
      %945 = vmatpush1.bf16.msra.mxu0 0
      %946 = vmatprep.subr.bf16.mxu0 0
      %947 = vmatpush1.bf16.msra.mxu0 0
      %948 = vmatprep.subr.bf16.mxu0 0
      %949 = vmatpush1.bf16.msra.mxu0 0
      %950 = vmatprep.subr.bf16.mxu0 0
      %951 = vmatpush1.bf16.msra.mxu0 0
      %952 = vmatprep.subr.bf16.mxu0 0
      %953 = vmatpush1.bf16.msra.mxu0 0
      %954 = vmatprep.subr.bf16.mxu0 0
      %955 = vmatpush1.bf16.msra.mxu0 0
      %956 = vmatprep.subr.bf16.mxu0 0
      %957 = vmatpush1.bf16.msra.mxu0 0
      %958 = vmatprep.subr.bf16.mxu0 0
      %959 = vmatpush1.bf16.msra.mxu0 0
      %960 = vmatprep.subr.bf16.mxu0 0
      %961 = vmatpush1.bf16.msra.mxu0 0
      %962 = vmatprep.subr.bf16.mxu0 0
      %963 = vmatpush1.bf16.msra.mxu0 0
      %964 = vmatprep.subr.bf16.mxu0 0
      %965 = vmatpush1.bf16.msra.mxu0 0
      %966 = vmatprep.subr.bf16.mxu0 0
      %967 = vmatpush1.bf16.msra.mxu0 0
      %968 = vmatprep.mubr.bf16.mxu0 0
      %969 = vmatmul.mubr.bf16.gmra.mrb[0].mxu0 %v931
      %v970 = vpop.f32.mrb[0].mxu0
      %v971 = vadd.f32 0.0, %v970
      %v972 = vpop.f32.mrb[0].mxu0
      %v973 = vpop.f32.mrb[0].mxu0
      %v974 = vadd.f32 0.0, %v973
      %v975 = vpop.f32.mrb[0].mxu0
      %976 = vmatprep.mubr.bf16.mxu0 0
      %977 = vmatmul.mubr.bf16.gmra.mrb[0].mxu0 %v934
      %v978 = vpop.f32.mrb[0].mxu0
      %v979 = vadd.f32 0.0, %v978
      %v980 = vpop.f32.mrb[0].mxu0
      %v981 = vpop.f32.mrb[0].mxu0
      %v982 = vpop.f32.mrb[0].mxu0
      %983 = vdwg.mxu0
      %v984 = vadd.f32 %v899, %v971
      %v985 = vadd.f32 %v900, %v974
      %v986 = vadd.f32 %v901, %v979
      %v987 = vld [vmem:[%s192 + $0xc] sm:$0xf]
      %v988 = vld [vmem:[%s1 + $0x90] sm:$0xf]
      %v989 = vld [vmem:[%s1 + $0x94] sm:$0xf]
      %v990 = vld [vmem:[%s1 + $0x98] sm:$0xf]
      %v991 = vld [vmem:[%s1 + $0x9c] sm:$0xf]
      %v993 = vunpack.c.l.b16 %v987
      %v994 = vpack.c.b16 %v993, %v993
      %vm995 = vsmask.f32 5376
      %v997 = vshrl.u32 %v912, 16
      %v999 = vrot.slane %v997, 2
      %v1000 = vshll.u32 %v912, 16
      %v1002 = vrot.slane %v1000, 3
      %v1003 = vor.u32 %v999, %v1002
      %v1005 = vshrl.u32 %v994, 16
      %v1007 = vrot.slane %v1005, 2
      %v1008 = vshll.u32 %v994, 16
      %v1010 = vrot.slane %v1008, 3
      %v1011 = vor.u32 %v1007, %v1010
      %v1012 = vsel %vm995, %v1003, %v1011
      %v1017 = vunpack.c.l.b16 %v988
      %v1018 = vunpack.c.l.b16 %v989
      %v1019 = vunpack.c.l.b16 %v990
      %v1020 = vunpack.c.l.b16 %v991
      %v1021 = vpack.c.b16 %v1018, %v1017
      %v1022 = vpack.c.b16 %v1020, %v1019
      %v1026 = vsel %vm247, %v1012, 0
      %v1029 = vsel %vm247, %v1011, 0
      %1031 = vmatprep.subr.bf16.mxu0 0
      %1032 = vmatpush1.bf16.msra.mxu0 %v1021
      %1033 = vmatprep.subr.bf16.mxu0 0
      %1034 = vmatpush1.bf16.msra.mxu0 %v1022
      %1035 = vmatprep.subr.bf16.mxu0 0
      %1036 = vmatpush1.bf16.msra.mxu0 0
      %1037 = vmatprep.subr.bf16.mxu0 0
      %1038 = vmatpush1.bf16.msra.mxu0 0
      %1039 = vmatprep.subr.bf16.mxu0 0
      %1040 = vmatpush1.bf16.msra.mxu0 0
      %1041 = vmatprep.subr.bf16.mxu0 0
      %1042 = vmatpush1.bf16.msra.mxu0 0
      %1043 = vmatprep.subr.bf16.mxu0 0
      %1044 = vmatpush1.bf16.msra.mxu0 0
      %1045 = vmatprep.subr.bf16.mxu0 0
      %1046 = vmatpush1.bf16.msra.mxu0 0
      %1047 = vmatprep.subr.bf16.mxu0 0
      %1048 = vmatpush1.bf16.msra.mxu0 0
      %1049 = vmatprep.subr.bf16.mxu0 0
      %1050 = vmatpush1.bf16.msra.mxu0 0
      %1051 = vmatprep.subr.bf16.mxu0 0
      %1052 = vmatpush1.bf16.msra.mxu0 0
      %1053 = vmatprep.subr.bf16.mxu0 0
      %1054 = vmatpush1.bf16.msra.mxu0 0
      %1055 = vmatprep.subr.bf16.mxu0 0
      %1056 = vmatpush1.bf16.msra.mxu0 0
      %1057 = vmatprep.subr.bf16.mxu0 0
      %1058 = vmatpush1.bf16.msra.mxu0 0
      %1059 = vmatprep.subr.bf16.mxu0 0
      %1060 = vmatpush1.bf16.msra.mxu0 0
      %1061 = vmatprep.subr.bf16.mxu0 0
      %1062 = vmatpush1.bf16.msra.mxu0 0
      %1063 = vmatprep.mubr.bf16.mxu0 0
      %1064 = vmatmul.mubr.bf16.gmra.mrb[0].mxu0 %v1026
      %v1065 = vpop.f32.mrb[0].mxu0
      %v1066 = vadd.f32 0.0, %v1065
      %v1067 = vpop.f32.mrb[0].mxu0
      %v1068 = vpop.f32.mrb[0].mxu0
      %v1069 = vadd.f32 0.0, %v1068
      %v1070 = vpop.f32.mrb[0].mxu0
      %1071 = vmatprep.mubr.bf16.mxu0 0
      %1072 = vmatmul.mubr.bf16.gmra.mrb[0].mxu0 %v1029
      %v1073 = vpop.f32.mrb[0].mxu0
      %v1074 = vadd.f32 0.0, %v1073
      %v1075 = vpop.f32.mrb[0].mxu0
      %v1076 = vpop.f32.mrb[0].mxu0
      %v1077 = vpop.f32.mrb[0].mxu0
      %1078 = vdwg.mxu0
      %v1079 = vadd.f32 %v984, %v1066
      %v1080 = vadd.f32 %v985, %v1069
      %v1081 = vadd.f32 %v986, %v1074
      %v1082 = vld [vmem:[%s192 + $0x4] sm:$0x8]
      %v1083 = vld [vmem:[%s1 + $0xa0] sm:$0xf]
      %v1084 = vld [vmem:[%s1 + $0xa4] sm:$0xf]
      %v1085 = vld [vmem:[%s1 + $0xa8] sm:$0xf]
      %v1086 = vld [vmem:[%s1 + $0xac] sm:$0xf]
      %v1088 = vunpack.c.l.b16 %v1082
      %v1089 = vpack.c.b16 %v645, %v1088
      %v1090 = vrot.slane %v1089, 3
      %v1091 = vrot.slane %v994, 3
      %v1092 = vsel %vm558, %v1090, %v1091
      %v1097 = vunpack.c.l.b16 %v1083
      %v1098 = vunpack.c.l.b16 %v1084
      %v1099 = vunpack.c.l.b16 %v1085
      %v1100 = vunpack.c.l.b16 %v1086
      %v1101 = vpack.c.b16 %v1098, %v1097
      %v1102 = vpack.c.b16 %v1100, %v1099
      %v1106 = vsel %vm247, %v1092, 0
      %v1109 = vsel %vm247, %v1091, 0
      %1111 = vmatprep.subr.bf16.mxu0 0
      %1112 = vmatpush1.bf16.msra.mxu0 %v1101
      %1113 = vmatprep.subr.bf16.mxu0 0
      %1114 = vmatpush1.bf16.msra.mxu0 %v1102
      %1115 = vmatprep.subr.bf16.mxu0 0
      %1116 = vmatpush1.bf16.msra.mxu0 0
      %1117 = vmatprep.subr.bf16.mxu0 0
      %1118 = vmatpush1.bf16.msra.mxu0 0
      %1119 = vmatprep.subr.bf16.mxu0 0
      %1120 = vmatpush1.bf16.msra.mxu0 0
      %1121 = vmatprep.subr.bf16.mxu0 0
      %1122 = vmatpush1.bf16.msra.mxu0 0
      %1123 = vmatprep.subr.bf16.mxu0 0
      %1124 = vmatpush1.bf16.msra.mxu0 0
      %1125 = vmatprep.subr.bf16.mxu0 0
      %1126 = vmatpush1.bf16.msra.mxu0 0
      %1127 = vmatprep.subr.bf16.mxu0 0
      %1128 = vmatpush1.bf16.msra.mxu0 0
      %1129 = vmatprep.subr.bf16.mxu0 0
      %1130 = vmatpush1.bf16.msra.mxu0 0
      %1131 = vmatprep.subr.bf16.mxu0 0
      %1132 = vmatpush1.bf16.msra.mxu0 0
      %1133 = vmatprep.subr.bf16.mxu0 0
      %1134 = vmatpush1.bf16.msra.mxu0 0
      %1135 = vmatprep.subr.bf16.mxu0 0
      %1136 = vmatpush1.bf16.msra.mxu0 0
      %1137 = vmatprep.subr.bf16.mxu0 0
      %1138 = vmatpush1.bf16.msra.mxu0 0
      %1139 = vmatprep.subr.bf16.mxu0 0
      %1140 = vmatpush1.bf16.msra.mxu0 0
      %1141 = vmatprep.subr.bf16.mxu0 0
      %1142 = vmatpush1.bf16.msra.mxu0 0
      %1143 = vmatprep.mubr.bf16.mxu0 0
      %1144 = vmatmul.mubr.bf16.gmra.mrb[0].mxu0 %v1106
      %v1145 = vpop.f32.mrb[0].mxu0
      %v1146 = vadd.f32 0.0, %v1145
      %v1147 = vpop.f32.mrb[0].mxu0
      %v1148 = vpop.f32.mrb[0].mxu0
      %v1149 = vadd.f32 0.0, %v1148
      %v1150 = vpop.f32.mrb[0].mxu0
      %1151 = vmatprep.mubr.bf16.mxu0 0
      %1152 = vmatmul.mubr.bf16.gmra.mrb[0].mxu0 %v1109
      %v1153 = vpop.f32.mrb[0].mxu0
      %v1154 = vadd.f32 0.0, %v1153
      %v1155 = vpop.f32.mrb[0].mxu0
      %v1156 = vpop.f32.mrb[0].mxu0
      %v1157 = vpop.f32.mrb[0].mxu0
      %1158 = vdwg.mxu0
      %v1159 = vadd.f32 %v1079, %v1146
      %v1160 = vadd.f32 %v1080, %v1149
      %v1161 = vadd.f32 %v1081, %v1154
      %v1162 = vld [vmem:[%s192 + $0x4] sm:$0x8]
      %v1163 = vld [vmem:[%s192 + $0x8] sm:$0xf]
      %v1164 = vld [vmem:[%s192 + $0xc] sm:$0xf]
      %v1165 = vld [vmem:[%s192 + $0x10] sm:$0x1]
      %v1166 = vld [vmem:[%s1 + $0xb0] sm:$0xf]
      %v1167 = vld [vmem:[%s1 + $0xb4] sm:$0xf]
      %v1168 = vld [vmem:[%s1 + $0xb8] sm:$0xf]
      %v1169 = vld [vmem:[%s1 + $0xbc] sm:$0xf]
      %v1174 = vunpack.c.l.b16 %v1162
      %v1175 = vunpack.c.l.b16 %v1163
      %v1176 = vunpack.c.l.b16 %v1164
      %v1177 = vunpack.c.l.b16 %v1165
      %v1178 = vpack.c.b16 %v1175, %v1174
      %v1179 = vpack.c.b16 %v1177, %v1176
      %v1181 = vshrl.u32 %v1178, 16
      %v1183 = vrot.slane %v1181, 3
      %v1184 = vshll.u32 %v1178, 16
      %v1186 = vrot.slane %v1184, 4
      %v1187 = vor.u32 %v1183, %v1186
      %v1189 = vshrl.u32 %v1179, 16
      %v1191 = vrot.slane %v1189, 3
      %v1192 = vshll.u32 %v1179, 16
      %v1194 = vrot.slane %v1192, 4
      %v1195 = vor.u32 %v1191, %v1194
      %v1196 = vsel %vm649, %v1187, %v1195
      %v1201 = vunpack.c.l.b16 %v1166
      %v1202 = vunpack.c.l.b16 %v1167
      %v1203 = vunpack.c.l.b16 %v1168
      %v1204 = vunpack.c.l.b16 %v1169
      %v1205 = vpack.c.b16 %v1202, %v1201
      %v1206 = vpack.c.b16 %v1204, %v1203
      %v1210 = vsel %vm247, %v1196, 0
      %v1213 = vsel %vm247, %v1195, 0
      %1215 = vmatprep.subr.bf16.mxu0 0
      %1216 = vmatpush1.bf16.msra.mxu0 %v1205
      %1217 = vmatprep.subr.bf16.mxu0 0
      %1218 = vmatpush1.bf16.msra.mxu0 %v1206
      %1219 = vmatprep.subr.bf16.mxu0 0
      %1220 = vmatpush1.bf16.msra.mxu0 0
      %1221 = vmatprep.subr.bf16.mxu0 0
      %1222 = vmatpush1.bf16.msra.mxu0 0
      %1223 = vmatprep.subr.bf16.mxu0 0
      %1224 = vmatpush1.bf16.msra.mxu0 0
      %1225 = vmatprep.subr.bf16.mxu0 0
      %1226 = vmatpush1.bf16.msra.mxu0 0
      %1227 = vmatprep.subr.bf16.mxu0 0
      %1228 = vmatpush1.bf16.msra.mxu0 0
      %1229 = vmatprep.subr.bf16.mxu0 0
      %1230 = vmatpush1.bf16.msra.mxu0 0
      %1231 = vmatprep.subr.bf16.mxu0 0
      %1232 = vmatpush1.bf16.msra.mxu0 0
      %1233 = vmatprep.subr.bf16.mxu0 0
      %1234 = vmatpush1.bf16.msra.mxu0 0
      %1235 = vmatprep.subr.bf16.mxu0 0
      %1236 = vmatpush1.bf16.msra.mxu0 0
      %1237 = vmatprep.subr.bf16.mxu0 0
      %1238 = vmatpush1.bf16.msra.mxu0 0
      %1239 = vmatprep.subr.bf16.mxu0 0
      %1240 = vmatpush1.bf16.msra.mxu0 0
      %1241 = vmatprep.subr.bf16.mxu0 0
      %1242 = vmatpush1.bf16.msra.mxu0 0
      %1243 = vmatprep.subr.bf16.mxu0 0
      %1244 = vmatpush1.bf16.msra.mxu0 0
      %1245 = vmatprep.subr.bf16.mxu0 0
      %1246 = vmatpush1.bf16.msra.mxu0 0
      %1247 = vmatprep.mubr.bf16.mxu0 0
      %1248 = vmatmul.mubr.bf16.gmra.mrb[0].mxu0 %v1210
      %v1249 = vpop.f32.mrb[0].mxu0
      %v1250 = vadd.f32 0.0, %v1249
      %v1251 = vpop.f32.mrb[0].mxu0
      %v1252 = vpop.f32.mrb[0].mxu0
      %v1253 = vadd.f32 0.0, %v1252
      %v1254 = vpop.f32.mrb[0].mxu0
      %1255 = vmatprep.mubr.bf16.mxu0 0
      %1256 = vmatmul.mubr.bf16.gmra.mrb[0].mxu0 %v1213
      %v1257 = vpop.f32.mrb[0].mxu0
      %v1258 = vadd.f32 0.0, %v1257
      %v1259 = vpop.f32.mrb[0].mxu0
      %v1260 = vpop.f32.mrb[0].mxu0
      %v1261 = vpop.f32.mrb[0].mxu0
      %1262 = vdwg.mxu0
      %v1263 = vadd.f32 %v1159, %v1250
      %v1264 = vadd.f32 %v1160, %v1253
      %v1265 = vadd.f32 %v1161, %v1258
      %v1266 = vld [vmem:[%s192 + $0x8] sm:$0xe]
      %v1267 = vld [vmem:[%s192 + $0x10] sm:$0x3]
      %v1268 = vld [vmem:[%s1 + $0xc0] sm:$0xf]
      %v1269 = vld [vmem:[%s1 + $0xc4] sm:$0xf]
      %v1270 = vld [vmem:[%s1 + $0xc8] sm:$0xf]
      %v1271 = vld [vmem:[%s1 + $0xcc] sm:$0xf]
      %v1274 = vunpack.c.l.b16 %v1266
      %v1275 = vunpack.c.l.b16 %v1267
      %v1276 = vpack.c.b16 %v1176, %v1274
      %v1277 = vpack.c.b16 %v1275, %v1275
      %v1278 = vrot.slane %v1276, 1
      %v1279 = vrot.slane %v1277, 1
      %v1280 = vsel %vm378, %v1278, %v1279
      %v1285 = vunpack.c.l.b16 %v1268
      %v1286 = vunpack.c.l.b16 %v1269
      %v1287 = vunpack.c.l.b16 %v1270
      %v1288 = vunpack.c.l.b16 %v1271
      %v1289 = vpack.c.b16 %v1286, %v1285
      %v1290 = vpack.c.b16 %v1288, %v1287
      %v1294 = vsel %vm247, %v1280, 0
      %v1297 = vsel %vm247, %v1279, 0
      %1299 = vmatprep.subr.bf16.mxu0 0
      %1300 = vmatpush1.bf16.msra.mxu0 %v1289
      %1301 = vmatprep.subr.bf16.mxu0 0
      %1302 = vmatpush1.bf16.msra.mxu0 %v1290
      %1303 = vmatprep.subr.bf16.mxu0 0
      %1304 = vmatpush1.bf16.msra.mxu0 0
      %1305 = vmatprep.subr.bf16.mxu0 0
      %1306 = vmatpush1.bf16.msra.mxu0 0
      %1307 = vmatprep.subr.bf16.mxu0 0
      %1308 = vmatpush1.bf16.msra.mxu0 0
      %1309 = vmatprep.subr.bf16.mxu0 0
      %1310 = vmatpush1.bf16.msra.mxu0 0
      %1311 = vmatprep.subr.bf16.mxu0 0
      %1312 = vmatpush1.bf16.msra.mxu0 0
      %1313 = vmatprep.subr.bf16.mxu0 0
      %1314 = vmatpush1.bf16.msra.mxu0 0
      %1315 = vmatprep.subr.bf16.mxu0 0
      %1316 = vmatpush1.bf16.msra.mxu0 0
      %1317 = vmatprep.subr.bf16.mxu0 0
      %1318 = vmatpush1.bf16.msra.mxu0 0
      %1319 = vmatprep.subr.bf16.mxu0 0
      %1320 = vmatpush1.bf16.msra.mxu0 0
      %1321 = vmatprep.subr.bf16.mxu0 0
      %1322 = vmatpush1.bf16.msra.mxu0 0
      %1323 = vmatprep.subr.bf16.mxu0 0
      %1324 = vmatpush1.bf16.msra.mxu0 0
      %1325 = vmatprep.subr.bf16.mxu0 0
      %1326 = vmatpush1.bf16.msra.mxu0 0
      %1327 = vmatprep.subr.bf16.mxu0 0
      %1328 = vmatpush1.bf16.msra.mxu0 0
      %1329 = vmatprep.subr.bf16.mxu0 0
      %1330 = vmatpush1.bf16.msra.mxu0 0
      %1331 = vmatprep.mubr.bf16.mxu0 0
      %1332 = vmatmul.mubr.bf16.gmra.mrb[0].mxu0 %v1294
      %v1333 = vpop.f32.mrb[0].mxu0
      %v1334 = vadd.f32 0.0, %v1333
      %v1335 = vpop.f32.mrb[0].mxu0
      %v1336 = vpop.f32.mrb[0].mxu0
      %v1337 = vadd.f32 0.0, %v1336
      %v1338 = vpop.f32.mrb[0].mxu0
      %1339 = vmatprep.mubr.bf16.mxu0 0
      %1340 = vmatmul.mubr.bf16.gmra.mrb[0].mxu0 %v1297
      %v1341 = vpop.f32.mrb[0].mxu0
      %v1342 = vadd.f32 0.0, %v1341
      %v1343 = vpop.f32.mrb[0].mxu0
      %v1344 = vpop.f32.mrb[0].mxu0
      %v1345 = vpop.f32.mrb[0].mxu0
      %1346 = vdwg.mxu0
      %v1347 = vadd.f32 %v1263, %v1334
      %v1348 = vadd.f32 %v1264, %v1337
      %v1349 = vadd.f32 %v1265, %v1342
      %v1350 = vld [vmem:[%s192 + $0x10] sm:$0x7]
      %v1351 = vld [vmem:[%s1 + $0xd0] sm:$0xf]
      %v1352 = vld [vmem:[%s1 + $0xd4] sm:$0xf]
      %v1353 = vld [vmem:[%s1 + $0xd8] sm:$0xf]
      %v1354 = vld [vmem:[%s1 + $0xdc] sm:$0xf]
      %v1356 = vunpack.c.l.b16 %v1350
      %v1357 = vpack.c.b16 %v1356, %v1356
      %v1359 = vshrl.u32 %v1276, 16
      %v1361 = vrot.slane %v1359, 1
      %v1362 = vshll.u32 %v1276, 16
      %v1364 = vrot.slane %v1362, 2
      %v1365 = vor.u32 %v1361, %v1364
      %v1367 = vshrl.u32 %v1357, 16
      %v1369 = vrot.slane %v1367, 1
      %v1370 = vshll.u32 %v1357, 16
      %v1372 = vrot.slane %v1370, 2
      %v1373 = vor.u32 %v1369, %v1372
      %v1374 = vsel %vm459, %v1365, %v1373
      %v1379 = vunpack.c.l.b16 %v1351
      %v1380 = vunpack.c.l.b16 %v1352
      %v1381 = vunpack.c.l.b16 %v1353
      %v1382 = vunpack.c.l.b16 %v1354
      %v1383 = vpack.c.b16 %v1380, %v1379
      %v1384 = vpack.c.b16 %v1382, %v1381
      %v1388 = vsel %vm247, %v1374, 0
      %v1391 = vsel %vm247, %v1373, 0
      %1393 = vmatprep.subr.bf16.mxu0 0
      %1394 = vmatpush1.bf16.msra.mxu0 %v1383
      %1395 = vmatprep.subr.bf16.mxu0 0
      %1396 = vmatpush1.bf16.msra.mxu0 %v1384
      %1397 = vmatprep.subr.bf16.mxu0 0
      %1398 = vmatpush1.bf16.msra.mxu0 0
      %1399 = vmatprep.subr.bf16.mxu0 0
      %1400 = vmatpush1.bf16.msra.mxu0 0
      %1401 = vmatprep.subr.bf16.mxu0 0
      %1402 = vmatpush1.bf16.msra.mxu0 0
      %1403 = vmatprep.subr.bf16.mxu0 0
      %1404 = vmatpush1.bf16.msra.mxu0 0
      %1405 = vmatprep.subr.bf16.mxu0 0
      %1406 = vmatpush1.bf16.msra.mxu0 0
      %1407 = vmatprep.subr.bf16.mxu0 0
      %1408 = vmatpush1.bf16.msra.mxu0 0
      %1409 = vmatprep.subr.bf16.mxu0 0
      %1410 = vmatpush1.bf16.msra.mxu0 0
      %1411 = vmatprep.subr.bf16.mxu0 0
      %1412 = vmatpush1.bf16.msra.mxu0 0
      %1413 = vmatprep.subr.bf16.mxu0 0
      %1414 = vmatpush1.bf16.msra.mxu0 0
      %1415 = vmatprep.subr.bf16.mxu0 0
      %1416 = vmatpush1.bf16.msra.mxu0 0
      %1417 = vmatprep.subr.bf16.mxu0 0
      %1418 = vmatpush1.bf16.msra.mxu0 0
      %1419 = vmatprep.subr.bf16.mxu0 0
      %1420 = vmatpush1.bf16.msra.mxu0 0
      %1421 = vmatprep.subr.bf16.mxu0 0
      %1422 = vmatpush1.bf16.msra.mxu0 0
      %1423 = vmatprep.subr.bf16.mxu0 0
      %1424 = vmatpush1.bf16.msra.mxu0 0
      %1425 = vmatprep.mubr.bf16.mxu0 0
      %1426 = vmatmul.mubr.bf16.gmra.mrb[0].mxu0 %v1388
      %v1427 = vpop.f32.mrb[0].mxu0
      %v1428 = vadd.f32 0.0, %v1427
      %v1429 = vpop.f32.mrb[0].mxu0
      %v1430 = vpop.f32.mrb[0].mxu0
      %v1431 = vadd.f32 0.0, %v1430
      %v1432 = vpop.f32.mrb[0].mxu0
      %1433 = vmatprep.mubr.bf16.mxu0 0
      %1434 = vmatmul.mubr.bf16.gmra.mrb[0].mxu0 %v1391
      %v1435 = vpop.f32.mrb[0].mxu0
      %v1436 = vadd.f32 0.0, %v1435
      %v1437 = vpop.f32.mrb[0].mxu0
      %v1438 = vpop.f32.mrb[0].mxu0
      %v1439 = vpop.f32.mrb[0].mxu0
      %1440 = vdwg.mxu0
      %v1441 = vadd.f32 %v1347, %v1428
      %v1442 = vadd.f32 %v1348, %v1431
      %v1443 = vadd.f32 %v1349, %v1436
      %v1444 = vld [vmem:[%s192 + $0x8] sm:$0xc]
      %v1445 = vld [vmem:[%s1 + $0xe0] sm:$0xf]
      %v1446 = vld [vmem:[%s1 + $0xe4] sm:$0xf]
      %v1447 = vld [vmem:[%s1 + $0xe8] sm:$0xf]
      %v1448 = vld [vmem:[%s1 + $0xec] sm:$0xf]
      %v1450 = vunpack.c.l.b16 %v1444
      %v1451 = vpack.c.b16 %v1176, %v1450
      %v1452 = vrot.slane %v1451, 2
      %v1453 = vrot.slane %v1357, 2
      %v1454 = vsel %vm914, %v1452, %v1453
      %v1459 = vunpack.c.l.b16 %v1445
      %v1460 = vunpack.c.l.b16 %v1446
      %v1461 = vunpack.c.l.b16 %v1447
      %v1462 = vunpack.c.l.b16 %v1448
      %v1463 = vpack.c.b16 %v1460, %v1459
      %v1464 = vpack.c.b16 %v1462, %v1461
      %v1468 = vsel %vm247, %v1454, 0
      %v1471 = vsel %vm247, %v1453, 0
      %1473 = vmatprep.subr.bf16.mxu0 0
      %1474 = vmatpush1.bf16.msra.mxu0 %v1463
      %1475 = vmatprep.subr.bf16.mxu0 0
      %1476 = vmatpush1.bf16.msra.mxu0 %v1464
      %1477 = vmatprep.subr.bf16.mxu0 0
      %1478 = vmatpush1.bf16.msra.mxu0 0
      %1479 = vmatprep.subr.bf16.mxu0 0
      %1480 = vmatpush1.bf16.msra.mxu0 0
      %1481 = vmatprep.subr.bf16.mxu0 0
      %1482 = vmatpush1.bf16.msra.mxu0 0
      %1483 = vmatprep.subr.bf16.mxu0 0
      %1484 = vmatpush1.bf16.msra.mxu0 0
      %1485 = vmatprep.subr.bf16.mxu0 0
      %1486 = vmatpush1.bf16.msra.mxu0 0
      %1487 = vmatprep.subr.bf16.mxu0 0
      %1488 = vmatpush1.bf16.msra.mxu0 0
      %1489 = vmatprep.subr.bf16.mxu0 0
      %1490 = vmatpush1.bf16.msra.mxu0 0
      %1491 = vmatprep.subr.bf16.mxu0 0
      %1492 = vmatpush1.bf16.msra.mxu0 0
      %1493 = vmatprep.subr.bf16.mxu0 0
      %1494 = vmatpush1.bf16.msra.mxu0 0
      %1495 = vmatprep.subr.bf16.mxu0 0
      %1496 = vmatpush1.bf16.msra.mxu0 0
      %1497 = vmatprep.subr.bf16.mxu0 0
      %1498 = vmatpush1.bf16.msra.mxu0 0
      %1499 = vmatprep.subr.bf16.mxu0 0
      %1500 = vmatpush1.bf16.msra.mxu0 0
      %1501 = vmatprep.subr.bf16.mxu0 0
      %1502 = vmatpush1.bf16.msra.mxu0 0
      %1503 = vmatprep.subr.bf16.mxu0 0
      %1504 = vmatpush1.bf16.msra.mxu0 0
      %1505 = vmatprep.mubr.bf16.mxu0 0
      %1506 = vmatmul.mubr.bf16.gmra.mrb[0].mxu0 %v1468
      %v1507 = vpop.f32.mrb[0].mxu0
      %v1508 = vadd.f32 0.0, %v1507
      %v1509 = vpop.f32.mrb[0].mxu0
      %v1510 = vpop.f32.mrb[0].mxu0
      %v1511 = vadd.f32 0.0, %v1510
      %v1512 = vpop.f32.mrb[0].mxu0
      %1513 = vmatprep.mubr.bf16.mxu0 0
      %1514 = vmatmul.mubr.bf16.gmra.mrb[0].mxu0 %v1471
      %v1515 = vpop.f32.mrb[0].mxu0
      %v1516 = vadd.f32 0.0, %v1515
      %v1517 = vpop.f32.mrb[0].mxu0
      %v1518 = vpop.f32.mrb[0].mxu0
      %v1519 = vpop.f32.mrb[0].mxu0
      %1520 = vdwg.mxu0
      %v1521 = vadd.f32 %v1441, %v1508
      %v1522 = vadd.f32 %v1442, %v1511
      %v1523 = vadd.f32 %v1443, %v1516
      %v1524 = vld [vmem:[%s192 + $0x10] sm:$0xf]
      %v1525 = vld [vmem:[%s1 + $0xf0] sm:$0xf]
      %v1526 = vld [vmem:[%s1 + $0xf4] sm:$0xf]
      %v1527 = vld [vmem:[%s1 + $0xf8] sm:$0xf]
      %v1528 = vld [vmem:[%s1 + $0xfc] sm:$0xf]
      %v1530 = vunpack.c.l.b16 %v1524
      %v1531 = vpack.c.b16 %v1530, %v1530
      %v1533 = vshrl.u32 %v1451, 16
      %v1535 = vrot.slane %v1533, 2
      %v1536 = vshll.u32 %v1451, 16
      %v1538 = vrot.slane %v1536, 3
      %v1539 = vor.u32 %v1535, %v1538
      %v1541 = vshrl.u32 %v1531, 16
      %v1543 = vrot.slane %v1541, 2
      %v1544 = vshll.u32 %v1531, 16
      %v1546 = vrot.slane %v1544, 3
      %v1547 = vor.u32 %v1543, %v1546
      %v1548 = vsel %vm995, %v1539, %v1547
      %v1553 = vunpack.c.l.b16 %v1525
      %v1554 = vunpack.c.l.b16 %v1526
      %v1555 = vunpack.c.l.b16 %v1527
      %v1556 = vunpack.c.l.b16 %v1528
      %v1557 = vpack.c.b16 %v1554, %v1553
      %v1558 = vpack.c.b16 %v1556, %v1555
      %v1562 = vsel %vm247, %v1548, 0
      %v1565 = vsel %vm247, %v1547, 0
      %1567 = vmatprep.subr.bf16.mxu0 0
      %1568 = vmatpush1.bf16.msra.mxu0 %v1557
      %1569 = vmatprep.subr.bf16.mxu0 0
      %1570 = vmatpush1.bf16.msra.mxu0 %v1558
      %1571 = vmatprep.subr.bf16.mxu0 0
      %1572 = vmatpush1.bf16.msra.mxu0 0
      %1573 = vmatprep.subr.bf16.mxu0 0
      %1574 = vmatpush1.bf16.msra.mxu0 0
      %1575 = vmatprep.subr.bf16.mxu0 0
      %1576 = vmatpush1.bf16.msra.mxu0 0
      %1577 = vmatprep.subr.bf16.mxu0 0
      %1578 = vmatpush1.bf16.msra.mxu0 0
      %1579 = vmatprep.subr.bf16.mxu0 0
      %1580 = vmatpush1.bf16.msra.mxu0 0
      %1581 = vmatprep.subr.bf16.mxu0 0
      %1582 = vmatpush1.bf16.msra.mxu0 0
      %1583 = vmatprep.subr.bf16.mxu0 0
      %1584 = vmatpush1.bf16.msra.mxu0 0
      %1585 = vmatprep.subr.bf16.mxu0 0
      %1586 = vmatpush1.bf16.msra.mxu0 0
      %1587 = vmatprep.subr.bf16.mxu0 0
      %1588 = vmatpush1.bf16.msra.mxu0 0
      %1589 = vmatprep.subr.bf16.mxu0 0
      %1590 = vmatpush1.bf16.msra.mxu0 0
      %1591 = vmatprep.subr.bf16.mxu0 0
      %1592 = vmatpush1.bf16.msra.mxu0 0
      %1593 = vmatprep.subr.bf16.mxu0 0
      %1594 = vmatpush1.bf16.msra.mxu0 0
      %1595 = vmatprep.subr.bf16.mxu0 0
      %1596 = vmatpush1.bf16.msra.mxu0 0
      %1597 = vmatprep.subr.bf16.mxu0 0
      %1598 = vmatpush1.bf16.msra.mxu0 0
      %1599 = vmatprep.mubr.bf16.mxu0 0
      %1600 = vmatmul.mubr.bf16.gmra.mrb[0].mxu0 %v1562
      %v1601 = vpop.f32.mrb[0].mxu0
      %v1602 = vadd.f32 0.0, %v1601
      %v1603 = vpop.f32.mrb[0].mxu0
      %v1604 = vpop.f32.mrb[0].mxu0
      %v1605 = vadd.f32 0.0, %v1604
      %v1606 = vpop.f32.mrb[0].mxu0
      %1607 = vmatprep.mubr.bf16.mxu0 0
      %1608 = vmatmul.mubr.bf16.gmra.mrb[0].mxu0 %v1565
      %v1609 = vpop.f32.mrb[0].mxu0
      %v1610 = vadd.f32 0.0, %v1609
      %v1611 = vpop.f32.mrb[0].mxu0
      %v1612 = vpop.f32.mrb[0].mxu0
      %v1613 = vpop.f32.mrb[0].mxu0
      %1614 = vdwg.mxu0
      %v1615 = vadd.f32 %v1521, %v1602
      %v1616 = vadd.f32 %v1522, %v1605
      %v1617 = vadd.f32 %v1523, %v1610
      %v1618 = vld [vmem:[%s3] sm:$0xff]
      %v1619 = vld [vmem:[%s3 + $0x8] sm:$0xff]
      %v1620 = vld [vmem:[%s3 + $0x10] sm:$0x3]
      %1622 = vset.pattern.permute.xlu0 0
      %1623 = vperm.xlu0 %1622, %v1618
      %v1624 = vpop.permute.xlu0 %1623
      %1627 = vset.pattern.permute.xlu0 0
      %1628 = vperm.xlu0 %1627, %v1619
      %v1629 = vpop.permute.xlu0 %1628
      %1632 = vset.pattern.permute.xlu0 0
      %1633 = vperm.xlu0 %1632, %v1620
      %v1634 = vpop.permute.xlu0 %1633
      %v1636 = vmul.f32 %v1615, %v1624
      %v1637 = vmul.f32 %v1616, %v1629
      %v1638 = vmul.f32 %v1617, %v1634
      %vm1639 = vcmask 523264
      %v1640 = vsel %vm1639, %v1636, 0.0
      %v1641 = vsel %vm1639, %v1637, 0.0
      %v1642 = vadd.f32 %v1640, %v1641
      %vm1643 = vcmask 517120
      %v1644 = vsel %vm1643, %v1638, 0.0
      %v1645 = vadd.f32 %v1642, %v1644
      %v1646 = vrot.slane %v1645, 4
      %v1647 = vadd.f32 %v1645, %v1646
      %v1648 = vrot.slane %v1647, 2
      %v1649 = vadd.f32 %v1647, %v1648
      %v1650 = vrot.slane %v1649, 1
      %v1651 = vadd.f32 %v1649, %v1650
      %v1652 = vmul.f32 %v1615, %v1615
      %v1653 = vmul.f32 %v1616, %v1616
      %v1654 = vmul.f32 %v1617, %v1617
      %v1655 = vmul.f32 %v1652, %v1624
      %v1656 = vmul.f32 %v1653, %v1629
      %v1657 = vmul.f32 %v1654, %v1634
      %v1658 = vsel %vm1639, %v1655, 0.0
      %v1659 = vsel %vm1639, %v1656, 0.0
      %v1660 = vadd.f32 %v1658, %v1659
      %v1661 = vsel %vm1643, %v1657, 0.0
      %v1662 = vadd.f32 %v1660, %v1661
      %v1663 = vrot.slane %v1662, 4
      %v1664 = vadd.f32 %v1662, %v1663
      %v1665 = vrot.slane %v1664, 2
      %v1666 = vadd.f32 %v1664, %v1665
      %v1667 = vrot.slane %v1666, 1
      %v1668 = vadd.f32 %v1666, %v1667
      %v1669 = vmul.f32 %v1651, 0.11111111
      %v1670 = vmul.f32 %v1668, 0.11111111
      %v1671 = vmul.f32 %v1669, %v1669
      %v1672 = vsub.f32 %v1670, %v1671
      %v1673 = vmax.f32 %v1672, 0.0
      %v1674 = vsub.f32 %v1615, %v1669
      %v1675 = vsub.f32 %v1616, %v1669
      %v1676 = vsub.f32 %v1617, %v1669
      %v1677 = vadd.f32 %v1673, 1e-05
      %v1678 = vrsqrt.pop %v1677
      %v1679 = vmul.f32 %v1674, %v1678
      %v1680 = vmul.f32 %v1675, %v1678
      %v1681 = vmul.f32 %v1676, %v1678
      %vm1682 = vcmp.ge.f32.partialorder %v1679, 0.0
      %vm1683 = vcmp.ge.f32.partialorder %v1680, 0.0
      %vm1684 = vcmp.ge.f32.partialorder %v1681, 0.0
      %v1685 = vmul.f32 %v1679, 0.2
      %v1686 = vmul.f32 %v1680, 0.2
      %v1687 = vmul.f32 %v1681, 0.2
      %v1688 = vsel %vm1682, %v1679, %v1685
      %v1689 = vsel %vm1683, %v1680, %v1686
      %v1690 = vsel %vm1684, %v1681, %v1687
      %v1691 = vpack.c.bf16 %v1689, %v1688
      %v1692 = vpack.c.bf16 %v1690, %v1690
      %v1695 = vunpack.c.l.b16 %v1691
      %v1696 = vunpack.c.h.b16 %v1691
      %v1697 = vunpack.c.l.b16 %v1692
      %v1698 = vpack.c.b16 %v1695, %v1695
      %v1699 = vpack.c.b16 %v1696, %v1696
      %v1700 = vpack.c.b16 %v1697, %v1697
      %vm1704 = vcmask 519168
      %1705 = vst.msk [vmem:[%s197] sm:$0xf] %vm1704, %v1698
      %1706 = vst.msk [vmem:[%s197 + $0x4] sm:$0xf] %vm1704, %v1699
      %vm1707 = vcmask 516096
      %1708 = vst.msk [vmem:[%s197 + $0x8] sm:$0x1] %vm1707, %v1700
      %p1709 = scmp.lt.s32.totalorder %s15, 1
      %s1710 = scalar_select %p1709, %s15, 1
      %s1711 = smul.addr %s1710, 3
      %s1712 = smul.addr %s1711, 4
      %s1713 = scalar_lea.vmem %s4, %s1712
      // Predicated region
      $region37: #{cycle_discriminator.8} parent=35 // pred_check
        %p1714 = pneg %p122
      $region38: #{cycle_discriminator.8} parent=35 // pred_check_branch
        %1716 = sbr.rel (%p1714) target = $region40
      $region39: #{cycle_discriminator.8} parent=35 // pred_region
        _
      $region40: #{cycle_discriminator.8} parent=35 // pred_fallthru
        _
    $region36: #{cycle_discriminator.8} parent=5 // pred_fallthru
      _
    %p1717 = scmp.le.s32.totalorder 2, %s10
    // Predicated region
    $region41: #{cycle_discriminator.8} parent=5 // pred_check
      %p1718 = pneg %p1717
    $region42: #{cycle_discriminator.8} parent=5 // pred_check_branch
      %1720 = sbr.rel (%p1718) target = $region44
    $region43: #{cycle_discriminator.8} parent=5 // pred_region
      %s1721 = ssub.s32 %s10, 2
      // Predicated region
      $region45: #{cycle_discriminator.8} parent=43 // pred_check
        %p1722 = pneg %p128
      $region46: #{cycle_discriminator.8} parent=43 // pred_check_branch
        %1724 = sbr.rel (%p1722) target = $region48
      $region47: #{cycle_discriminator.8} parent=43 // pred_region
        %p1725 = scmp.lt.s32.totalorder %s16, 1
        %s1726 = scalar_select %p1725, %s16, 1
        %s1727 = smul.addr %s1726, 3
        %s1728 = smul.addr %s1727, 4
        %s1729 = scalar_lea.vmem %s4, %s1728
      $region48: #{cycle_discriminator.8} parent=43 // pred_fallthru
        _
    $region44: #{cycle_discriminator.8} parent=5 // pred_fallthru
      _
  $region6: #{cycle_discriminator.8} parent=0 // loop_footer
    %s14 = sadd.s32 1, %s10
  $region7: #{cycle_discriminator.8} parent=0 // loop_footer_branch
    %9 = sbr.rel target = $region3
  $region8: #{cycle_discriminator.8} parent=0 // loop_exit
    _

// kernel: cycle_discriminator.9
$region0: #{cycle_discriminator.9}
  #allocation0 [shape = 'u32[]', space=smem, size = 0x4, offset = 0x4, fixed_abs, tag = 'smem constant byte address 0x4 - core index']
  #allocation1 [shape = 'u32[144,128]{1,0:T(1,128)}', space=vmem, size = 0x12000, scoped, tag = 'internal scratch']
  #allocation2 [shape = 'f32[1,1]{1,0:T(1,128)S(1)}', space=vmem, size = 0x200, scoped, tag = 'scoped memory for cycle_discriminator.9']
  %s0 = inlined_call_operand.vmem [shape: bf16[2,28,64], index: 0, kind: input, shape index: {}]
  %s1 = inlined_call_operand.vmem [shape: bf16[1024,1], index: 1, kind: input, shape index: {}]
  %s2 = inlined_call_operand.<no memory space> [shape: f32[1,1], index: 2, kind: input, shape index: {}]
  %s3 = inlined_call_operand.vmem [shape: f32[10,1], index: 3, kind: input, shape index: {}]
  %s4 = inlined_call_operand.vmem [shape: f32[2,10,1], index: 4, kind: output, shape index: {}]
  %s5 = sld [smem:[#allocation0]]
  $region49: #{cycle_discriminator.9} parent=0
    _
  %s7 = ssub.s32 1, %s5
  %s8 = scalar_select 0, %s7, %s5
  %v9 = vstv %s2
  %10 = vst [vmem:[#allocation2] sm:$0x1] %v9
  loop: start=0, step=1, limit=4
  $region2: #{cycle_discriminator.9} parent=0 // loop_pre_header
    _
  $region3: #{cycle_discriminator.9} parent=0 // loop_header
    %s12 = sphi 0, %s16
    %p13 = scmp.ge.s32.totalorder %s12, 4
    %s22 = sphi 0, %s24
    %s25 = sphi 0, %s22
    %s26 = sphi 0, %s25
    %s42 = sphi 0, %s26
    %s46 = sphi 0, %s46
    %s48 = sphi 0, %s46
    %s49 = sphi 0, %s48
    %s63 = sphi 0, %s49
    %s67 = sphi 0, %s67
    %s69 = sphi 0, %s67
    %s70 = sphi 0, %s69
    %s84 = sphi 0, %s70
    %s88 = sphi 0, %s88
    %s90 = sphi 0, %s88
    %s91 = sphi 0, %s90
    %s105 = sphi 0, %s91
    %s111 = sphi 0, %s113
    %s114 = sphi 0, %s111
    %s115 = sphi 0, %s114
    %s131 = sphi 0, %s115
  $region4: #{cycle_discriminator.9} parent=0 // loop_header_branch
    %15 = sbr.rel (%p13) target = $region8
  $region5: #{cycle_discriminator.9} parent=0 // loop_body
    %s17 = ssub.s32 %s12, 1
    %s18 = ssub.s32 %s12, 2
    %s19 = sadd.s32 %s12, 1
    %s20 = ssub.s32 %s12, %s19
    %p21 = scmp.eq.s32.totalorder %s20, 0
    %s23 = sadd.s32 %s22, 1
    %s24 = scalar_select %p21, %s22, %s23
    %p27 = pneg %p21
    %p28 = scmp.eq.s32.totalorder %s12, 1
    %p29 = por %p27, %p28
    %p30 = scmp.ne.s32.totalorder %s22, %s25
    %p31 = scmp.eq.s32.totalorder %s12, 0
    %p32 = por %p30, %p31
    %p33 = scmp.ne.s32.totalorder %s22, %s25
    %p34 = scmp.eq.s32.totalorder %s17, 1
    %p35 = por %p33, %p34
    %p36 = scmp.ne.s32.totalorder %s25, %s26
    %p37 = scmp.eq.s32.totalorder %s17, 0
    %p38 = por %p36, %p37
    %p39 = scmp.ne.s32.totalorder %s25, %s26
    %p40 = scmp.eq.s32.totalorder %s18, 1
    %p41 = por %p39, %p40
    %p43 = scmp.ne.s32.totalorder %s26, %s42
    %p44 = scmp.eq.s32.totalorder %s18, 0
    %p45 = por %p43, %p44
    %s47 = sadd.s32 %s46, 1
    %p50 = scmp.eq.s32.totalorder %s12, 1
    %p51 = scmp.ne.s32.totalorder %s46, %s48
    %p52 = scmp.eq.s32.totalorder %s12, 0
    %p53 = por %p51, %p52
    %p54 = scmp.ne.s32.totalorder %s46, %s48
    %p55 = scmp.eq.s32.totalorder %s17, 1
    %p56 = por %p54, %p55
    %p57 = scmp.ne.s32.totalorder %s48, %s49
    %p58 = scmp.eq.s32.totalorder %s17, 0
    %p59 = por %p57, %p58
    %p60 = scmp.ne.s32.totalorder %s48, %s49
    %p61 = scmp.eq.s32.totalorder %s18, 1
    %p62 = por %p60, %p61
    %p64 = scmp.ne.s32.totalorder %s49, %s63
    %p65 = scmp.eq.s32.totalorder %s18, 0
    %p66 = por %p64, %p65
    %s68 = sadd.s32 %s67, 1
    %p71 = scmp.eq.s32.totalorder %s12, 1
    %p72 = scmp.ne.s32.totalorder %s67, %s69
    %p73 = scmp.eq.s32.totalorder %s12, 0
    %p74 = por %p72, %p73
    %p75 = scmp.ne.s32.totalorder %s67, %s69
    %p76 = scmp.eq.s32.totalorder %s17, 1
    %p77 = por %p75, %p76
    %p78 = scmp.ne.s32.totalorder %s69, %s70
    %p79 = scmp.eq.s32.totalorder %s17, 0
    %p80 = por %p78, %p79
    %p81 = scmp.ne.s32.totalorder %s69, %s70
    %p82 = scmp.eq.s32.totalorder %s18, 1
    %p83 = por %p81, %p82
    %p85 = scmp.ne.s32.totalorder %s70, %s84
    %p86 = scmp.eq.s32.totalorder %s18, 0
    %p87 = por %p85, %p86
    %s89 = sadd.s32 %s88, 1
    %p92 = scmp.eq.s32.totalorder %s12, 1
    %p93 = scmp.ne.s32.totalorder %s88, %s90
    %p94 = scmp.eq.s32.totalorder %s12, 0
    %p95 = por %p93, %p94
    %p96 = scmp.ne.s32.totalorder %s88, %s90
    %p97 = scmp.eq.s32.totalorder %s17, 1
    %p98 = por %p96, %p97
    %p99 = scmp.ne.s32.totalorder %s90, %s91
    %p100 = scmp.eq.s32.totalorder %s17, 0
    %p101 = por %p99, %p100
    %p102 = scmp.ne.s32.totalorder %s90, %s91
    %p103 = scmp.eq.s32.totalorder %s18, 1
    %p104 = por %p102, %p103
    %p106 = scmp.ne.s32.totalorder %s91, %s105
    %p107 = scmp.eq.s32.totalorder %s18, 0
    %p108 = por %p106, %p107
    %s109 = ssub.s32 %s12, %s19
    %p110 = scmp.eq.s32.totalorder %s109, 0
    %s112 = sadd.s32 %s111, 1
    %s113 = scalar_select %p110, %s111, %s112
    %p116 = pneg %p110
    %p117 = scmp.eq.s32.totalorder %s12, 1
    %p118 = por %p116, %p117
    %p119 = scmp.ne.s32.totalorder %s111, %s114
    %p120 = scmp.eq.s32.totalorder %s12, 0
    %p121 = por %p119, %p120
    %p122 = scmp.ne.s32.totalorder %s111, %s114
    %p123 = scmp.eq.s32.totalorder %s17, 1
    %p124 = por %p122, %p123
    %p125 = scmp.ne.s32.totalorder %s114, %s115
    %p126 = scmp.eq.s32.totalorder %s17, 0
    %p127 = por %p125, %p126
    %p128 = scmp.ne.s32.totalorder %s114, %s115
    %p129 = scmp.eq.s32.totalorder %s18, 1
    %p130 = por %p128, %p129
    %p132 = scmp.ne.s32.totalorder %s115, %s131
    %p133 = scmp.eq.s32.totalorder %s18, 0
    %p134 = por %p132, %p133
    %p135 = scmp.le.s32.totalorder 1, %s12
    %p136 = scmp.lt.s32.totalorder %s12, 3
    %p137 = pnand %p135, %p136
    %p138 = pneg %p137
    // Predicated region
    $region9: #{cycle_discriminator.9} parent=5 // pred_check
      _
    $region10: #{cycle_discriminator.9} parent=5 // pred_check_branch
      %140 = sbr.rel (%p137) target = $region12
    $region11: #{cycle_discriminator.9} parent=5 // pred_region
      %s141 = ssub.s32 %s12, 1
      // Predicated region
      $region13: #{cycle_discriminator.9} parent=11 // pred_check
        %p142 = pneg %p59
      $region14: #{cycle_discriminator.9} parent=11 // pred_check_branch
        %144 = sbr.rel (%p142) target = $region16
      $region15: #{cycle_discriminator.9} parent=11 // pred_region
        _
      $region16: #{cycle_discriminator.9} parent=11 // pred_fallthru
        _
      // Predicated region
      $region17: #{cycle_discriminator.9} parent=11 // pred_check
        %p145 = pneg %p80
      $region18: #{cycle_discriminator.9} parent=11 // pred_check_branch
        %147 = sbr.rel (%p145) target = $region20
      $region19: #{cycle_discriminator.9} parent=11 // pred_region
        _
      $region20: #{cycle_discriminator.9} parent=11 // pred_fallthru
        _
      // Predicated region
      $region21: #{cycle_discriminator.9} parent=11 // pred_check
        %p148 = pneg %p101
      $region22: #{cycle_discriminator.9} parent=11 // pred_check_branch
        %150 = sbr.rel (%p148) target = $region24
      $region23: #{cycle_discriminator.9} parent=11 // pred_region
        _
      $region24: #{cycle_discriminator.9} parent=11 // pred_fallthru
        _
    $region12: #{cycle_discriminator.9} parent=5 // pred_fallthru
      _
    %p151 = scmp.lt.s32.totalorder %s12, 2
    // Predicated region
    $region25: #{cycle_discriminator.9} parent=5 // pred_check
      %p152 = pneg %p151
    $region26: #{cycle_discriminator.9} parent=5 // pred_check_branch
      %154 = sbr.rel (%p152) target = $region28
    $region27: #{cycle_discriminator.9} parent=5 // pred_region
      // Predicated region
      $region29: #{cycle_discriminator.9} parent=27 // pred_check
        %p155 = pneg %p32
      $region30: #{cycle_discriminator.9} parent=27 // pred_check_branch
        %157 = sbr.rel (%p155) target = $region32
      $region31: #{cycle_discriminator.9} parent=27 // pred_region
        %p158 = scmp.lt.s32.totalorder %s12, 1
        %s159 = scalar_select %p158, %s12, 1
        %s160 = smul.addr %s159, 4
        %s161 = smul.addr %s160, 4
        %s162 = scalar_lea.vmem %s0, %s161
      $region32: #{cycle_discriminator.9} parent=27 // pred_fallthru
        _
    $region28: #{cycle_discriminator.9} parent=5 // pred_fallthru
      _
    %p163 = scmp.le.s32.totalorder 1, %s12
    %p164 = scmp.lt.s32.totalorder %s12, 3
    %p165 = pnand %p163, %p164
    %p166 = pneg %p165
    // Predicated region
    $region33: #{cycle_discriminator.9} parent=5 // pred_check
      _
    $region34: #{cycle_discriminator.9} parent=5 // pred_check_branch
      %168 = sbr.rel (%p165) target = $region36
    $region35: #{cycle_discriminator.9} parent=5 // pred_region
      %s169 = ssub.s32 %s12, 1
      %p170 = scmp.lt.s32.totalorder %s17, 1
      %s171 = scalar_select %p170, %s17, 1
      %s172 = smul.addr %s171, 4
      %s173 = smul.addr %s172, 4
      %s174 = scalar_lea.vmem %s0, %s173
      %p175 = pneg %p38
      %p176 = pneg %p35
      %p177 = pneg %p59
      %p178 = pneg %p56
      %p179 = pneg %p80
      %p180 = pneg %p77
      %p181 = pneg %p101
      %p182 = pneg %p98
      %p183 = pneg %p127
      %p184 = pneg %p124
      %p185 = scmp.lt.s32.totalorder %s17, 1
      %s186 = scalar_select %p185, %s17, 1
      %s187 = smul.addr %s186, 2
      %s188 = smul.addr %s187, 8
      %s189 = scalar_lea.vmem %s4, %s188
      %p190 = scmp.lt.s32.totalorder %s17, 1
      %s191 = scalar_select %p190, %s17, 1
      %s192 = smul.addr %s191, 4
      %s193 = smul.addr %s192, 4
      %s194 = scalar_lea.vmem %s0, %s193
      %p195 = scmp.lt.s32.totalorder %s17, 1
      %s196 = scalar_select %p195, %s17, 1
      %s197 = smul.addr %s196, 2
      %s198 = smul.addr %s197, 8
      %s199 = scalar_lea.vmem %s4, %s198
      %v201 = vld [vmem:[%s194] sm:$0xf]
      %v202 = vld [vmem:[%s194 + $0x4] sm:$0x1]
      %v203 = vld [vmem:[%s1] sm:$0xf]
      %v204 = vld [vmem:[%s1 + $0x4] sm:$0xf]
      %v205 = vld [vmem:[%s1 + $0x8] sm:$0xf]
      %v206 = vld [vmem:[%s1 + $0xc] sm:$0xf]
      %v207 = vld [vmem:[%s1 + $0x10] sm:$0xf]
      %v208 = vld [vmem:[%s1 + $0x14] sm:$0xf]
      %v209 = vld [vmem:[%s1 + $0x18] sm:$0xf]
      %v210 = vld [vmem:[%s1 + $0x1c] sm:$0xf]
      %v211 = vld [vmem:[%s194 + $0x4] sm:$0x3]
      %v212 = vld [vmem:[%s1 + $0x20] sm:$0xf]
      %v213 = vld [vmem:[%s1 + $0x24] sm:$0xf]
      %v214 = vld [vmem:[%s1 + $0x28] sm:$0xf]
      %v215 = vld [vmem:[%s1 + $0x2c] sm:$0xf]
      %v216 = vld [vmem:[%s1 + $0x30] sm:$0xf]
      %v217 = vld [vmem:[%s1 + $0x34] sm:$0xf]
      %v218 = vld [vmem:[%s1 + $0x38] sm:$0xf]
      %v219 = vld [vmem:[%s1 + $0x3c] sm:$0xf]
      %v222 = vunpack.c.l.b16 %v201
      %v223 = vunpack.c.l.b16 %v211
      %v224 = vpack.c.b16 %v223, %v222
      %v226 = vshrl.u32 %v224, 16
      %v228 = vshll.u32 %v224, 16
      %v230 = vrot.slane %v228, 1
      %v231 = vor.u32 %v226, %v230
      %v240 = vunpack.c.l.b16 %v212
      %v241 = vunpack.c.l.b16 %v213
      %v242 = vunpack.c.l.b16 %v214
      %v243 = vunpack.c.l.b16 %v215
      %v244 = vunpack.c.l.b16 %v216
      %v245 = vunpack.c.l.b16 %v217
      %v246 = vunpack.c.l.b16 %v218
      %v247 = vunpack.c.l.b16 %v219
      %v248 = vpack.c.b16 %v241, %v240
      %v249 = vpack.c.b16 %v243, %v242
      %v250 = vpack.c.b16 %v245, %v244
      %v251 = vpack.c.b16 %v247, %v246
      %vm256 = vcmask 523264
      %v258 = vsel %vm256, %v231, 0
      %260 = vmatprep.subr.bf16.mxu0 0
      %261 = vmatpush1.bf16.msra.mxu0 %v248
      %262 = vmatprep.subr.bf16.mxu0 0
      %263 = vmatpush1.bf16.msra.mxu0 %v249
      %264 = vmatprep.subr.bf16.mxu0 0
      %265 = vmatpush1.bf16.msra.mxu0 %v250
      %266 = vmatprep.subr.bf16.mxu0 0
      %267 = vmatpush1.bf16.msra.mxu0 %v251
      %268 = vmatprep.subr.bf16.mxu0 0
      %269 = vmatpush1.bf16.msra.mxu0 0
      %270 = vmatprep.subr.bf16.mxu0 0
      %271 = vmatpush1.bf16.msra.mxu0 0
      %272 = vmatprep.subr.bf16.mxu0 0
      %273 = vmatpush1.bf16.msra.mxu0 0
      %274 = vmatprep.subr.bf16.mxu0 0
      %275 = vmatpush1.bf16.msra.mxu0 0
      %276 = vmatprep.subr.bf16.mxu0 0
      %277 = vmatpush1.bf16.msra.mxu0 0
      %278 = vmatprep.subr.bf16.mxu0 0
      %279 = vmatpush1.bf16.msra.mxu0 0
      %280 = vmatprep.subr.bf16.mxu0 0
      %281 = vmatpush1.bf16.msra.mxu0 0
      %282 = vmatprep.subr.bf16.mxu0 0
      %283 = vmatpush1.bf16.msra.mxu0 0
      %284 = vmatprep.subr.bf16.mxu0 0
      %285 = vmatpush1.bf16.msra.mxu0 0
      %286 = vmatprep.subr.bf16.mxu0 0
      %287 = vmatpush1.bf16.msra.mxu0 0
      %288 = vmatprep.subr.bf16.mxu0 0
      %289 = vmatpush1.bf16.msra.mxu0 0
      %290 = vmatprep.subr.bf16.mxu0 0
      %291 = vmatpush1.bf16.msra.mxu0 0
      %292 = vmatprep.mubr.bf16.mxu0 0
      %293 = vmatmul.mubr.bf16.gmra.mrb[0].mxu0 %v258
      %v294 = vpop.f32.mrb[0].mxu0
      %v295 = vadd.f32 0.0, %v294
      %v296 = vpop.f32.mrb[0].mxu0
      %v297 = vpop.f32.mrb[0].mxu0
      %v298 = vadd.f32 0.0, %v297
      %v299 = vpop.f32.mrb[0].mxu0
      %300 = vdwg.mxu0
      %v302 = vunpack.c.l.b16 %v202
      %v303 = vpack.c.b16 %v302, %v222
      %v312 = vunpack.c.l.b16 %v203
      %v313 = vunpack.c.l.b16 %v204
      %v314 = vunpack.c.l.b16 %v205
      %v315 = vunpack.c.l.b16 %v206
      %v316 = vunpack.c.l.b16 %v207
      %v317 = vunpack.c.l.b16 %v208
      %v318 = vunpack.c.l.b16 %v209
      %v319 = vunpack.c.l.b16 %v210
      %v320 = vpack.c.b16 %v313, %v312
      %v321 = vpack.c.b16 %v315, %v314
      %v322 = vpack.c.b16 %v317, %v316
      %v323 = vpack.c.b16 %v319, %v318
      %v329 = vsel %vm256, %v303, 0
      %331 = vmatprep.subr.bf16.mxu0 0
      %332 = vmatpush1.bf16.msra.mxu0 %v320
      %333 = vmatprep.subr.bf16.mxu0 0
      %334 = vmatpush1.bf16.msra.mxu0 %v321
      %335 = vmatprep.subr.bf16.mxu0 0
      %336 = vmatpush1.bf16.msra.mxu0 %v322
      %337 = vmatprep.subr.bf16.mxu0 0
      %338 = vmatpush1.bf16.msra.mxu0 %v323
      %339 = vmatprep.subr.bf16.mxu0 0
      %340 = vmatpush1.bf16.msra.mxu0 0
      %341 = vmatprep.subr.bf16.mxu0 0
      %342 = vmatpush1.bf16.msra.mxu0 0
      %343 = vmatprep.subr.bf16.mxu0 0
      %344 = vmatpush1.bf16.msra.mxu0 0
      %345 = vmatprep.subr.bf16.mxu0 0
      %346 = vmatpush1.bf16.msra.mxu0 0
      %347 = vmatprep.subr.bf16.mxu0 0
      %348 = vmatpush1.bf16.msra.mxu0 0
      %349 = vmatprep.subr.bf16.mxu0 0
      %350 = vmatpush1.bf16.msra.mxu0 0
      %351 = vmatprep.subr.bf16.mxu0 0
      %352 = vmatpush1.bf16.msra.mxu0 0
      %353 = vmatprep.subr.bf16.mxu0 0
      %354 = vmatpush1.bf16.msra.mxu0 0
      %355 = vmatprep.subr.bf16.mxu0 0
      %356 = vmatpush1.bf16.msra.mxu0 0
      %357 = vmatprep.subr.bf16.mxu0 0
      %358 = vmatpush1.bf16.msra.mxu0 0
      %359 = vmatprep.subr.bf16.mxu0 0
      %360 = vmatpush1.bf16.msra.mxu0 0
      %361 = vmatprep.subr.bf16.mxu0 0
      %362 = vmatpush1.bf16.msra.mxu0 0
      %363 = vmatprep.mubr.bf16.mxu0 0
      %364 = vmatmul.mubr.bf16.gmra.mrb[0].mxu0 %v329
      %v365 = vpop.f32.mrb[0].mxu0
      %v366 = vadd.f32 %v295, %v365
      %v367 = vpop.f32.mrb[0].mxu0
      %v368 = vpop.f32.mrb[0].mxu0
      %v369 = vadd.f32 %v298, %v368
      %v370 = vpop.f32.mrb[0].mxu0
      %371 = vdwg.mxu0
      %v372 = vld [vmem:[%s194] sm:$0xe]
      %v373 = vld [vmem:[%s1 + $0x40] sm:$0xf]
      %v374 = vld [vmem:[%s1 + $0x44] sm:$0xf]
      %v375 = vld [vmem:[%s1 + $0x48] sm:$0xf]
      %v376 = vld [vmem:[%s1 + $0x4c] sm:$0xf]
      %v377 = vld [vmem:[%s1 + $0x50] sm:$0xf]
      %v378 = vld [vmem:[%s1 + $0x54] sm:$0xf]
      %v379 = vld [vmem:[%s1 + $0x58] sm:$0xf]
      %v380 = vld [vmem:[%s1 + $0x5c] sm:$0xf]
      %v382 = vunpack.c.l.b16 %v372
      %v383 = vpack.c.b16 %v223, %v382
      %v384 = vrot.slane %v383, 1
      %v393 = vunpack.c.l.b16 %v373
      %v394 = vunpack.c.l.b16 %v374
      %v395 = vunpack.c.l.b16 %v375
      %v396 = vunpack.c.l.b16 %v376
      %v397 = vunpack.c.l.b16 %v377
      %v398 = vunpack.c.l.b16 %v378
      %v399 = vunpack.c.l.b16 %v379
      %v400 = vunpack.c.l.b16 %v380
      %v401 = vpack.c.b16 %v394, %v393
      %v402 = vpack.c.b16 %v396, %v395
      %v403 = vpack.c.b16 %v398, %v397
      %v404 = vpack.c.b16 %v400, %v399
      %v410 = vsel %vm256, %v384, 0
      %412 = vmatprep.subr.bf16.mxu0 0
      %413 = vmatpush1.bf16.msra.mxu0 %v401
      %414 = vmatprep.subr.bf16.mxu0 0
      %415 = vmatpush1.bf16.msra.mxu0 %v402
      %416 = vmatprep.subr.bf16.mxu0 0
      %417 = vmatpush1.bf16.msra.mxu0 %v403
      %418 = vmatprep.subr.bf16.mxu0 0
      %419 = vmatpush1.bf16.msra.mxu0 %v404
      %420 = vmatprep.subr.bf16.mxu0 0
      %421 = vmatpush1.bf16.msra.mxu0 0
      %422 = vmatprep.subr.bf16.mxu0 0
      %423 = vmatpush1.bf16.msra.mxu0 0
      %424 = vmatprep.subr.bf16.mxu0 0
      %425 = vmatpush1.bf16.msra.mxu0 0
      %426 = vmatprep.subr.bf16.mxu0 0
      %427 = vmatpush1.bf16.msra.mxu0 0
      %428 = vmatprep.subr.bf16.mxu0 0
      %429 = vmatpush1.bf16.msra.mxu0 0
      %430 = vmatprep.subr.bf16.mxu0 0
      %431 = vmatpush1.bf16.msra.mxu0 0
      %432 = vmatprep.subr.bf16.mxu0 0
      %433 = vmatpush1.bf16.msra.mxu0 0
      %434 = vmatprep.subr.bf16.mxu0 0
      %435 = vmatpush1.bf16.msra.mxu0 0
      %436 = vmatprep.subr.bf16.mxu0 0
      %437 = vmatpush1.bf16.msra.mxu0 0
      %438 = vmatprep.subr.bf16.mxu0 0
      %439 = vmatpush1.bf16.msra.mxu0 0
      %440 = vmatprep.subr.bf16.mxu0 0
      %441 = vmatpush1.bf16.msra.mxu0 0
      %442 = vmatprep.subr.bf16.mxu0 0
      %443 = vmatpush1.bf16.msra.mxu0 0
      %444 = vmatprep.mubr.bf16.mxu0 0
      %445 = vmatmul.mubr.bf16.gmra.mrb[0].mxu0 %v410
      %v446 = vpop.f32.mrb[0].mxu0
      %v447 = vadd.f32 0.0, %v446
      %v448 = vpop.f32.mrb[0].mxu0
      %v449 = vpop.f32.mrb[0].mxu0
      %v450 = vadd.f32 0.0, %v449
      %v451 = vpop.f32.mrb[0].mxu0
      %452 = vdwg.mxu0
      %v453 = vadd.f32 %v366, %v447
      %v454 = vadd.f32 %v369, %v450
      %v455 = vld [vmem:[%s194 + $0x4] sm:$0x7]
      %v456 = vld [vmem:[%s1 + $0x60] sm:$0xf]
      %v457 = vld [vmem:[%s1 + $0x64] sm:$0xf]
      %v458 = vld [vmem:[%s1 + $0x68] sm:$0xf]
      %v459 = vld [vmem:[%s1 + $0x6c] sm:$0xf]
      %v460 = vld [vmem:[%s1 + $0x70] sm:$0xf]
      %v461 = vld [vmem:[%s1 + $0x74] sm:$0xf]
      %v462 = vld [vmem:[%s1 + $0x78] sm:$0xf]
      %v463 = vld [vmem:[%s1 + $0x7c] sm:$0xf]
      %v465 = vunpack.c.l.b16 %v455
      %v466 = vpack.c.b16 %v465, %v382
      %v468 = vshrl.u32 %v466, 16
      %v470 = vrot.slane %v468, 1
      %v471 = vshll.u32 %v466, 16
      %v473 = vrot.slane %v471, 2
      %v474 = vor.u32 %v470, %v473
      %v483 = vunpack.c.l.b16 %v456
      %v484 = vunpack.c.l.b16 %v457
      %v485 = vunpack.c.l.b16 %v458
      %v486 = vunpack.c.l.b16 %v459
      %v487 = vunpack.c.l.b16 %v460
      %v488 = vunpack.c.l.b16 %v461
      %v489 = vunpack.c.l.b16 %v462
      %v490 = vunpack.c.l.b16 %v463
      %v491 = vpack.c.b16 %v484, %v483
      %v492 = vpack.c.b16 %v486, %v485
      %v493 = vpack.c.b16 %v488, %v487
      %v494 = vpack.c.b16 %v490, %v489
      %v500 = vsel %vm256, %v474, 0
      %502 = vmatprep.subr.bf16.mxu0 0
      %503 = vmatpush1.bf16.msra.mxu0 %v491
      %504 = vmatprep.subr.bf16.mxu0 0
      %505 = vmatpush1.bf16.msra.mxu0 %v492
      %506 = vmatprep.subr.bf16.mxu0 0
      %507 = vmatpush1.bf16.msra.mxu0 %v493
      %508 = vmatprep.subr.bf16.mxu0 0
      %509 = vmatpush1.bf16.msra.mxu0 %v494
      %510 = vmatprep.subr.bf16.mxu0 0
      %511 = vmatpush1.bf16.msra.mxu0 0
      %512 = vmatprep.subr.bf16.mxu0 0
      %513 = vmatpush1.bf16.msra.mxu0 0
      %514 = vmatprep.subr.bf16.mxu0 0
      %515 = vmatpush1.bf16.msra.mxu0 0
      %516 = vmatprep.subr.bf16.mxu0 0
      %517 = vmatpush1.bf16.msra.mxu0 0
      %518 = vmatprep.subr.bf16.mxu0 0
      %519 = vmatpush1.bf16.msra.mxu0 0
      %520 = vmatprep.subr.bf16.mxu0 0
      %521 = vmatpush1.bf16.msra.mxu0 0
      %522 = vmatprep.subr.bf16.mxu0 0
      %523 = vmatpush1.bf16.msra.mxu0 0
      %524 = vmatprep.subr.bf16.mxu0 0
      %525 = vmatpush1.bf16.msra.mxu0 0
      %526 = vmatprep.subr.bf16.mxu0 0
      %527 = vmatpush1.bf16.msra.mxu0 0
      %528 = vmatprep.subr.bf16.mxu0 0
      %529 = vmatpush1.bf16.msra.mxu0 0
      %530 = vmatprep.subr.bf16.mxu0 0
      %531 = vmatpush1.bf16.msra.mxu0 0
      %532 = vmatprep.subr.bf16.mxu0 0
      %533 = vmatpush1.bf16.msra.mxu0 0
      %534 = vmatprep.mubr.bf16.mxu0 0
      %535 = vmatmul.mubr.bf16.gmra.mrb[0].mxu0 %v500
      %v536 = vpop.f32.mrb[0].mxu0
      %v537 = vadd.f32 0.0, %v536
      %v538 = vpop.f32.mrb[0].mxu0
      %v539 = vpop.f32.mrb[0].mxu0
      %v540 = vadd.f32 0.0, %v539
      %v541 = vpop.f32.mrb[0].mxu0
      %542 = vdwg.mxu0
      %v543 = vadd.f32 %v453, %v537
      %v544 = vadd.f32 %v454, %v540
      %v545 = vld [vmem:[%s194] sm:$0xc]
      %v546 = vld [vmem:[%s194 + $0x4] sm:$0xf]
      %v547 = vld [vmem:[%s1 + $0x80] sm:$0xf]
      %v548 = vld [vmem:[%s1 + $0x84] sm:$0xf]
      %v549 = vld [vmem:[%s1 + $0x88] sm:$0xf]
      %v550 = vld [vmem:[%s1 + $0x8c] sm:$0xf]
      %v551 = vld [vmem:[%s1 + $0x90] sm:$0xf]
      %v552 = vld [vmem:[%s1 + $0x94] sm:$0xf]
      %v553 = vld [vmem:[%s1 + $0x98] sm:$0xf]
      %v554 = vld [vmem:[%s1 + $0x9c] sm:$0xf]
      %v557 = vunpack.c.l.b16 %v545
      %v558 = vunpack.c.l.b16 %v546
      %v559 = vpack.c.b16 %v558, %v557
      %v561 = vshrl.u32 %v559, 16
      %v563 = vrot.slane %v561, 2
      %v564 = vshll.u32 %v559, 16
      %v566 = vrot.slane %v564, 3
      %v567 = vor.u32 %v563, %v566
      %v576 = vunpack.c.l.b16 %v547
      %v577 = vunpack.c.l.b16 %v548
      %v578 = vunpack.c.l.b16 %v549
      %v579 = vunpack.c.l.b16 %v550
      %v580 = vunpack.c.l.b16 %v551
      %v581 = vunpack.c.l.b16 %v552
      %v582 = vunpack.c.l.b16 %v553
      %v583 = vunpack.c.l.b16 %v554
      %v584 = vpack.c.b16 %v577, %v576
      %v585 = vpack.c.b16 %v579, %v578
      %v586 = vpack.c.b16 %v581, %v580
      %v587 = vpack.c.b16 %v583, %v582
      %v593 = vsel %vm256, %v567, 0
      %595 = vmatprep.subr.bf16.mxu0 0
      %596 = vmatpush1.bf16.msra.mxu0 %v584
      %597 = vmatprep.subr.bf16.mxu0 0
      %598 = vmatpush1.bf16.msra.mxu0 %v585
      %599 = vmatprep.subr.bf16.mxu0 0
      %600 = vmatpush1.bf16.msra.mxu0 %v586
      %601 = vmatprep.subr.bf16.mxu0 0
      %602 = vmatpush1.bf16.msra.mxu0 %v587
      %603 = vmatprep.subr.bf16.mxu0 0
      %604 = vmatpush1.bf16.msra.mxu0 0
      %605 = vmatprep.subr.bf16.mxu0 0
      %606 = vmatpush1.bf16.msra.mxu0 0
      %607 = vmatprep.subr.bf16.mxu0 0
      %608 = vmatpush1.bf16.msra.mxu0 0
      %609 = vmatprep.subr.bf16.mxu0 0
      %610 = vmatpush1.bf16.msra.mxu0 0
      %611 = vmatprep.subr.bf16.mxu0 0
      %612 = vmatpush1.bf16.msra.mxu0 0
      %613 = vmatprep.subr.bf16.mxu0 0
      %614 = vmatpush1.bf16.msra.mxu0 0
      %615 = vmatprep.subr.bf16.mxu0 0
      %616 = vmatpush1.bf16.msra.mxu0 0
      %617 = vmatprep.subr.bf16.mxu0 0
      %618 = vmatpush1.bf16.msra.mxu0 0
      %619 = vmatprep.subr.bf16.mxu0 0
      %620 = vmatpush1.bf16.msra.mxu0 0
      %621 = vmatprep.subr.bf16.mxu0 0
      %622 = vmatpush1.bf16.msra.mxu0 0
      %623 = vmatprep.subr.bf16.mxu0 0
      %624 = vmatpush1.bf16.msra.mxu0 0
      %625 = vmatprep.subr.bf16.mxu0 0
      %626 = vmatpush1.bf16.msra.mxu0 0
      %627 = vmatprep.mubr.bf16.mxu0 0
      %628 = vmatmul.mubr.bf16.gmra.mrb[0].mxu0 %v593
      %v629 = vpop.f32.mrb[0].mxu0
      %v630 = vadd.f32 0.0, %v629
      %v631 = vpop.f32.mrb[0].mxu0
      %v632 = vpop.f32.mrb[0].mxu0
      %v633 = vadd.f32 0.0, %v632
      %v634 = vpop.f32.mrb[0].mxu0
      %635 = vdwg.mxu0
      %v636 = vadd.f32 %v543, %v630
      %v637 = vadd.f32 %v544, %v633
      %v638 = vld [vmem:[%s194] sm:$0x8]
      %v639 = vld [vmem:[%s1 + $0xa0] sm:$0xf]
      %v640 = vld [vmem:[%s1 + $0xa4] sm:$0xf]
      %v641 = vld [vmem:[%s1 + $0xa8] sm:$0xf]
      %v642 = vld [vmem:[%s1 + $0xac] sm:$0xf]
      %v643 = vld [vmem:[%s1 + $0xb0] sm:$0xf]
      %v644 = vld [vmem:[%s1 + $0xb4] sm:$0xf]
      %v645 = vld [vmem:[%s1 + $0xb8] sm:$0xf]
      %v646 = vld [vmem:[%s1 + $0xbc] sm:$0xf]
      %v648 = vunpack.c.l.b16 %v638
      %v649 = vpack.c.b16 %v558, %v648
      %v650 = vrot.slane %v649, 3
      %v659 = vunpack.c.l.b16 %v639
      %v660 = vunpack.c.l.b16 %v640
      %v661 = vunpack.c.l.b16 %v641
      %v662 = vunpack.c.l.b16 %v642
      %v663 = vunpack.c.l.b16 %v643
      %v664 = vunpack.c.l.b16 %v644
      %v665 = vunpack.c.l.b16 %v645
      %v666 = vunpack.c.l.b16 %v646
      %v667 = vpack.c.b16 %v660, %v659
      %v668 = vpack.c.b16 %v662, %v661
      %v669 = vpack.c.b16 %v664, %v663
      %v670 = vpack.c.b16 %v666, %v665
      %v676 = vsel %vm256, %v650, 0
      %678 = vmatprep.subr.bf16.mxu0 0
      %679 = vmatpush1.bf16.msra.mxu0 %v667
      %680 = vmatprep.subr.bf16.mxu0 0
      %681 = vmatpush1.bf16.msra.mxu0 %v668
      %682 = vmatprep.subr.bf16.mxu0 0
      %683 = vmatpush1.bf16.msra.mxu0 %v669
      %684 = vmatprep.subr.bf16.mxu0 0
      %685 = vmatpush1.bf16.msra.mxu0 %v670
      %686 = vmatprep.subr.bf16.mxu0 0
      %687 = vmatpush1.bf16.msra.mxu0 0
      %688 = vmatprep.subr.bf16.mxu0 0
      %689 = vmatpush1.bf16.msra.mxu0 0
      %690 = vmatprep.subr.bf16.mxu0 0
      %691 = vmatpush1.bf16.msra.mxu0 0
      %692 = vmatprep.subr.bf16.mxu0 0
      %693 = vmatpush1.bf16.msra.mxu0 0
      %694 = vmatprep.subr.bf16.mxu0 0
      %695 = vmatpush1.bf16.msra.mxu0 0
      %696 = vmatprep.subr.bf16.mxu0 0
      %697 = vmatpush1.bf16.msra.mxu0 0
      %698 = vmatprep.subr.bf16.mxu0 0
      %699 = vmatpush1.bf16.msra.mxu0 0
      %700 = vmatprep.subr.bf16.mxu0 0
      %701 = vmatpush1.bf16.msra.mxu0 0
      %702 = vmatprep.subr.bf16.mxu0 0
      %703 = vmatpush1.bf16.msra.mxu0 0
      %704 = vmatprep.subr.bf16.mxu0 0
      %705 = vmatpush1.bf16.msra.mxu0 0
      %706 = vmatprep.subr.bf16.mxu0 0
      %707 = vmatpush1.bf16.msra.mxu0 0
      %708 = vmatprep.subr.bf16.mxu0 0
      %709 = vmatpush1.bf16.msra.mxu0 0
      %710 = vmatprep.mubr.bf16.mxu0 0
      %711 = vmatmul.mubr.bf16.gmra.mrb[0].mxu0 %v676
      %v712 = vpop.f32.mrb[0].mxu0
      %v713 = vadd.f32 0.0, %v712
      %v714 = vpop.f32.mrb[0].mxu0
      %v715 = vpop.f32.mrb[0].mxu0
      %v716 = vadd.f32 0.0, %v715
      %v717 = vpop.f32.mrb[0].mxu0
      %718 = vdwg.mxu0
      %v719 = vadd.f32 %v636, %v713
      %v720 = vadd.f32 %v637, %v716
      %v721 = vld [vmem:[%s194] sm:$0x8]
      %v722 = vld [vmem:[%s194 + $0x4] sm:$0xf]
      %v723 = vld [vmem:[%s194 + $0x8] sm:$0x1]
      %v724 = vld [vmem:[%s1 + $0xc0] sm:$0xf]
      %v725 = vld [vmem:[%s1 + $0xc4] sm:$0xf]
      %v726 = vld [vmem:[%s1 + $0xc8] sm:$0xf]
      %v727 = vld [vmem:[%s1 + $0xcc] sm:$0xf]
      %v728 = vld [vmem:[%s1 + $0xd0] sm:$0xf]
      %v729 = vld [vmem:[%s1 + $0xd4] sm:$0xf]
      %v730 = vld [vmem:[%s1 + $0xd8] sm:$0xf]
      %v731 = vld [vmem:[%s1 + $0xdc] sm:$0xf]
      %v735 = vunpack.c.l.b16 %v721
      %v736 = vunpack.c.l.b16 %v722
      %v737 = vunpack.c.l.b16 %v723
      %v738 = vpack.c.b16 %v736, %v735
      %v739 = vpack.c.b16 %v737, %v737
      %vm740 = vsmask.f32 4352
      %v742 = vshrl.u32 %v738, 16
      %v744 = vrot.slane %v742, 3
      %v745 = vshll.u32 %v738, 16
      %v747 = vrot.slane %v745, 4
      %v748 = vor.u32 %v744, %v747
      %v750 = vshll.u32 %v739, 16
      %v752 = vrot.slane %v750, 4
      %v753 = vsel %vm740, %v748, %v752
      %v762 = vunpack.c.l.b16 %v724
      %v763 = vunpack.c.l.b16 %v725
      %v764 = vunpack.c.l.b16 %v726
      %v765 = vunpack.c.l.b16 %v727
      %v766 = vunpack.c.l.b16 %v728
      %v767 = vunpack.c.l.b16 %v729
      %v768 = vunpack.c.l.b16 %v730
      %v769 = vunpack.c.l.b16 %v731
      %v770 = vpack.c.b16 %v763, %v762
      %v771 = vpack.c.b16 %v765, %v764
      %v772 = vpack.c.b16 %v767, %v766
      %v773 = vpack.c.b16 %v769, %v768
      %v779 = vsel %vm256, %v753, 0
      %781 = vmatprep.subr.bf16.mxu0 0
      %782 = vmatpush1.bf16.msra.mxu0 %v770
      %783 = vmatprep.subr.bf16.mxu0 0
      %784 = vmatpush1.bf16.msra.mxu0 %v771
      %785 = vmatprep.subr.bf16.mxu0 0
      %786 = vmatpush1.bf16.msra.mxu0 %v772
      %787 = vmatprep.subr.bf16.mxu0 0
      %788 = vmatpush1.bf16.msra.mxu0 %v773
      %789 = vmatprep.subr.bf16.mxu0 0
      %790 = vmatpush1.bf16.msra.mxu0 0
      %791 = vmatprep.subr.bf16.mxu0 0
      %792 = vmatpush1.bf16.msra.mxu0 0
      %793 = vmatprep.subr.bf16.mxu0 0
      %794 = vmatpush1.bf16.msra.mxu0 0
      %795 = vmatprep.subr.bf16.mxu0 0
      %796 = vmatpush1.bf16.msra.mxu0 0
      %797 = vmatprep.subr.bf16.mxu0 0
      %798 = vmatpush1.bf16.msra.mxu0 0
      %799 = vmatprep.subr.bf16.mxu0 0
      %800 = vmatpush1.bf16.msra.mxu0 0
      %801 = vmatprep.subr.bf16.mxu0 0
      %802 = vmatpush1.bf16.msra.mxu0 0
      %803 = vmatprep.subr.bf16.mxu0 0
      %804 = vmatpush1.bf16.msra.mxu0 0
      %805 = vmatprep.subr.bf16.mxu0 0
      %806 = vmatpush1.bf16.msra.mxu0 0
      %807 = vmatprep.subr.bf16.mxu0 0
      %808 = vmatpush1.bf16.msra.mxu0 0
      %809 = vmatprep.subr.bf16.mxu0 0
      %810 = vmatpush1.bf16.msra.mxu0 0
      %811 = vmatprep.subr.bf16.mxu0 0
      %812 = vmatpush1.bf16.msra.mxu0 0
      %813 = vmatprep.mubr.bf16.mxu0 0
      %814 = vmatmul.mubr.bf16.gmra.mrb[0].mxu0 %v779
      %v815 = vpop.f32.mrb[0].mxu0
      %v816 = vadd.f32 0.0, %v815
      %v817 = vpop.f32.mrb[0].mxu0
      %v818 = vpop.f32.mrb[0].mxu0
      %v819 = vadd.f32 0.0, %v818
      %v820 = vpop.f32.mrb[0].mxu0
      %821 = vdwg.mxu0
      %v822 = vadd.f32 %v719, %v816
      %v823 = vadd.f32 %v720, %v819
      %v824 = vld [vmem:[%s1 + $0xe0] sm:$0xf]
      %v825 = vld [vmem:[%s1 + $0xe4] sm:$0xf]
      %v826 = vld [vmem:[%s1 + $0xe8] sm:$0xf]
      %v827 = vld [vmem:[%s1 + $0xec] sm:$0xf]
      %v828 = vld [vmem:[%s1 + $0xf0] sm:$0xf]
      %v829 = vld [vmem:[%s1 + $0xf4] sm:$0xf]
      %v830 = vld [vmem:[%s1 + $0xf8] sm:$0xf]
      %v831 = vld [vmem:[%s1 + $0xfc] sm:$0xf]
      %v832 = vpack.c.b16 %v737, %v736
      %v841 = vunpack.c.l.b16 %v824
      %v842 = vunpack.c.l.b16 %v825
      %v843 = vunpack.c.l.b16 %v826
      %v844 = vunpack.c.l.b16 %v827
      %v845 = vunpack.c.l.b16 %v828
      %v846 = vunpack.c.l.b16 %v829
      %v847 = vunpack.c.l.b16 %v830
      %v848 = vunpack.c.l.b16 %v831
      %v849 = vpack.c.b16 %v842, %v841
      %v850 = vpack.c.b16 %v844, %v843
      %v851 = vpack.c.b16 %v846, %v845
      %v852 = vpack.c.b16 %v848, %v847
      %v858 = vsel %vm256, %v832, 0
      %860 = vmatprep.subr.bf16.mxu0 0
      %861 = vmatpush1.bf16.msra.mxu0 %v849
      %862 = vmatprep.subr.bf16.mxu0 0
      %863 = vmatpush1.bf16.msra.mxu0 %v850
      %864 = vmatprep.subr.bf16.mxu0 0
      %865 = vmatpush1.bf16.msra.mxu0 %v851
      %866 = vmatprep.subr.bf16.mxu0 0
      %867 = vmatpush1.bf16.msra.mxu0 %v852
      %868 = vmatprep.subr.bf16.mxu0 0
      %869 = vmatpush1.bf16.msra.mxu0 0
      %870 = vmatprep.subr.bf16.mxu0 0
      %871 = vmatpush1.bf16.msra.mxu0 0
      %872 = vmatprep.subr.bf16.mxu0 0
      %873 = vmatpush1.bf16.msra.mxu0 0
      %874 = vmatprep.subr.bf16.mxu0 0
      %875 = vmatpush1.bf16.msra.mxu0 0
      %876 = vmatprep.subr.bf16.mxu0 0
      %877 = vmatpush1.bf16.msra.mxu0 0
      %878 = vmatprep.subr.bf16.mxu0 0
      %879 = vmatpush1.bf16.msra.mxu0 0
      %880 = vmatprep.subr.bf16.mxu0 0
      %881 = vmatpush1.bf16.msra.mxu0 0
      %882 = vmatprep.subr.bf16.mxu0 0
      %883 = vmatpush1.bf16.msra.mxu0 0
      %884 = vmatprep.subr.bf16.mxu0 0
      %885 = vmatpush1.bf16.msra.mxu0 0
      %886 = vmatprep.subr.bf16.mxu0 0
      %887 = vmatpush1.bf16.msra.mxu0 0
      %888 = vmatprep.subr.bf16.mxu0 0
      %889 = vmatpush1.bf16.msra.mxu0 0
      %890 = vmatprep.subr.bf16.mxu0 0
      %891 = vmatpush1.bf16.msra.mxu0 0
      %892 = vmatprep.mubr.bf16.mxu0 0
      %893 = vmatmul.mubr.bf16.gmra.mrb[0].mxu0 %v858
      %v894 = vpop.f32.mrb[0].mxu0
      %v895 = vadd.f32 0.0, %v894
      %v896 = vpop.f32.mrb[0].mxu0
      %v897 = vpop.f32.mrb[0].mxu0
      %v898 = vadd.f32 0.0, %v897
      %v899 = vpop.f32.mrb[0].mxu0
      %900 = vdwg.mxu0
      %v901 = vadd.f32 %v822, %v895
      %v902 = vadd.f32 %v823, %v898
      %v903 = vld [vmem:[%s194 + $0x4] sm:$0xe]
      %v904 = vld [vmem:[%s194 + $0x8] sm:$0x3]
      %v905 = vld [vmem:[%s1 + $0x100] sm:$0xf]
      %v906 = vld [vmem:[%s1 + $0x104] sm:$0xf]
      %v907 = vld [vmem:[%s1 + $0x108] sm:$0xf]
      %v908 = vld [vmem:[%s1 + $0x10c] sm:$0xf]
      %v909 = vld [vmem:[%s1 + $0x110] sm:$0xf]
      %v910 = vld [vmem:[%s1 + $0x114] sm:$0xf]
      %v911 = vld [vmem:[%s1 + $0x118] sm:$0xf]
      %v912 = vld [vmem:[%s1 + $0x11c] sm:$0xf]
      %v915 = vunpack.c.l.b16 %v903
      %v916 = vunpack.c.l.b16 %v904
      %v917 = vpack.c.b16 %v916, %v915
      %v918 = vrot.slane %v917, 1
      %v927 = vunpack.c.l.b16 %v905
      %v928 = vunpack.c.l.b16 %v906
      %v929 = vunpack.c.l.b16 %v907
      %v930 = vunpack.c.l.b16 %v908
      %v931 = vunpack.c.l.b16 %v909
      %v932 = vunpack.c.l.b16 %v910
      %v933 = vunpack.c.l.b16 %v911
      %v934 = vunpack.c.l.b16 %v912
      %v935 = vpack.c.b16 %v928, %v927
      %v936 = vpack.c.b16 %v930, %v929
      %v937 = vpack.c.b16 %v932, %v931
      %v938 = vpack.c.b16 %v934, %v933
      %v944 = vsel %vm256, %v918, 0
      %946 = vmatprep.subr.bf16.mxu0 0
      %947 = vmatpush1.bf16.msra.mxu0 %v935
      %948 = vmatprep.subr.bf16.mxu0 0
      %949 = vmatpush1.bf16.msra.mxu0 %v936
      %950 = vmatprep.subr.bf16.mxu0 0
      %951 = vmatpush1.bf16.msra.mxu0 %v937
      %952 = vmatprep.subr.bf16.mxu0 0
      %953 = vmatpush1.bf16.msra.mxu0 %v938
      %954 = vmatprep.subr.bf16.mxu0 0
      %955 = vmatpush1.bf16.msra.mxu0 0
      %956 = vmatprep.subr.bf16.mxu0 0
      %957 = vmatpush1.bf16.msra.mxu0 0
      %958 = vmatprep.subr.bf16.mxu0 0
      %959 = vmatpush1.bf16.msra.mxu0 0
      %960 = vmatprep.subr.bf16.mxu0 0
      %961 = vmatpush1.bf16.msra.mxu0 0
      %962 = vmatprep.subr.bf16.mxu0 0
      %963 = vmatpush1.bf16.msra.mxu0 0
      %964 = vmatprep.subr.bf16.mxu0 0
      %965 = vmatpush1.bf16.msra.mxu0 0
      %966 = vmatprep.subr.bf16.mxu0 0
      %967 = vmatpush1.bf16.msra.mxu0 0
      %968 = vmatprep.subr.bf16.mxu0 0
      %969 = vmatpush1.bf16.msra.mxu0 0
      %970 = vmatprep.subr.bf16.mxu0 0
      %971 = vmatpush1.bf16.msra.mxu0 0
      %972 = vmatprep.subr.bf16.mxu0 0
      %973 = vmatpush1.bf16.msra.mxu0 0
      %974 = vmatprep.subr.bf16.mxu0 0
      %975 = vmatpush1.bf16.msra.mxu0 0
      %976 = vmatprep.subr.bf16.mxu0 0
      %977 = vmatpush1.bf16.msra.mxu0 0
      %978 = vmatprep.mubr.bf16.mxu0 0
      %979 = vmatmul.mubr.bf16.gmra.mrb[0].mxu0 %v944
      %v980 = vpop.f32.mrb[0].mxu0
      %v981 = vadd.f32 0.0, %v980
      %v982 = vpop.f32.mrb[0].mxu0
      %v983 = vpop.f32.mrb[0].mxu0
      %v984 = vadd.f32 0.0, %v983
      %v985 = vpop.f32.mrb[0].mxu0
      %986 = vdwg.mxu0
      %v987 = vadd.f32 %v901, %v981
      %v988 = vadd.f32 %v902, %v984
      %v989 = vld [vmem:[%s194 + $0x8] sm:$0x7]
      %v990 = vld [vmem:[%s1 + $0x120] sm:$0xf]
      %v991 = vld [vmem:[%s1 + $0x124] sm:$0xf]
      %v992 = vld [vmem:[%s1 + $0x128] sm:$0xf]
      %v993 = vld [vmem:[%s1 + $0x12c] sm:$0xf]
      %v994 = vld [vmem:[%s1 + $0x130] sm:$0xf]
      %v995 = vld [vmem:[%s1 + $0x134] sm:$0xf]
      %v996 = vld [vmem:[%s1 + $0x138] sm:$0xf]
      %v997 = vld [vmem:[%s1 + $0x13c] sm:$0xf]
      %v999 = vunpack.c.l.b16 %v989
      %v1000 = vpack.c.b16 %v999, %v915
      %v1002 = vshrl.u32 %v1000, 16
      %v1004 = vrot.slane %v1002, 1
      %v1005 = vshll.u32 %v1000, 16
      %v1007 = vrot.slane %v1005, 2
      %v1008 = vor.u32 %v1004, %v1007
      %v1017 = vunpack.c.l.b16 %v990
      %v1018 = vunpack.c.l.b16 %v991
      %v1019 = vunpack.c.l.b16 %v992
      %v1020 = vunpack.c.l.b16 %v993
      %v1021 = vunpack.c.l.b16 %v994
      %v1022 = vunpack.c.l.b16 %v995
      %v1023 = vunpack.c.l.b16 %v996
      %v1024 = vunpack.c.l.b16 %v997
      %v1025 = vpack.c.b16 %v1018, %v1017
      %v1026 = vpack.c.b16 %v1020, %v1019
      %v1027 = vpack.c.b16 %v1022, %v1021
      %v1028 = vpack.c.b16 %v1024, %v1023
      %v1034 = vsel %vm256, %v1008, 0
      %1036 = vmatprep.subr.bf16.mxu0 0
      %1037 = vmatpush1.bf16.msra.mxu0 %v1025
      %1038 = vmatprep.subr.bf16.mxu0 0
      %1039 = vmatpush1.bf16.msra.mxu0 %v1026
      %1040 = vmatprep.subr.bf16.mxu0 0
      %1041 = vmatpush1.bf16.msra.mxu0 %v1027
      %1042 = vmatprep.subr.bf16.mxu0 0
      %1043 = vmatpush1.bf16.msra.mxu0 %v1028
      %1044 = vmatprep.subr.bf16.mxu0 0
      %1045 = vmatpush1.bf16.msra.mxu0 0
      %1046 = vmatprep.subr.bf16.mxu0 0
      %1047 = vmatpush1.bf16.msra.mxu0 0
      %1048 = vmatprep.subr.bf16.mxu0 0
      %1049 = vmatpush1.bf16.msra.mxu0 0
      %1050 = vmatprep.subr.bf16.mxu0 0
      %1051 = vmatpush1.bf16.msra.mxu0 0
      %1052 = vmatprep.subr.bf16.mxu0 0
      %1053 = vmatpush1.bf16.msra.mxu0 0
      %1054 = vmatprep.subr.bf16.mxu0 0
      %1055 = vmatpush1.bf16.msra.mxu0 0
      %1056 = vmatprep.subr.bf16.mxu0 0
      %1057 = vmatpush1.bf16.msra.mxu0 0
      %1058 = vmatprep.subr.bf16.mxu0 0
      %1059 = vmatpush1.bf16.msra.mxu0 0
      %1060 = vmatprep.subr.bf16.mxu0 0
      %1061 = vmatpush1.bf16.msra.mxu0 0
      %1062 = vmatprep.subr.bf16.mxu0 0
      %1063 = vmatpush1.bf16.msra.mxu0 0
      %1064 = vmatprep.subr.bf16.mxu0 0
      %1065 = vmatpush1.bf16.msra.mxu0 0
      %1066 = vmatprep.subr.bf16.mxu0 0
      %1067 = vmatpush1.bf16.msra.mxu0 0
      %1068 = vmatprep.mubr.bf16.mxu0 0
      %1069 = vmatmul.mubr.bf16.gmra.mrb[0].mxu0 %v1034
      %v1070 = vpop.f32.mrb[0].mxu0
      %v1071 = vadd.f32 0.0, %v1070
      %v1072 = vpop.f32.mrb[0].mxu0
      %v1073 = vpop.f32.mrb[0].mxu0
      %v1074 = vadd.f32 0.0, %v1073
      %v1075 = vpop.f32.mrb[0].mxu0
      %1076 = vdwg.mxu0
      %v1077 = vadd.f32 %v987, %v1071
      %v1078 = vadd.f32 %v988, %v1074
      %v1079 = vld [vmem:[%s194 + $0x4] sm:$0xc]
      %v1080 = vld [vmem:[%s1 + $0x140] sm:$0xf]
      %v1081 = vld [vmem:[%s1 + $0x144] sm:$0xf]
      %v1082 = vld [vmem:[%s1 + $0x148] sm:$0xf]
      %v1083 = vld [vmem:[%s1 + $0x14c] sm:$0xf]
      %v1084 = vld [vmem:[%s1 + $0x150] sm:$0xf]
      %v1085 = vld [vmem:[%s1 + $0x154] sm:$0xf]
      %v1086 = vld [vmem:[%s1 + $0x158] sm:$0xf]
      %v1087 = vld [vmem:[%s1 + $0x15c] sm:$0xf]
      %v1089 = vunpack.c.l.b16 %v1079
      %v1090 = vpack.c.b16 %v999, %v1089
      %v1091 = vrot.slane %v1090, 2
      %v1100 = vunpack.c.l.b16 %v1080
      %v1101 = vunpack.c.l.b16 %v1081
      %v1102 = vunpack.c.l.b16 %v1082
      %v1103 = vunpack.c.l.b16 %v1083
      %v1104 = vunpack.c.l.b16 %v1084
      %v1105 = vunpack.c.l.b16 %v1085
      %v1106 = vunpack.c.l.b16 %v1086
      %v1107 = vunpack.c.l.b16 %v1087
      %v1108 = vpack.c.b16 %v1101, %v1100
      %v1109 = vpack.c.b16 %v1103, %v1102
      %v1110 = vpack.c.b16 %v1105, %v1104
      %v1111 = vpack.c.b16 %v1107, %v1106
      %v1117 = vsel %vm256, %v1091, 0
      %1119 = vmatprep.subr.bf16.mxu0 0
      %1120 = vmatpush1.bf16.msra.mxu0 %v1108
      %1121 = vmatprep.subr.bf16.mxu0 0
      %1122 = vmatpush1.bf16.msra.mxu0 %v1109
      %1123 = vmatprep.subr.bf16.mxu0 0
      %1124 = vmatpush1.bf16.msra.mxu0 %v1110
      %1125 = vmatprep.subr.bf16.mxu0 0
      %1126 = vmatpush1.bf16.msra.mxu0 %v1111
      %1127 = vmatprep.subr.bf16.mxu0 0
      %1128 = vmatpush1.bf16.msra.mxu0 0
      %1129 = vmatprep.subr.bf16.mxu0 0
      %1130 = vmatpush1.bf16.msra.mxu0 0
      %1131 = vmatprep.subr.bf16.mxu0 0
      %1132 = vmatpush1.bf16.msra.mxu0 0
      %1133 = vmatprep.subr.bf16.mxu0 0
      %1134 = vmatpush1.bf16.msra.mxu0 0
      %1135 = vmatprep.subr.bf16.mxu0 0
      %1136 = vmatpush1.bf16.msra.mxu0 0
      %1137 = vmatprep.subr.bf16.mxu0 0
      %1138 = vmatpush1.bf16.msra.mxu0 0
      %1139 = vmatprep.subr.bf16.mxu0 0
      %1140 = vmatpush1.bf16.msra.mxu0 0
      %1141 = vmatprep.subr.bf16.mxu0 0
      %1142 = vmatpush1.bf16.msra.mxu0 0
      %1143 = vmatprep.subr.bf16.mxu0 0
      %1144 = vmatpush1.bf16.msra.mxu0 0
      %1145 = vmatprep.subr.bf16.mxu0 0
      %1146 = vmatpush1.bf16.msra.mxu0 0
      %1147 = vmatprep.subr.bf16.mxu0 0
      %1148 = vmatpush1.bf16.msra.mxu0 0
      %1149 = vmatprep.subr.bf16.mxu0 0
      %1150 = vmatpush1.bf16.msra.mxu0 0
      %1151 = vmatprep.mubr.bf16.mxu0 0
      %1152 = vmatmul.mubr.bf16.gmra.mrb[0].mxu0 %v1117
      %v1153 = vpop.f32.mrb[0].mxu0
      %v1154 = vadd.f32 0.0, %v1153
      %v1155 = vpop.f32.mrb[0].mxu0
      %v1156 = vpop.f32.mrb[0].mxu0
      %v1157 = vadd.f32 0.0, %v1156
      %v1158 = vpop.f32.mrb[0].mxu0
      %1159 = vdwg.mxu0
      %v1160 = vadd.f32 %v1077, %v1154
      %v1161 = vadd.f32 %v1078, %v1157
      %v1162 = vld [vmem:[%s194 + $0x8] sm:$0xf]
      %v1163 = vld [vmem:[%s1 + $0x160] sm:$0xf]
      %v1164 = vld [vmem:[%s1 + $0x164] sm:$0xf]
      %v1165 = vld [vmem:[%s1 + $0x168] sm:$0xf]
      %v1166 = vld [vmem:[%s1 + $0x16c] sm:$0xf]
      %v1167 = vld [vmem:[%s1 + $0x170] sm:$0xf]
      %v1168 = vld [vmem:[%s1 + $0x174] sm:$0xf]
      %v1169 = vld [vmem:[%s1 + $0x178] sm:$0xf]
      %v1170 = vld [vmem:[%s1 + $0x17c] sm:$0xf]
      %v1172 = vunpack.c.l.b16 %v1162
      %v1173 = vpack.c.b16 %v1172, %v1089
      %v1175 = vshrl.u32 %v1173, 16
      %v1177 = vrot.slane %v1175, 2
      %v1178 = vshll.u32 %v1173, 16
      %v1180 = vrot.slane %v1178, 3
      %v1181 = vor.u32 %v1177, %v1180
      %v1190 = vunpack.c.l.b16 %v1163
      %v1191 = vunpack.c.l.b16 %v1164
      %v1192 = vunpack.c.l.b16 %v1165
      %v1193 = vunpack.c.l.b16 %v1166
      %v1194 = vunpack.c.l.b16 %v1167
      %v1195 = vunpack.c.l.b16 %v1168
      %v1196 = vunpack.c.l.b16 %v1169
      %v1197 = vunpack.c.l.b16 %v1170
      %v1198 = vpack.c.b16 %v1191, %v1190
      %v1199 = vpack.c.b16 %v1193, %v1192
      %v1200 = vpack.c.b16 %v1195, %v1194
      %v1201 = vpack.c.b16 %v1197, %v1196
      %v1207 = vsel %vm256, %v1181, 0
      %1209 = vmatprep.subr.bf16.mxu0 0
      %1210 = vmatpush1.bf16.msra.mxu0 %v1198
      %1211 = vmatprep.subr.bf16.mxu0 0
      %1212 = vmatpush1.bf16.msra.mxu0 %v1199
      %1213 = vmatprep.subr.bf16.mxu0 0
      %1214 = vmatpush1.bf16.msra.mxu0 %v1200
      %1215 = vmatprep.subr.bf16.mxu0 0
      %1216 = vmatpush1.bf16.msra.mxu0 %v1201
      %1217 = vmatprep.subr.bf16.mxu0 0
      %1218 = vmatpush1.bf16.msra.mxu0 0
      %1219 = vmatprep.subr.bf16.mxu0 0
      %1220 = vmatpush1.bf16.msra.mxu0 0
      %1221 = vmatprep.subr.bf16.mxu0 0
      %1222 = vmatpush1.bf16.msra.mxu0 0
      %1223 = vmatprep.subr.bf16.mxu0 0
      %1224 = vmatpush1.bf16.msra.mxu0 0
      %1225 = vmatprep.subr.bf16.mxu0 0
      %1226 = vmatpush1.bf16.msra.mxu0 0
      %1227 = vmatprep.subr.bf16.mxu0 0
      %1228 = vmatpush1.bf16.msra.mxu0 0
      %1229 = vmatprep.subr.bf16.mxu0 0
      %1230 = vmatpush1.bf16.msra.mxu0 0
      %1231 = vmatprep.subr.bf16.mxu0 0
      %1232 = vmatpush1.bf16.msra.mxu0 0
      %1233 = vmatprep.subr.bf16.mxu0 0
      %1234 = vmatpush1.bf16.msra.mxu0 0
      %1235 = vmatprep.subr.bf16.mxu0 0
      %1236 = vmatpush1.bf16.msra.mxu0 0
      %1237 = vmatprep.subr.bf16.mxu0 0
      %1238 = vmatpush1.bf16.msra.mxu0 0
      %1239 = vmatprep.subr.bf16.mxu0 0
      %1240 = vmatpush1.bf16.msra.mxu0 0
      %1241 = vmatprep.mubr.bf16.mxu0 0
      %1242 = vmatmul.mubr.bf16.gmra.mrb[0].mxu0 %v1207
      %v1243 = vpop.f32.mrb[0].mxu0
      %v1244 = vadd.f32 0.0, %v1243
      %v1245 = vpop.f32.mrb[0].mxu0
      %v1246 = vpop.f32.mrb[0].mxu0
      %v1247 = vadd.f32 0.0, %v1246
      %v1248 = vpop.f32.mrb[0].mxu0
      %1249 = vdwg.mxu0
      %v1250 = vadd.f32 %v1160, %v1244
      %v1251 = vadd.f32 %v1161, %v1247
      %v1252 = vld [vmem:[%s194 + $0x4] sm:$0x8]
      %v1253 = vld [vmem:[%s194 + $0x8] sm:$0xf]
      %v1254 = vld [vmem:[%s194 + $0xc] sm:$0x1]
      %v1255 = vld [vmem:[%s1 + $0x180] sm:$0xf]
      %v1256 = vld [vmem:[%s1 + $0x184] sm:$0xf]
      %v1257 = vld [vmem:[%s1 + $0x188] sm:$0xf]
      %v1258 = vld [vmem:[%s1 + $0x18c] sm:$0xf]
      %v1259 = vld [vmem:[%s1 + $0x190] sm:$0xf]
      %v1260 = vld [vmem:[%s1 + $0x194] sm:$0xf]
      %v1261 = vld [vmem:[%s1 + $0x198] sm:$0xf]
      %v1262 = vld [vmem:[%s1 + $0x19c] sm:$0xf]
      %v1266 = vunpack.c.l.b16 %v1252
      %v1267 = vunpack.c.l.b16 %v1253
      %v1268 = vunpack.c.l.b16 %v1254
      %v1269 = vpack.c.b16 %v1267, %v1266
      %v1270 = vpack.c.b16 %v1268, %v1268
      %v1272 = vshrl.u32 %v1269, 16
      %v1274 = vrot.slane %v1272, 3
      %v1275 = vshll.u32 %v1269, 16
      %v1277 = vrot.slane %v1275, 4
      %v1278 = vor.u32 %v1274, %v1277
      %v1280 = vshll.u32 %v1270, 16
      %v1282 = vrot.slane %v1280, 4
      %v1283 = vsel %vm740, %v1278, %v1282
      %v1292 = vunpack.c.l.b16 %v1255
      %v1293 = vunpack.c.l.b16 %v1256
      %v1294 = vunpack.c.l.b16 %v1257
      %v1295 = vunpack.c.l.b16 %v1258
      %v1296 = vunpack.c.l.b16 %v1259
      %v1297 = vunpack.c.l.b16 %v1260
      %v1298 = vunpack.c.l.b16 %v1261
      %v1299 = vunpack.c.l.b16 %v1262
      %v1300 = vpack.c.b16 %v1293, %v1292
      %v1301 = vpack.c.b16 %v1295, %v1294
      %v1302 = vpack.c.b16 %v1297, %v1296
      %v1303 = vpack.c.b16 %v1299, %v1298
      %v1309 = vsel %vm256, %v1283, 0
      %1311 = vmatprep.subr.bf16.mxu0 0
      %1312 = vmatpush1.bf16.msra.mxu0 %v1300
      %1313 = vmatprep.subr.bf16.mxu0 0
      %1314 = vmatpush1.bf16.msra.mxu0 %v1301
      %1315 = vmatprep.subr.bf16.mxu0 0
      %1316 = vmatpush1.bf16.msra.mxu0 %v1302
      %1317 = vmatprep.subr.bf16.mxu0 0
      %1318 = vmatpush1.bf16.msra.mxu0 %v1303
      %1319 = vmatprep.subr.bf16.mxu0 0
      %1320 = vmatpush1.bf16.msra.mxu0 0
      %1321 = vmatprep.subr.bf16.mxu0 0
      %1322 = vmatpush1.bf16.msra.mxu0 0
      %1323 = vmatprep.subr.bf16.mxu0 0
      %1324 = vmatpush1.bf16.msra.mxu0 0
      %1325 = vmatprep.subr.bf16.mxu0 0
      %1326 = vmatpush1.bf16.msra.mxu0 0
      %1327 = vmatprep.subr.bf16.mxu0 0
      %1328 = vmatpush1.bf16.msra.mxu0 0
      %1329 = vmatprep.subr.bf16.mxu0 0
      %1330 = vmatpush1.bf16.msra.mxu0 0
      %1331 = vmatprep.subr.bf16.mxu0 0
      %1332 = vmatpush1.bf16.msra.mxu0 0
      %1333 = vmatprep.subr.bf16.mxu0 0
      %1334 = vmatpush1.bf16.msra.mxu0 0
      %1335 = vmatprep.subr.bf16.mxu0 0
      %1336 = vmatpush1.bf16.msra.mxu0 0
      %1337 = vmatprep.subr.bf16.mxu0 0
      %1338 = vmatpush1.bf16.msra.mxu0 0
      %1339 = vmatprep.subr.bf16.mxu0 0
      %1340 = vmatpush1.bf16.msra.mxu0 0
      %1341 = vmatprep.subr.bf16.mxu0 0
      %1342 = vmatpush1.bf16.msra.mxu0 0
      %1343 = vmatprep.mubr.bf16.mxu0 0
      %1344 = vmatmul.mubr.bf16.gmra.mrb[0].mxu0 %v1309
      %v1345 = vpop.f32.mrb[0].mxu0
      %v1346 = vadd.f32 0.0, %v1345
      %v1347 = vpop.f32.mrb[0].mxu0
      %v1348 = vpop.f32.mrb[0].mxu0
      %v1349 = vadd.f32 0.0, %v1348
      %v1350 = vpop.f32.mrb[0].mxu0
      %1351 = vdwg.mxu0
      %v1352 = vadd.f32 %v1250, %v1346
      %v1353 = vadd.f32 %v1251, %v1349
      %v1354 = vld [vmem:[%s1 + $0x1a0] sm:$0xf]
      %v1355 = vld [vmem:[%s1 + $0x1a4] sm:$0xf]
      %v1356 = vld [vmem:[%s1 + $0x1a8] sm:$0xf]
      %v1357 = vld [vmem:[%s1 + $0x1ac] sm:$0xf]
      %v1358 = vld [vmem:[%s1 + $0x1b0] sm:$0xf]
      %v1359 = vld [vmem:[%s1 + $0x1b4] sm:$0xf]
      %v1360 = vld [vmem:[%s1 + $0x1b8] sm:$0xf]
      %v1361 = vld [vmem:[%s1 + $0x1bc] sm:$0xf]
      %v1362 = vpack.c.b16 %v1268, %v1267
      %v1371 = vunpack.c.l.b16 %v1354
      %v1372 = vunpack.c.l.b16 %v1355
      %v1373 = vunpack.c.l.b16 %v1356
      %v1374 = vunpack.c.l.b16 %v1357
      %v1375 = vunpack.c.l.b16 %v1358
      %v1376 = vunpack.c.l.b16 %v1359
      %v1377 = vunpack.c.l.b16 %v1360
      %v1378 = vunpack.c.l.b16 %v1361
      %v1379 = vpack.c.b16 %v1372, %v1371
      %v1380 = vpack.c.b16 %v1374, %v1373
      %v1381 = vpack.c.b16 %v1376, %v1375
      %v1382 = vpack.c.b16 %v1378, %v1377
      %v1388 = vsel %vm256, %v1362, 0
      %1390 = vmatprep.subr.bf16.mxu0 0
      %1391 = vmatpush1.bf16.msra.mxu0 %v1379
      %1392 = vmatprep.subr.bf16.mxu0 0
      %1393 = vmatpush1.bf16.msra.mxu0 %v1380
      %1394 = vmatprep.subr.bf16.mxu0 0
      %1395 = vmatpush1.bf16.msra.mxu0 %v1381
      %1396 = vmatprep.subr.bf16.mxu0 0
      %1397 = vmatpush1.bf16.msra.mxu0 %v1382
      %1398 = vmatprep.subr.bf16.mxu0 0
      %1399 = vmatpush1.bf16.msra.mxu0 0
      %1400 = vmatprep.subr.bf16.mxu0 0
      %1401 = vmatpush1.bf16.msra.mxu0 0
      %1402 = vmatprep.subr.bf16.mxu0 0
      %1403 = vmatpush1.bf16.msra.mxu0 0
      %1404 = vmatprep.subr.bf16.mxu0 0
      %1405 = vmatpush1.bf16.msra.mxu0 0
      %1406 = vmatprep.subr.bf16.mxu0 0
      %1407 = vmatpush1.bf16.msra.mxu0 0
      %1408 = vmatprep.subr.bf16.mxu0 0
      %1409 = vmatpush1.bf16.msra.mxu0 0
      %1410 = vmatprep.subr.bf16.mxu0 0
      %1411 = vmatpush1.bf16.msra.mxu0 0
      %1412 = vmatprep.subr.bf16.mxu0 0
      %1413 = vmatpush1.bf16.msra.mxu0 0
      %1414 = vmatprep.subr.bf16.mxu0 0
      %1415 = vmatpush1.bf16.msra.mxu0 0
      %1416 = vmatprep.subr.bf16.mxu0 0
      %1417 = vmatpush1.bf16.msra.mxu0 0
      %1418 = vmatprep.subr.bf16.mxu0 0
      %1419 = vmatpush1.bf16.msra.mxu0 0
      %1420 = vmatprep.subr.bf16.mxu0 0
      %1421 = vmatpush1.bf16.msra.mxu0 0
      %1422 = vmatprep.mubr.bf16.mxu0 0
      %1423 = vmatmul.mubr.bf16.gmra.mrb[0].mxu0 %v1388
      %v1424 = vpop.f32.mrb[0].mxu0
      %v1425 = vadd.f32 0.0, %v1424
      %v1426 = vpop.f32.mrb[0].mxu0
      %v1427 = vpop.f32.mrb[0].mxu0
      %v1428 = vadd.f32 0.0, %v1427
      %v1429 = vpop.f32.mrb[0].mxu0
      %1430 = vdwg.mxu0
      %v1431 = vadd.f32 %v1352, %v1425
      %v1432 = vadd.f32 %v1353, %v1428
      %v1433 = vld [vmem:[%s194 + $0xc] sm:$0x3]
      %v1434 = vld [vmem:[%s1 + $0x1c0] sm:$0xf]
      %v1435 = vld [vmem:[%s1 + $0x1c4] sm:$0xf]
      %v1436 = vld [vmem:[%s1 + $0x1c8] sm:$0xf]
      %v1437 = vld [vmem:[%s1 + $0x1cc] sm:$0xf]
      %v1438 = vld [vmem:[%s1 + $0x1d0] sm:$0xf]
      %v1439 = vld [vmem:[%s1 + $0x1d4] sm:$0xf]
      %v1440 = vld [vmem:[%s1 + $0x1d8] sm:$0xf]
      %v1441 = vld [vmem:[%s1 + $0x1dc] sm:$0xf]
      %v1443 = vunpack.c.l.b16 %v1433
      %v1444 = vpack.c.b16 %v1443, %v1267
      %v1446 = vshrl.u32 %v1444, 16
      %v1448 = vshll.u32 %v1444, 16
      %v1450 = vrot.slane %v1448, 1
      %v1451 = vor.u32 %v1446, %v1450
      %v1460 = vunpack.c.l.b16 %v1434
      %v1461 = vunpack.c.l.b16 %v1435
      %v1462 = vunpack.c.l.b16 %v1436
      %v1463 = vunpack.c.l.b16 %v1437
      %v1464 = vunpack.c.l.b16 %v1438
      %v1465 = vunpack.c.l.b16 %v1439
      %v1466 = vunpack.c.l.b16 %v1440
      %v1467 = vunpack.c.l.b16 %v1441
      %v1468 = vpack.c.b16 %v1461, %v1460
      %v1469 = vpack.c.b16 %v1463, %v1462
      %v1470 = vpack.c.b16 %v1465, %v1464
      %v1471 = vpack.c.b16 %v1467, %v1466
      %v1477 = vsel %vm256, %v1451, 0
      %1479 = vmatprep.subr.bf16.mxu0 0
      %1480 = vmatpush1.bf16.msra.mxu0 %v1468
      %1481 = vmatprep.subr.bf16.mxu0 0
      %1482 = vmatpush1.bf16.msra.mxu0 %v1469
      %1483 = vmatprep.subr.bf16.mxu0 0
      %1484 = vmatpush1.bf16.msra.mxu0 %v1470
      %1485 = vmatprep.subr.bf16.mxu0 0
      %1486 = vmatpush1.bf16.msra.mxu0 %v1471
      %1487 = vmatprep.subr.bf16.mxu0 0
      %1488 = vmatpush1.bf16.msra.mxu0 0
      %1489 = vmatprep.subr.bf16.mxu0 0
      %1490 = vmatpush1.bf16.msra.mxu0 0
      %1491 = vmatprep.subr.bf16.mxu0 0
      %1492 = vmatpush1.bf16.msra.mxu0 0
      %1493 = vmatprep.subr.bf16.mxu0 0
      %1494 = vmatpush1.bf16.msra.mxu0 0
      %1495 = vmatprep.subr.bf16.mxu0 0
      %1496 = vmatpush1.bf16.msra.mxu0 0
      %1497 = vmatprep.subr.bf16.mxu0 0
      %1498 = vmatpush1.bf16.msra.mxu0 0
      %1499 = vmatprep.subr.bf16.mxu0 0
      %1500 = vmatpush1.bf16.msra.mxu0 0
      %1501 = vmatprep.subr.bf16.mxu0 0
      %1502 = vmatpush1.bf16.msra.mxu0 0
      %1503 = vmatprep.subr.bf16.mxu0 0
      %1504 = vmatpush1.bf16.msra.mxu0 0
      %1505 = vmatprep.subr.bf16.mxu0 0
      %1506 = vmatpush1.bf16.msra.mxu0 0
      %1507 = vmatprep.subr.bf16.mxu0 0
      %1508 = vmatpush1.bf16.msra.mxu0 0
      %1509 = vmatprep.subr.bf16.mxu0 0
      %1510 = vmatpush1.bf16.msra.mxu0 0
      %1511 = vmatprep.mubr.bf16.mxu0 0
      %1512 = vmatmul.mubr.bf16.gmra.mrb[0].mxu0 %v1477
      %v1513 = vpop.f32.mrb[0].mxu0
      %v1514 = vadd.f32 0.0, %v1513
      %v1515 = vpop.f32.mrb[0].mxu0
      %v1516 = vpop.f32.mrb[0].mxu0
      %v1517 = vadd.f32 0.0, %v1516
      %v1518 = vpop.f32.mrb[0].mxu0
      %1519 = vdwg.mxu0
      %v1520 = vadd.f32 %v1431, %v1514
      %v1521 = vadd.f32 %v1432, %v1517
      %v1522 = vld [vmem:[%s194 + $0x8] sm:$0xe]
      %v1523 = vld [vmem:[%s1 + $0x1e0] sm:$0xf]
      %v1524 = vld [vmem:[%s1 + $0x1e4] sm:$0xf]
      %v1525 = vld [vmem:[%s1 + $0x1e8] sm:$0xf]
      %v1526 = vld [vmem:[%s1 + $0x1ec] sm:$0xf]
      %v1527 = vld [vmem:[%s1 + $0x1f0] sm:$0xf]
      %v1528 = vld [vmem:[%s1 + $0x1f4] sm:$0xf]
      %v1529 = vld [vmem:[%s1 + $0x1f8] sm:$0xf]
      %v1530 = vld [vmem:[%s1 + $0x1fc] sm:$0xf]
      %v1532 = vunpack.c.l.b16 %v1522
      %v1533 = vpack.c.b16 %v1443, %v1532
      %v1534 = vrot.slane %v1533, 1
      %v1543 = vunpack.c.l.b16 %v1523
      %v1544 = vunpack.c.l.b16 %v1524
      %v1545 = vunpack.c.l.b16 %v1525
      %v1546 = vunpack.c.l.b16 %v1526
      %v1547 = vunpack.c.l.b16 %v1527
      %v1548 = vunpack.c.l.b16 %v1528
      %v1549 = vunpack.c.l.b16 %v1529
      %v1550 = vunpack.c.l.b16 %v1530
      %v1551 = vpack.c.b16 %v1544, %v1543
      %v1552 = vpack.c.b16 %v1546, %v1545
      %v1553 = vpack.c.b16 %v1548, %v1547
      %v1554 = vpack.c.b16 %v1550, %v1549
      %v1560 = vsel %vm256, %v1534, 0
      %1562 = vmatprep.subr.bf16.mxu0 0
      %1563 = vmatpush1.bf16.msra.mxu0 %v1551
      %1564 = vmatprep.subr.bf16.mxu0 0
      %1565 = vmatpush1.bf16.msra.mxu0 %v1552
      %1566 = vmatprep.subr.bf16.mxu0 0
      %1567 = vmatpush1.bf16.msra.mxu0 %v1553
      %1568 = vmatprep.subr.bf16.mxu0 0
      %1569 = vmatpush1.bf16.msra.mxu0 %v1554
      %1570 = vmatprep.subr.bf16.mxu0 0
      %1571 = vmatpush1.bf16.msra.mxu0 0
      %1572 = vmatprep.subr.bf16.mxu0 0
      %1573 = vmatpush1.bf16.msra.mxu0 0
      %1574 = vmatprep.subr.bf16.mxu0 0
      %1575 = vmatpush1.bf16.msra.mxu0 0
      %1576 = vmatprep.subr.bf16.mxu0 0
      %1577 = vmatpush1.bf16.msra.mxu0 0
      %1578 = vmatprep.subr.bf16.mxu0 0
      %1579 = vmatpush1.bf16.msra.mxu0 0
      %1580 = vmatprep.subr.bf16.mxu0 0
      %1581 = vmatpush1.bf16.msra.mxu0 0
      %1582 = vmatprep.subr.bf16.mxu0 0
      %1583 = vmatpush1.bf16.msra.mxu0 0
      %1584 = vmatprep.subr.bf16.mxu0 0
      %1585 = vmatpush1.bf16.msra.mxu0 0
      %1586 = vmatprep.subr.bf16.mxu0 0
      %1587 = vmatpush1.bf16.msra.mxu0 0
      %1588 = vmatprep.subr.bf16.mxu0 0
      %1589 = vmatpush1.bf16.msra.mxu0 0
      %1590 = vmatprep.subr.bf16.mxu0 0
      %1591 = vmatpush1.bf16.msra.mxu0 0
      %1592 = vmatprep.subr.bf16.mxu0 0
      %1593 = vmatpush1.bf16.msra.mxu0 0
      %1594 = vmatprep.mubr.bf16.mxu0 0
      %1595 = vmatmul.mubr.bf16.gmra.mrb[0].mxu0 %v1560
      %v1596 = vpop.f32.mrb[0].mxu0
      %v1597 = vadd.f32 0.0, %v1596
      %v1598 = vpop.f32.mrb[0].mxu0
      %v1599 = vpop.f32.mrb[0].mxu0
      %v1600 = vadd.f32 0.0, %v1599
      %v1601 = vpop.f32.mrb[0].mxu0
      %1602 = vdwg.mxu0
      %v1603 = vadd.f32 %v1520, %v1597
      %v1604 = vadd.f32 %v1521, %v1600
      %v1605 = vld [vmem:[#allocation2] sm:$0x1]
      %v1607 = vlaneseq
      %v1608 = vshrl.u32 %v1607, 7
      %v1609 = vsub.s32 0, %v1608
      %v1610 = vrot.slane %v1605, %v1609
      %v1612 = vadd.f32 %v1603, %v1610
      %v1613 = vadd.f32 %v1604, %v1610
      %vm1614 = vcmask 7168
      %1615 = vst.msk [vmem:[%s199] sm:$0xff] %vm1614, %v1612
      %vm1616 = vcmask 1024
      %1617 = vst.msk [vmem:[%s199 + $0x8] sm:$0x3] %vm1616, %v1613
      %p1618 = scmp.lt.s32.totalorder %s17, 1
      %s1619 = scalar_select %p1618, %s17, 1
      %s1620 = smul.addr %s1619, 2
      %s1621 = smul.addr %s1620, 8
      %s1622 = scalar_lea.vmem %s4, %s1621
      // Predicated region
      $region37: #{cycle_discriminator.9} parent=35 // pred_check
        %p1623 = pneg %p124
      $region38: #{cycle_discriminator.9} parent=35 // pred_check_branch
        %1625 = sbr.rel (%p1623) target = $region40
      $region39: #{cycle_discriminator.9} parent=35 // pred_region
        _
      $region40: #{cycle_discriminator.9} parent=35 // pred_fallthru
        _
    $region36: #{cycle_discriminator.9} parent=5 // pred_fallthru
      _
    %p1626 = scmp.le.s32.totalorder 2, %s12
    // Predicated region
    $region41: #{cycle_discriminator.9} parent=5 // pred_check
      %p1627 = pneg %p1626
    $region42: #{cycle_discriminator.9} parent=5 // pred_check_branch
      %1629 = sbr.rel (%p1627) target = $region44
    $region43: #{cycle_discriminator.9} parent=5 // pred_region
      %s1630 = ssub.s32 %s12, 2
      // Predicated region
      $region45: #{cycle_discriminator.9} parent=43 // pred_check
        %p1631 = pneg %p130
      $region46: #{cycle_discriminator.9} parent=43 // pred_check_branch
        %1633 = sbr.rel (%p1631) target = $region48
      $region47: #{cycle_discriminator.9} parent=43 // pred_region
        %p1634 = scmp.lt.s32.totalorder %s18, 1
        %s1635 = scalar_select %p1634, %s18, 1
        %s1636 = smul.addr %s1635, 2
        %s1637 = smul.addr %s1636, 8
        %s1638 = scalar_lea.vmem %s4, %s1637
      $region48: #{cycle_discriminator.9} parent=43 // pred_fallthru
        _
    $region44: #{cycle_discriminator.9} parent=5 // pred_fallthru
      _
  $region6: #{cycle_discriminator.9} parent=0 // loop_footer
    %s16 = sadd.s32 1, %s12
  $region7: #{cycle_discriminator.9} parent=0 // loop_footer_branch
    %11 = sbr.rel target = $region3
  $region8: #{cycle_discriminator.9} parent=0 // loop_exit
    _

</llo_original>
